<compile_context>
chip_gen: v5e
topology: v5e:2x2
jax: 0.10.0
libtpu: 0.0.40
codegen_flags: <defaults>
</compile_context>

<pallas_src>
import functools

import jax
import jax.numpy as jnp
from jax import lax
from jax.experimental import pallas as pl
from jax.experimental.pallas import tpu as pltpu


NEG_BIG = -1e30  # finite "-inf" for masking padded keys (avoids inf-inf NaNs)

# dot_general dimension numbers -- both are MXU-native on Mosaic (no transposes).
NT = (((1,), (1,)), ((), ()))   # contract last dim of both operands
NN = (((1,), (0,)), ((), ()))   # standard matmul


def _attention_flash_kernel(xq_ref, xk_ref, wq_ref, wkv_ref, wo_ref, b_ref,
                            o_ref,
                            q_buf, m_buf, l_buf, acc_buf,
                            *, heads, dim_head, n_valid, n_padded, block_k):
    # xq_ref : (1, TQ, C) bf16   query-tile slab of x (spatial-major)
    # xk_ref : (1, TK, C) bf16   key-tile slab of x
    # wq_ref : (hidden, C) bf16  q weights, all heads (softmax scale pre-folded)
    # wkv_ref: (2*hidden, C) bf16  [k; v] weights, all heads
    # wo_ref : (C, hidden) bf16  output-projection weights
    # b_ref  : (C, 1) f32        output-projection bias
    # o_ref  : (1, C, TQ)        lane-dense output tile
    dh = dim_head
    hidden = heads * dh
    ki = pl.program_id(2)
    nk = pl.num_programs(2)

    # ---- per-(batch, q-tile) init: project q for all heads once, reset state ----
    @pl.when(ki == 0)
    def _():
        q = lax.dot_general(xq_ref[0], wq_ref[...], NT,
                            preferred_element_type=jnp.float32)       # (TQ, hidden)
        q_buf[...] = q.astype(q_buf.dtype)                              # bf16
        m_buf[...] = jnp.full_like(m_buf, -jnp.inf)
        l_buf[...] = jnp.zeros_like(l_buf)
        acc_buf[...] = jnp.zeros_like(acc_buf)

    def flash_step(apply_mask):
        # One (TK, C) x (C, 2*hidden) projection for K and V of ALL heads.
        kv = lax.dot_general(xk_ref[0], wkv_ref[...], NT,
                             preferred_element_type=jnp.float32)        # (TK, 2*hidden)
        kv = kv.astype(jnp.bfloat16)
        if apply_mask:
            # Only emitted (and executed) on the last key tile.
            col = lax.broadcasted_iota(jnp.int32, (1, block_k), 1) + ki * block_k
            kmask = col < n_valid                                       # (1, TK)
        for h in range(heads):                                          # unrolled, heads=4
            q_h = q_buf[:, h * dh:(h + 1) * dh]                         # (TQ, dh) bf16
            k_h = kv[:, h * dh:(h + 1) * dh]                            # (TK, dh) bf16
            v_h = kv[:, hidden + h * dh:hidden + (h + 1) * dh]          # (TK, dh) bf16
            sim = lax.dot_general(q_h, k_h, NT,
                                  preferred_element_type=jnp.float32)   # (TQ, TK)
            if apply_mask:
                sim = jnp.where(kmask, sim, NEG_BIG)
            m_prev = m_buf[h]                                           # (TQ, 1)
            m_new = jnp.maximum(m_prev, jnp.max(sim, axis=-1, keepdims=True))
            alpha = jnp.exp(m_prev - m_new)
            p = jnp.exp(sim - m_new)                                    # (TQ, TK) f32
            l_buf[h] = alpha * l_buf[h] + jnp.sum(p, axis=-1, keepdims=True)
            pv = lax.dot_general(p.astype(jnp.bfloat16), v_h, NN,
                                 preferred_element_type=jnp.float32)    # (TQ, dh)
            acc_buf[:, h * dh:(h + 1) * dh] = (
                alpha * acc_buf[:, h * dh:(h + 1) * dh] + pv)
            m_buf[h] = m_new

    if n_padded == n_valid:       # static: no spatial padding -> never mask
        flash_step(apply_mask=False)
    else:
        # Padding (< 128) lives entirely in the LAST k-tile (block_k >= 128),
        # so earlier tiles never need the mask and a fully-masked tile can
        # never be the first tile (the invariant is asserted in the wrapper).
        @pl.when(ki < nk - 1)
        def _():
            flash_step(apply_mask=False)

        @pl.when(ki == nk - 1)
        def _():
            flash_step(apply_mask=True)

    # ---- finalize: normalize (EUP reciprocal) + fused hidden-wide out-proj ----
    @pl.when(ki == nk - 1)
    def _():
        for h in range(heads):
            inv_l = pl.reciprocal(l_buf[h], approx=True)                # (TQ, 1)
            acc_buf[:, h * dh:(h + 1) * dh] = (
                acc_buf[:, h * dh:(h + 1) * dh] * inv_l)
        out_all = acc_buf[...].astype(jnp.bfloat16)                     # (TQ, hidden)
        o = lax.dot_general(wo_ref[...], out_all, NT,
                            preferred_element_type=jnp.float32)         # (C, TQ)
        o_ref[0] = (o + b_ref[...]).astype(o_ref.dtype)


def _round_up(x, m):
    return (x + m - 1) // m * m


def _pick_tile(total, candidates, min_blocks=1):
    for t in candidates:
        if total % t == 0 and total // t >= min_blocks:
            return t
    return 128


def attention_forward(x, w_qkv, w_out, b_out, *, heads=4, dim_head=32):
    """x: (B, C, H, W) NCHW. w_qkv: (3*hidden, C, 1, 1). w_out: (C, hidden, 1, 1). b_out: (C,)."""
    B, C, H, W = x.shape
    N = H * W
    hidden = heads * dim_head
    scale = dim_head ** (-0.5)

    # Lane-dense padded spatial length and tile sizes that divide it.
    Np = _round_up(N, 128)
    # Large tiles amortize per-step overhead; when B == 1 shrink block_q (if
    # possible) so the parallel extent B*nq >= 2 and both v7x cores get work.
    block_q = _pick_tile(Np, (512, 256, 128), min_blocks=2 if B == 1 else 1)
    block_k = _pick_tile(Np, (1024, 512, 256, 128))
    nq = Np // block_q
    nk = Np // block_k
    # Masking invariant: all padding lands in the last key tile.
    assert Np - N < block_k, "padded keys must fit entirely in the last k-tile"

    # NCHW -> (B, Np, C) bf16: spatial-major slabs make every in-kernel matmul a
    # native NT/NN MXU form; bf16 halves the dominant xq/xk HBM streams.
    x2 = jnp.transpose(x.reshape(B, C, N), (0, 2, 1)).astype(jnp.bfloat16)
    if Np != N:
        x2 = jnp.pad(x2, ((0, 0), (0, Np - N), (0, 0)))

    wqkv2 = w_qkv.reshape(3 * hidden, C)
    wq = (wqkv2[:hidden] * scale).astype(jnp.bfloat16)        # (hidden, C), scale folded
    wkv = wqkv2[hidden:].astype(jnp.bfloat16)                 # (2*hidden, C) = [k; v]
    wo = w_out.reshape(C, hidden).astype(jnp.bfloat16)        # (C, hidden)
    bo = b_out.reshape(C, 1).astype(jnp.float32)

    # Deeper xk buffering only pays off when the k-loop is long enough.
    xk_kwargs = {"pipeline_mode": pl.Buffered(3)} if nk >= 3 else {}
    xk_bufs = 3 if nk >= 3 else 2

    # Explicit VMEM budget (sized for the real C / tiles; safe for v7x 64 MiB).
    vmem_need = (
        2 * block_q * C * 2                                    # xq (bf16, double-buffered)
        + xk_bufs * block_k * C * 2                            # xk stream (bf16)
        + 2 * (hidden * C + 2 * hidden * C + C * hidden) * 2   # weights (bf16)
        + 2 * C * 128 * 4                                      # bias (lane-padded)
        + 2 * C * block_q * 4                                  # output tile (f32)
        + block_q * hidden * (2 + 4)                           # q_buf (bf16) + acc (f32)
        + 2 * heads * block_q * 128 * 4                        # m, l (lane-padded f32)
        + 2 * block_q * block_k * 4                            # score/p tile headroom
    )
    vmem_limit = int(max(vmem_need + (8 << 20), 16 << 20))

    kernel = functools.partial(_attention_flash_kernel,
                               heads=heads, dim_head=dim_head,
                               n_valid=N, n_padded=Np, block_k=block_k)

    out = pl.pallas_call(
        kernel,
        out_shape=jax.ShapeDtypeStruct((B, C, Np), x.dtype),
        grid_spec=pltpu.PrefetchScalarGridSpec(
            num_scalar_prefetch=0,
            grid=(B, nq, nk),
            in_specs=[
                pl.BlockSpec((1, block_q, C), lambda b, qi, ki: (b, qi, 0)),  # x, query tile
                pl.BlockSpec((1, block_k, C), lambda b, qi, ki: (b, ki, 0),   # x, key tile
                             **xk_kwargs),
                pl.BlockSpec((hidden, C), lambda b, qi, ki: (0, 0)),          # wq (scaled)
                pl.BlockSpec((2 * hidden, C), lambda b, qi, ki: (0, 0)),      # wkv
                pl.BlockSpec((C, hidden), lambda b, qi, ki: (0, 0)),          # w_out
                pl.BlockSpec((C, 1), lambda b, qi, ki: (0, 0)),               # bias
            ],
            out_specs=pl.BlockSpec((1, C, block_q), lambda b, qi, ki: (b, 0, qi)),
            scratch_shapes=[
                pltpu.VMEM((block_q, hidden), jnp.bfloat16),      # q, all heads
                pltpu.VMEM((heads, block_q, 1), jnp.float32),     # running max per head
                pltpu.VMEM((heads, block_q, 1), jnp.float32),     # running sum per head
                pltpu.VMEM((block_q, hidden), jnp.float32),       # attention accumulator
            ],
        ),
        compiler_params=pltpu.CompilerParams(
            dimension_semantics=("parallel", "parallel", "arbitrary"),
            vmem_limit_bytes=vmem_limit,
        ),
    )(x2, x2, wq, wkv, wo, bo)

    return out[:, :, :N].reshape(B, C, H, W)


def attention_reference(x, w_qkv, w_out, b_out, *, heads=4, dim_head=32):
    """Pure-JAX f32 reference mirroring the PyTorch forward pass."""
    B, C, H, W = x.shape
    N = H * W
    hidden = heads * dim_head
    scale = dim_head ** (-0.5)

    x2 = x.reshape(B, C, N)
    qkv = jnp.einsum('oc,bcn->bon', w_qkv.reshape(3 * hidden, C), x2)
    q, k, v = jnp.split(qkv, 3, axis=1)
    q = q.reshape(B, heads, dim_head, N) * scale
    k = k.reshape(B, heads, dim_head, N)
    v = v.reshape(B, heads, dim_head, N)
    sim = jnp.einsum('bhdi,bhdj->bhij', q, k)
    sim = sim - jnp.max(sim, axis=-1, keepdims=True)
    attn = jax.nn.softmax(sim, axis=-1)
    out = jnp.einsum('bhij,bhdj->bhid', attn, v)              # (B, heads, N, dh)
    out = jnp.transpose(out, (0, 1, 3, 2)).reshape(B, hidden, N)
    res = jnp.einsum('oc,bcn->bon', w_out.reshape(C, hidden), out) + b_out[None, :, None]
    return res.reshape(B, C, H, W)


if __name__ == "__main__":
    # Small, module-consistent shapes (dim=8, PyTorch default heads/dim_head).
    B, C, H, W = 2, 8, 8, 8
    heads, dim_head = 4, 32
    hidden = heads * dim_head

    key = jax.random.PRNGKey(0)
    kx, kq, kw, kb = jax.random.split(key, 4)

    x = jax.random.normal(kx, (B, C, H, W), dtype=jnp.float32)
    # Conv2d 1x1 weight layout: (out, in, 1, 1).
    w_qkv = jax.random.normal(kq, (3 * hidden, C, 1, 1), dtype=jnp.float32) * (1.0 / jnp.sqrt(C))
    w_out = jax.random.normal(kw, (C, hidden, 1, 1), dtype=jnp.float32) * (1.0 / jnp.sqrt(hidden))
    b_out = jax.random.normal(kb, (C,), dtype=jnp.float32) * 0.01

    y = attention_forward(x, w_qkv, w_out, b_out, heads=heads, dim_head=dim_head)
    y = jax.block_until_ready(y)

    y_ref = attention_reference(x, w_qkv, w_out, b_out, heads=heads, dim_head=dim_head)
    assert y.shape == (B, C, H, W)
    max_err = float(jnp.max(jnp.abs(y - y_ref)))
    # bf16 operands everywhere (inputs, projections, out-proj) with f32 accumulation
    # -> slightly relaxed tolerance vs the pure-f32 reference.
    assert jnp.allclose(y, y_ref, atol=4e-2, rtol=4e-2), f"mismatch vs reference (max abs err {max_err})"

    print("KERNEL_OK")
</pallas_src>

<mosaic_0001>
module attributes {stable_mosaic.version = 11 : i64} {
  func.func @_attention_flash_kernel(%arg0: i32, %arg1: i32, %arg2: i32, %arg3: memref<1x128x8xbf16, #tpu.memory_space<vmem>>, %arg4: memref<1x128x8xbf16, #tpu.memory_space<vmem>>, %arg5: memref<128x8xbf16, #tpu.memory_space<vmem>>, %arg6: memref<256x8xbf16, #tpu.memory_space<vmem>>, %arg7: memref<8x128xbf16, #tpu.memory_space<vmem>>, %arg8: memref<8x1xf32, #tpu.memory_space<vmem>>, %arg9: memref<1x8x128xf32, #tpu.memory_space<vmem>>, %arg10: memref<128x128xbf16, #tpu.memory_space<vmem>>, %arg11: memref<4x128x1xf32, #tpu.memory_space<vmem>>, %arg12: memref<4x128x1xf32, #tpu.memory_space<vmem>>, %arg13: memref<128x128xf32, #tpu.memory_space<vmem>>) attributes {dimension_semantics = [#tpu.dimension_semantics<parallel>, #tpu.dimension_semantics<parallel>, #tpu.dimension_semantics<arbitrary>], iteration_bounds = array<i64: 2, 1, 1>, scalar_prefetch = 0 : i64, scratch_operands = 4 : i64, tpu.core_type = #tpu.core_type<tc>, window_params = [{transform_indices = @transform_0, window_bounds = array<i64: 1, 128, 8>}, {transform_indices = @transform_1, window_bounds = array<i64: 1, 128, 8>}, {pipeline_mode = #tpu.pipeline_mode<synchronous>, transform_indices = @transform_2, window_bounds = array<i64: 128, 8>}, {pipeline_mode = #tpu.pipeline_mode<synchronous>, transform_indices = @transform_3, window_bounds = array<i64: 256, 8>}, {pipeline_mode = #tpu.pipeline_mode<synchronous>, transform_indices = @transform_4, window_bounds = array<i64: 8, 128>}, {pipeline_mode = #tpu.pipeline_mode<synchronous>, transform_indices = @transform_5, window_bounds = array<i64: 8, 1>}, {transform_indices = @transform_6, window_bounds = array<i64: 1, 8, 128>}]} {
    %c0_i32 = arith.constant 0 : i32
    %0 = arith.cmpi eq, %arg2, %c0_i32 : i32
    %1 = arith.extui %0 : i1 to i32
    %c0_i32_0 = arith.constant 0 : i32
    %2 = arith.cmpi ne, %1, %c0_i32_0 : i32
    scf.if %2 {
      %c0 = arith.constant 0 : index
      %c0_7 = arith.constant 0 : index
      %c0_8 = arith.constant 0 : index
      %12 = vector.load %arg3[%c0, %c0_7, %c0_8] : memref<1x128x8xbf16, #tpu.memory_space<vmem>>, vector<1x128x8xbf16>
      %13 = vector.shape_cast %12 : vector<1x128x8xbf16> to vector<128x8xbf16>
      %c0_9 = arith.constant 0 : index
      %c0_10 = arith.constant 0 : index
      %14 = vector.load %arg5[%c0_9, %c0_10] : memref<128x8xbf16, #tpu.memory_space<vmem>>, vector<128x8xbf16>
      %cst = arith.constant dense<0.000000e+00> : vector<128x128xf32>
      %15 = tpu.matmul %13, %14, %cst {dimension_numbers = #tpu.dot_dimension_numbers<[1], [1], [0], [0], [0, 0, 1, 0], [], []>} : vector<128x8xbf16>, vector<128x8xbf16>, vector<128x128xf32> -> vector<128x128xf32>
      %16 = arith.truncf %15 : vector<128x128xf32> to vector<128x128xbf16>
      %c0_11 = arith.constant 0 : index
      %c0_12 = arith.constant 0 : index
      %17 = vector.load %arg10[%c0_11, %c0_12] : memref<128x128xbf16, #tpu.memory_space<vmem>>, vector<128x128xbf16>
      tpu.vector_store %arg10[%c0_11, %c0_12], %16 {strides = array<i32>} : memref<128x128xbf16, #tpu.memory_space<vmem>>, vector<128x128xbf16>,
      %cst_13 = arith.constant 0xFF800000 : f32
      %18 = vector.broadcast %cst_13 : f32 to vector<4x128x1xf32>
      %c0_14 = arith.constant 0 : index
      %c0_15 = arith.constant 0 : index
      %c0_16 = arith.constant 0 : index
      %19 = vector.load %arg11[%c0_14, %c0_15, %c0_16] : memref<4x128x1xf32, #tpu.memory_space<vmem>>, vector<4x128x1xf32>
      tpu.vector_store %arg11[%c0_14, %c0_15, %c0_16], %18 {strides = array<i32>} : memref<4x128x1xf32, #tpu.memory_space<vmem>>, vector<4x128x1xf32>,
      %cst_17 = arith.constant 0.000000e+00 : f32
      %20 = vector.broadcast %cst_17 : f32 to vector<4x128x1xf32>
      %c0_18 = arith.constant 0 : index
      %c0_19 = arith.constant 0 : index
      %c0_20 = arith.constant 0 : index
      %21 = vector.load %arg12[%c0_18, %c0_19, %c0_20] : memref<4x128x1xf32, #tpu.memory_space<vmem>>, vector<4x128x1xf32>
      tpu.vector_store %arg12[%c0_18, %c0_19, %c0_20], %20 {strides = array<i32>} : memref<4x128x1xf32, #tpu.memory_space<vmem>>, vector<4x128x1xf32>,
      %cst_21 = arith.constant 0.000000e+00 : f32
      %22 = vector.broadcast %cst_21 : f32 to vector<128x128xf32>
      %c0_22 = arith.constant 0 : index
      %c0_23 = arith.constant 0 : index
      %23 = vector.load %arg13[%c0_22, %c0_23] : memref<128x128xf32, #tpu.memory_space<vmem>>, vector<128x128xf32>
      tpu.vector_store %arg13[%c0_22, %c0_23], %22 {strides = array<i32>} : memref<128x128xf32, #tpu.memory_space<vmem>>, vector<128x128xf32>,
    } else {
    }
    %c0_i32_1 = arith.constant 0 : i32
    %3 = arith.cmpi slt, %arg2, %c0_i32_1 : i32
    %4 = arith.extui %3 : i1 to i32
    %c0_i32_2 = arith.constant 0 : i32
    %5 = arith.cmpi ne, %4, %c0_i32_2 : i32
    scf.if %5 {
      %c0 = arith.constant 0 : index
      %c0_7 = arith.constant 0 : index
      %c0_8 = arith.constant 0 : index
      %12 = vector.load %arg4[%c0, %c0_7, %c0_8] : memref<1x128x8xbf16, #tpu.memory_space<vmem>>, vector<1x128x8xbf16>
      %13 = vector.shape_cast %12 : vector<1x128x8xbf16> to vector<128x8xbf16>
      %c0_9 = arith.constant 0 : index
      %c0_10 = arith.constant 0 : index
      %14 = vector.load %arg6[%c0_9, %c0_10] : memref<256x8xbf16, #tpu.memory_space<vmem>>, vector<256x8xbf16>
      %cst = arith.constant dense<0.000000e+00> : vector<128x256xf32>
      %15 = tpu.matmul %13, %14, %cst {dimension_numbers = #tpu.dot_dimension_numbers<[1], [1], [0], [0], [0, 0, 1, 0], [], []>} : vector<128x8xbf16>, vector<256x8xbf16>, vector<128x256xf32> -> vector<128x256xf32>
      %16 = arith.truncf %15 : vector<128x256xf32> to vector<128x256xbf16>
      %c0_11 = arith.constant 0 : index
      %c0_12 = arith.constant 0 : index
      %17 = vector.load %arg10[%c0_11, %c0_12] : memref<128x128xbf16, #tpu.memory_space<vmem>>, vector<128x32xbf16>
      %18 = vector.extract_strided_slice %16 {offsets = [0, 0], sizes = [128, 32], strides = [1, 1]} : vector<128x256xbf16> to vector<128x32xbf16>
      %19 = vector.extract_strided_slice %16 {offsets = [0, 128], sizes = [128, 32], strides = [1, 1]} : vector<128x256xbf16> to vector<128x32xbf16>
      %cst_13 = arith.constant dense<0.000000e+00> : vector<128x128xf32>
      %20 = tpu.matmul %17, %18, %cst_13 {dimension_numbers = #tpu.dot_dimension_numbers<[1], [1], [0], [0], [0, 0, 1, 0], [], []>} : vector<128x32xbf16>, vector<128x32xbf16>, vector<128x128xf32> -> vector<128x128xf32>
      %c0_14 = arith.constant 0 : index
      %c0_15 = arith.constant 0 : index
      %c0_16 = arith.constant 0 : index
      %21 = vector.load %arg11[%c0_14, %c0_15, %c0_16] : memref<4x128x1xf32, #tpu.memory_space<vmem>>, vector<1x128x1xf32>
      %22 = vector.shape_cast %21 : vector<1x128x1xf32> to vector<128x1xf32>
      %cst_17 = arith.constant dense<0xFF800000> : vector<128xf32>
      %23 = vector.multi_reduction <maximumf>, %20, %cst_17 [1] : vector<128x128xf32> to vector<128xf32>
      %24 = vector.shape_cast %23 : vector<128xf32> to vector<128x1xf32>
      %25 = arith.maximumf %22, %24 : vector<128x1xf32>
      %26 = arith.subf %22, %25 : vector<128x1xf32>
      %27 = math.exp %26 : vector<128x1xf32>
      %28 = vector.broadcast %25 : vector<128x1xf32> to vector<128x128xf32>
      %29 = arith.subf %20, %28 : vector<128x128xf32>
      %30 = math.exp %29 : vector<128x128xf32>
      %c0_18 = arith.constant 0 : index
      %c0_19 = arith.constant 0 : index
      %c0_20 = arith.constant 0 : index
      %31 = vector.load %arg12[%c0_18, %c0_19, %c0_20] : memref<4x128x1xf32, #tpu.memory_space<vmem>>, vector<1x128x1xf32>
      %32 = vector.shape_cast %31 : vector<1x128x1xf32> to vector<128x1xf32>
      %33 = arith.mulf %27, %32 : vector<128x1xf32>
      %cst_21 = arith.constant dense<0.000000e+00> : vector<128xf32>
      %34 = vector.multi_reduction <add>, %30, %cst_21 [1] : vector<128x128xf32> to vector<128xf32>
      %35 = vector.shape_cast %34 : vector<128xf32> to vector<128x1xf32>
      %36 = arith.addf %33, %35 : vector<128x1xf32>
      %c0_22 = arith.constant 0 : index
      %c0_23 = arith.constant 0 : index
      %c0_24 = arith.constant 0 : index
      %37 = vector.load %arg12[%c0_22, %c0_23, %c0_24] : memref<4x128x1xf32, #tpu.memory_space<vmem>>, vector<1x128x1xf32>
      %38 = vector.shape_cast %37 : vector<1x128x1xf32> to vector<128x1xf32>
      %39 = vector.shape_cast %36 : vector<128x1xf32> to vector<1x128x1xf32>
      tpu.vector_store %arg12[%c0_22, %c0_23, %c0_24], %39 {strides = array<i32>} : memref<4x128x1xf32, #tpu.memory_space<vmem>>, vector<1x128x1xf32>,
      %40 = arith.truncf %30 : vector<128x128xf32> to vector<128x128xbf16>
      %cst_25 = arith.constant dense<0.000000e+00> : vector<128x32xf32>
      %41 = tpu.matmul %40, %19, %cst_25 {dimension_numbers = #tpu.dot_dimension_numbers<[1], [0], [0], [1], [0, 0, 1, 1], [], []>} : vector<128x128xbf16>, vector<128x32xbf16>, vector<128x32xf32> -> vector<128x32xf32>
      %c0_26 = arith.constant 0 : index
      %c0_27 = arith.constant 0 : index
      %42 = vector.load %arg13[%c0_26, %c0_27] : memref<128x128xf32, #tpu.memory_space<vmem>>, vector<128x32xf32>
      %43 = vector.broadcast %27 : vector<128x1xf32> to vector<128x32xf32>
      %44 = arith.mulf %43, %42 : vector<128x32xf32>
      %45 = arith.addf %44, %41 : vector<128x32xf32>
      %c0_28 = arith.constant 0 : index
      %c0_29 = arith.constant 0 : index
      %46 = vector.load %arg13[%c0_28, %c0_29] : memref<128x128xf32, #tpu.memory_space<vmem>>, vector<128x32xf32>
      tpu.vector_store %arg13[%c0_28, %c0_29], %45 {strides = array<i32>} : memref<128x128xf32, #tpu.memory_space<vmem>>, vector<128x32xf32>,
      %c0_30 = arith.constant 0 : index
      %c0_31 = arith.constant 0 : index
      %c0_32 = arith.constant 0 : index
      %47 = vector.load %arg11[%c0_30, %c0_31, %c0_32] : memref<4x128x1xf32, #tpu.memory_space<vmem>>, vector<1x128x1xf32>
      %48 = vector.shape_cast %47 : vector<1x128x1xf32> to vector<128x1xf32>
      %49 = vector.shape_cast %25 : vector<128x1xf32> to vector<1x128x1xf32>
      tpu.vector_store %arg11[%c0_30, %c0_31, %c0_32], %49 {strides = array<i32>} : memref<4x128x1xf32, #tpu.memory_space<vmem>>, vector<1x128x1xf32>,
      %c0_33 = arith.constant 0 : index
      %c32 = arith.constant 32 : index
      %50 = vector.load %arg10[%c0_33, %c32] : memref<128x128xbf16, #tpu.memory_space<vmem>>, vector<128x32xbf16>
      %51 = vector.extract_strided_slice %16 {offsets = [0, 32], sizes = [128, 32], strides = [1, 1]} : vector<128x256xbf16> to vector<128x32xbf16>
      %52 = vector.extract_strided_slice %16 {offsets = [0, 160], sizes = [128, 32], strides = [1, 1]} : vector<128x256xbf16> to vector<128x32xbf16>
      %cst_34 = arith.constant dense<0.000000e+00> : vector<128x128xf32>
      %53 = tpu.matmul %50, %51, %cst_34 {dimension_numbers = #tpu.dot_dimension_numbers<[1], [1], [0], [0], [0, 0, 1, 0], [], []>} : vector<128x32xbf16>, vector<128x32xbf16>, vector<128x128xf32> -> vector<128x128xf32>
      %c1 = arith.constant 1 : index
      %c0_35 = arith.constant 0 : index
      %c0_36 = arith.constant 0 : index
      %54 = vector.load %arg11[%c1, %c0_35, %c0_36] : memref<4x128x1xf32, #tpu.memory_space<vmem>>, vector<1x128x1xf32>
      %55 = vector.shape_cast %54 : vector<1x128x1xf32> to vector<128x1xf32>
      %cst_37 = arith.constant dense<0xFF800000> : vector<128xf32>
      %56 = vector.multi_reduction <maximumf>, %53, %cst_37 [1] : vector<128x128xf32> to vector<128xf32>
      %57 = vector.shape_cast %56 : vector<128xf32> to vector<128x1xf32>
      %58 = arith.maximumf %55, %57 : vector<128x1xf32>
      %59 = arith.subf %55, %58 : vector<128x1xf32>
      %60 = math.exp %59 : vector<128x1xf32>
      %61 = vector.broadcast %58 : vector<128x1xf32> to vector<128x128xf32>
      %62 = arith.subf %53, %61 : vector<128x128xf32>
      %63 = math.exp %62 : vector<128x128xf32>
      %c1_38 = arith.constant 1 : index
      %c0_39 = arith.constant 0 : index
      %c0_40 = arith.constant 0 : index
      %64 = vector.load %arg12[%c1_38, %c0_39, %c0_40] : memref<4x128x1xf32, #tpu.memory_space<vmem>>, vector<1x128x1xf32>
      %65 = vector.shape_cast %64 : vector<1x128x1xf32> to vector<128x1xf32>
      %66 = arith.mulf %60, %65 : vector<128x1xf32>
      %cst_41 = arith.constant dense<0.000000e+00> : vector<128xf32>
      %67 = vector.multi_reduction <add>, %63, %cst_41 [1] : vector<128x128xf32> to vector<128xf32>
      %68 = vector.shape_cast %67 : vector<128xf32> to vector<128x1xf32>
      %69 = arith.addf %66, %68 : vector<128x1xf32>
      %c1_42 = arith.constant 1 : index
      %c0_43 = arith.constant 0 : index
      %c0_44 = arith.constant 0 : index
      %70 = vector.load %arg12[%c1_42, %c0_43, %c0_44] : memref<4x128x1xf32, #tpu.memory_space<vmem>>, vector<1x128x1xf32>
      %71 = vector.shape_cast %70 : vector<1x128x1xf32> to vector<128x1xf32>
      %72 = vector.shape_cast %69 : vector<128x1xf32> to vector<1x128x1xf32>
      tpu.vector_store %arg12[%c1_42, %c0_43, %c0_44], %72 {strides = array<i32>} : memref<4x128x1xf32, #tpu.memory_space<vmem>>, vector<1x128x1xf32>,
      %73 = arith.truncf %63 : vector<128x128xf32> to vector<128x128xbf16>
      %cst_45 = arith.constant dense<0.000000e+00> : vector<128x32xf32>
      %74 = tpu.matmul %73, %52, %cst_45 {dimension_numbers = #tpu.dot_dimension_numbers<[1], [0], [0], [1], [0, 0, 1, 1], [], []>} : vector<128x128xbf16>, vector<128x32xbf16>, vector<128x32xf32> -> vector<128x32xf32>
      %c0_46 = arith.constant 0 : index
      %c32_47 = arith.constant 32 : index
      %75 = vector.load %arg13[%c0_46, %c32_47] : memref<128x128xf32, #tpu.memory_space<vmem>>, vector<128x32xf32>
      %76 = vector.broadcast %60 : vector<128x1xf32> to vector<128x32xf32>
      %77 = arith.mulf %76, %75 : vector<128x32xf32>
      %78 = arith.addf %77, %74 : vector<128x32xf32>
      %c0_48 = arith.constant 0 : index
      %c32_49 = arith.constant 32 : index
      %79 = vector.load %arg13[%c0_48, %c32_49] : memref<128x128xf32, #tpu.memory_space<vmem>>, vector<128x32xf32>
      tpu.vector_store %arg13[%c0_48, %c32_49], %78 {strides = array<i32>} : memref<128x128xf32, #tpu.memory_space<vmem>>, vector<128x32xf32>,
      %c1_50 = arith.constant 1 : index
      %c0_51 = arith.constant 0 : index
      %c0_52 = arith.constant 0 : index
      %80 = vector.load %arg11[%c1_50, %c0_51, %c0_52] : memref<4x128x1xf32, #tpu.memory_space<vmem>>, vector<1x128x1xf32>
      %81 = vector.shape_cast %80 : vector<1x128x1xf32> to vector<128x1xf32>
      %82 = vector.shape_cast %58 : vector<128x1xf32> to vector<1x128x1xf32>
      tpu.vector_store %arg11[%c1_50, %c0_51, %c0_52], %82 {strides = array<i32>} : memref<4x128x1xf32, #tpu.memory_space<vmem>>, vector<1x128x1xf32>,
      %c0_53 = arith.constant 0 : index
      %c64 = arith.constant 64 : index
      %83 = vector.load %arg10[%c0_53, %c64] : memref<128x128xbf16, #tpu.memory_space<vmem>>, vector<128x32xbf16>
      %84 = vector.extract_strided_slice %16 {offsets = [0, 64], sizes = [128, 32], strides = [1, 1]} : vector<128x256xbf16> to vector<128x32xbf16>
      %85 = vector.extract_strided_slice %16 {offsets = [0, 192], sizes = [128, 32], strides = [1, 1]} : vector<128x256xbf16> to vector<128x32xbf16>
      %cst_54 = arith.constant dense<0.000000e+00> : vector<128x128xf32>
      %86 = tpu.matmul %83, %84, %cst_54 {dimension_numbers = #tpu.dot_dimension_numbers<[1], [1], [0], [0], [0, 0, 1, 0], [], []>} : vector<128x32xbf16>, vector<128x32xbf16>, vector<128x128xf32> -> vector<128x128xf32>
      %c2 = arith.constant 2 : index
      %c0_55 = arith.constant 0 : index
      %c0_56 = arith.constant 0 : index
      %87 = vector.load %arg11[%c2, %c0_55, %c0_56] : memref<4x128x1xf32, #tpu.memory_space<vmem>>, vector<1x128x1xf32>
      %88 = vector.shape_cast %87 : vector<1x128x1xf32> to vector<128x1xf32>
      %cst_57 = arith.constant dense<0xFF800000> : vector<128xf32>
      %89 = vector.multi_reduction <maximumf>, %86, %cst_57 [1] : vector<128x128xf32> to vector<128xf32>
      %90 = vector.shape_cast %89 : vector<128xf32> to vector<128x1xf32>
      %91 = arith.maximumf %88, %90 : vector<128x1xf32>
      %92 = arith.subf %88, %91 : vector<128x1xf32>
      %93 = math.exp %92 : vector<128x1xf32>
      %94 = vector.broadcast %91 : vector<128x1xf32> to vector<128x128xf32>
      %95 = arith.subf %86, %94 : vector<128x128xf32>
      %96 = math.exp %95 : vector<128x128xf32>
      %c2_58 = arith.constant 2 : index
      %c0_59 = arith.constant 0 : index
      %c0_60 = arith.constant 0 : index
      %97 = vector.load %arg12[%c2_58, %c0_59, %c0_60] : memref<4x128x1xf32, #tpu.memory_space<vmem>>, vector<1x128x1xf32>
      %98 = vector.shape_cast %97 : vector<1x128x1xf32> to vector<128x1xf32>
      %99 = arith.mulf %93, %98 : vector<128x1xf32>
      %cst_61 = arith.constant dense<0.000000e+00> : vector<128xf32>
      %100 = vector.multi_reduction <add>, %96, %cst_61 [1] : vector<128x128xf32> to vector<128xf32>
      %101 = vector.shape_cast %100 : vector<128xf32> to vector<128x1xf32>
      %102 = arith.addf %99, %101 : vector<128x1xf32>
      %c2_62 = arith.constant 2 : index
      %c0_63 = arith.constant 0 : index
      %c0_64 = arith.constant 0 : index
      %103 = vector.load %arg12[%c2_62, %c0_63, %c0_64] : memref<4x128x1xf32, #tpu.memory_space<vmem>>, vector<1x128x1xf32>
      %104 = vector.shape_cast %103 : vector<1x128x1xf32> to vector<128x1xf32>
      %105 = vector.shape_cast %102 : vector<128x1xf32> to vector<1x128x1xf32>
      tpu.vector_store %arg12[%c2_62, %c0_63, %c0_64], %105 {strides = array<i32>} : memref<4x128x1xf32, #tpu.memory_space<vmem>>, vector<1x128x1xf32>,
      %106 = arith.truncf %96 : vector<128x128xf32> to vector<128x128xbf16>
      %cst_65 = arith.constant dense<0.000000e+00> : vector<128x32xf32>
      %107 = tpu.matmul %106, %85, %cst_65 {dimension_numbers = #tpu.dot_dimension_numbers<[1], [0], [0], [1], [0, 0, 1, 1], [], []>} : vector<128x128xbf16>, vector<128x32xbf16>, vector<128x32xf32> -> vector<128x32xf32>
      %c0_66 = arith.constant 0 : index
      %c64_67 = arith.constant 64 : index
      %108 = vector.load %arg13[%c0_66, %c64_67] : memref<128x128xf32, #tpu.memory_space<vmem>>, vector<128x32xf32>
      %109 = vector.broadcast %93 : vector<128x1xf32> to vector<128x32xf32>
      %110 = arith.mulf %109, %108 : vector<128x32xf32>
      %111 = arith.addf %110, %107 : vector<128x32xf32>
      %c0_68 = arith.constant 0 : index
      %c64_69 = arith.constant 64 : index
      %112 = vector.load %arg13[%c0_68, %c64_69] : memref<128x128xf32, #tpu.memory_space<vmem>>, vector<128x32xf32>
      tpu.vector_store %arg13[%c0_68, %c64_69], %111 {strides = array<i32>} : memref<128x128xf32, #tpu.memory_space<vmem>>, vector<128x32xf32>,
      %c2_70 = arith.constant 2 : index
      %c0_71 = arith.constant 0 : index
      %c0_72 = arith.constant 0 : index
      %113 = vector.load %arg11[%c2_70, %c0_71, %c0_72] : memref<4x128x1xf32, #tpu.memory_space<vmem>>, vector<1x128x1xf32>
      %114 = vector.shape_cast %113 : vector<1x128x1xf32> to vector<128x1xf32>
      %115 = vector.shape_cast %91 : vector<128x1xf32> to vector<1x128x1xf32>
      tpu.vector_store %arg11[%c2_70, %c0_71, %c0_72], %115 {strides = array<i32>} : memref<4x128x1xf32, #tpu.memory_space<vmem>>, vector<1x128x1xf32>,
      %c0_73 = arith.constant 0 : index
      %c96 = arith.constant 96 : index
      %116 = vector.load %arg10[%c0_73, %c96] : memref<128x128xbf16, #tpu.memory_space<vmem>>, vector<128x32xbf16>
      %117 = vector.extract_strided_slice %16 {offsets = [0, 96], sizes = [128, 32], strides = [1, 1]} : vector<128x256xbf16> to vector<128x32xbf16>
      %118 = vector.extract_strided_slice %16 {offsets = [0, 224], sizes = [128, 32], strides = [1, 1]} : vector<128x256xbf16> to vector<128x32xbf16>
      %cst_74 = arith.constant dense<0.000000e+00> : vector<128x128xf32>
      %119 = tpu.matmul %116, %117, %cst_74 {dimension_numbers = #tpu.dot_dimension_numbers<[1], [1], [0], [0], [0, 0, 1, 0], [], []>} : vector<128x32xbf16>, vector<128x32xbf16>, vector<128x128xf32> -> vector<128x128xf32>
      %c3 = arith.constant 3 : index
      %c0_75 = arith.constant 0 : index
      %c0_76 = arith.constant 0 : index
      %120 = vector.load %arg11[%c3, %c0_75, %c0_76] : memref<4x128x1xf32, #tpu.memory_space<vmem>>, vector<1x128x1xf32>
      %121 = vector.shape_cast %120 : vector<1x128x1xf32> to vector<128x1xf32>
      %cst_77 = arith.constant dense<0xFF800000> : vector<128xf32>
      %122 = vector.multi_reduction <maximumf>, %119, %cst_77 [1] : vector<128x128xf32> to vector<128xf32>
      %123 = vector.shape_cast %122 : vector<128xf32> to vector<128x1xf32>
      %124 = arith.maximumf %121, %123 : vector<128x1xf32>
      %125 = arith.subf %121, %124 : vector<128x1xf32>
      %126 = math.exp %125 : vector<128x1xf32>
      %127 = vector.broadcast %124 : vector<128x1xf32> to vector<128x128xf32>
      %128 = arith.subf %119, %127 : vector<128x128xf32>
      %129 = math.exp %128 : vector<128x128xf32>
      %c3_78 = arith.constant 3 : index
      %c0_79 = arith.constant 0 : index
      %c0_80 = arith.constant 0 : index
      %130 = vector.load %arg12[%c3_78, %c0_79, %c0_80] : memref<4x128x1xf32, #tpu.memory_space<vmem>>, vector<1x128x1xf32>
      %131 = vector.shape_cast %130 : vector<1x128x1xf32> to vector<128x1xf32>
      %132 = arith.mulf %126, %131 : vector<128x1xf32>
      %cst_81 = arith.constant dense<0.000000e+00> : vector<128xf32>
      %133 = vector.multi_reduction <add>, %129, %cst_81 [1] : vector<128x128xf32> to vector<128xf32>
      %134 = vector.shape_cast %133 : vector<128xf32> to vector<128x1xf32>
      %135 = arith.addf %132, %134 : vector<128x1xf32>
      %c3_82 = arith.constant 3 : index
      %c0_83 = arith.constant 0 : index
      %c0_84 = arith.constant 0 : index
      %136 = vector.load %arg12[%c3_82, %c0_83, %c0_84] : memref<4x128x1xf32, #tpu.memory_space<vmem>>, vector<1x128x1xf32>
      %137 = vector.shape_cast %136 : vector<1x128x1xf32> to vector<128x1xf32>
      %138 = vector.shape_cast %135 : vector<128x1xf32> to vector<1x128x1xf32>
      tpu.vector_store %arg12[%c3_82, %c0_83, %c0_84], %138 {strides = array<i32>} : memref<4x128x1xf32, #tpu.memory_space<vmem>>, vector<1x128x1xf32>,
      %139 = arith.truncf %129 : vector<128x128xf32> to vector<128x128xbf16>
      %cst_85 = arith.constant dense<0.000000e+00> : vector<128x32xf32>
      %140 = tpu.matmul %139, %118, %cst_85 {dimension_numbers = #tpu.dot_dimension_numbers<[1], [0], [0], [1], [0, 0, 1, 1], [], []>} : vector<128x128xbf16>, vector<128x32xbf16>, vector<128x32xf32> -> vector<128x32xf32>
      %c0_86 = arith.constant 0 : index
      %c96_87 = arith.constant 96 : index
      %141 = vector.load %arg13[%c0_86, %c96_87] : memref<128x128xf32, #tpu.memory_space<vmem>>, vector<128x32xf32>
      %142 = vector.broadcast %126 : vector<128x1xf32> to vector<128x32xf32>
      %143 = arith.mulf %142, %141 : vector<128x32xf32>
      %144 = arith.addf %143, %140 : vector<128x32xf32>
      %c0_88 = arith.constant 0 : index
      %c96_89 = arith.constant 96 : index
      %145 = vector.load %arg13[%c0_88, %c96_89] : memref<128x128xf32, #tpu.memory_space<vmem>>, vector<128x32xf32>
      tpu.vector_store %arg13[%c0_88, %c96_89], %144 {strides = array<i32>} : memref<128x128xf32, #tpu.memory_space<vmem>>, vector<128x32xf32>,
      %c3_90 = arith.constant 3 : index
      %c0_91 = arith.constant 0 : index
      %c0_92 = arith.constant 0 : index
      %146 = vector.load %arg11[%c3_90, %c0_91, %c0_92] : memref<4x128x1xf32, #tpu.memory_space<vmem>>, vector<1x128x1xf32>
      %147 = vector.shape_cast %146 : vector<1x128x1xf32> to vector<128x1xf32>
      %148 = vector.shape_cast %124 : vector<128x1xf32> to vector<1x128x1xf32>
      tpu.vector_store %arg11[%c3_90, %c0_91, %c0_92], %148 {strides = array<i32>} : memref<4x128x1xf32, #tpu.memory_space<vmem>>, vector<1x128x1xf32>,
    } else {
    }
    %c0_i32_3 = arith.constant 0 : i32
    %6 = arith.cmpi eq, %arg2, %c0_i32_3 : i32
    %7 = arith.extui %6 : i1 to i32
    %c0_i32_4 = arith.constant 0 : i32
    %8 = arith.cmpi ne, %7, %c0_i32_4 : i32
    scf.if %8 {
      %c0 = arith.constant 0 : index
      %c0_7 = arith.constant 0 : index
      %c0_8 = arith.constant 0 : index
      %12 = vector.load %arg4[%c0, %c0_7, %c0_8] : memref<1x128x8xbf16, #tpu.memory_space<vmem>>, vector<1x128x8xbf16>
      %13 = vector.shape_cast %12 : vector<1x128x8xbf16> to vector<128x8xbf16>
      %c0_9 = arith.constant 0 : index
      %c0_10 = arith.constant 0 : index
      %14 = vector.load %arg6[%c0_9, %c0_10] : memref<256x8xbf16, #tpu.memory_space<vmem>>, vector<256x8xbf16>
      %cst = arith.constant dense<0.000000e+00> : vector<128x256xf32>
      %15 = tpu.matmul %13, %14, %cst {dimension_numbers = #tpu.dot_dimension_numbers<[1], [1], [0], [0], [0, 0, 1, 0], [], []>} : vector<128x8xbf16>, vector<256x8xbf16>, vector<128x256xf32> -> vector<128x256xf32>
      %16 = arith.truncf %15 : vector<128x256xf32> to vector<128x256xbf16>
      %17 = tpu.iota {dimensions = array<i32: 1>} : vector<1x128xi32>
      %c128_i32 = arith.constant 128 : i32
      %18 = arith.muli %arg2, %c128_i32 : i32
      %19 = vector.broadcast %18 : i32 to vector<1x128xi32>
      %20 = arith.addi %17, %19 : vector<1x128xi32>
      %c64_i32 = arith.constant 64 : i32
      %21 = vector.broadcast %c64_i32 : i32 to vector<1x128xi32>
      %22 = arith.cmpi slt, %20, %21 : vector<1x128xi32>
      %c0_11 = arith.constant 0 : index
      %c0_12 = arith.constant 0 : index
      %23 = vector.load %arg10[%c0_11, %c0_12] : memref<128x128xbf16, #tpu.memory_space<vmem>>, vector<128x32xbf16>
      %24 = vector.extract_strided_slice %16 {offsets = [0, 0], sizes = [128, 32], strides = [1, 1]} : vector<128x256xbf16> to vector<128x32xbf16>
      %25 = vector.extract_strided_slice %16 {offsets = [0, 128], sizes = [128, 32], strides = [1, 1]} : vector<128x256xbf16> to vector<128x32xbf16>
      %cst_13 = arith.constant dense<0.000000e+00> : vector<128x128xf32>
      %26 = tpu.matmul %23, %24, %cst_13 {dimension_numbers = #tpu.dot_dimension_numbers<[1], [1], [0], [0], [0, 0, 1, 0], [], []>} : vector<128x32xbf16>, vector<128x32xbf16>, vector<128x128xf32> -> vector<128x128xf32>
      %cst_14 = arith.constant -1.000000e+30 : f32
      %27 = vector.shape_cast %22 : vector<1x128xi1> to vector<1x128xi1>
      %28 = vector.broadcast %27 : vector<1x128xi1> to vector<128x128xi1>
      %29 = vector.broadcast %cst_14 : f32 to vector<128x128xf32>
      %30 = arith.select %28, %26, %29 : vector<128x128xi1>, vector<128x128xf32>
      %c0_15 = arith.constant 0 : index
      %c0_16 = arith.constant 0 : index
      %c0_17 = arith.constant 0 : index
      %31 = vector.load %arg11[%c0_15, %c0_16, %c0_17] : memref<4x128x1xf32, #tpu.memory_space<vmem>>, vector<1x128x1xf32>
      %32 = vector.shape_cast %31 : vector<1x128x1xf32> to vector<128x1xf32>
      %cst_18 = arith.constant dense<0xFF800000> : vector<128xf32>
      %33 = vector.multi_reduction <maximumf>, %30, %cst_18 [1] : vector<128x128xf32> to vector<128xf32>
      %34 = vector.shape_cast %33 : vector<128xf32> to vector<128x1xf32>
      %35 = arith.maximumf %32, %34 : vector<128x1xf32>
      %36 = arith.subf %32, %35 : vector<128x1xf32>
      %37 = math.exp %36 : vector<128x1xf32>
      %38 = vector.broadcast %35 : vector<128x1xf32> to vector<128x128xf32>
      %39 = arith.subf %30, %38 : vector<128x128xf32>
      %40 = math.exp %39 : vector<128x128xf32>
      %c0_19 = arith.constant 0 : index
      %c0_20 = arith.constant 0 : index
      %c0_21 = arith.constant 0 : index
      %41 = vector.load %arg12[%c0_19, %c0_20, %c0_21] : memref<4x128x1xf32, #tpu.memory_space<vmem>>, vector<1x128x1xf32>
      %42 = vector.shape_cast %41 : vector<1x128x1xf32> to vector<128x1xf32>
      %43 = arith.mulf %37, %42 : vector<128x1xf32>
      %cst_22 = arith.constant dense<0.000000e+00> : vector<128xf32>
      %44 = vector.multi_reduction <add>, %40, %cst_22 [1] : vector<128x128xf32> to vector<128xf32>
      %45 = vector.shape_cast %44 : vector<128xf32> to vector<128x1xf32>
      %46 = arith.addf %43, %45 : vector<128x1xf32>
      %c0_23 = arith.constant 0 : index
      %c0_24 = arith.constant 0 : index
      %c0_25 = arith.constant 0 : index
      %47 = vector.load %arg12[%c0_23, %c0_24, %c0_25] : memref<4x128x1xf32, #tpu.memory_space<vmem>>, vector<1x128x1xf32>
      %48 = vector.shape_cast %47 : vector<1x128x1xf32> to vector<128x1xf32>
      %49 = vector.shape_cast %46 : vector<128x1xf32> to vector<1x128x1xf32>
      tpu.vector_store %arg12[%c0_23, %c0_24, %c0_25], %49 {strides = array<i32>} : memref<4x128x1xf32, #tpu.memory_space<vmem>>, vector<1x128x1xf32>,
      %50 = arith.truncf %40 : vector<128x128xf32> to vector<128x128xbf16>
      %cst_26 = arith.constant dense<0.000000e+00> : vector<128x32xf32>
      %51 = tpu.matmul %50, %25, %cst_26 {dimension_numbers = #tpu.dot_dimension_numbers<[1], [0], [0], [1], [0, 0, 1, 1], [], []>} : vector<128x128xbf16>, vector<128x32xbf16>, vector<128x32xf32> -> vector<128x32xf32>
      %c0_27 = arith.constant 0 : index
      %c0_28 = arith.constant 0 : index
      %52 = vector.load %arg13[%c0_27, %c0_28] : memref<128x128xf32, #tpu.memory_space<vmem>>, vector<128x32xf32>
      %53 = vector.broadcast %37 : vector<128x1xf32> to vector<128x32xf32>
      %54 = arith.mulf %53, %52 : vector<128x32xf32>
      %55 = arith.addf %54, %51 : vector<128x32xf32>
      %c0_29 = arith.constant 0 : index
      %c0_30 = arith.constant 0 : index
      %56 = vector.load %arg13[%c0_29, %c0_30] : memref<128x128xf32, #tpu.memory_space<vmem>>, vector<128x32xf32>
      tpu.vector_store %arg13[%c0_29, %c0_30], %55 {strides = array<i32>} : memref<128x128xf32, #tpu.memory_space<vmem>>, vector<128x32xf32>,
      %c0_31 = arith.constant 0 : index
      %c0_32 = arith.constant 0 : index
      %c0_33 = arith.constant 0 : index
      %57 = vector.load %arg11[%c0_31, %c0_32, %c0_33] : memref<4x128x1xf32, #tpu.memory_space<vmem>>, vector<1x128x1xf32>
      %58 = vector.shape_cast %57 : vector<1x128x1xf32> to vector<128x1xf32>
      %59 = vector.shape_cast %35 : vector<128x1xf32> to vector<1x128x1xf32>
      tpu.vector_store %arg11[%c0_31, %c0_32, %c0_33], %59 {strides = array<i32>} : memref<4x128x1xf32, #tpu.memory_space<vmem>>, vector<1x128x1xf32>,
      %c0_34 = arith.constant 0 : index
      %c32 = arith.constant 32 : index
      %60 = vector.load %arg10[%c0_34, %c32] : memref<128x128xbf16, #tpu.memory_space<vmem>>, vector<128x32xbf16>
      %61 = vector.extract_strided_slice %16 {offsets = [0, 32], sizes = [128, 32], strides = [1, 1]} : vector<128x256xbf16> to vector<128x32xbf16>
      %62 = vector.extract_strided_slice %16 {offsets = [0, 160], sizes = [128, 32], strides = [1, 1]} : vector<128x256xbf16> to vector<128x32xbf16>
      %cst_35 = arith.constant dense<0.000000e+00> : vector<128x128xf32>
      %63 = tpu.matmul %60, %61, %cst_35 {dimension_numbers = #tpu.dot_dimension_numbers<[1], [1], [0], [0], [0, 0, 1, 0], [], []>} : vector<128x32xbf16>, vector<128x32xbf16>, vector<128x128xf32> -> vector<128x128xf32>
      %cst_36 = arith.constant -1.000000e+30 : f32
      %64 = vector.shape_cast %22 : vector<1x128xi1> to vector<1x128xi1>
      %65 = vector.broadcast %64 : vector<1x128xi1> to vector<128x128xi1>
      %66 = vector.broadcast %cst_36 : f32 to vector<128x128xf32>
      %67 = arith.select %65, %63, %66 : vector<128x128xi1>, vector<128x128xf32>
      %c1 = arith.constant 1 : index
      %c0_37 = arith.constant 0 : index
      %c0_38 = arith.constant 0 : index
      %68 = vector.load %arg11[%c1, %c0_37, %c0_38] : memref<4x128x1xf32, #tpu.memory_space<vmem>>, vector<1x128x1xf32>
      %69 = vector.shape_cast %68 : vector<1x128x1xf32> to vector<128x1xf32>
      %cst_39 = arith.constant dense<0xFF800000> : vector<128xf32>
      %70 = vector.multi_reduction <maximumf>, %67, %cst_39 [1] : vector<128x128xf32> to vector<128xf32>
      %71 = vector.shape_cast %70 : vector<128xf32> to vector<128x1xf32>
      %72 = arith.maximumf %69, %71 : vector<128x1xf32>
      %73 = arith.subf %69, %72 : vector<128x1xf32>
      %74 = math.exp %73 : vector<128x1xf32>
      %75 = vector.broadcast %72 : vector<128x1xf32> to vector<128x128xf32>
      %76 = arith.subf %67, %75 : vector<128x128xf32>
      %77 = math.exp %76 : vector<128x128xf32>
      %c1_40 = arith.constant 1 : index
      %c0_41 = arith.constant 0 : index
      %c0_42 = arith.constant 0 : index
      %78 = vector.load %arg12[%c1_40, %c0_41, %c0_42] : memref<4x128x1xf32, #tpu.memory_space<vmem>>, vector<1x128x1xf32>
      %79 = vector.shape_cast %78 : vector<1x128x1xf32> to vector<128x1xf32>
      %80 = arith.mulf %74, %79 : vector<128x1xf32>
      %cst_43 = arith.constant dense<0.000000e+00> : vector<128xf32>
      %81 = vector.multi_reduction <add>, %77, %cst_43 [1] : vector<128x128xf32> to vector<128xf32>
      %82 = vector.shape_cast %81 : vector<128xf32> to vector<128x1xf32>
      %83 = arith.addf %80, %82 : vector<128x1xf32>
      %c1_44 = arith.constant 1 : index
      %c0_45 = arith.constant 0 : index
      %c0_46 = arith.constant 0 : index
      %84 = vector.load %arg12[%c1_44, %c0_45, %c0_46] : memref<4x128x1xf32, #tpu.memory_space<vmem>>, vector<1x128x1xf32>
      %85 = vector.shape_cast %84 : vector<1x128x1xf32> to vector<128x1xf32>
      %86 = vector.shape_cast %83 : vector<128x1xf32> to vector<1x128x1xf32>
      tpu.vector_store %arg12[%c1_44, %c0_45, %c0_46], %86 {strides = array<i32>} : memref<4x128x1xf32, #tpu.memory_space<vmem>>, vector<1x128x1xf32>,
      %87 = arith.truncf %77 : vector<128x128xf32> to vector<128x128xbf16>
      %cst_47 = arith.constant dense<0.000000e+00> : vector<128x32xf32>
      %88 = tpu.matmul %87, %62, %cst_47 {dimension_numbers = #tpu.dot_dimension_numbers<[1], [0], [0], [1], [0, 0, 1, 1], [], []>} : vector<128x128xbf16>, vector<128x32xbf16>, vector<128x32xf32> -> vector<128x32xf32>
      %c0_48 = arith.constant 0 : index
      %c32_49 = arith.constant 32 : index
      %89 = vector.load %arg13[%c0_48, %c32_49] : memref<128x128xf32, #tpu.memory_space<vmem>>, vector<128x32xf32>
      %90 = vector.broadcast %74 : vector<128x1xf32> to vector<128x32xf32>
      %91 = arith.mulf %90, %89 : vector<128x32xf32>
      %92 = arith.addf %91, %88 : vector<128x32xf32>
      %c0_50 = arith.constant 0 : index
      %c32_51 = arith.constant 32 : index
      %93 = vector.load %arg13[%c0_50, %c32_51] : memref<128x128xf32, #tpu.memory_space<vmem>>, vector<128x32xf32>
      tpu.vector_store %arg13[%c0_50, %c32_51], %92 {strides = array<i32>} : memref<128x128xf32, #tpu.memory_space<vmem>>, vector<128x32xf32>,
      %c1_52 = arith.constant 1 : index
      %c0_53 = arith.constant 0 : index
      %c0_54 = arith.constant 0 : index
      %94 = vector.load %arg11[%c1_52, %c0_53, %c0_54] : memref<4x128x1xf32, #tpu.memory_space<vmem>>, vector<1x128x1xf32>
      %95 = vector.shape_cast %94 : vector<1x128x1xf32> to vector<128x1xf32>
      %96 = vector.shape_cast %72 : vector<128x1xf32> to vector<1x128x1xf32>
      tpu.vector_store %arg11[%c1_52, %c0_53, %c0_54], %96 {strides = array<i32>} : memref<4x128x1xf32, #tpu.memory_space<vmem>>, vector<1x128x1xf32>,
      %c0_55 = arith.constant 0 : index
      %c64 = arith.constant 64 : index
      %97 = vector.load %arg10[%c0_55, %c64] : memref<128x128xbf16, #tpu.memory_space<vmem>>, vector<128x32xbf16>
      %98 = vector.extract_strided_slice %16 {offsets = [0, 64], sizes = [128, 32], strides = [1, 1]} : vector<128x256xbf16> to vector<128x32xbf16>
      %99 = vector.extract_strided_slice %16 {offsets = [0, 192], sizes = [128, 32], strides = [1, 1]} : vector<128x256xbf16> to vector<128x32xbf16>
      %cst_56 = arith.constant dense<0.000000e+00> : vector<128x128xf32>
      %100 = tpu.matmul %97, %98, %cst_56 {dimension_numbers = #tpu.dot_dimension_numbers<[1], [1], [0], [0], [0, 0, 1, 0], [], []>} : vector<128x32xbf16>, vector<128x32xbf16>, vector<128x128xf32> -> vector<128x128xf32>
      %cst_57 = arith.constant -1.000000e+30 : f32
      %101 = vector.shape_cast %22 : vector<1x128xi1> to vector<1x128xi1>
      %102 = vector.broadcast %101 : vector<1x128xi1> to vector<128x128xi1>
      %103 = vector.broadcast %cst_57 : f32 to vector<128x128xf32>
      %104 = arith.select %102, %100, %103 : vector<128x128xi1>, vector<128x128xf32>
      %c2 = arith.constant 2 : index
      %c0_58 = arith.constant 0 : index
      %c0_59 = arith.constant 0 : index
      %105 = vector.load %arg11[%c2, %c0_58, %c0_59] : memref<4x128x1xf32, #tpu.memory_space<vmem>>, vector<1x128x1xf32>
      %106 = vector.shape_cast %105 : vector<1x128x1xf32> to vector<128x1xf32>
      %cst_60 = arith.constant dense<0xFF800000> : vector<128xf32>
      %107 = vector.multi_reduction <maximumf>, %104, %cst_60 [1] : vector<128x128xf32> to vector<128xf32>
      %108 = vector.shape_cast %107 : vector<128xf32> to vector<128x1xf32>
      %109 = arith.maximumf %106, %108 : vector<128x1xf32>
      %110 = arith.subf %106, %109 : vector<128x1xf32>
      %111 = math.exp %110 : vector<128x1xf32>
      %112 = vector.broadcast %109 : vector<128x1xf32> to vector<128x128xf32>
      %113 = arith.subf %104, %112 : vector<128x128xf32>
      %114 = math.exp %113 : vector<128x128xf32>
      %c2_61 = arith.constant 2 : index
      %c0_62 = arith.constant 0 : index
      %c0_63 = arith.constant 0 : index
      %115 = vector.load %arg12[%c2_61, %c0_62, %c0_63] : memref<4x128x1xf32, #tpu.memory_space<vmem>>, vector<1x128x1xf32>
      %116 = vector.shape_cast %115 : vector<1x128x1xf32> to vector<128x1xf32>
      %117 = arith.mulf %111, %116 : vector<128x1xf32>
      %cst_64 = arith.constant dense<0.000000e+00> : vector<128xf32>
      %118 = vector.multi_reduction <add>, %114, %cst_64 [1] : vector<128x128xf32> to vector<128xf32>
      %119 = vector.shape_cast %118 : vector<128xf32> to vector<128x1xf32>
      %120 = arith.addf %117, %119 : vector<128x1xf32>
      %c2_65 = arith.constant 2 : index
      %c0_66 = arith.constant 0 : index
      %c0_67 = arith.constant 0 : index
      %121 = vector.load %arg12[%c2_65, %c0_66, %c0_67] : memref<4x128x1xf32, #tpu.memory_space<vmem>>, vector<1x128x1xf32>
      %122 = vector.shape_cast %121 : vector<1x128x1xf32> to vector<128x1xf32>
      %123 = vector.shape_cast %120 : vector<128x1xf32> to vector<1x128x1xf32>
      tpu.vector_store %arg12[%c2_65, %c0_66, %c0_67], %123 {strides = array<i32>} : memref<4x128x1xf32, #tpu.memory_space<vmem>>, vector<1x128x1xf32>,
      %124 = arith.truncf %114 : vector<128x128xf32> to vector<128x128xbf16>
      %cst_68 = arith.constant dense<0.000000e+00> : vector<128x32xf32>
      %125 = tpu.matmul %124, %99, %cst_68 {dimension_numbers = #tpu.dot_dimension_numbers<[1], [0], [0], [1], [0, 0, 1, 1], [], []>} : vector<128x128xbf16>, vector<128x32xbf16>, vector<128x32xf32> -> vector<128x32xf32>
      %c0_69 = arith.constant 0 : index
      %c64_70 = arith.constant 64 : index
      %126 = vector.load %arg13[%c0_69, %c64_70] : memref<128x128xf32, #tpu.memory_space<vmem>>, vector<128x32xf32>
      %127 = vector.broadcast %111 : vector<128x1xf32> to vector<128x32xf32>
      %128 = arith.mulf %127, %126 : vector<128x32xf32>
      %129 = arith.addf %128, %125 : vector<128x32xf32>
      %c0_71 = arith.constant 0 : index
      %c64_72 = arith.constant 64 : index
      %130 = vector.load %arg13[%c0_71, %c64_72] : memref<128x128xf32, #tpu.memory_space<vmem>>, vector<128x32xf32>
      tpu.vector_store %arg13[%c0_71, %c64_72], %129 {strides = array<i32>} : memref<128x128xf32, #tpu.memory_space<vmem>>, vector<128x32xf32>,
      %c2_73 = arith.constant 2 : index
      %c0_74 = arith.constant 0 : index
      %c0_75 = arith.constant 0 : index
      %131 = vector.load %arg11[%c2_73, %c0_74, %c0_75] : memref<4x128x1xf32, #tpu.memory_space<vmem>>, vector<1x128x1xf32>
      %132 = vector.shape_cast %131 : vector<1x128x1xf32> to vector<128x1xf32>
      %133 = vector.shape_cast %109 : vector<128x1xf32> to vector<1x128x1xf32>
      tpu.vector_store %arg11[%c2_73, %c0_74, %c0_75], %133 {strides = array<i32>} : memref<4x128x1xf32, #tpu.memory_space<vmem>>, vector<1x128x1xf32>,
      %c0_76 = arith.constant 0 : index
      %c96 = arith.constant 96 : index
      %134 = vector.load %arg10[%c0_76, %c96] : memref<128x128xbf16, #tpu.memory_space<vmem>>, vector<128x32xbf16>
      %135 = vector.extract_strided_slice %16 {offsets = [0, 96], sizes = [128, 32], strides = [1, 1]} : vector<128x256xbf16> to vector<128x32xbf16>
      %136 = vector.extract_strided_slice %16 {offsets = [0, 224], sizes = [128, 32], strides = [1, 1]} : vector<128x256xbf16> to vector<128x32xbf16>
      %cst_77 = arith.constant dense<0.000000e+00> : vector<128x128xf32>
      %137 = tpu.matmul %134, %135, %cst_77 {dimension_numbers = #tpu.dot_dimension_numbers<[1], [1], [0], [0], [0, 0, 1, 0], [], []>} : vector<128x32xbf16>, vector<128x32xbf16>, vector<128x128xf32> -> vector<128x128xf32>
      %cst_78 = arith.constant -1.000000e+30 : f32
      %138 = vector.shape_cast %22 : vector<1x128xi1> to vector<1x128xi1>
      %139 = vector.broadcast %138 : vector<1x128xi1> to vector<128x128xi1>
      %140 = vector.broadcast %cst_78 : f32 to vector<128x128xf32>
      %141 = arith.select %139, %137, %140 : vector<128x128xi1>, vector<128x128xf32>
      %c3 = arith.constant 3 : index
      %c0_79 = arith.constant 0 : index
      %c0_80 = arith.constant 0 : index
      %142 = vector.load %arg11[%c3, %c0_79, %c0_80] : memref<4x128x1xf32, #tpu.memory_space<vmem>>, vector<1x128x1xf32>
      %143 = vector.shape_cast %142 : vector<1x128x1xf32> to vector<128x1xf32>
      %cst_81 = arith.constant dense<0xFF800000> : vector<128xf32>
      %144 = vector.multi_reduction <maximumf>, %141, %cst_81 [1] : vector<128x128xf32> to vector<128xf32>
      %145 = vector.shape_cast %144 : vector<128xf32> to vector<128x1xf32>
      %146 = arith.maximumf %143, %145 : vector<128x1xf32>
      %147 = arith.subf %143, %146 : vector<128x1xf32>
      %148 = math.exp %147 : vector<128x1xf32>
      %149 = vector.broadcast %146 : vector<128x1xf32> to vector<128x128xf32>
      %150 = arith.subf %141, %149 : vector<128x128xf32>
      %151 = math.exp %150 : vector<128x128xf32>
      %c3_82 = arith.constant 3 : index
      %c0_83 = arith.constant 0 : index
      %c0_84 = arith.constant 0 : index
      %152 = vector.load %arg12[%c3_82, %c0_83, %c0_84] : memref<4x128x1xf32, #tpu.memory_space<vmem>>, vector<1x128x1xf32>
      %153 = vector.shape_cast %152 : vector<1x128x1xf32> to vector<128x1xf32>
      %154 = arith.mulf %148, %153 : vector<128x1xf32>
      %cst_85 = arith.constant dense<0.000000e+00> : vector<128xf32>
      %155 = vector.multi_reduction <add>, %151, %cst_85 [1] : vector<128x128xf32> to vector<128xf32>
      %156 = vector.shape_cast %155 : vector<128xf32> to vector<128x1xf32>
      %157 = arith.addf %154, %156 : vector<128x1xf32>
      %c3_86 = arith.constant 3 : index
      %c0_87 = arith.constant 0 : index
      %c0_88 = arith.constant 0 : index
      %158 = vector.load %arg12[%c3_86, %c0_87, %c0_88] : memref<4x128x1xf32, #tpu.memory_space<vmem>>, vector<1x128x1xf32>
      %159 = vector.shape_cast %158 : vector<1x128x1xf32> to vector<128x1xf32>
      %160 = vector.shape_cast %157 : vector<128x1xf32> to vector<1x128x1xf32>
      tpu.vector_store %arg12[%c3_86, %c0_87, %c0_88], %160 {strides = array<i32>} : memref<4x128x1xf32, #tpu.memory_space<vmem>>, vector<1x128x1xf32>,
      %161 = arith.truncf %151 : vector<128x128xf32> to vector<128x128xbf16>
      %cst_89 = arith.constant dense<0.000000e+00> : vector<128x32xf32>
      %162 = tpu.matmul %161, %136, %cst_89 {dimension_numbers = #tpu.dot_dimension_numbers<[1], [0], [0], [1], [0, 0, 1, 1], [], []>} : vector<128x128xbf16>, vector<128x32xbf16>, vector<128x32xf32> -> vector<128x32xf32>
      %c0_90 = arith.constant 0 : index
      %c96_91 = arith.constant 96 : index
      %163 = vector.load %arg13[%c0_90, %c96_91] : memref<128x128xf32, #tpu.memory_space<vmem>>, vector<128x32xf32>
      %164 = vector.broadcast %148 : vector<128x1xf32> to vector<128x32xf32>
      %165 = arith.mulf %164, %163 : vector<128x32xf32>
      %166 = arith.addf %165, %162 : vector<128x32xf32>
      %c0_92 = arith.constant 0 : index
      %c96_93 = arith.constant 96 : index
      %167 = vector.load %arg13[%c0_92, %c96_93] : memref<128x128xf32, #tpu.memory_space<vmem>>, vector<128x32xf32>
      tpu.vector_store %arg13[%c0_92, %c96_93], %166 {strides = array<i32>} : memref<128x128xf32, #tpu.memory_space<vmem>>, vector<128x32xf32>,
      %c3_94 = arith.constant 3 : index
      %c0_95 = arith.constant 0 : index
      %c0_96 = arith.constant 0 : index
      %168 = vector.load %arg11[%c3_94, %c0_95, %c0_96] : memref<4x128x1xf32, #tpu.memory_space<vmem>>, vector<1x128x1xf32>
      %169 = vector.shape_cast %168 : vector<1x128x1xf32> to vector<128x1xf32>
      %170 = vector.shape_cast %146 : vector<128x1xf32> to vector<1x128x1xf32>
      tpu.vector_store %arg11[%c3_94, %c0_95, %c0_96], %170 {strides = array<i32>} : memref<4x128x1xf32, #tpu.memory_space<vmem>>, vector<1x128x1xf32>,
    } else {
    }
    %c0_i32_5 = arith.constant 0 : i32
    %9 = arith.cmpi eq, %arg2, %c0_i32_5 : i32
    %10 = arith.extui %9 : i1 to i32
    %c0_i32_6 = arith.constant 0 : i32
    %11 = arith.cmpi ne, %10, %c0_i32_6 : i32
    scf.if %11 {
      %c0 = arith.constant 0 : index
      %c0_7 = arith.constant 0 : index
      %c0_8 = arith.constant 0 : index
      %12 = vector.load %arg12[%c0, %c0_7, %c0_8] : memref<4x128x1xf32, #tpu.memory_space<vmem>>, vector<1x128x1xf32>
      %13 = vector.shape_cast %12 : vector<1x128x1xf32> to vector<128x1xf32>
      %14 = tpu.reciprocal %13 {approx = true} : vector<128x1xf32> -> vector<128x1xf32>
      %c0_9 = arith.constant 0 : index
      %c0_10 = arith.constant 0 : index
      %15 = vector.load %arg13[%c0_9, %c0_10] : memref<128x128xf32, #tpu.memory_space<vmem>>, vector<128x32xf32>
      %16 = vector.broadcast %14 : vector<128x1xf32> to vector<128x32xf32>
      %17 = arith.mulf %15, %16 : vector<128x32xf32>
      %c0_11 = arith.constant 0 : index
      %c0_12 = arith.constant 0 : index
      %18 = vector.load %arg13[%c0_11, %c0_12] : memref<128x128xf32, #tpu.memory_space<vmem>>, vector<128x32xf32>
      tpu.vector_store %arg13[%c0_11, %c0_12], %17 {strides = array<i32>} : memref<128x128xf32, #tpu.memory_space<vmem>>, vector<128x32xf32>,
      %c1 = arith.constant 1 : index
      %c0_13 = arith.constant 0 : index
      %c0_14 = arith.constant 0 : index
      %19 = vector.load %arg12[%c1, %c0_13, %c0_14] : memref<4x128x1xf32, #tpu.memory_space<vmem>>, vector<1x128x1xf32>
      %20 = vector.shape_cast %19 : vector<1x128x1xf32> to vector<128x1xf32>
      %21 = tpu.reciprocal %20 {approx = true} : vector<128x1xf32> -> vector<128x1xf32>
      %c0_15 = arith.constant 0 : index
      %c32 = arith.constant 32 : index
      %22 = vector.load %arg13[%c0_15, %c32] : memref<128x128xf32, #tpu.memory_space<vmem>>, vector<128x32xf32>
      %23 = vector.broadcast %21 : vector<128x1xf32> to vector<128x32xf32>
      %24 = arith.mulf %22, %23 : vector<128x32xf32>
      %c0_16 = arith.constant 0 : index
      %c32_17 = arith.constant 32 : index
      %25 = vector.load %arg13[%c0_16, %c32_17] : memref<128x128xf32, #tpu.memory_space<vmem>>, vector<128x32xf32>
      tpu.vector_store %arg13[%c0_16, %c32_17], %24 {strides = array<i32>} : memref<128x128xf32, #tpu.memory_space<vmem>>, vector<128x32xf32>,
      %c2 = arith.constant 2 : index
      %c0_18 = arith.constant 0 : index
      %c0_19 = arith.constant 0 : index
      %26 = vector.load %arg12[%c2, %c0_18, %c0_19] : memref<4x128x1xf32, #tpu.memory_space<vmem>>, vector<1x128x1xf32>
      %27 = vector.shape_cast %26 : vector<1x128x1xf32> to vector<128x1xf32>
      %28 = tpu.reciprocal %27 {approx = true} : vector<128x1xf32> -> vector<128x1xf32>
      %c0_20 = arith.constant 0 : index
      %c64 = arith.constant 64 : index
      %29 = vector.load %arg13[%c0_20, %c64] : memref<128x128xf32, #tpu.memory_space<vmem>>, vector<128x32xf32>
      %30 = vector.broadcast %28 : vector<128x1xf32> to vector<128x32xf32>
      %31 = arith.mulf %29, %30 : vector<128x32xf32>
      %c0_21 = arith.constant 0 : index
      %c64_22 = arith.constant 64 : index
      %32 = vector.load %arg13[%c0_21, %c64_22] : memref<128x128xf32, #tpu.memory_space<vmem>>, vector<128x32xf32>
      tpu.vector_store %arg13[%c0_21, %c64_22], %31 {strides = array<i32>} : memref<128x128xf32, #tpu.memory_space<vmem>>, vector<128x32xf32>,
      %c3 = arith.constant 3 : index
      %c0_23 = arith.constant 0 : index
      %c0_24 = arith.constant 0 : index
      %33 = vector.load %arg12[%c3, %c0_23, %c0_24] : memref<4x128x1xf32, #tpu.memory_space<vmem>>, vector<1x128x1xf32>
      %34 = vector.shape_cast %33 : vector<1x128x1xf32> to vector<128x1xf32>
      %35 = tpu.reciprocal %34 {approx = true} : vector<128x1xf32> -> vector<128x1xf32>
      %c0_25 = arith.constant 0 : index
      %c96 = arith.constant 96 : index
      %36 = vector.load %arg13[%c0_25, %c96] : memref<128x128xf32, #tpu.memory_space<vmem>>, vector<128x32xf32>
      %37 = vector.broadcast %35 : vector<128x1xf32> to vector<128x32xf32>
      %38 = arith.mulf %36, %37 : vector<128x32xf32>
      %c0_26 = arith.constant 0 : index
      %c96_27 = arith.constant 96 : index
      %39 = vector.load %arg13[%c0_26, %c96_27] : memref<128x128xf32, #tpu.memory_space<vmem>>, vector<128x32xf32>
      tpu.vector_store %arg13[%c0_26, %c96_27], %38 {strides = array<i32>} : memref<128x128xf32, #tpu.memory_space<vmem>>, vector<128x32xf32>,
      %c0_28 = arith.constant 0 : index
      %c0_29 = arith.constant 0 : index
      %40 = vector.load %arg13[%c0_28, %c0_29] : memref<128x128xf32, #tpu.memory_space<vmem>>, vector<128x128xf32>
      %41 = arith.truncf %40 : vector<128x128xf32> to vector<128x128xbf16>
      %c0_30 = arith.constant 0 : index
      %c0_31 = arith.constant 0 : index
      %42 = vector.load %arg7[%c0_30, %c0_31] : memref<8x128xbf16, #tpu.memory_space<vmem>>, vector<8x128xbf16>
      %cst = arith.constant dense<0.000000e+00> : vector<8x128xf32>
      %43 = tpu.matmul %42, %41, %cst {dimension_numbers = #tpu.dot_dimension_numbers<[1], [1], [0], [0], [0, 0, 1, 0], [], []>} : vector<8x128xbf16>, vector<128x128xbf16>, vector<8x128xf32> -> vector<8x128xf32>
      %c0_32 = arith.constant 0 : index
      %c0_33 = arith.constant 0 : index
      %44 = vector.load %arg8[%c0_32, %c0_33] : memref<8x1xf32, #tpu.memory_space<vmem>>, vector<8x1xf32>
      %45 = vector.broadcast %44 : vector<8x1xf32> to vector<8x128xf32>
      %46 = arith.addf %43, %45 : vector<8x128xf32>
      %c0_34 = arith.constant 0 : index
      %c0_35 = arith.constant 0 : index
      %c0_36 = arith.constant 0 : index
      %47 = vector.load %arg9[%c0_34, %c0_35, %c0_36] : memref<1x8x128xf32, #tpu.memory_space<vmem>>, vector<1x8x128xf32>
      %48 = vector.shape_cast %47 : vector<1x8x128xf32> to vector<8x128xf32>
      %49 = vector.shape_cast %46 : vector<8x128xf32> to vector<1x8x128xf32>
      tpu.vector_store %arg9[%c0_34, %c0_35, %c0_36], %49 {strides = array<i32>} : memref<1x8x128xf32, #tpu.memory_space<vmem>>, vector<1x8x128xf32>,
    } else {
    }
    return
  }
  func.func @transform_0(%arg0: i32, %arg1: i32, %arg2: i32) -> (i32, i32, i32) {
    %c0_i32 = arith.constant 0 : i32
    %c0_i32_0 = arith.constant 0 : i32
    return %arg0, %arg1, %c0_i32 : i32, i32, i32
  }
  func.func @transform_1(%arg0: i32, %arg1: i32, %arg2: i32) -> (i32, i32, i32) {
    %c0_i32 = arith.constant 0 : i32
    %c0_i32_0 = arith.constant 0 : i32
    return %arg0, %arg2, %c0_i32 : i32, i32, i32
  }
  func.func @transform_2(%arg0: i32, %arg1: i32, %arg2: i32) -> (i32, i32) {
    %c0_i32 = arith.constant 0 : i32
    %c0_i32_0 = arith.constant 0 : i32
    %c0_i32_1 = arith.constant 0 : i32
    return %c0_i32, %c0_i32_0 : i32, i32
  }
  func.func @transform_3(%arg0: i32, %arg1: i32, %arg2: i32) -> (i32, i32) {
    %c0_i32 = arith.constant 0 : i32
    %c0_i32_0 = arith.constant 0 : i32
    %c0_i32_1 = arith.constant 0 : i32
    return %c0_i32, %c0_i32_0 : i32, i32
  }
  func.func @transform_4(%arg0: i32, %arg1: i32, %arg2: i32) -> (i32, i32) {
    %c0_i32 = arith.constant 0 : i32
    %c0_i32_0 = arith.constant 0 : i32
    %c0_i32_1 = arith.constant 0 : i32
    return %c0_i32, %c0_i32_0 : i32, i32
  }
  func.func @transform_5(%arg0: i32, %arg1: i32, %arg2: i32) -> (i32, i32) {
    %c0_i32 = arith.constant 0 : i32
    %c0_i32_0 = arith.constant 0 : i32
    %c0_i32_1 = arith.constant 0 : i32
    return %c0_i32, %c0_i32_0 : i32, i32
  }
  func.func @transform_6(%arg0: i32, %arg1: i32, %arg2: i32) -> (i32, i32, i32) {
    %c0_i32 = arith.constant 0 : i32
    %c0_i32_0 = arith.constant 0 : i32
    return %arg0, %c0_i32, %arg1 : i32, i32, i32
  }
}

</mosaic_0001>

<llo_original>
// kernel: tpu_custom_call.1
$region0: #{tpu_custom_call.1}
  #allocation0 [shape = 'u32[]', space=smem, size = 0x4, offset = 0x4, fixed_abs, tag = 'smem constant byte address 0x4 - core index']
  #allocation1 [shape = 'u32[72,128]{1,0:T(1,128)}', space=vmem, size = 0x9000, scoped, tag = 'internal scratch']
  #allocation2 [shape = 'bf16[128,128]{1,0:T(8,128)(2,1)}', space=vmem, size = 0x8000, scoped, tag = 'scratch operand']
  #allocation3 [shape = 'f32[4,128,1]{2,1,0:T(8,128)}', space=vmem, size = 0x40000, scoped, tag = 'scratch operand']
  #allocation4 [shape = 'f32[4,128,1]{2,1,0:T(8,128)}', space=vmem, size = 0x40000, scoped, tag = 'scratch operand']
  #allocation5 [shape = 'f32[128,128]{1,0:T(8,128)}', space=vmem, size = 0x10000, scoped, tag = 'scratch operand']
  %s0 = inlined_call_operand.vmem [shape: bf16[2,128,8], index: 0, kind: input, shape index: {}]
  %s1 = inlined_call_operand.vmem [shape: bf16[2,128,8], index: 1, kind: input, shape index: {}]
  %s2 = inlined_call_operand.vmem [shape: bf16[128,8], index: 2, kind: input, shape index: {}]
  %s3 = inlined_call_operand.vmem [shape: bf16[256,8], index: 3, kind: input, shape index: {}]
  %s4 = inlined_call_operand.vmem [shape: bf16[8,128], index: 4, kind: input, shape index: {}]
  %s5 = inlined_call_operand.vmem [shape: f32[8,1], index: 5, kind: input, shape index: {}]
  %s6 = inlined_call_operand.hbm [shape: f32[2,8,128], index: 6, kind: output, shape index: {}]
  %s7 = sld [smem:[#allocation0]]
  $region69: #{tpu_custom_call.1} parent=0
    _
  %s9 = ssub.s32 1, %s7
  %s10 = scalar_select 0, %s9, %s7
  $region1: #{tpu_custom_call.1} parent=0
    #allocation6 [shape = 'u8[8192]{0}', space=vmem, size = 0x2000, scoped, tag = 'output window, operand 0']
    #allocation7 [shape = 's32[2]{0}', space=sflag, size = 0x8, scoped, tag = 'scoped memory for tpu_custom_call.1']
    %11 = vsyncpa [#allocation7], 0
    %s12 = scalar_lea.sflag [#allocation7], 1
    %13 = vsyncpa %s12, 0
    loop: start=0, step=1, limit=4
    $region2: #{tpu_custom_call.1} parent=1 // loop_pre_header
      _
    $region3: #{tpu_custom_call.1} parent=1 // loop_header
      %s15 = sphi 0, %s19
      %p16 = scmp.ge.s32.totalorder %s15, 4
      %s22 = sphi 0, %s41
      %s23 = sphi 0, %s37
      %s24 = sphi 0, %s33
      %s25 = sphi 0, %s22
      %s26 = sphi 0, %s23
      %s27 = sphi 0, %s24
      %s28 = sphi 0, %s25
      %s29 = sphi 0, %s26
      %s30 = sphi 0, %s27
      %s46 = sphi 0, %s48
      %s49 = sphi 0, %s46
      %s50 = sphi 0, %s49
      %s66 = sphi 0, %s50
      %s74 = sphi 0, %s76
      %s77 = sphi 0, %s74
      %s78 = sphi 0, %s77
      %s94 = sphi 0, %s78
      %s98 = sphi 0, %s98
      %s100 = sphi 0, %s98
      %s101 = sphi 0, %s100
      %s115 = sphi 0, %s101
      %s119 = sphi 0, %s119
      %s121 = sphi 0, %s119
      %s122 = sphi 0, %s121
      %s136 = sphi 0, %s122
      %s140 = sphi 0, %s140
      %s142 = sphi 0, %s140
      %s143 = sphi 0, %s142
      %s157 = sphi 0, %s143
      %s161 = sphi 0, %s161
      %s163 = sphi 0, %s161
      %s164 = sphi 0, %s163
      %s178 = sphi 0, %s164
      %s186 = sphi 0, %s188
      %s189 = sphi 0, %s186
      %s190 = sphi 0, %s189
      %s206 = sphi 0, %s190
    $region4: #{tpu_custom_call.1} parent=1 // loop_header_branch
      %18 = sbr.rel (%p16) target = $region8
    $region5: #{tpu_custom_call.1} parent=1 // loop_body
      %s20 = ssub.s32 %s15, 1
      %s21 = ssub.s32 %s15, 2
      %s31 = sadd.s32 1, %s24
      %p32 = scmp.ge.s32.totalorder %s31, 1
      %s33 = scalar_select %p32, 0, %s31
      %s34 = sadd.s32 1, %s23
      %s35 = scalar_select %p32, %s34, %s23
      %p36 = scmp.ge.s32.totalorder %s35, 1
      %s37 = scalar_select %p36, 0, %s35
      %s38 = sadd.s32 1, %s22
      %s39 = scalar_select %p36, %s38, %s22
      %p40 = scmp.ge.s32.totalorder %s39, 2
      %s41 = scalar_select %p40, 0, %s39
      %s42 = ssub.s32 %s22, %s41
      %s43 = ssub.s32 %s23, %s37
      %s44 = sor.u32 %s42, %s43
      %p45 = scmp.eq.s32.totalorder %s44, 0
      %s47 = sadd.s32 %s46, 1
      %s48 = scalar_select %p45, %s46, %s47
      %p51 = pneg %p45
      %p52 = scmp.eq.s32.totalorder %s15, 1
      %p53 = por %p51, %p52
      %p54 = scmp.ne.s32.totalorder %s46, %s49
      %p55 = scmp.eq.s32.totalorder %s15, 0
      %p56 = por %p54, %p55
      %p57 = scmp.ne.s32.totalorder %s46, %s49
      %p58 = scmp.eq.s32.totalorder %s20, 1
      %p59 = por %p57, %p58
      %p60 = scmp.ne.s32.totalorder %s49, %s50
      %p61 = scmp.eq.s32.totalorder %s20, 0
      %p62 = por %p60, %p61
      %p63 = scmp.ne.s32.totalorder %s49, %s50
      %p64 = scmp.eq.s32.totalorder %s21, 1
      %p65 = por %p63, %p64
      %p67 = scmp.ne.s32.totalorder %s50, %s66
      %p68 = scmp.eq.s32.totalorder %s21, 0
      %p69 = por %p67, %p68
      %s70 = ssub.s32 %s22, %s41
      %s71 = ssub.s32 %s24, %s33
      %s72 = sor.u32 %s70, %s71
      %p73 = scmp.eq.s32.totalorder %s72, 0
      %s75 = sadd.s32 %s74, 1
      %s76 = scalar_select %p73, %s74, %s75
      %p79 = pneg %p73
      %p80 = scmp.eq.s32.totalorder %s15, 1
      %p81 = por %p79, %p80
      %p82 = scmp.ne.s32.totalorder %s74, %s77
      %p83 = scmp.eq.s32.totalorder %s15, 0
      %p84 = por %p82, %p83
      %p85 = scmp.ne.s32.totalorder %s74, %s77
      %p86 = scmp.eq.s32.totalorder %s20, 1
      %p87 = por %p85, %p86
      %p88 = scmp.ne.s32.totalorder %s77, %s78
      %p89 = scmp.eq.s32.totalorder %s20, 0
      %p90 = por %p88, %p89
      %p91 = scmp.ne.s32.totalorder %s77, %s78
      %p92 = scmp.eq.s32.totalorder %s21, 1
      %p93 = por %p91, %p92
      %p95 = scmp.ne.s32.totalorder %s78, %s94
      %p96 = scmp.eq.s32.totalorder %s21, 0
      %p97 = por %p95, %p96
      %s99 = sadd.s32 %s98, 1
      %p102 = scmp.eq.s32.totalorder %s15, 1
      %p103 = scmp.ne.s32.totalorder %s98, %s100
      %p104 = scmp.eq.s32.totalorder %s15, 0
      %p105 = por %p103, %p104
      %p106 = scmp.ne.s32.totalorder %s98, %s100
      %p107 = scmp.eq.s32.totalorder %s20, 1
      %p108 = por %p106, %p107
      %p109 = scmp.ne.s32.totalorder %s100, %s101
      %p110 = scmp.eq.s32.totalorder %s20, 0
      %p111 = por %p109, %p110
      %p112 = scmp.ne.s32.totalorder %s100, %s101
      %p113 = scmp.eq.s32.totalorder %s21, 1
      %p114 = por %p112, %p113
      %p116 = scmp.ne.s32.totalorder %s101, %s115
      %p117 = scmp.eq.s32.totalorder %s21, 0
      %p118 = por %p116, %p117
      %s120 = sadd.s32 %s119, 1
      %p123 = scmp.eq.s32.totalorder %s15, 1
      %p124 = scmp.ne.s32.totalorder %s119, %s121
      %p125 = scmp.eq.s32.totalorder %s15, 0
      %p126 = por %p124, %p125
      %p127 = scmp.ne.s32.totalorder %s119, %s121
      %p128 = scmp.eq.s32.totalorder %s20, 1
      %p129 = por %p127, %p128
      %p130 = scmp.ne.s32.totalorder %s121, %s122
      %p131 = scmp.eq.s32.totalorder %s20, 0
      %p132 = por %p130, %p131
      %p133 = scmp.ne.s32.totalorder %s121, %s122
      %p134 = scmp.eq.s32.totalorder %s21, 1
      %p135 = por %p133, %p134
      %p137 = scmp.ne.s32.totalorder %s122, %s136
      %p138 = scmp.eq.s32.totalorder %s21, 0
      %p139 = por %p137, %p138
      %s141 = sadd.s32 %s140, 1
      %p144 = scmp.eq.s32.totalorder %s15, 1
      %p145 = scmp.ne.s32.totalorder %s140, %s142
      %p146 = scmp.eq.s32.totalorder %s15, 0
      %p147 = por %p145, %p146
      %p148 = scmp.ne.s32.totalorder %s140, %s142
      %p149 = scmp.eq.s32.totalorder %s20, 1
      %p150 = por %p148, %p149
      %p151 = scmp.ne.s32.totalorder %s142, %s143
      %p152 = scmp.eq.s32.totalorder %s20, 0
      %p153 = por %p151, %p152
      %p154 = scmp.ne.s32.totalorder %s142, %s143
      %p155 = scmp.eq.s32.totalorder %s21, 1
      %p156 = por %p154, %p155
      %p158 = scmp.ne.s32.totalorder %s143, %s157
      %p159 = scmp.eq.s32.totalorder %s21, 0
      %p160 = por %p158, %p159
      %s162 = sadd.s32 %s161, 1
      %p165 = scmp.eq.s32.totalorder %s15, 1
      %p166 = scmp.ne.s32.totalorder %s161, %s163
      %p167 = scmp.eq.s32.totalorder %s15, 0
      %p168 = por %p166, %p167
      %p169 = scmp.ne.s32.totalorder %s161, %s163
      %p170 = scmp.eq.s32.totalorder %s20, 1
      %p171 = por %p169, %p170
      %p172 = scmp.ne.s32.totalorder %s163, %s164
      %p173 = scmp.eq.s32.totalorder %s20, 0
      %p174 = por %p172, %p173
      %p175 = scmp.ne.s32.totalorder %s163, %s164
      %p176 = scmp.eq.s32.totalorder %s21, 1
      %p177 = por %p175, %p176
      %p179 = scmp.ne.s32.totalorder %s164, %s178
      %p180 = scmp.eq.s32.totalorder %s21, 0
      %p181 = por %p179, %p180
      %s182 = ssub.s32 %s22, %s41
      %s183 = ssub.s32 %s23, %s37
      %s184 = sor.u32 %s182, %s183
      %p185 = scmp.eq.s32.totalorder %s184, 0
      %s187 = sadd.s32 %s186, 1
      %s188 = scalar_select %p185, %s186, %s187
      %p191 = pneg %p185
      %p192 = scmp.eq.s32.totalorder %s15, 1
      %p193 = por %p191, %p192
      %p194 = scmp.ne.s32.totalorder %s186, %s189
      %p195 = scmp.eq.s32.totalorder %s15, 0
      %p196 = por %p194, %p195
      %p197 = scmp.ne.s32.totalorder %s186, %s189
      %p198 = scmp.eq.s32.totalorder %s20, 1
      %p199 = por %p197, %p198
      %p200 = scmp.ne.s32.totalorder %s189, %s190
      %p201 = scmp.eq.s32.totalorder %s20, 0
      %p202 = por %p200, %p201
      %p203 = scmp.ne.s32.totalorder %s189, %s190
      %p204 = scmp.eq.s32.totalorder %s21, 1
      %p205 = por %p203, %p204
      %p207 = scmp.ne.s32.totalorder %s190, %s206
      %p208 = scmp.eq.s32.totalorder %s21, 0
      %p209 = por %p207, %p208
      %p210 = scmp.le.s32.totalorder 1, %s15
      %p211 = scmp.lt.s32.totalorder %s15, 3
      %p212 = pnand %p210, %p211
      %p213 = pneg %p212
      // Predicated region
      $region9: #{tpu_custom_call.1} parent=5 // pred_check
        _
      $region10: #{tpu_custom_call.1} parent=5 // pred_check_branch
        %215 = sbr.rel (%p212) target = $region12
      $region11: #{tpu_custom_call.1} parent=5 // pred_region
        %s216 = ssub.s32 %s15, 1
        // Predicated region
        $region13: #{tpu_custom_call.1} parent=11 // pred_check
          %p217 = pneg %p111
        $region14: #{tpu_custom_call.1} parent=11 // pred_check_branch
          %219 = sbr.rel (%p217) target = $region16
        $region15: #{tpu_custom_call.1} parent=11 // pred_region
          _
        $region16: #{tpu_custom_call.1} parent=11 // pred_fallthru
          _
        // Predicated region
        $region17: #{tpu_custom_call.1} parent=11 // pred_check
          %p220 = pneg %p132
        $region18: #{tpu_custom_call.1} parent=11 // pred_check_branch
          %222 = sbr.rel (%p220) target = $region20
        $region19: #{tpu_custom_call.1} parent=11 // pred_region
          _
        $region20: #{tpu_custom_call.1} parent=11 // pred_fallthru
          _
        // Predicated region
        $region21: #{tpu_custom_call.1} parent=11 // pred_check
          %p223 = pneg %p153
        $region22: #{tpu_custom_call.1} parent=11 // pred_check_branch
          %225 = sbr.rel (%p223) target = $region24
        $region23: #{tpu_custom_call.1} parent=11 // pred_region
          _
        $region24: #{tpu_custom_call.1} parent=11 // pred_fallthru
          _
        // Predicated region
        $region25: #{tpu_custom_call.1} parent=11 // pred_check
          %p226 = pneg %p174
        $region26: #{tpu_custom_call.1} parent=11 // pred_check_branch
          %228 = sbr.rel (%p226) target = $region28
        $region27: #{tpu_custom_call.1} parent=11 // pred_region
          _
        $region28: #{tpu_custom_call.1} parent=11 // pred_fallthru
          _
      $region12: #{tpu_custom_call.1} parent=5 // pred_fallthru
        _
      %p229 = scmp.lt.s32.totalorder %s15, 2
      // Predicated region
      $region29: #{tpu_custom_call.1} parent=5 // pred_check
        %p230 = pneg %p229
      $region30: #{tpu_custom_call.1} parent=5 // pred_check_branch
        %232 = sbr.rel (%p230) target = $region32
      $region31: #{tpu_custom_call.1} parent=5 // pred_region
        // Predicated region
        $region33: #{tpu_custom_call.1} parent=31 // pred_check
          %p233 = pneg %p56
        $region34: #{tpu_custom_call.1} parent=31 // pred_check_branch
          %235 = sbr.rel (%p233) target = $region36
        $region35: #{tpu_custom_call.1} parent=31 // pred_region
          %s236 = smul.u32 16, %s23
          %p237 = scmp.lt.s32.totalorder %s22, 1
          %s238 = scalar_select %p237, %s22, 1
          %p239 = scmp.lt.s32.totalorder %s236, 15
          %s240 = scalar_select %p239, %s236, 15
          %s241 = smul.addr %s238, 16
          %s242 = sadd.s32 %s240, %s241
          %s243 = smul.addr %s242, 4
          %s244 = scalar_lea.vmem %s0, %s243
          %s245 = smul.u32 16, %s23
        $region36: #{tpu_custom_call.1} parent=31 // pred_fallthru
          _
        // Predicated region
        $region37: #{tpu_custom_call.1} parent=31 // pred_check
          %p246 = pneg %p84
        $region38: #{tpu_custom_call.1} parent=31 // pred_check_branch
          %248 = sbr.rel (%p246) target = $region40
        $region39: #{tpu_custom_call.1} parent=31 // pred_region
          %s249 = smul.u32 16, %s24
          %p250 = scmp.lt.s32.totalorder %s22, 1
          %s251 = scalar_select %p250, %s22, 1
          %p252 = scmp.lt.s32.totalorder %s249, 15
          %s253 = scalar_select %p252, %s249, 15
          %s254 = smul.addr %s251, 16
          %s255 = sadd.s32 %s253, %s254
          %s256 = smul.addr %s255, 4
          %s257 = scalar_lea.vmem %s1, %s256
          %s258 = smul.u32 16, %s24
        $region40: #{tpu_custom_call.1} parent=31 // pred_fallthru
          _
      $region32: #{tpu_custom_call.1} parent=5 // pred_fallthru
        _
      %p259 = scmp.le.s32.totalorder 1, %s15
      %p260 = scmp.lt.s32.totalorder %s15, 3
      %p261 = pnand %p259, %p260
      %p262 = pneg %p261
      // Predicated region
      $region41: #{tpu_custom_call.1} parent=5 // pred_check
        _
      $region42: #{tpu_custom_call.1} parent=5 // pred_check_branch
        %264 = sbr.rel (%p261) target = $region44
      $region43: #{tpu_custom_call.1} parent=5 // pred_region
        %s265 = ssub.s32 %s15, 1
        %s266 = smul.u32 16, %s26
        %p267 = scmp.lt.s32.totalorder %s25, 1
        %s268 = scalar_select %p267, %s25, 1
        %p269 = scmp.lt.s32.totalorder %s266, 15
        %s270 = scalar_select %p269, %s266, 15
        %s271 = smul.addr %s268, 16
        %s272 = sadd.s32 %s270, %s271
        %s273 = smul.addr %s272, 4
        %s274 = scalar_lea.vmem %s0, %s273
        %p275 = pneg %p62
        %p276 = pneg %p59
        %s277 = smul.u32 16, %s27
        %p278 = scmp.lt.s32.totalorder %s25, 1
        %s279 = scalar_select %p278, %s25, 1
        %p280 = scmp.lt.s32.totalorder %s277, 15
        %s281 = scalar_select %p280, %s277, 15
        %s282 = smul.addr %s279, 16
        %s283 = sadd.s32 %s281, %s282
        %s284 = smul.addr %s283, 4
        %s285 = scalar_lea.vmem %s1, %s284
        %p286 = pneg %p90
        %p287 = pneg %p87
        %p288 = pneg %p111
        %p289 = pneg %p108
        %p290 = pneg %p132
        %p291 = pneg %p129
        %p292 = pneg %p153
        %p293 = pneg %p150
        %p294 = pneg %p174
        %p295 = pneg %p171
        %p296 = pneg %p202
        %p297 = pneg %p199
        %s298 = sand.u32 %s189, 1
        %s299 = scalar_lea.sflag [#allocation7], %s298
        %s300 = sand.u32 %s189, 1
        %s301 = smul.addr %s300, 8
        %s302 = scalar_lea.vmem [#allocation6], %s301
        %s303 = smul.u32 16, %s26
        %p304 = scmp.lt.s32.totalorder %s25, 1
        %s305 = scalar_select %p304, %s25, 1
        %p306 = scmp.lt.s32.totalorder %s303, 15
        %s307 = scalar_select %p306, %s303, 15
        %s308 = smul.addr %s305, 16
        %s309 = sadd.s32 %s307, %s308
        %s310 = smul.addr %s309, 4
        %s311 = scalar_lea.vmem %s0, %s310
        %s312 = smul.u32 16, %s26
        %s313 = smul.u32 16, %s27
        %p314 = scmp.lt.s32.totalorder %s25, 1
        %s315 = scalar_select %p314, %s25, 1
        %p316 = scmp.lt.s32.totalorder %s313, 15
        %s317 = scalar_select %p316, %s313, 15
        %s318 = smul.addr %s315, 16
        %s319 = sadd.s32 %s317, %s318
        %s320 = smul.addr %s319, 4
        %s321 = scalar_lea.vmem %s1, %s320
        %s322 = smul.u32 16, %s27
        %p323 = scmp.eq.s32.totalorder %s27, 0
        // Predicated region
        $region45: #{tpu_custom_call.1} parent=43 // pred_check
          %p324 = pneg %p323
        $region46: #{tpu_custom_call.1} parent=43 // pred_check_branch
          %326 = sbr.rel (%p324) target = $region48
        $region47: #{tpu_custom_call.1} parent=43 // pred_region
          %v327 = vld [vmem:[%s311] sm:$0xf]
          %v328 = vld [vmem:[%s311 + $0x4] sm:$0xf]
          %v329 = vld [vmem:[%s311 + $0x8] sm:$0xf]
          %v330 = vld [vmem:[%s311 + $0xc] sm:$0xf]
          %v331 = vld [vmem:[%s311 + $0x10] sm:$0xf]
          %v332 = vld [vmem:[%s311 + $0x14] sm:$0xf]
          %v333 = vld [vmem:[%s311 + $0x18] sm:$0xf]
          %v334 = vld [vmem:[%s311 + $0x1c] sm:$0xf]
          %v335 = vld [vmem:[%s311 + $0x20] sm:$0xf]
          %v336 = vld [vmem:[%s311 + $0x24] sm:$0xf]
          %v337 = vld [vmem:[%s311 + $0x28] sm:$0xf]
          %v338 = vld [vmem:[%s311 + $0x2c] sm:$0xf]
          %v339 = vld [vmem:[%s311 + $0x30] sm:$0xf]
          %v340 = vld [vmem:[%s311 + $0x34] sm:$0xf]
          %v341 = vld [vmem:[%s311 + $0x38] sm:$0xf]
          %v342 = vld [vmem:[%s311 + $0x3c] sm:$0xf]
          %v343 = vld [vmem:[%s2] sm:$0xf]
          %v344 = vld [vmem:[%s2 + $0x4] sm:$0xf]
          %v345 = vld [vmem:[%s2 + $0x8] sm:$0xf]
          %v346 = vld [vmem:[%s2 + $0xc] sm:$0xf]
          %v347 = vld [vmem:[%s2 + $0x10] sm:$0xf]
          %v348 = vld [vmem:[%s2 + $0x14] sm:$0xf]
          %v349 = vld [vmem:[%s2 + $0x18] sm:$0xf]
          %v350 = vld [vmem:[%s2 + $0x1c] sm:$0xf]
          %v351 = vld [vmem:[%s2 + $0x20] sm:$0xf]
          %v352 = vld [vmem:[%s2 + $0x24] sm:$0xf]
          %v353 = vld [vmem:[%s2 + $0x28] sm:$0xf]
          %v354 = vld [vmem:[%s2 + $0x2c] sm:$0xf]
          %v355 = vld [vmem:[%s2 + $0x30] sm:$0xf]
          %v356 = vld [vmem:[%s2 + $0x34] sm:$0xf]
          %v357 = vld [vmem:[%s2 + $0x38] sm:$0xf]
          %v358 = vld [vmem:[%s2 + $0x3c] sm:$0xf]
          %v375 = vunpack.c.l.b16 %v327
          %v376 = vunpack.c.l.b16 %v328
          %v377 = vunpack.c.l.b16 %v329
          %v378 = vunpack.c.l.b16 %v330
          %v379 = vunpack.c.l.b16 %v331
          %v380 = vunpack.c.l.b16 %v332
          %v381 = vunpack.c.l.b16 %v333
          %v382 = vunpack.c.l.b16 %v334
          %v383 = vunpack.c.l.b16 %v335
          %v384 = vunpack.c.l.b16 %v336
          %v385 = vunpack.c.l.b16 %v337
          %v386 = vunpack.c.l.b16 %v338
          %v387 = vunpack.c.l.b16 %v339
          %v388 = vunpack.c.l.b16 %v340
          %v389 = vunpack.c.l.b16 %v341
          %v390 = vunpack.c.l.b16 %v342
          %v391 = vpack.c.b16 %v376, %v375
          %v392 = vpack.c.b16 %v378, %v377
          %v393 = vpack.c.b16 %v380, %v379
          %v394 = vpack.c.b16 %v382, %v381
          %v395 = vpack.c.b16 %v384, %v383
          %v396 = vpack.c.b16 %v386, %v385
          %v397 = vpack.c.b16 %v388, %v387
          %v398 = vpack.c.b16 %v390, %v389
          %v415 = vunpack.c.l.b16 %v343
          %v416 = vunpack.c.l.b16 %v344
          %v417 = vunpack.c.l.b16 %v345
          %v418 = vunpack.c.l.b16 %v346
          %v419 = vunpack.c.l.b16 %v347
          %v420 = vunpack.c.l.b16 %v348
          %v421 = vunpack.c.l.b16 %v349
          %v422 = vunpack.c.l.b16 %v350
          %v423 = vunpack.c.l.b16 %v351
          %v424 = vunpack.c.l.b16 %v352
          %v425 = vunpack.c.l.b16 %v353
          %v426 = vunpack.c.l.b16 %v354
          %v427 = vunpack.c.l.b16 %v355
          %v428 = vunpack.c.l.b16 %v356
          %v429 = vunpack.c.l.b16 %v357
          %v430 = vunpack.c.l.b16 %v358
          %v431 = vpack.c.b16 %v416, %v415
          %v432 = vpack.c.b16 %v418, %v417
          %v433 = vpack.c.b16 %v420, %v419
          %v434 = vpack.c.b16 %v422, %v421
          %v435 = vpack.c.b16 %v424, %v423
          %v436 = vpack.c.b16 %v426, %v425
          %v437 = vpack.c.b16 %v428, %v427
          %v438 = vpack.c.b16 %v430, %v429
          %vm439 = vcmask 64512
          %v441 = vsel %vm439, %v391, 0
          %v444 = vsel %vm439, %v392, 0
          %v447 = vsel %vm439, %v393, 0
          %v450 = vsel %vm439, %v394, 0
          %v453 = vsel %vm439, %v395, 0
          %v456 = vsel %vm439, %v396, 0
          %v459 = vsel %vm439, %v397, 0
          %v462 = vsel %vm439, %v398, 0
          %v465 = vsel %vm439, %v431, 0
          %v468 = vsel %vm439, %v432, 0
          %v471 = vsel %vm439, %v433, 0
          %v474 = vsel %vm439, %v434, 0
          %v477 = vsel %vm439, %v435, 0
          %v480 = vsel %vm439, %v436, 0
          %v483 = vsel %vm439, %v437, 0
          %v486 = vsel %vm439, %v438, 0
          %488 = vmatpush.bf16.xpose.msra.mxu0 %v486
          %489 = vmatpush.bf16.xpose.msra.mxu0 %v483
          %490 = vmatpush.bf16.xpose.msra.mxu0 %v480
          %491 = vmatpush.bf16.xpose.msra.mxu0 %v477
          %492 = vmatpush.bf16.xpose.msra.mxu0 %v474
          %493 = vmatpush.bf16.xpose.msra.mxu0 %v471
          %494 = vmatpush.bf16.xpose.msra.mxu0 %v468
          %495 = vmatpush.bf16.xpose.msra.mxu0 %v465
          %496 = vmatmul.bf16.gmra.mxu0 %v441
          %v497 = vpop.f32.mrf.mxu0
          %v498 = vadd.f32 0.0, %v497
          %v499 = vpop.f32.mrf.mxu0
          %v500 = vadd.f32 0.0, %v499
          %501 = vmatmul.bf16.gmra.mxu0 %v444
          %v502 = vpop.f32.mrf.mxu0
          %v503 = vadd.f32 0.0, %v502
          %v504 = vpop.f32.mrf.mxu0
          %v505 = vadd.f32 0.0, %v504
          %506 = vmatmul.bf16.gmra.mxu0 %v447
          %v507 = vpop.f32.mrf.mxu0
          %v508 = vadd.f32 0.0, %v507
          %v509 = vpop.f32.mrf.mxu0
          %v510 = vadd.f32 0.0, %v509
          %511 = vmatmul.bf16.gmra.mxu0 %v450
          %v512 = vpop.f32.mrf.mxu0
          %v513 = vadd.f32 0.0, %v512
          %v514 = vpop.f32.mrf.mxu0
          %v515 = vadd.f32 0.0, %v514
          %516 = vmatmul.bf16.gmra.mxu0 %v453
          %v517 = vpop.f32.mrf.mxu0
          %v518 = vadd.f32 0.0, %v517
          %v519 = vpop.f32.mrf.mxu0
          %v520 = vadd.f32 0.0, %v519
          %521 = vmatmul.bf16.gmra.mxu0 %v456
          %v522 = vpop.f32.mrf.mxu0
          %v523 = vadd.f32 0.0, %v522
          %v524 = vpop.f32.mrf.mxu0
          %v525 = vadd.f32 0.0, %v524
          %526 = vmatmul.bf16.gmra.mxu0 %v459
          %v527 = vpop.f32.mrf.mxu0
          %v528 = vadd.f32 0.0, %v527
          %v529 = vpop.f32.mrf.mxu0
          %v530 = vadd.f32 0.0, %v529
          %531 = vmatmul.bf16.gmra.mxu0 %v462
          %v532 = vpop.f32.mrf.mxu0
          %v533 = vadd.f32 0.0, %v532
          %v534 = vpop.f32.mrf.mxu0
          %v535 = vadd.f32 0.0, %v534
          %536 = vdwg.mxu0
          %v537 = vpack.c.bf16 %v498, %v498
          %v538 = vpack.c.bf16 %v500, %v500
          %v539 = vpack.c.bf16 %v503, %v503
          %v540 = vpack.c.bf16 %v505, %v505
          %v541 = vpack.c.bf16 %v508, %v508
          %v542 = vpack.c.bf16 %v510, %v510
          %v543 = vpack.c.bf16 %v513, %v513
          %v544 = vpack.c.bf16 %v515, %v515
          %v545 = vpack.c.bf16 %v518, %v518
          %v546 = vpack.c.bf16 %v520, %v520
          %v547 = vpack.c.bf16 %v523, %v523
          %v548 = vpack.c.bf16 %v525, %v525
          %v549 = vpack.c.bf16 %v528, %v528
          %v550 = vpack.c.bf16 %v530, %v530
          %v551 = vpack.c.bf16 %v533, %v533
          %v552 = vpack.c.bf16 %v535, %v535
          %553 = vst [vmem:[#allocation2] sm:$0xf] %v537
          %554 = vst [vmem:[#allocation2 + $0x4] sm:$0xf] %v538
          %555 = vst [vmem:[#allocation2 + $0x8] sm:$0xf] %v539
          %556 = vst [vmem:[#allocation2 + $0xc] sm:$0xf] %v540
          %557 = vst [vmem:[#allocation2 + $0x10] sm:$0xf] %v541
          %558 = vst [vmem:[#allocation2 + $0x14] sm:$0xf] %v542
          %559 = vst [vmem:[#allocation2 + $0x18] sm:$0xf] %v543
          %560 = vst [vmem:[#allocation2 + $0x1c] sm:$0xf] %v544
          %561 = vst [vmem:[#allocation2 + $0x20] sm:$0xf] %v545
          %562 = vst [vmem:[#allocation2 + $0x24] sm:$0xf] %v546
          %563 = vst [vmem:[#allocation2 + $0x28] sm:$0xf] %v547
          %564 = vst [vmem:[#allocation2 + $0x2c] sm:$0xf] %v548
          %565 = vst [vmem:[#allocation2 + $0x30] sm:$0xf] %v549
          %566 = vst [vmem:[#allocation2 + $0x34] sm:$0xf] %v550
          %567 = vst [vmem:[#allocation2 + $0x38] sm:$0xf] %v551
          %568 = vst [vmem:[#allocation2 + $0x3c] sm:$0xf] %v552
          %vm569 = vcmask 7168
          %570 = vst.msk [vmem:[#allocation3] sm:$0xff] %vm569, -inf
          %571 = vst.msk [vmem:[#allocation3 + $0x8] sm:$0xff] %vm569, -inf
          %572 = vst.msk [vmem:[#allocation3 + $0x10] sm:$0xff] %vm569, -inf
          %573 = vst.msk [vmem:[#allocation3 + $0x18] sm:$0xff] %vm569, -inf
          %574 = vst.msk [vmem:[#allocation3 + $0x20] sm:$0xff] %vm569, -inf
          %575 = vst.msk [vmem:[#allocation3 + $0x28] sm:$0xff] %vm569, -inf
          %576 = vst.msk [vmem:[#allocation3 + $0x30] sm:$0xff] %vm569, -inf
          %577 = vst.msk [vmem:[#allocation3 + $0x38] sm:$0xff] %vm569, -inf
          %578 = vst.msk [vmem:[#allocation3 + $0x40] sm:$0xff] %vm569, -inf
          %579 = vst.msk [vmem:[#allocation3 + $0x48] sm:$0xff] %vm569, -inf
          %580 = vst.msk [vmem:[#allocation3 + $0x50] sm:$0xff] %vm569, -inf
          %581 = vst.msk [vmem:[#allocation3 + $0x58] sm:$0xff] %vm569, -inf
          %582 = vst.msk [vmem:[#allocation3 + $0x60] sm:$0xff] %vm569, -inf
          %583 = vst.msk [vmem:[#allocation3 + $0x68] sm:$0xff] %vm569, -inf
          %584 = vst.msk [vmem:[#allocation3 + $0x70] sm:$0xff] %vm569, -inf
          %585 = vst.msk [vmem:[#allocation3 + $0x78] sm:$0xff] %vm569, -inf
          %586 = vst.msk [vmem:[#allocation3 + $0x80] sm:$0xff] %vm569, -inf
          %587 = vst.msk [vmem:[#allocation3 + $0x88] sm:$0xff] %vm569, -inf
          %588 = vst.msk [vmem:[#allocation3 + $0x90] sm:$0xff] %vm569, -inf
          %589 = vst.msk [vmem:[#allocation3 + $0x98] sm:$0xff] %vm569, -inf
          %590 = vst.msk [vmem:[#allocation3 + $0xa0] sm:$0xff] %vm569, -inf
          %591 = vst.msk [vmem:[#allocation3 + $0xa8] sm:$0xff] %vm569, -inf
          %592 = vst.msk [vmem:[#allocation3 + $0xb0] sm:$0xff] %vm569, -inf
          %593 = vst.msk [vmem:[#allocation3 + $0xb8] sm:$0xff] %vm569, -inf
          %594 = vst.msk [vmem:[#allocation3 + $0xc0] sm:$0xff] %vm569, -inf
          %595 = vst.msk [vmem:[#allocation3 + $0xc8] sm:$0xff] %vm569, -inf
          %596 = vst.msk [vmem:[#allocation3 + $0xd0] sm:$0xff] %vm569, -inf
          %597 = vst.msk [vmem:[#allocation3 + $0xd8] sm:$0xff] %vm569, -inf
          %598 = vst.msk [vmem:[#allocation3 + $0xe0] sm:$0xff] %vm569, -inf
          %599 = vst.msk [vmem:[#allocation3 + $0xe8] sm:$0xff] %vm569, -inf
          %600 = vst.msk [vmem:[#allocation3 + $0xf0] sm:$0xff] %vm569, -inf
          %601 = vst.msk [vmem:[#allocation3 + $0xf8] sm:$0xff] %vm569, -inf
          %602 = vst.msk [vmem:[#allocation3 + $0x100] sm:$0xff] %vm569, -inf
          %603 = vst.msk [vmem:[#allocation3 + $0x108] sm:$0xff] %vm569, -inf
          %604 = vst.msk [vmem:[#allocation3 + $0x110] sm:$0xff] %vm569, -inf
          %605 = vst.msk [vmem:[#allocation3 + $0x118] sm:$0xff] %vm569, -inf
          %606 = vst.msk [vmem:[#allocation3 + $0x120] sm:$0xff] %vm569, -inf
          %607 = vst.msk [vmem:[#allocation3 + $0x128] sm:$0xff] %vm569, -inf
          %608 = vst.msk [vmem:[#allocation3 + $0x130] sm:$0xff] %vm569, -inf
          %609 = vst.msk [vmem:[#allocation3 + $0x138] sm:$0xff] %vm569, -inf
          %610 = vst.msk [vmem:[#allocation3 + $0x140] sm:$0xff] %vm569, -inf
          %611 = vst.msk [vmem:[#allocation3 + $0x148] sm:$0xff] %vm569, -inf
          %612 = vst.msk [vmem:[#allocation3 + $0x150] sm:$0xff] %vm569, -inf
          %613 = vst.msk [vmem:[#allocation3 + $0x158] sm:$0xff] %vm569, -inf
          %614 = vst.msk [vmem:[#allocation3 + $0x160] sm:$0xff] %vm569, -inf
          %615 = vst.msk [vmem:[#allocation3 + $0x168] sm:$0xff] %vm569, -inf
          %616 = vst.msk [vmem:[#allocation3 + $0x170] sm:$0xff] %vm569, -inf
          %617 = vst.msk [vmem:[#allocation3 + $0x178] sm:$0xff] %vm569, -inf
          %618 = vst.msk [vmem:[#allocation3 + $0x180] sm:$0xff] %vm569, -inf
          %619 = vst.msk [vmem:[#allocation3 + $0x188] sm:$0xff] %vm569, -inf
          %620 = vst.msk [vmem:[#allocation3 + $0x190] sm:$0xff] %vm569, -inf
          %621 = vst.msk [vmem:[#allocation3 + $0x198] sm:$0xff] %vm569, -inf
          %622 = vst.msk [vmem:[#allocation3 + $0x1a0] sm:$0xff] %vm569, -inf
          %623 = vst.msk [vmem:[#allocation3 + $0x1a8] sm:$0xff] %vm569, -inf
          %624 = vst.msk [vmem:[#allocation3 + $0x1b0] sm:$0xff] %vm569, -inf
          %625 = vst.msk [vmem:[#allocation3 + $0x1b8] sm:$0xff] %vm569, -inf
          %626 = vst.msk [vmem:[#allocation3 + $0x1c0] sm:$0xff] %vm569, -inf
          %627 = vst.msk [vmem:[#allocation3 + $0x1c8] sm:$0xff] %vm569, -inf
          %628 = vst.msk [vmem:[#allocation3 + $0x1d0] sm:$0xff] %vm569, -inf
          %629 = vst.msk [vmem:[#allocation3 + $0x1d8] sm:$0xff] %vm569, -inf
          %630 = vst.msk [vmem:[#allocation3 + $0x1e0] sm:$0xff] %vm569, -inf
          %631 = vst.msk [vmem:[#allocation3 + $0x1e8] sm:$0xff] %vm569, -inf
          %632 = vst.msk [vmem:[#allocation3 + $0x1f0] sm:$0xff] %vm569, -inf
          %633 = vst.msk [vmem:[#allocation3 + $0x1f8] sm:$0xff] %vm569, -inf
          %634 = vst.msk [vmem:[#allocation4] sm:$0xff] %vm569, 0.0
          %635 = vst.msk [vmem:[#allocation4 + $0x8] sm:$0xff] %vm569, 0.0
          %636 = vst.msk [vmem:[#allocation4 + $0x10] sm:$0xff] %vm569, 0.0
          %637 = vst.msk [vmem:[#allocation4 + $0x18] sm:$0xff] %vm569, 0.0
          %638 = vst.msk [vmem:[#allocation4 + $0x20] sm:$0xff] %vm569, 0.0
          %639 = vst.msk [vmem:[#allocation4 + $0x28] sm:$0xff] %vm569, 0.0
          %640 = vst.msk [vmem:[#allocation4 + $0x30] sm:$0xff] %vm569, 0.0
          %641 = vst.msk [vmem:[#allocation4 + $0x38] sm:$0xff] %vm569, 0.0
          %642 = vst.msk [vmem:[#allocation4 + $0x40] sm:$0xff] %vm569, 0.0
          %643 = vst.msk [vmem:[#allocation4 + $0x48] sm:$0xff] %vm569, 0.0
          %644 = vst.msk [vmem:[#allocation4 + $0x50] sm:$0xff] %vm569, 0.0
          %645 = vst.msk [vmem:[#allocation4 + $0x58] sm:$0xff] %vm569, 0.0
          %646 = vst.msk [vmem:[#allocation4 + $0x60] sm:$0xff] %vm569, 0.0
          %647 = vst.msk [vmem:[#allocation4 + $0x68] sm:$0xff] %vm569, 0.0
          %648 = vst.msk [vmem:[#allocation4 + $0x70] sm:$0xff] %vm569, 0.0
          %649 = vst.msk [vmem:[#allocation4 + $0x78] sm:$0xff] %vm569, 0.0
          %650 = vst.msk [vmem:[#allocation4 + $0x80] sm:$0xff] %vm569, 0.0
          %651 = vst.msk [vmem:[#allocation4 + $0x88] sm:$0xff] %vm569, 0.0
          %652 = vst.msk [vmem:[#allocation4 + $0x90] sm:$0xff] %vm569, 0.0
          %653 = vst.msk [vmem:[#allocation4 + $0x98] sm:$0xff] %vm569, 0.0
          %654 = vst.msk [vmem:[#allocation4 + $0xa0] sm:$0xff] %vm569, 0.0
          %655 = vst.msk [vmem:[#allocation4 + $0xa8] sm:$0xff] %vm569, 0.0
          %656 = vst.msk [vmem:[#allocation4 + $0xb0] sm:$0xff] %vm569, 0.0
          %657 = vst.msk [vmem:[#allocation4 + $0xb8] sm:$0xff] %vm569, 0.0
          %658 = vst.msk [vmem:[#allocation4 + $0xc0] sm:$0xff] %vm569, 0.0
          %659 = vst.msk [vmem:[#allocation4 + $0xc8] sm:$0xff] %vm569, 0.0
          %660 = vst.msk [vmem:[#allocation4 + $0xd0] sm:$0xff] %vm569, 0.0
          %661 = vst.msk [vmem:[#allocation4 + $0xd8] sm:$0xff] %vm569, 0.0
          %662 = vst.msk [vmem:[#allocation4 + $0xe0] sm:$0xff] %vm569, 0.0
          %663 = vst.msk [vmem:[#allocation4 + $0xe8] sm:$0xff] %vm569, 0.0
          %664 = vst.msk [vmem:[#allocation4 + $0xf0] sm:$0xff] %vm569, 0.0
          %665 = vst.msk [vmem:[#allocation4 + $0xf8] sm:$0xff] %vm569, 0.0
          %666 = vst.msk [vmem:[#allocation4 + $0x100] sm:$0xff] %vm569, 0.0
          %667 = vst.msk [vmem:[#allocation4 + $0x108] sm:$0xff] %vm569, 0.0
          %668 = vst.msk [vmem:[#allocation4 + $0x110] sm:$0xff] %vm569, 0.0
          %669 = vst.msk [vmem:[#allocation4 + $0x118] sm:$0xff] %vm569, 0.0
          %670 = vst.msk [vmem:[#allocation4 + $0x120] sm:$0xff] %vm569, 0.0
          %671 = vst.msk [vmem:[#allocation4 + $0x128] sm:$0xff] %vm569, 0.0
          %672 = vst.msk [vmem:[#allocation4 + $0x130] sm:$0xff] %vm569, 0.0
          %673 = vst.msk [vmem:[#allocation4 + $0x138] sm:$0xff] %vm569, 0.0
          %674 = vst.msk [vmem:[#allocation4 + $0x140] sm:$0xff] %vm569, 0.0
          %675 = vst.msk [vmem:[#allocation4 + $0x148] sm:$0xff] %vm569, 0.0
          %676 = vst.msk [vmem:[#allocation4 + $0x150] sm:$0xff] %vm569, 0.0
          %677 = vst.msk [vmem:[#allocation4 + $0x158] sm:$0xff] %vm569, 0.0
          %678 = vst.msk [vmem:[#allocation4 + $0x160] sm:$0xff] %vm569, 0.0
          %679 = vst.msk [vmem:[#allocation4 + $0x168] sm:$0xff] %vm569, 0.0
          %680 = vst.msk [vmem:[#allocation4 + $0x170] sm:$0xff] %vm569, 0.0
          %681 = vst.msk [vmem:[#allocation4 + $0x178] sm:$0xff] %vm569, 0.0
          %682 = vst.msk [vmem:[#allocation4 + $0x180] sm:$0xff] %vm569, 0.0
          %683 = vst.msk [vmem:[#allocation4 + $0x188] sm:$0xff] %vm569, 0.0
          %684 = vst.msk [vmem:[#allocation4 + $0x190] sm:$0xff] %vm569, 0.0
          %685 = vst.msk [vmem:[#allocation4 + $0x198] sm:$0xff] %vm569, 0.0
          %686 = vst.msk [vmem:[#allocation4 + $0x1a0] sm:$0xff] %vm569, 0.0
          %687 = vst.msk [vmem:[#allocation4 + $0x1a8] sm:$0xff] %vm569, 0.0
          %688 = vst.msk [vmem:[#allocation4 + $0x1b0] sm:$0xff] %vm569, 0.0
          %689 = vst.msk [vmem:[#allocation4 + $0x1b8] sm:$0xff] %vm569, 0.0
          %690 = vst.msk [vmem:[#allocation4 + $0x1c0] sm:$0xff] %vm569, 0.0
          %691 = vst.msk [vmem:[#allocation4 + $0x1c8] sm:$0xff] %vm569, 0.0
          %692 = vst.msk [vmem:[#allocation4 + $0x1d0] sm:$0xff] %vm569, 0.0
          %693 = vst.msk [vmem:[#allocation4 + $0x1d8] sm:$0xff] %vm569, 0.0
          %694 = vst.msk [vmem:[#allocation4 + $0x1e0] sm:$0xff] %vm569, 0.0
          %695 = vst.msk [vmem:[#allocation4 + $0x1e8] sm:$0xff] %vm569, 0.0
          %696 = vst.msk [vmem:[#allocation4 + $0x1f0] sm:$0xff] %vm569, 0.0
          %697 = vst.msk [vmem:[#allocation4 + $0x1f8] sm:$0xff] %vm569, 0.0
          %698 = vst [vmem:[#allocation5] sm:$0xff] 0.0
          %699 = vst [vmem:[#allocation5 + $0x8] sm:$0xff] 0.0
          %700 = vst [vmem:[#allocation5 + $0x10] sm:$0xff] 0.0
          %701 = vst [vmem:[#allocation5 + $0x18] sm:$0xff] 0.0
          %702 = vst [vmem:[#allocation5 + $0x20] sm:$0xff] 0.0
          %703 = vst [vmem:[#allocation5 + $0x28] sm:$0xff] 0.0
          %704 = vst [vmem:[#allocation5 + $0x30] sm:$0xff] 0.0
          %705 = vst [vmem:[#allocation5 + $0x38] sm:$0xff] 0.0
          %706 = vst [vmem:[#allocation5 + $0x40] sm:$0xff] 0.0
          %707 = vst [vmem:[#allocation5 + $0x48] sm:$0xff] 0.0
          %708 = vst [vmem:[#allocation5 + $0x50] sm:$0xff] 0.0
          %709 = vst [vmem:[#allocation5 + $0x58] sm:$0xff] 0.0
          %710 = vst [vmem:[#allocation5 + $0x60] sm:$0xff] 0.0
          %711 = vst [vmem:[#allocation5 + $0x68] sm:$0xff] 0.0
          %712 = vst [vmem:[#allocation5 + $0x70] sm:$0xff] 0.0
          %713 = vst [vmem:[#allocation5 + $0x78] sm:$0xff] 0.0
        $region48: #{tpu_custom_call.1} parent=43 // pred_fallthru
          _
        %p714 = scmp.lt.s32.totalorder %s27, 0
        // Predicated region
        $region49: #{tpu_custom_call.1} parent=43 // pred_check
          %p715 = pneg %p714
        $region50: #{tpu_custom_call.1} parent=43 // pred_check_branch
          %717 = sbr.rel (%p715) target = $region52
        $region51: #{tpu_custom_call.1} parent=43 // pred_region
          %v718 = vld [vmem:[%s321] sm:$0xf]
          %v719 = vld [vmem:[%s321 + $0x4] sm:$0xf]
          %v720 = vld [vmem:[%s321 + $0x8] sm:$0xf]
          %v721 = vld [vmem:[%s321 + $0xc] sm:$0xf]
          %v722 = vld [vmem:[%s321 + $0x10] sm:$0xf]
          %v723 = vld [vmem:[%s321 + $0x14] sm:$0xf]
          %v724 = vld [vmem:[%s321 + $0x18] sm:$0xf]
          %v725 = vld [vmem:[%s321 + $0x1c] sm:$0xf]
          %v726 = vld [vmem:[%s321 + $0x20] sm:$0xf]
          %v727 = vld [vmem:[%s321 + $0x24] sm:$0xf]
          %v728 = vld [vmem:[%s321 + $0x28] sm:$0xf]
          %v729 = vld [vmem:[%s321 + $0x2c] sm:$0xf]
          %v730 = vld [vmem:[%s321 + $0x30] sm:$0xf]
          %v731 = vld [vmem:[%s321 + $0x34] sm:$0xf]
          %v732 = vld [vmem:[%s321 + $0x38] sm:$0xf]
          %v733 = vld [vmem:[%s321 + $0x3c] sm:$0xf]
          %v734 = vld [vmem:[%s3] sm:$0xf]
          %v735 = vld [vmem:[%s3 + $0x4] sm:$0xf]
          %v736 = vld [vmem:[%s3 + $0x8] sm:$0xf]
          %v737 = vld [vmem:[%s3 + $0xc] sm:$0xf]
          %v738 = vld [vmem:[%s3 + $0x10] sm:$0xf]
          %v739 = vld [vmem:[%s3 + $0x14] sm:$0xf]
          %v740 = vld [vmem:[%s3 + $0x18] sm:$0xf]
          %v741 = vld [vmem:[%s3 + $0x1c] sm:$0xf]
          %v742 = vld [vmem:[%s3 + $0x20] sm:$0xf]
          %v743 = vld [vmem:[%s3 + $0x24] sm:$0xf]
          %v744 = vld [vmem:[%s3 + $0x28] sm:$0xf]
          %v745 = vld [vmem:[%s3 + $0x2c] sm:$0xf]
          %v746 = vld [vmem:[%s3 + $0x30] sm:$0xf]
          %v747 = vld [vmem:[%s3 + $0x34] sm:$0xf]
          %v748 = vld [vmem:[%s3 + $0x38] sm:$0xf]
          %v749 = vld [vmem:[%s3 + $0x3c] sm:$0xf]
          %v750 = vld [vmem:[%s3 + $0x40] sm:$0xf]
          %v751 = vld [vmem:[%s3 + $0x44] sm:$0xf]
          %v752 = vld [vmem:[%s3 + $0x48] sm:$0xf]
          %v753 = vld [vmem:[%s3 + $0x4c] sm:$0xf]
          %v754 = vld [vmem:[%s3 + $0x50] sm:$0xf]
          %v755 = vld [vmem:[%s3 + $0x54] sm:$0xf]
          %v756 = vld [vmem:[%s3 + $0x58] sm:$0xf]
          %v757 = vld [vmem:[%s3 + $0x5c] sm:$0xf]
          %v758 = vld [vmem:[%s3 + $0x60] sm:$0xf]
          %v759 = vld [vmem:[%s3 + $0x64] sm:$0xf]
          %v760 = vld [vmem:[%s3 + $0x68] sm:$0xf]
          %v761 = vld [vmem:[%s3 + $0x6c] sm:$0xf]
          %v762 = vld [vmem:[%s3 + $0x70] sm:$0xf]
          %v763 = vld [vmem:[%s3 + $0x74] sm:$0xf]
          %v764 = vld [vmem:[%s3 + $0x78] sm:$0xf]
          %v765 = vld [vmem:[%s3 + $0x7c] sm:$0xf]
          %v782 = vunpack.c.l.b16 %v718
          %v783 = vunpack.c.l.b16 %v719
          %v784 = vunpack.c.l.b16 %v720
          %v785 = vunpack.c.l.b16 %v721
          %v786 = vunpack.c.l.b16 %v722
          %v787 = vunpack.c.l.b16 %v723
          %v788 = vunpack.c.l.b16 %v724
          %v789 = vunpack.c.l.b16 %v725
          %v790 = vunpack.c.l.b16 %v726
          %v791 = vunpack.c.l.b16 %v727
          %v792 = vunpack.c.l.b16 %v728
          %v793 = vunpack.c.l.b16 %v729
          %v794 = vunpack.c.l.b16 %v730
          %v795 = vunpack.c.l.b16 %v731
          %v796 = vunpack.c.l.b16 %v732
          %v797 = vunpack.c.l.b16 %v733
          %v798 = vpack.c.b16 %v783, %v782
          %v799 = vpack.c.b16 %v785, %v784
          %v800 = vpack.c.b16 %v787, %v786
          %v801 = vpack.c.b16 %v789, %v788
          %v802 = vpack.c.b16 %v791, %v790
          %v803 = vpack.c.b16 %v793, %v792
          %v804 = vpack.c.b16 %v795, %v794
          %v805 = vpack.c.b16 %v797, %v796
          %v838 = vunpack.c.l.b16 %v734
          %v839 = vunpack.c.l.b16 %v735
          %v840 = vunpack.c.l.b16 %v736
          %v841 = vunpack.c.l.b16 %v737
          %v842 = vunpack.c.l.b16 %v738
          %v843 = vunpack.c.l.b16 %v739
          %v844 = vunpack.c.l.b16 %v740
          %v845 = vunpack.c.l.b16 %v741
          %v846 = vunpack.c.l.b16 %v742
          %v847 = vunpack.c.l.b16 %v743
          %v848 = vunpack.c.l.b16 %v744
          %v849 = vunpack.c.l.b16 %v745
          %v850 = vunpack.c.l.b16 %v746
          %v851 = vunpack.c.l.b16 %v747
          %v852 = vunpack.c.l.b16 %v748
          %v853 = vunpack.c.l.b16 %v749
          %v854 = vunpack.c.l.b16 %v750
          %v855 = vunpack.c.l.b16 %v751
          %v856 = vunpack.c.l.b16 %v752
          %v857 = vunpack.c.l.b16 %v753
          %v858 = vunpack.c.l.b16 %v754
          %v859 = vunpack.c.l.b16 %v755
          %v860 = vunpack.c.l.b16 %v756
          %v861 = vunpack.c.l.b16 %v757
          %v862 = vunpack.c.l.b16 %v758
          %v863 = vunpack.c.l.b16 %v759
          %v864 = vunpack.c.l.b16 %v760
          %v865 = vunpack.c.l.b16 %v761
          %v866 = vunpack.c.l.b16 %v762
          %v867 = vunpack.c.l.b16 %v763
          %v868 = vunpack.c.l.b16 %v764
          %v869 = vunpack.c.l.b16 %v765
          %v870 = vpack.c.b16 %v839, %v838
          %v871 = vpack.c.b16 %v841, %v840
          %v872 = vpack.c.b16 %v843, %v842
          %v873 = vpack.c.b16 %v845, %v844
          %v874 = vpack.c.b16 %v847, %v846
          %v875 = vpack.c.b16 %v849, %v848
          %v876 = vpack.c.b16 %v851, %v850
          %v877 = vpack.c.b16 %v853, %v852
          %v878 = vpack.c.b16 %v855, %v854
          %v879 = vpack.c.b16 %v857, %v856
          %v880 = vpack.c.b16 %v859, %v858
          %v881 = vpack.c.b16 %v861, %v860
          %v882 = vpack.c.b16 %v863, %v862
          %v883 = vpack.c.b16 %v865, %v864
          %v884 = vpack.c.b16 %v867, %v866
          %v885 = vpack.c.b16 %v869, %v868
          %vm886 = vcmask 64512
          %v888 = vsel %vm886, %v798, 0
          %v891 = vsel %vm886, %v799, 0
          %v894 = vsel %vm886, %v800, 0
          %v897 = vsel %vm886, %v801, 0
          %v900 = vsel %vm886, %v802, 0
          %v903 = vsel %vm886, %v803, 0
          %v906 = vsel %vm886, %v804, 0
          %v909 = vsel %vm886, %v805, 0
          %v912 = vsel %vm886, %v870, 0
          %v915 = vsel %vm886, %v871, 0
          %v918 = vsel %vm886, %v872, 0
          %v921 = vsel %vm886, %v873, 0
          %v924 = vsel %vm886, %v874, 0
          %v927 = vsel %vm886, %v875, 0
          %v930 = vsel %vm886, %v876, 0
          %v933 = vsel %vm886, %v877, 0
          %v936 = vsel %vm886, %v878, 0
          %v939 = vsel %vm886, %v879, 0
          %v942 = vsel %vm886, %v880, 0
          %v945 = vsel %vm886, %v881, 0
          %v948 = vsel %vm886, %v882, 0
          %v951 = vsel %vm886, %v883, 0
          %v954 = vsel %vm886, %v884, 0
          %v957 = vsel %vm886, %v885, 0
          %959 = vmatpush.bf16.xpose.msra.mxu0 %v933
          %960 = vmatpush.bf16.xpose.msra.mxu0 %v930
          %961 = vmatpush.bf16.xpose.msra.mxu0 %v927
          %962 = vmatpush.bf16.xpose.msra.mxu0 %v924
          %963 = vmatpush.bf16.xpose.msra.mxu0 %v921
          %964 = vmatpush.bf16.xpose.msra.mxu0 %v918
          %965 = vmatpush.bf16.xpose.msra.mxu0 %v915
          %966 = vmatpush.bf16.xpose.msra.mxu0 %v912
          %967 = vmatmul.bf16.gmra.mxu0 %v888
          %v968 = vpop.f32.mrf.mxu0
          %v969 = vadd.f32 0.0, %v968
          %v970 = vpop.f32.mrf.mxu0
          %v971 = vadd.f32 0.0, %v970
          %972 = vmatmul.bf16.gmra.mxu0 %v891
          %v973 = vpop.f32.mrf.mxu0
          %v974 = vadd.f32 0.0, %v973
          %v975 = vpop.f32.mrf.mxu0
          %v976 = vadd.f32 0.0, %v975
          %977 = vmatmul.bf16.gmra.mxu0 %v894
          %v978 = vpop.f32.mrf.mxu0
          %v979 = vadd.f32 0.0, %v978
          %v980 = vpop.f32.mrf.mxu0
          %v981 = vadd.f32 0.0, %v980
          %982 = vmatmul.bf16.gmra.mxu0 %v897
          %v983 = vpop.f32.mrf.mxu0
          %v984 = vadd.f32 0.0, %v983
          %v985 = vpop.f32.mrf.mxu0
          %v986 = vadd.f32 0.0, %v985
          %987 = vmatmul.bf16.gmra.mxu0 %v900
          %v988 = vpop.f32.mrf.mxu0
          %v989 = vadd.f32 0.0, %v988
          %v990 = vpop.f32.mrf.mxu0
          %v991 = vadd.f32 0.0, %v990
          %992 = vmatmul.bf16.gmra.mxu0 %v903
          %v993 = vpop.f32.mrf.mxu0
          %v994 = vadd.f32 0.0, %v993
          %v995 = vpop.f32.mrf.mxu0
          %v996 = vadd.f32 0.0, %v995
          %997 = vmatmul.bf16.gmra.mxu0 %v906
          %v998 = vpop.f32.mrf.mxu0
          %v999 = vadd.f32 0.0, %v998
          %v1000 = vpop.f32.mrf.mxu0
          %v1001 = vadd.f32 0.0, %v1000
          %1002 = vmatmul.bf16.gmra.mxu0 %v909
          %v1003 = vpop.f32.mrf.mxu0
          %v1004 = vadd.f32 0.0, %v1003
          %v1005 = vpop.f32.mrf.mxu0
          %v1006 = vadd.f32 0.0, %v1005
          %1007 = vdwg.mxu0
          %1008 = vmatpush.bf16.xpose.msra.mxu0 %v957
          %1009 = vmatpush.bf16.xpose.msra.mxu0 %v954
          %1010 = vmatpush.bf16.xpose.msra.mxu0 %v951
          %1011 = vmatpush.bf16.xpose.msra.mxu0 %v948
          %1012 = vmatpush.bf16.xpose.msra.mxu0 %v945
          %1013 = vmatpush.bf16.xpose.msra.mxu0 %v942
          %1014 = vmatpush.bf16.xpose.msra.mxu0 %v939
          %1015 = vmatpush.bf16.xpose.msra.mxu0 %v936
          %1016 = vmatmul.bf16.gmra.mxu0 %v888
          %v1017 = vpop.f32.mrf.mxu0
          %v1018 = vadd.f32 0.0, %v1017
          %v1019 = vpop.f32.mrf.mxu0
          %v1020 = vadd.f32 0.0, %v1019
          %1021 = vmatmul.bf16.gmra.mxu0 %v891
          %v1022 = vpop.f32.mrf.mxu0
          %v1023 = vadd.f32 0.0, %v1022
          %v1024 = vpop.f32.mrf.mxu0
          %v1025 = vadd.f32 0.0, %v1024
          %1026 = vmatmul.bf16.gmra.mxu0 %v894
          %v1027 = vpop.f32.mrf.mxu0
          %v1028 = vadd.f32 0.0, %v1027
          %v1029 = vpop.f32.mrf.mxu0
          %v1030 = vadd.f32 0.0, %v1029
          %1031 = vmatmul.bf16.gmra.mxu0 %v897
          %v1032 = vpop.f32.mrf.mxu0
          %v1033 = vadd.f32 0.0, %v1032
          %v1034 = vpop.f32.mrf.mxu0
          %v1035 = vadd.f32 0.0, %v1034
          %1036 = vmatmul.bf16.gmra.mxu0 %v900
          %v1037 = vpop.f32.mrf.mxu0
          %v1038 = vadd.f32 0.0, %v1037
          %v1039 = vpop.f32.mrf.mxu0
          %v1040 = vadd.f32 0.0, %v1039
          %1041 = vmatmul.bf16.gmra.mxu0 %v903
          %v1042 = vpop.f32.mrf.mxu0
          %v1043 = vadd.f32 0.0, %v1042
          %v1044 = vpop.f32.mrf.mxu0
          %v1045 = vadd.f32 0.0, %v1044
          %1046 = vmatmul.bf16.gmra.mxu0 %v906
          %v1047 = vpop.f32.mrf.mxu0
          %v1048 = vadd.f32 0.0, %v1047
          %v1049 = vpop.f32.mrf.mxu0
          %v1050 = vadd.f32 0.0, %v1049
          %1051 = vmatmul.bf16.gmra.mxu0 %v909
          %v1052 = vpop.f32.mrf.mxu0
          %v1053 = vadd.f32 0.0, %v1052
          %v1054 = vpop.f32.mrf.mxu0
          %v1055 = vadd.f32 0.0, %v1054
          %1056 = vdwg.mxu0
          %v1057 = vpack.c.bf16 %v1018, %v969
          %v1058 = vpack.c.bf16 %v1020, %v971
          %v1059 = vpack.c.bf16 %v1023, %v974
          %v1060 = vpack.c.bf16 %v1025, %v976
          %v1061 = vpack.c.bf16 %v1028, %v979
          %v1062 = vpack.c.bf16 %v1030, %v981
          %v1063 = vpack.c.bf16 %v1033, %v984
          %v1064 = vpack.c.bf16 %v1035, %v986
          %v1065 = vpack.c.bf16 %v1038, %v989
          %v1066 = vpack.c.bf16 %v1040, %v991
          %v1067 = vpack.c.bf16 %v1043, %v994
          %v1068 = vpack.c.bf16 %v1045, %v996
          %v1069 = vpack.c.bf16 %v1048, %v999
          %v1070 = vpack.c.bf16 %v1050, %v1001
          %v1071 = vpack.c.bf16 %v1053, %v1004
          %v1072 = vpack.c.bf16 %v1055, %v1006
          %v1073 = vld [vmem:[#allocation2] sm:$0xf]
          %v1074 = vld [vmem:[#allocation2 + $0x4] sm:$0xf]
          %v1075 = vld [vmem:[#allocation2 + $0x8] sm:$0xf]
          %v1076 = vld [vmem:[#allocation2 + $0xc] sm:$0xf]
          %v1077 = vld [vmem:[#allocation2 + $0x10] sm:$0xf]
          %v1078 = vld [vmem:[#allocation2 + $0x14] sm:$0xf]
          %v1079 = vld [vmem:[#allocation2 + $0x18] sm:$0xf]
          %v1080 = vld [vmem:[#allocation2 + $0x1c] sm:$0xf]
          %v1081 = vld [vmem:[#allocation2 + $0x20] sm:$0xf]
          %v1082 = vld [vmem:[#allocation2 + $0x24] sm:$0xf]
          %v1083 = vld [vmem:[#allocation2 + $0x28] sm:$0xf]
          %v1084 = vld [vmem:[#allocation2 + $0x2c] sm:$0xf]
          %v1085 = vld [vmem:[#allocation2 + $0x30] sm:$0xf]
          %v1086 = vld [vmem:[#allocation2 + $0x34] sm:$0xf]
          %v1087 = vld [vmem:[#allocation2 + $0x38] sm:$0xf]
          %v1088 = vld [vmem:[#allocation2 + $0x3c] sm:$0xf]
          %v1105 = vunpack.c.l.b16 %v1073
          %v1106 = vunpack.c.l.b16 %v1074
          %v1107 = vunpack.c.l.b16 %v1075
          %v1108 = vunpack.c.l.b16 %v1076
          %v1109 = vunpack.c.l.b16 %v1077
          %v1110 = vunpack.c.l.b16 %v1078
          %v1111 = vunpack.c.l.b16 %v1079
          %v1112 = vunpack.c.l.b16 %v1080
          %v1113 = vunpack.c.l.b16 %v1081
          %v1114 = vunpack.c.l.b16 %v1082
          %v1115 = vunpack.c.l.b16 %v1083
          %v1116 = vunpack.c.l.b16 %v1084
          %v1117 = vunpack.c.l.b16 %v1085
          %v1118 = vunpack.c.l.b16 %v1086
          %v1119 = vunpack.c.l.b16 %v1087
          %v1120 = vunpack.c.l.b16 %v1088
          %v1121 = vpack.c.b16 %v1106, %v1105
          %v1122 = vpack.c.b16 %v1108, %v1107
          %v1123 = vpack.c.b16 %v1110, %v1109
          %v1124 = vpack.c.b16 %v1112, %v1111
          %v1125 = vpack.c.b16 %v1114, %v1113
          %v1126 = vpack.c.b16 %v1116, %v1115
          %v1127 = vpack.c.b16 %v1118, %v1117
          %v1128 = vpack.c.b16 %v1120, %v1119
          %v1145 = vunpack.c.l.b16 %v1057
          %v1146 = vunpack.c.l.b16 %v1058
          %v1147 = vunpack.c.l.b16 %v1059
          %v1148 = vunpack.c.l.b16 %v1060
          %v1149 = vunpack.c.l.b16 %v1061
          %v1150 = vunpack.c.l.b16 %v1062
          %v1151 = vunpack.c.l.b16 %v1063
          %v1152 = vunpack.c.l.b16 %v1064
          %v1153 = vunpack.c.l.b16 %v1065
          %v1154 = vunpack.c.l.b16 %v1066
          %v1155 = vunpack.c.l.b16 %v1067
          %v1156 = vunpack.c.l.b16 %v1068
          %v1157 = vunpack.c.l.b16 %v1069
          %v1158 = vunpack.c.l.b16 %v1070
          %v1159 = vunpack.c.l.b16 %v1071
          %v1160 = vunpack.c.l.b16 %v1072
          %v1161 = vpack.c.b16 %v1146, %v1145
          %v1162 = vpack.c.b16 %v1148, %v1147
          %v1163 = vpack.c.b16 %v1150, %v1149
          %v1164 = vpack.c.b16 %v1152, %v1151
          %v1165 = vpack.c.b16 %v1154, %v1153
          %v1166 = vpack.c.b16 %v1156, %v1155
          %v1167 = vpack.c.b16 %v1158, %v1157
          %v1168 = vpack.c.b16 %v1160, %v1159
          %vm1169 = vcmask 261120
          %v1171 = vsel %vm1169, %v1121, 0
          %v1174 = vsel %vm1169, %v1122, 0
          %v1177 = vsel %vm1169, %v1123, 0
          %v1180 = vsel %vm1169, %v1124, 0
          %v1183 = vsel %vm1169, %v1125, 0
          %v1186 = vsel %vm1169, %v1126, 0
          %v1189 = vsel %vm1169, %v1127, 0
          %v1192 = vsel %vm1169, %v1128, 0
          %v1195 = vsel %vm1169, %v1161, 0
          %v1198 = vsel %vm1169, %v1162, 0
          %v1201 = vsel %vm1169, %v1163, 0
          %v1204 = vsel %vm1169, %v1164, 0
          %v1207 = vsel %vm1169, %v1165, 0
          %v1210 = vsel %vm1169, %v1166, 0
          %v1213 = vsel %vm1169, %v1167, 0
          %v1216 = vsel %vm1169, %v1168, 0
          %1218 = vmatpush.bf16.xpose.msra.mxu0 %v1216
          %1219 = vmatpush.bf16.xpose.msra.mxu0 %v1213
          %1220 = vmatpush.bf16.xpose.msra.mxu0 %v1210
          %1221 = vmatpush.bf16.xpose.msra.mxu0 %v1207
          %1222 = vmatpush.bf16.xpose.msra.mxu0 %v1204
          %1223 = vmatpush.bf16.xpose.msra.mxu0 %v1201
          %1224 = vmatpush.bf16.xpose.msra.mxu0 %v1198
          %1225 = vmatpush.bf16.xpose.msra.mxu0 %v1195
          %1226 = vmatmul.bf16.gmra.mxu0 %v1171
          %v1227 = vpop.f32.mrf.mxu0
          %v1228 = vadd.f32 0.0, %v1227
          %v1229 = vpop.f32.mrf.mxu0
          %v1230 = vadd.f32 0.0, %v1229
          %1231 = vmatmul.bf16.gmra.mxu0 %v1174
          %v1232 = vpop.f32.mrf.mxu0
          %v1233 = vadd.f32 0.0, %v1232
          %v1234 = vpop.f32.mrf.mxu0
          %v1235 = vadd.f32 0.0, %v1234
          %1236 = vmatmul.bf16.gmra.mxu0 %v1177
          %v1237 = vpop.f32.mrf.mxu0
          %v1238 = vadd.f32 0.0, %v1237
          %v1239 = vpop.f32.mrf.mxu0
          %v1240 = vadd.f32 0.0, %v1239
          %1241 = vmatmul.bf16.gmra.mxu0 %v1180
          %v1242 = vpop.f32.mrf.mxu0
          %v1243 = vadd.f32 0.0, %v1242
          %v1244 = vpop.f32.mrf.mxu0
          %v1245 = vadd.f32 0.0, %v1244
          %1246 = vmatmul.bf16.gmra.mxu0 %v1183
          %v1247 = vpop.f32.mrf.mxu0
          %v1248 = vadd.f32 0.0, %v1247
          %v1249 = vpop.f32.mrf.mxu0
          %v1250 = vadd.f32 0.0, %v1249
          %1251 = vmatmul.bf16.gmra.mxu0 %v1186
          %v1252 = vpop.f32.mrf.mxu0
          %v1253 = vadd.f32 0.0, %v1252
          %v1254 = vpop.f32.mrf.mxu0
          %v1255 = vadd.f32 0.0, %v1254
          %1256 = vmatmul.bf16.gmra.mxu0 %v1189
          %v1257 = vpop.f32.mrf.mxu0
          %v1258 = vadd.f32 0.0, %v1257
          %v1259 = vpop.f32.mrf.mxu0
          %v1260 = vadd.f32 0.0, %v1259
          %1261 = vmatmul.bf16.gmra.mxu0 %v1192
          %v1262 = vpop.f32.mrf.mxu0
          %v1263 = vadd.f32 0.0, %v1262
          %v1264 = vpop.f32.mrf.mxu0
          %v1265 = vadd.f32 0.0, %v1264
          %1266 = vdwg.mxu0
          %v1267 = vld [vmem:[#allocation3] sm:$0xff]
          %v1268 = vld [vmem:[#allocation3 + $0x8] sm:$0xff]
          %v1269 = vld [vmem:[#allocation3 + $0x10] sm:$0xff]
          %v1270 = vld [vmem:[#allocation3 + $0x18] sm:$0xff]
          %v1271 = vld [vmem:[#allocation3 + $0x20] sm:$0xff]
          %v1272 = vld [vmem:[#allocation3 + $0x28] sm:$0xff]
          %v1273 = vld [vmem:[#allocation3 + $0x30] sm:$0xff]
          %v1274 = vld [vmem:[#allocation3 + $0x38] sm:$0xff]
          %v1275 = vld [vmem:[#allocation3 + $0x40] sm:$0xff]
          %v1276 = vld [vmem:[#allocation3 + $0x48] sm:$0xff]
          %v1277 = vld [vmem:[#allocation3 + $0x50] sm:$0xff]
          %v1278 = vld [vmem:[#allocation3 + $0x58] sm:$0xff]
          %v1279 = vld [vmem:[#allocation3 + $0x60] sm:$0xff]
          %v1280 = vld [vmem:[#allocation3 + $0x68] sm:$0xff]
          %v1281 = vld [vmem:[#allocation3 + $0x70] sm:$0xff]
          %v1282 = vld [vmem:[#allocation3 + $0x78] sm:$0xff]
          %1283 = vmax.xlane.f32.xlu0 %v1228
          %v1284 = vpop.xlane.xlu0 %1283
          %1285 = vmax.xlane.f32.xlu0 %v1230
          %v1286 = vpop.xlane.xlu0 %1285
          %1287 = vmax.xlane.f32.xlu0 %v1233
          %v1288 = vpop.xlane.xlu0 %1287
          %1289 = vmax.xlane.f32.xlu0 %v1235
          %v1290 = vpop.xlane.xlu0 %1289
          %1291 = vmax.xlane.f32.xlu0 %v1238
          %v1292 = vpop.xlane.xlu0 %1291
          %1293 = vmax.xlane.f32.xlu0 %v1240
          %v1294 = vpop.xlane.xlu0 %1293
          %1295 = vmax.xlane.f32.xlu0 %v1243
          %v1296 = vpop.xlane.xlu0 %1295
          %1297 = vmax.xlane.f32.xlu0 %v1245
          %v1298 = vpop.xlane.xlu0 %1297
          %1299 = vmax.xlane.f32.xlu0 %v1248
          %v1300 = vpop.xlane.xlu0 %1299
          %1301 = vmax.xlane.f32.xlu0 %v1250
          %v1302 = vpop.xlane.xlu0 %1301
          %1303 = vmax.xlane.f32.xlu0 %v1253
          %v1304 = vpop.xlane.xlu0 %1303
          %1305 = vmax.xlane.f32.xlu0 %v1255
          %v1306 = vpop.xlane.xlu0 %1305
          %1307 = vmax.xlane.f32.xlu0 %v1258
          %v1308 = vpop.xlane.xlu0 %1307
          %1309 = vmax.xlane.f32.xlu0 %v1260
          %v1310 = vpop.xlane.xlu0 %1309
          %1311 = vmax.xlane.f32.xlu0 %v1263
          %v1312 = vpop.xlane.xlu0 %1311
          %1313 = vmax.xlane.f32.xlu0 %v1265
          %v1314 = vpop.xlane.xlu0 %1313
          %v1315 = vmax.f32 %v1267, %v1284
          %v1316 = vmax.f32 %v1268, %v1286
          %v1317 = vmax.f32 %v1269, %v1288
          %v1318 = vmax.f32 %v1270, %v1290
          %v1319 = vmax.f32 %v1271, %v1292
          %v1320 = vmax.f32 %v1272, %v1294
          %v1321 = vmax.f32 %v1273, %v1296
          %v1322 = vmax.f32 %v1274, %v1298
          %v1323 = vmax.f32 %v1275, %v1300
          %v1324 = vmax.f32 %v1276, %v1302
          %v1325 = vmax.f32 %v1277, %v1304
          %v1326 = vmax.f32 %v1278, %v1306
          %v1327 = vmax.f32 %v1279, %v1308
          %v1328 = vmax.f32 %v1280, %v1310
          %v1329 = vmax.f32 %v1281, %v1312
          %v1330 = vmax.f32 %v1282, %v1314
          %v1331 = vsub.f32 %v1267, %v1315
          %v1332 = vsub.f32 %v1268, %v1316
          %v1333 = vsub.f32 %v1269, %v1317
          %v1334 = vsub.f32 %v1270, %v1318
          %v1335 = vsub.f32 %v1271, %v1319
          %v1336 = vsub.f32 %v1272, %v1320
          %v1337 = vsub.f32 %v1273, %v1321
          %v1338 = vsub.f32 %v1274, %v1322
          %v1339 = vsub.f32 %v1275, %v1323
          %v1340 = vsub.f32 %v1276, %v1324
          %v1341 = vsub.f32 %v1277, %v1325
          %v1342 = vsub.f32 %v1278, %v1326
          %v1343 = vsub.f32 %v1279, %v1327
          %v1344 = vsub.f32 %v1280, %v1328
          %v1345 = vsub.f32 %v1281, %v1329
          %v1346 = vsub.f32 %v1282, %v1330
          %v1347 = vmul.f32 %v1331, 1.442695
          %v1348 = vpow.pop %v1347
          %v1349 = vmul.f32 %v1332, 1.442695
          %v1350 = vpow.pop %v1349
          %v1351 = vmul.f32 %v1333, 1.442695
          %v1352 = vpow.pop %v1351
          %v1353 = vmul.f32 %v1334, 1.442695
          %v1354 = vpow.pop %v1353
          %v1355 = vmul.f32 %v1335, 1.442695
          %v1356 = vpow.pop %v1355
          %v1357 = vmul.f32 %v1336, 1.442695
          %v1358 = vpow.pop %v1357
          %v1359 = vmul.f32 %v1337, 1.442695
          %v1360 = vpow.pop %v1359
          %v1361 = vmul.f32 %v1338, 1.442695
          %v1362 = vpow.pop %v1361
          %v1363 = vmul.f32 %v1339, 1.442695
          %v1364 = vpow.pop %v1363
          %v1365 = vmul.f32 %v1340, 1.442695
          %v1366 = vpow.pop %v1365
          %v1367 = vmul.f32 %v1341, 1.442695
          %v1368 = vpow.pop %v1367
          %v1369 = vmul.f32 %v1342, 1.442695
          %v1370 = vpow.pop %v1369
          %v1371 = vmul.f32 %v1343, 1.442695
          %v1372 = vpow.pop %v1371
          %v1373 = vmul.f32 %v1344, 1.442695
          %v1374 = vpow.pop %v1373
          %v1375 = vmul.f32 %v1345, 1.442695
          %v1376 = vpow.pop %v1375
          %v1377 = vmul.f32 %v1346, 1.442695
          %v1378 = vpow.pop %v1377
          %1380 = vset.pattern.permute.xlu0 0
          %1381 = vperm.xlu0 %1380, %v1315
          %v1382 = vpop.permute.xlu0 %1381
          %1385 = vset.pattern.permute.xlu0 0
          %1386 = vperm.xlu0 %1385, %v1316
          %v1387 = vpop.permute.xlu0 %1386
          %1390 = vset.pattern.permute.xlu0 0
          %1391 = vperm.xlu0 %1390, %v1317
          %v1392 = vpop.permute.xlu0 %1391
          %1395 = vset.pattern.permute.xlu0 0
          %1396 = vperm.xlu0 %1395, %v1318
          %v1397 = vpop.permute.xlu0 %1396
          %1400 = vset.pattern.permute.xlu0 0
          %1401 = vperm.xlu0 %1400, %v1319
          %v1402 = vpop.permute.xlu0 %1401
          %1405 = vset.pattern.permute.xlu0 0
          %1406 = vperm.xlu0 %1405, %v1320
          %v1407 = vpop.permute.xlu0 %1406
          %1410 = vset.pattern.permute.xlu0 0
          %1411 = vperm.xlu0 %1410, %v1321
          %v1412 = vpop.permute.xlu0 %1411
          %1415 = vset.pattern.permute.xlu0 0
          %1416 = vperm.xlu0 %1415, %v1322
          %v1417 = vpop.permute.xlu0 %1416
          %1420 = vset.pattern.permute.xlu0 0
          %1421 = vperm.xlu0 %1420, %v1323
          %v1422 = vpop.permute.xlu0 %1421
          %1425 = vset.pattern.permute.xlu0 0
          %1426 = vperm.xlu0 %1425, %v1324
          %v1427 = vpop.permute.xlu0 %1426
          %1430 = vset.pattern.permute.xlu0 0
          %1431 = vperm.xlu0 %1430, %v1325
          %v1432 = vpop.permute.xlu0 %1431
          %1435 = vset.pattern.permute.xlu0 0
          %1436 = vperm.xlu0 %1435, %v1326
          %v1437 = vpop.permute.xlu0 %1436
          %1440 = vset.pattern.permute.xlu0 0
          %1441 = vperm.xlu0 %1440, %v1327
          %v1442 = vpop.permute.xlu0 %1441
          %1445 = vset.pattern.permute.xlu0 0
          %1446 = vperm.xlu0 %1445, %v1328
          %v1447 = vpop.permute.xlu0 %1446
          %1450 = vset.pattern.permute.xlu0 0
          %1451 = vperm.xlu0 %1450, %v1329
          %v1452 = vpop.permute.xlu0 %1451
          %1455 = vset.pattern.permute.xlu0 0
          %1456 = vperm.xlu0 %1455, %v1330
          %v1457 = vpop.permute.xlu0 %1456
          %v1459 = vsub.f32 %v1228, %v1382
          %v1460 = vsub.f32 %v1230, %v1387
          %v1461 = vsub.f32 %v1233, %v1392
          %v1462 = vsub.f32 %v1235, %v1397
          %v1463 = vsub.f32 %v1238, %v1402
          %v1464 = vsub.f32 %v1240, %v1407
          %v1465 = vsub.f32 %v1243, %v1412
          %v1466 = vsub.f32 %v1245, %v1417
          %v1467 = vsub.f32 %v1248, %v1422
          %v1468 = vsub.f32 %v1250, %v1427
          %v1469 = vsub.f32 %v1253, %v1432
          %v1470 = vsub.f32 %v1255, %v1437
          %v1471 = vsub.f32 %v1258, %v1442
          %v1472 = vsub.f32 %v1260, %v1447
          %v1473 = vsub.f32 %v1263, %v1452
          %v1474 = vsub.f32 %v1265, %v1457
          %v1475 = vmul.f32 %v1459, 1.442695
          %v1476 = vpow.pop %v1475
          %v1477 = vmul.f32 %v1460, 1.442695
          %v1478 = vpow.pop %v1477
          %v1479 = vmul.f32 %v1461, 1.442695
          %v1480 = vpow.pop %v1479
          %v1481 = vmul.f32 %v1462, 1.442695
          %v1482 = vpow.pop %v1481
          %v1483 = vmul.f32 %v1463, 1.442695
          %v1484 = vpow.pop %v1483
          %v1485 = vmul.f32 %v1464, 1.442695
          %v1486 = vpow.pop %v1485
          %v1487 = vmul.f32 %v1465, 1.442695
          %v1488 = vpow.pop %v1487
          %v1489 = vmul.f32 %v1466, 1.442695
          %v1490 = vpow.pop %v1489
          %v1491 = vmul.f32 %v1467, 1.442695
          %v1492 = vpow.pop %v1491
          %v1493 = vmul.f32 %v1468, 1.442695
          %v1494 = vpow.pop %v1493
          %v1495 = vmul.f32 %v1469, 1.442695
          %v1496 = vpow.pop %v1495
          %v1497 = vmul.f32 %v1470, 1.442695
          %v1498 = vpow.pop %v1497
          %v1499 = vmul.f32 %v1471, 1.442695
          %v1500 = vpow.pop %v1499
          %v1501 = vmul.f32 %v1472, 1.442695
          %v1502 = vpow.pop %v1501
          %v1503 = vmul.f32 %v1473, 1.442695
          %v1504 = vpow.pop %v1503
          %v1505 = vmul.f32 %v1474, 1.442695
          %v1506 = vpow.pop %v1505
          %v1507 = vld [vmem:[#allocation4] sm:$0xff]
          %v1508 = vld [vmem:[#allocation4 + $0x8] sm:$0xff]
          %v1509 = vld [vmem:[#allocation4 + $0x10] sm:$0xff]
          %v1510 = vld [vmem:[#allocation4 + $0x18] sm:$0xff]
          %v1511 = vld [vmem:[#allocation4 + $0x20] sm:$0xff]
          %v1512 = vld [vmem:[#allocation4 + $0x28] sm:$0xff]
          %v1513 = vld [vmem:[#allocation4 + $0x30] sm:$0xff]
          %v1514 = vld [vmem:[#allocation4 + $0x38] sm:$0xff]
          %v1515 = vld [vmem:[#allocation4 + $0x40] sm:$0xff]
          %v1516 = vld [vmem:[#allocation4 + $0x48] sm:$0xff]
          %v1517 = vld [vmem:[#allocation4 + $0x50] sm:$0xff]
          %v1518 = vld [vmem:[#allocation4 + $0x58] sm:$0xff]
          %v1519 = vld [vmem:[#allocation4 + $0x60] sm:$0xff]
          %v1520 = vld [vmem:[#allocation4 + $0x68] sm:$0xff]
          %v1521 = vld [vmem:[#allocation4 + $0x70] sm:$0xff]
          %v1522 = vld [vmem:[#allocation4 + $0x78] sm:$0xff]
          %v1523 = vmul.f32 %v1348, %v1507
          %v1524 = vmul.f32 %v1350, %v1508
          %v1525 = vmul.f32 %v1352, %v1509
          %v1526 = vmul.f32 %v1354, %v1510
          %v1527 = vmul.f32 %v1356, %v1511
          %v1528 = vmul.f32 %v1358, %v1512
          %v1529 = vmul.f32 %v1360, %v1513
          %v1530 = vmul.f32 %v1362, %v1514
          %v1531 = vmul.f32 %v1364, %v1515
          %v1532 = vmul.f32 %v1366, %v1516
          %v1533 = vmul.f32 %v1368, %v1517
          %v1534 = vmul.f32 %v1370, %v1518
          %v1535 = vmul.f32 %v1372, %v1519
          %v1536 = vmul.f32 %v1374, %v1520
          %v1537 = vmul.f32 %v1376, %v1521
          %v1538 = vmul.f32 %v1378, %v1522
          %1539 = vadd.xlane.f32.xlu0 %v1476
          %v1540 = vpop.xlane.xlu0 %1539
          %1541 = vadd.xlane.f32.xlu0 %v1478
          %v1542 = vpop.xlane.xlu0 %1541
          %1543 = vadd.xlane.f32.xlu0 %v1480
          %v1544 = vpop.xlane.xlu0 %1543
          %1545 = vadd.xlane.f32.xlu0 %v1482
          %v1546 = vpop.xlane.xlu0 %1545
          %1547 = vadd.xlane.f32.xlu0 %v1484
          %v1548 = vpop.xlane.xlu0 %1547
          %1549 = vadd.xlane.f32.xlu0 %v1486
          %v1550 = vpop.xlane.xlu0 %1549
          %1551 = vadd.xlane.f32.xlu0 %v1488
          %v1552 = vpop.xlane.xlu0 %1551
          %1553 = vadd.xlane.f32.xlu0 %v1490
          %v1554 = vpop.xlane.xlu0 %1553
          %1555 = vadd.xlane.f32.xlu0 %v1492
          %v1556 = vpop.xlane.xlu0 %1555
          %1557 = vadd.xlane.f32.xlu0 %v1494
          %v1558 = vpop.xlane.xlu0 %1557
          %1559 = vadd.xlane.f32.xlu0 %v1496
          %v1560 = vpop.xlane.xlu0 %1559
          %1561 = vadd.xlane.f32.xlu0 %v1498
          %v1562 = vpop.xlane.xlu0 %1561
          %1563 = vadd.xlane.f32.xlu0 %v1500
          %v1564 = vpop.xlane.xlu0 %1563
          %1565 = vadd.xlane.f32.xlu0 %v1502
          %v1566 = vpop.xlane.xlu0 %1565
          %1567 = vadd.xlane.f32.xlu0 %v1504
          %v1568 = vpop.xlane.xlu0 %1567
          %1569 = vadd.xlane.f32.xlu0 %v1506
          %v1570 = vpop.xlane.xlu0 %1569
          %v1571 = vadd.f32 %v1523, %v1540
          %v1572 = vadd.f32 %v1524, %v1542
          %v1573 = vadd.f32 %v1525, %v1544
          %v1574 = vadd.f32 %v1526, %v1546
          %v1575 = vadd.f32 %v1527, %v1548
          %v1576 = vadd.f32 %v1528, %v1550
          %v1577 = vadd.f32 %v1529, %v1552
          %v1578 = vadd.f32 %v1530, %v1554
          %v1579 = vadd.f32 %v1531, %v1556
          %v1580 = vadd.f32 %v1532, %v1558
          %v1581 = vadd.f32 %v1533, %v1560
          %v1582 = vadd.f32 %v1534, %v1562
          %v1583 = vadd.f32 %v1535, %v1564
          %v1584 = vadd.f32 %v1536, %v1566
          %v1585 = vadd.f32 %v1537, %v1568
          %v1586 = vadd.f32 %v1538, %v1570
          %vm1587 = vcmask 7168
          %1588 = vst.msk [vmem:[#allocation4] sm:$0xff] %vm1587, %v1571
          %1589 = vst.msk [vmem:[#allocation4 + $0x8] sm:$0xff] %vm1587, %v1572
          %1590 = vst.msk [vmem:[#allocation4 + $0x10] sm:$0xff] %vm1587, %v1573
          %1591 = vst.msk [vmem:[#allocation4 + $0x18] sm:$0xff] %vm1587, %v1574
          %1592 = vst.msk [vmem:[#allocation4 + $0x20] sm:$0xff] %vm1587, %v1575
          %1593 = vst.msk [vmem:[#allocation4 + $0x28] sm:$0xff] %vm1587, %v1576
          %1594 = vst.msk [vmem:[#allocation4 + $0x30] sm:$0xff] %vm1587, %v1577
          %1595 = vst.msk [vmem:[#allocation4 + $0x38] sm:$0xff] %vm1587, %v1578
          %1596 = vst.msk [vmem:[#allocation4 + $0x40] sm:$0xff] %vm1587, %v1579
          %1597 = vst.msk [vmem:[#allocation4 + $0x48] sm:$0xff] %vm1587, %v1580
          %1598 = vst.msk [vmem:[#allocation4 + $0x50] sm:$0xff] %vm1587, %v1581
          %1599 = vst.msk [vmem:[#allocation4 + $0x58] sm:$0xff] %vm1587, %v1582
          %1600 = vst.msk [vmem:[#allocation4 + $0x60] sm:$0xff] %vm1587, %v1583
          %1601 = vst.msk [vmem:[#allocation4 + $0x68] sm:$0xff] %vm1587, %v1584
          %1602 = vst.msk [vmem:[#allocation4 + $0x70] sm:$0xff] %vm1587, %v1585
          %1603 = vst.msk [vmem:[#allocation4 + $0x78] sm:$0xff] %vm1587, %v1586
          %v1604 = vpack.c.bf16 %v1478, %v1476
          %v1605 = vpack.c.bf16 %v1482, %v1480
          %v1606 = vpack.c.bf16 %v1486, %v1484
          %v1607 = vpack.c.bf16 %v1490, %v1488
          %v1608 = vpack.c.bf16 %v1494, %v1492
          %v1609 = vpack.c.bf16 %v1498, %v1496
          %v1610 = vpack.c.bf16 %v1502, %v1500
          %v1611 = vpack.c.bf16 %v1506, %v1504
          %v1612 = vunpack.c.h.b16 %v1057
          %v1613 = vunpack.c.h.b16 %v1058
          %v1614 = vunpack.c.h.b16 %v1059
          %v1615 = vunpack.c.h.b16 %v1060
          %v1616 = vunpack.c.h.b16 %v1061
          %v1617 = vunpack.c.h.b16 %v1062
          %v1618 = vunpack.c.h.b16 %v1063
          %v1619 = vunpack.c.h.b16 %v1064
          %v1620 = vunpack.c.h.b16 %v1065
          %v1621 = vunpack.c.h.b16 %v1066
          %v1622 = vunpack.c.h.b16 %v1067
          %v1623 = vunpack.c.h.b16 %v1068
          %v1624 = vunpack.c.h.b16 %v1069
          %v1625 = vunpack.c.h.b16 %v1070
          %v1626 = vunpack.c.h.b16 %v1071
          %v1627 = vunpack.c.h.b16 %v1072
          %v1628 = vpack.c.b16 %v1613, %v1612
          %v1629 = vpack.c.b16 %v1615, %v1614
          %v1630 = vpack.c.b16 %v1617, %v1616
          %v1631 = vpack.c.b16 %v1619, %v1618
          %v1632 = vpack.c.b16 %v1621, %v1620
          %v1633 = vpack.c.b16 %v1623, %v1622
          %v1634 = vpack.c.b16 %v1625, %v1624
          %v1635 = vpack.c.b16 %v1627, %v1626
          %1644 = vmatpush.bf16.msra.mxu0 %v1635
          %1645 = vmatpush.bf16.msra.mxu0 %v1634
          %1646 = vmatpush.bf16.msra.mxu0 %v1633
          %1647 = vmatpush.bf16.msra.mxu0 %v1632
          %1648 = vmatpush.bf16.msra.mxu0 %v1631
          %1649 = vmatpush.bf16.msra.mxu0 %v1630
          %1650 = vmatpush.bf16.msra.mxu0 %v1629
          %1651 = vmatpush.bf16.msra.mxu0 %v1628
          %1652 = vmatmul.bf16.gmra.mxu0 %v1604
          %v1653 = vpop.f32.mrf.mxu0
          %v1654 = vadd.f32 0.0, %v1653
          %v1655 = vpop.f32.mrf.mxu0
          %v1656 = vadd.f32 0.0, %v1655
          %1657 = vmatmul.bf16.gmra.mxu0 %v1605
          %v1658 = vpop.f32.mrf.mxu0
          %v1659 = vadd.f32 0.0, %v1658
          %v1660 = vpop.f32.mrf.mxu0
          %v1661 = vadd.f32 0.0, %v1660
          %1662 = vmatmul.bf16.gmra.mxu0 %v1606
          %v1663 = vpop.f32.mrf.mxu0
          %v1664 = vadd.f32 0.0, %v1663
          %v1665 = vpop.f32.mrf.mxu0
          %v1666 = vadd.f32 0.0, %v1665
          %1667 = vmatmul.bf16.gmra.mxu0 %v1607
          %v1668 = vpop.f32.mrf.mxu0
          %v1669 = vadd.f32 0.0, %v1668
          %v1670 = vpop.f32.mrf.mxu0
          %v1671 = vadd.f32 0.0, %v1670
          %1672 = vmatmul.bf16.gmra.mxu0 %v1608
          %v1673 = vpop.f32.mrf.mxu0
          %v1674 = vadd.f32 0.0, %v1673
          %v1675 = vpop.f32.mrf.mxu0
          %v1676 = vadd.f32 0.0, %v1675
          %1677 = vmatmul.bf16.gmra.mxu0 %v1609
          %v1678 = vpop.f32.mrf.mxu0
          %v1679 = vadd.f32 0.0, %v1678
          %v1680 = vpop.f32.mrf.mxu0
          %v1681 = vadd.f32 0.0, %v1680
          %1682 = vmatmul.bf16.gmra.mxu0 %v1610
          %v1683 = vpop.f32.mrf.mxu0
          %v1684 = vadd.f32 0.0, %v1683
          %v1685 = vpop.f32.mrf.mxu0
          %v1686 = vadd.f32 0.0, %v1685
          %1687 = vmatmul.bf16.gmra.mxu0 %v1611
          %v1688 = vpop.f32.mrf.mxu0
          %v1689 = vadd.f32 0.0, %v1688
          %v1690 = vpop.f32.mrf.mxu0
          %v1691 = vadd.f32 0.0, %v1690
          %1692 = vdwg.mxu0
          %v1693 = vld [vmem:[#allocation5] sm:$0xff]
          %v1694 = vld [vmem:[#allocation5 + $0x8] sm:$0xff]
          %v1695 = vld [vmem:[#allocation5 + $0x10] sm:$0xff]
          %v1696 = vld [vmem:[#allocation5 + $0x18] sm:$0xff]
          %v1697 = vld [vmem:[#allocation5 + $0x20] sm:$0xff]
          %v1698 = vld [vmem:[#allocation5 + $0x28] sm:$0xff]
          %v1699 = vld [vmem:[#allocation5 + $0x30] sm:$0xff]
          %v1700 = vld [vmem:[#allocation5 + $0x38] sm:$0xff]
          %v1701 = vld [vmem:[#allocation5 + $0x40] sm:$0xff]
          %v1702 = vld [vmem:[#allocation5 + $0x48] sm:$0xff]
          %v1703 = vld [vmem:[#allocation5 + $0x50] sm:$0xff]
          %v1704 = vld [vmem:[#allocation5 + $0x58] sm:$0xff]
          %v1705 = vld [vmem:[#allocation5 + $0x60] sm:$0xff]
          %v1706 = vld [vmem:[#allocation5 + $0x68] sm:$0xff]
          %v1707 = vld [vmem:[#allocation5 + $0x70] sm:$0xff]
          %v1708 = vld [vmem:[#allocation5 + $0x78] sm:$0xff]
          %1710 = vset.pattern.permute.xlu0 0
          %1711 = vperm.xlu0 %1710, %v1348
          %v1712 = vpop.permute.xlu0 %1711
          %1715 = vset.pattern.permute.xlu0 0
          %1716 = vperm.xlu0 %1715, %v1350
          %v1717 = vpop.permute.xlu0 %1716
          %1720 = vset.pattern.permute.xlu0 0
          %1721 = vperm.xlu0 %1720, %v1352
          %v1722 = vpop.permute.xlu0 %1721
          %1725 = vset.pattern.permute.xlu0 0
          %1726 = vperm.xlu0 %1725, %v1354
          %v1727 = vpop.permute.xlu0 %1726
          %1730 = vset.pattern.permute.xlu0 0
          %1731 = vperm.xlu0 %1730, %v1356
          %v1732 = vpop.permute.xlu0 %1731
          %1735 = vset.pattern.permute.xlu0 0
          %1736 = vperm.xlu0 %1735, %v1358
          %v1737 = vpop.permute.xlu0 %1736
          %1740 = vset.pattern.permute.xlu0 0
          %1741 = vperm.xlu0 %1740, %v1360
          %v1742 = vpop.permute.xlu0 %1741
          %1745 = vset.pattern.permute.xlu0 0
          %1746 = vperm.xlu0 %1745, %v1362
          %v1747 = vpop.permute.xlu0 %1746
          %1750 = vset.pattern.permute.xlu0 0
          %1751 = vperm.xlu0 %1750, %v1364
          %v1752 = vpop.permute.xlu0 %1751
          %1755 = vset.pattern.permute.xlu0 0
          %1756 = vperm.xlu0 %1755, %v1366
          %v1757 = vpop.permute.xlu0 %1756
          %1760 = vset.pattern.permute.xlu0 0
          %1761 = vperm.xlu0 %1760, %v1368
          %v1762 = vpop.permute.xlu0 %1761
          %1765 = vset.pattern.permute.xlu0 0
          %1766 = vperm.xlu0 %1765, %v1370
          %v1767 = vpop.permute.xlu0 %1766
          %1770 = vset.pattern.permute.xlu0 0
          %1771 = vperm.xlu0 %1770, %v1372
          %v1772 = vpop.permute.xlu0 %1771
          %1775 = vset.pattern.permute.xlu0 0
          %1776 = vperm.xlu0 %1775, %v1374
          %v1777 = vpop.permute.xlu0 %1776
          %1780 = vset.pattern.permute.xlu0 0
          %1781 = vperm.xlu0 %1780, %v1376
          %v1782 = vpop.permute.xlu0 %1781
          %1785 = vset.pattern.permute.xlu0 0
          %1786 = vperm.xlu0 %1785, %v1378
          %v1787 = vpop.permute.xlu0 %1786
          %v1789 = vmul.f32 %v1712, %v1693
          %v1790 = vmul.f32 %v1717, %v1694
          %v1791 = vmul.f32 %v1722, %v1695
          %v1792 = vmul.f32 %v1727, %v1696
          %v1793 = vmul.f32 %v1732, %v1697
          %v1794 = vmul.f32 %v1737, %v1698
          %v1795 = vmul.f32 %v1742, %v1699
          %v1796 = vmul.f32 %v1747, %v1700
          %v1797 = vmul.f32 %v1752, %v1701
          %v1798 = vmul.f32 %v1757, %v1702
          %v1799 = vmul.f32 %v1762, %v1703
          %v1800 = vmul.f32 %v1767, %v1704
          %v1801 = vmul.f32 %v1772, %v1705
          %v1802 = vmul.f32 %v1777, %v1706
          %v1803 = vmul.f32 %v1782, %v1707
          %v1804 = vmul.f32 %v1787, %v1708
          %v1805 = vadd.f32 %v1789, %v1654
          %v1806 = vadd.f32 %v1790, %v1656
          %v1807 = vadd.f32 %v1791, %v1659
          %v1808 = vadd.f32 %v1792, %v1661
          %v1809 = vadd.f32 %v1793, %v1664
          %v1810 = vadd.f32 %v1794, %v1666
          %v1811 = vadd.f32 %v1795, %v1669
          %v1812 = vadd.f32 %v1796, %v1671
          %v1813 = vadd.f32 %v1797, %v1674
          %v1814 = vadd.f32 %v1798, %v1676
          %v1815 = vadd.f32 %v1799, %v1679
          %v1816 = vadd.f32 %v1800, %v1681
          %v1817 = vadd.f32 %v1801, %v1684
          %v1818 = vadd.f32 %v1802, %v1686
          %v1819 = vadd.f32 %v1803, %v1689
          %v1820 = vadd.f32 %v1804, %v1691
          %1821 = vst.msk [vmem:[#allocation5] sm:$0xff] %vm1169, %v1805
          %1822 = vst.msk [vmem:[#allocation5 + $0x8] sm:$0xff] %vm1169, %v1806
          %1823 = vst.msk [vmem:[#allocation5 + $0x10] sm:$0xff] %vm1169, %v1807
          %1824 = vst.msk [vmem:[#allocation5 + $0x18] sm:$0xff] %vm1169, %v1808
          %1825 = vst.msk [vmem:[#allocation5 + $0x20] sm:$0xff] %vm1169, %v1809
          %1826 = vst.msk [vmem:[#allocation5 + $0x28] sm:$0xff] %vm1169, %v1810
          %1827 = vst.msk [vmem:[#allocation5 + $0x30] sm:$0xff] %vm1169, %v1811
          %1828 = vst.msk [vmem:[#allocation5 + $0x38] sm:$0xff] %vm1169, %v1812
          %1829 = vst.msk [vmem:[#allocation5 + $0x40] sm:$0xff] %vm1169, %v1813
          %1830 = vst.msk [vmem:[#allocation5 + $0x48] sm:$0xff] %vm1169, %v1814
          %1831 = vst.msk [vmem:[#allocation5 + $0x50] sm:$0xff] %vm1169, %v1815
          %1832 = vst.msk [vmem:[#allocation5 + $0x58] sm:$0xff] %vm1169, %v1816
          %1833 = vst.msk [vmem:[#allocation5 + $0x60] sm:$0xff] %vm1169, %v1817
          %1834 = vst.msk [vmem:[#allocation5 + $0x68] sm:$0xff] %vm1169, %v1818
          %1835 = vst.msk [vmem:[#allocation5 + $0x70] sm:$0xff] %vm1169, %v1819
          %1836 = vst.msk [vmem:[#allocation5 + $0x78] sm:$0xff] %vm1169, %v1820
          %1837 = vst.msk [vmem:[#allocation3] sm:$0xff] %vm1587, %v1315
          %1838 = vst.msk [vmem:[#allocation3 + $0x8] sm:$0xff] %vm1587, %v1316
          %1839 = vst.msk [vmem:[#allocation3 + $0x10] sm:$0xff] %vm1587, %v1317
          %1840 = vst.msk [vmem:[#allocation3 + $0x18] sm:$0xff] %vm1587, %v1318
          %1841 = vst.msk [vmem:[#allocation3 + $0x20] sm:$0xff] %vm1587, %v1319
          %1842 = vst.msk [vmem:[#allocation3 + $0x28] sm:$0xff] %vm1587, %v1320
          %1843 = vst.msk [vmem:[#allocation3 + $0x30] sm:$0xff] %vm1587, %v1321
          %1844 = vst.msk [vmem:[#allocation3 + $0x38] sm:$0xff] %vm1587, %v1322
          %1845 = vst.msk [vmem:[#allocation3 + $0x40] sm:$0xff] %vm1587, %v1323
          %1846 = vst.msk [vmem:[#allocation3 + $0x48] sm:$0xff] %vm1587, %v1324
          %1847 = vst.msk [vmem:[#allocation3 + $0x50] sm:$0xff] %vm1587, %v1325
          %1848 = vst.msk [vmem:[#allocation3 + $0x58] sm:$0xff] %vm1587, %v1326
          %1849 = vst.msk [vmem:[#allocation3 + $0x60] sm:$0xff] %vm1587, %v1327
          %1850 = vst.msk [vmem:[#allocation3 + $0x68] sm:$0xff] %vm1587, %v1328
          %1851 = vst.msk [vmem:[#allocation3 + $0x70] sm:$0xff] %vm1587, %v1329
          %1852 = vst.msk [vmem:[#allocation3 + $0x78] sm:$0xff] %vm1587, %v1330
          %v1853 = vld [vmem:[#allocation2] sm:$0xf]
          %v1854 = vld [vmem:[#allocation2 + $0x4] sm:$0xf]
          %v1855 = vld [vmem:[#allocation2 + $0x8] sm:$0xf]
          %v1856 = vld [vmem:[#allocation2 + $0xc] sm:$0xf]
          %v1857 = vld [vmem:[#allocation2 + $0x10] sm:$0xf]
          %v1858 = vld [vmem:[#allocation2 + $0x14] sm:$0xf]
          %v1859 = vld [vmem:[#allocation2 + $0x18] sm:$0xf]
          %v1860 = vld [vmem:[#allocation2 + $0x1c] sm:$0xf]
          %v1861 = vld [vmem:[#allocation2 + $0x20] sm:$0xf]
          %v1862 = vld [vmem:[#allocation2 + $0x24] sm:$0xf]
          %v1863 = vld [vmem:[#allocation2 + $0x28] sm:$0xf]
          %v1864 = vld [vmem:[#allocation2 + $0x2c] sm:$0xf]
          %v1865 = vld [vmem:[#allocation2 + $0x30] sm:$0xf]
          %v1866 = vld [vmem:[#allocation2 + $0x34] sm:$0xf]
          %v1867 = vld [vmem:[#allocation2 + $0x38] sm:$0xf]
          %v1868 = vld [vmem:[#allocation2 + $0x3c] sm:$0xf]
          %v1885 = vunpack.c.l.b16 %v1853
          %v1886 = vunpack.c.l.b16 %v1854
          %v1887 = vunpack.c.l.b16 %v1855
          %v1888 = vunpack.c.l.b16 %v1856
          %v1889 = vunpack.c.l.b16 %v1857
          %v1890 = vunpack.c.l.b16 %v1858
          %v1891 = vunpack.c.l.b16 %v1859
          %v1892 = vunpack.c.l.b16 %v1860
          %v1893 = vunpack.c.l.b16 %v1861
          %v1894 = vunpack.c.l.b16 %v1862
          %v1895 = vunpack.c.l.b16 %v1863
          %v1896 = vunpack.c.l.b16 %v1864
          %v1897 = vunpack.c.l.b16 %v1865
          %v1898 = vunpack.c.l.b16 %v1866
          %v1899 = vunpack.c.l.b16 %v1867
          %v1900 = vunpack.c.l.b16 %v1868
          %v1901 = vpack.c.b16 %v1886, %v1885
          %v1902 = vpack.c.b16 %v1888, %v1887
          %v1903 = vpack.c.b16 %v1890, %v1889
          %v1904 = vpack.c.b16 %v1892, %v1891
          %v1905 = vpack.c.b16 %v1894, %v1893
          %v1906 = vpack.c.b16 %v1896, %v1895
          %v1907 = vpack.c.b16 %v1898, %v1897
          %v1908 = vpack.c.b16 %v1900, %v1899
          %1909 = vrot.lane.b32.xlu0 %v1901, 96
          %v1910 = vpop.permute.xlu0 %1909
          %1911 = vrot.lane.b32.xlu0 %v1902, 96
          %v1912 = vpop.permute.xlu0 %1911
          %1913 = vrot.lane.b32.xlu0 %v1903, 96
          %v1914 = vpop.permute.xlu0 %1913
          %1915 = vrot.lane.b32.xlu0 %v1904, 96
          %v1916 = vpop.permute.xlu0 %1915
          %1917 = vrot.lane.b32.xlu0 %v1905, 96
          %v1918 = vpop.permute.xlu0 %1917
          %1919 = vrot.lane.b32.xlu0 %v1906, 96
          %v1920 = vpop.permute.xlu0 %1919
          %1921 = vrot.lane.b32.xlu0 %v1907, 96
          %v1922 = vpop.permute.xlu0 %1921
          %1923 = vrot.lane.b32.xlu0 %v1908, 96
          %v1924 = vpop.permute.xlu0 %1923
          %1925 = vrot.lane.b32.xlu0 %v1161, 96
          %v1926 = vpop.permute.xlu0 %1925
          %1927 = vrot.lane.b32.xlu0 %v1162, 96
          %v1928 = vpop.permute.xlu0 %1927
          %1929 = vrot.lane.b32.xlu0 %v1163, 96
          %v1930 = vpop.permute.xlu0 %1929
          %1931 = vrot.lane.b32.xlu0 %v1164, 96
          %v1932 = vpop.permute.xlu0 %1931
          %1933 = vrot.lane.b32.xlu0 %v1165, 96
          %v1934 = vpop.permute.xlu0 %1933
          %1935 = vrot.lane.b32.xlu0 %v1166, 96
          %v1936 = vpop.permute.xlu0 %1935
          %1937 = vrot.lane.b32.xlu0 %v1167, 96
          %v1938 = vpop.permute.xlu0 %1937
          %1939 = vrot.lane.b32.xlu0 %v1168, 96
          %v1940 = vpop.permute.xlu0 %1939
          %v1942 = vsel %vm1169, %v1910, 0
          %v1945 = vsel %vm1169, %v1912, 0
          %v1948 = vsel %vm1169, %v1914, 0
          %v1951 = vsel %vm1169, %v1916, 0
          %v1954 = vsel %vm1169, %v1918, 0
          %v1957 = vsel %vm1169, %v1920, 0
          %v1960 = vsel %vm1169, %v1922, 0
          %v1963 = vsel %vm1169, %v1924, 0
          %v1966 = vsel %vm1169, %v1926, 0
          %v1969 = vsel %vm1169, %v1928, 0
          %v1972 = vsel %vm1169, %v1930, 0
          %v1975 = vsel %vm1169, %v1932, 0
          %v1978 = vsel %vm1169, %v1934, 0
          %v1981 = vsel %vm1169, %v1936, 0
          %v1984 = vsel %vm1169, %v1938, 0
          %v1987 = vsel %vm1169, %v1940, 0
          %1989 = vmatpush.bf16.xpose.msra.mxu0 %v1987
          %1990 = vmatpush.bf16.xpose.msra.mxu0 %v1984
          %1991 = vmatpush.bf16.xpose.msra.mxu0 %v1981
          %1992 = vmatpush.bf16.xpose.msra.mxu0 %v1978
          %1993 = vmatpush.bf16.xpose.msra.mxu0 %v1975
          %1994 = vmatpush.bf16.xpose.msra.mxu0 %v1972
          %1995 = vmatpush.bf16.xpose.msra.mxu0 %v1969
          %1996 = vmatpush.bf16.xpose.msra.mxu0 %v1966
          %1997 = vmatmul.bf16.gmra.mxu0 %v1942
          %v1998 = vpop.f32.mrf.mxu0
          %v1999 = vadd.f32 0.0, %v1998
          %v2000 = vpop.f32.mrf.mxu0
          %v2001 = vadd.f32 0.0, %v2000
          %2002 = vmatmul.bf16.gmra.mxu0 %v1945
          %v2003 = vpop.f32.mrf.mxu0
          %v2004 = vadd.f32 0.0, %v2003
          %v2005 = vpop.f32.mrf.mxu0
          %v2006 = vadd.f32 0.0, %v2005
          %2007 = vmatmul.bf16.gmra.mxu0 %v1948
          %v2008 = vpop.f32.mrf.mxu0
          %v2009 = vadd.f32 0.0, %v2008
          %v2010 = vpop.f32.mrf.mxu0
          %v2011 = vadd.f32 0.0, %v2010
          %2012 = vmatmul.bf16.gmra.mxu0 %v1951
          %v2013 = vpop.f32.mrf.mxu0
          %v2014 = vadd.f32 0.0, %v2013
          %v2015 = vpop.f32.mrf.mxu0
          %v2016 = vadd.f32 0.0, %v2015
          %2017 = vmatmul.bf16.gmra.mxu0 %v1954
          %v2018 = vpop.f32.mrf.mxu0
          %v2019 = vadd.f32 0.0, %v2018
          %v2020 = vpop.f32.mrf.mxu0
          %v2021 = vadd.f32 0.0, %v2020
          %2022 = vmatmul.bf16.gmra.mxu0 %v1957
          %v2023 = vpop.f32.mrf.mxu0
          %v2024 = vadd.f32 0.0, %v2023
          %v2025 = vpop.f32.mrf.mxu0
          %v2026 = vadd.f32 0.0, %v2025
          %2027 = vmatmul.bf16.gmra.mxu0 %v1960
          %v2028 = vpop.f32.mrf.mxu0
          %v2029 = vadd.f32 0.0, %v2028
          %v2030 = vpop.f32.mrf.mxu0
          %v2031 = vadd.f32 0.0, %v2030
          %2032 = vmatmul.bf16.gmra.mxu0 %v1963
          %v2033 = vpop.f32.mrf.mxu0
          %v2034 = vadd.f32 0.0, %v2033
          %v2035 = vpop.f32.mrf.mxu0
          %v2036 = vadd.f32 0.0, %v2035
          %2037 = vdwg.mxu0
          %s2038 = scalar_lea.vmem [#allocation3], 128
          %v2039 = vld [vmem:[%s2038] sm:$0xff]
          %v2040 = vld [vmem:[%s2038 + $0x8] sm:$0xff]
          %v2041 = vld [vmem:[%s2038 + $0x10] sm:$0xff]
          %v2042 = vld [vmem:[%s2038 + $0x18] sm:$0xff]
          %v2043 = vld [vmem:[%s2038 + $0x20] sm:$0xff]
          %v2044 = vld [vmem:[%s2038 + $0x28] sm:$0xff]
          %v2045 = vld [vmem:[%s2038 + $0x30] sm:$0xff]
          %v2046 = vld [vmem:[%s2038 + $0x38] sm:$0xff]
          %v2047 = vld [vmem:[%s2038 + $0x40] sm:$0xff]
          %v2048 = vld [vmem:[%s2038 + $0x48] sm:$0xff]
          %v2049 = vld [vmem:[%s2038 + $0x50] sm:$0xff]
          %v2050 = vld [vmem:[%s2038 + $0x58] sm:$0xff]
          %v2051 = vld [vmem:[%s2038 + $0x60] sm:$0xff]
          %v2052 = vld [vmem:[%s2038 + $0x68] sm:$0xff]
          %v2053 = vld [vmem:[%s2038 + $0x70] sm:$0xff]
          %v2054 = vld [vmem:[%s2038 + $0x78] sm:$0xff]
          %2055 = vmax.xlane.f32.xlu0 %v1999
          %v2056 = vpop.xlane.xlu0 %2055
          %2057 = vmax.xlane.f32.xlu0 %v2001
          %v2058 = vpop.xlane.xlu0 %2057
          %2059 = vmax.xlane.f32.xlu0 %v2004
          %v2060 = vpop.xlane.xlu0 %2059
          %2061 = vmax.xlane.f32.xlu0 %v2006
          %v2062 = vpop.xlane.xlu0 %2061
          %2063 = vmax.xlane.f32.xlu0 %v2009
          %v2064 = vpop.xlane.xlu0 %2063
          %2065 = vmax.xlane.f32.xlu0 %v2011
          %v2066 = vpop.xlane.xlu0 %2065
          %2067 = vmax.xlane.f32.xlu0 %v2014
          %v2068 = vpop.xlane.xlu0 %2067
          %2069 = vmax.xlane.f32.xlu0 %v2016
          %v2070 = vpop.xlane.xlu0 %2069
          %2071 = vmax.xlane.f32.xlu0 %v2019
          %v2072 = vpop.xlane.xlu0 %2071
          %2073 = vmax.xlane.f32.xlu0 %v2021
          %v2074 = vpop.xlane.xlu0 %2073
          %2075 = vmax.xlane.f32.xlu0 %v2024
          %v2076 = vpop.xlane.xlu0 %2075
          %2077 = vmax.xlane.f32.xlu0 %v2026
          %v2078 = vpop.xlane.xlu0 %2077
          %2079 = vmax.xlane.f32.xlu0 %v2029
          %v2080 = vpop.xlane.xlu0 %2079
          %2081 = vmax.xlane.f32.xlu0 %v2031
          %v2082 = vpop.xlane.xlu0 %2081
          %2083 = vmax.xlane.f32.xlu0 %v2034
          %v2084 = vpop.xlane.xlu0 %2083
          %2085 = vmax.xlane.f32.xlu0 %v2036
          %v2086 = vpop.xlane.xlu0 %2085
          %v2087 = vmax.f32 %v2039, %v2056
          %v2088 = vmax.f32 %v2040, %v2058
          %v2089 = vmax.f32 %v2041, %v2060
          %v2090 = vmax.f32 %v2042, %v2062
          %v2091 = vmax.f32 %v2043, %v2064
          %v2092 = vmax.f32 %v2044, %v2066
          %v2093 = vmax.f32 %v2045, %v2068
          %v2094 = vmax.f32 %v2046, %v2070
          %v2095 = vmax.f32 %v2047, %v2072
          %v2096 = vmax.f32 %v2048, %v2074
          %v2097 = vmax.f32 %v2049, %v2076
          %v2098 = vmax.f32 %v2050, %v2078
          %v2099 = vmax.f32 %v2051, %v2080
          %v2100 = vmax.f32 %v2052, %v2082
          %v2101 = vmax.f32 %v2053, %v2084
          %v2102 = vmax.f32 %v2054, %v2086
          %v2103 = vsub.f32 %v2039, %v2087
          %v2104 = vsub.f32 %v2040, %v2088
          %v2105 = vsub.f32 %v2041, %v2089
          %v2106 = vsub.f32 %v2042, %v2090
          %v2107 = vsub.f32 %v2043, %v2091
          %v2108 = vsub.f32 %v2044, %v2092
          %v2109 = vsub.f32 %v2045, %v2093
          %v2110 = vsub.f32 %v2046, %v2094
          %v2111 = vsub.f32 %v2047, %v2095
          %v2112 = vsub.f32 %v2048, %v2096
          %v2113 = vsub.f32 %v2049, %v2097
          %v2114 = vsub.f32 %v2050, %v2098
          %v2115 = vsub.f32 %v2051, %v2099
          %v2116 = vsub.f32 %v2052, %v2100
          %v2117 = vsub.f32 %v2053, %v2101
          %v2118 = vsub.f32 %v2054, %v2102
          %v2119 = vmul.f32 %v2103, 1.442695
          %v2120 = vpow.pop %v2119
          %v2121 = vmul.f32 %v2104, 1.442695
          %v2122 = vpow.pop %v2121
          %v2123 = vmul.f32 %v2105, 1.442695
          %v2124 = vpow.pop %v2123
          %v2125 = vmul.f32 %v2106, 1.442695
          %v2126 = vpow.pop %v2125
          %v2127 = vmul.f32 %v2107, 1.442695
          %v2128 = vpow.pop %v2127
          %v2129 = vmul.f32 %v2108, 1.442695
          %v2130 = vpow.pop %v2129
          %v2131 = vmul.f32 %v2109, 1.442695
          %v2132 = vpow.pop %v2131
          %v2133 = vmul.f32 %v2110, 1.442695
          %v2134 = vpow.pop %v2133
          %v2135 = vmul.f32 %v2111, 1.442695
          %v2136 = vpow.pop %v2135
          %v2137 = vmul.f32 %v2112, 1.442695
          %v2138 = vpow.pop %v2137
          %v2139 = vmul.f32 %v2113, 1.442695
          %v2140 = vpow.pop %v2139
          %v2141 = vmul.f32 %v2114, 1.442695
          %v2142 = vpow.pop %v2141
          %v2143 = vmul.f32 %v2115, 1.442695
          %v2144 = vpow.pop %v2143
          %v2145 = vmul.f32 %v2116, 1.442695
          %v2146 = vpow.pop %v2145
          %v2147 = vmul.f32 %v2117, 1.442695
          %v2148 = vpow.pop %v2147
          %v2149 = vmul.f32 %v2118, 1.442695
          %v2150 = vpow.pop %v2149
          %2152 = vset.pattern.permute.xlu0 0
          %2153 = vperm.xlu0 %2152, %v2087
          %v2154 = vpop.permute.xlu0 %2153
          %2157 = vset.pattern.permute.xlu0 0
          %2158 = vperm.xlu0 %2157, %v2088
          %v2159 = vpop.permute.xlu0 %2158
          %2162 = vset.pattern.permute.xlu0 0
          %2163 = vperm.xlu0 %2162, %v2089
          %v2164 = vpop.permute.xlu0 %2163
          %2167 = vset.pattern.permute.xlu0 0
          %2168 = vperm.xlu0 %2167, %v2090
          %v2169 = vpop.permute.xlu0 %2168
          %2172 = vset.pattern.permute.xlu0 0
          %2173 = vperm.xlu0 %2172, %v2091
          %v2174 = vpop.permute.xlu0 %2173
          %2177 = vset.pattern.permute.xlu0 0
          %2178 = vperm.xlu0 %2177, %v2092
          %v2179 = vpop.permute.xlu0 %2178
          %2182 = vset.pattern.permute.xlu0 0
          %2183 = vperm.xlu0 %2182, %v2093
          %v2184 = vpop.permute.xlu0 %2183
          %2187 = vset.pattern.permute.xlu0 0
          %2188 = vperm.xlu0 %2187, %v2094
          %v2189 = vpop.permute.xlu0 %2188
          %2192 = vset.pattern.permute.xlu0 0
          %2193 = vperm.xlu0 %2192, %v2095
          %v2194 = vpop.permute.xlu0 %2193
          %2197 = vset.pattern.permute.xlu0 0
          %2198 = vperm.xlu0 %2197, %v2096
          %v2199 = vpop.permute.xlu0 %2198
          %2202 = vset.pattern.permute.xlu0 0
          %2203 = vperm.xlu0 %2202, %v2097
          %v2204 = vpop.permute.xlu0 %2203
          %2207 = vset.pattern.permute.xlu0 0
          %2208 = vperm.xlu0 %2207, %v2098
          %v2209 = vpop.permute.xlu0 %2208
          %2212 = vset.pattern.permute.xlu0 0
          %2213 = vperm.xlu0 %2212, %v2099
          %v2214 = vpop.permute.xlu0 %2213
          %2217 = vset.pattern.permute.xlu0 0
          %2218 = vperm.xlu0 %2217, %v2100
          %v2219 = vpop.permute.xlu0 %2218
          %2222 = vset.pattern.permute.xlu0 0
          %2223 = vperm.xlu0 %2222, %v2101
          %v2224 = vpop.permute.xlu0 %2223
          %2227 = vset.pattern.permute.xlu0 0
          %2228 = vperm.xlu0 %2227, %v2102
          %v2229 = vpop.permute.xlu0 %2228
          %v2231 = vsub.f32 %v1999, %v2154
          %v2232 = vsub.f32 %v2001, %v2159
          %v2233 = vsub.f32 %v2004, %v2164
          %v2234 = vsub.f32 %v2006, %v2169
          %v2235 = vsub.f32 %v2009, %v2174
          %v2236 = vsub.f32 %v2011, %v2179
          %v2237 = vsub.f32 %v2014, %v2184
          %v2238 = vsub.f32 %v2016, %v2189
          %v2239 = vsub.f32 %v2019, %v2194
          %v2240 = vsub.f32 %v2021, %v2199
          %v2241 = vsub.f32 %v2024, %v2204
          %v2242 = vsub.f32 %v2026, %v2209
          %v2243 = vsub.f32 %v2029, %v2214
          %v2244 = vsub.f32 %v2031, %v2219
          %v2245 = vsub.f32 %v2034, %v2224
          %v2246 = vsub.f32 %v2036, %v2229
          %v2247 = vmul.f32 %v2231, 1.442695
          %v2248 = vpow.pop %v2247
          %v2249 = vmul.f32 %v2232, 1.442695
          %v2250 = vpow.pop %v2249
          %v2251 = vmul.f32 %v2233, 1.442695
          %v2252 = vpow.pop %v2251
          %v2253 = vmul.f32 %v2234, 1.442695
          %v2254 = vpow.pop %v2253
          %v2255 = vmul.f32 %v2235, 1.442695
          %v2256 = vpow.pop %v2255
          %v2257 = vmul.f32 %v2236, 1.442695
          %v2258 = vpow.pop %v2257
          %v2259 = vmul.f32 %v2237, 1.442695
          %v2260 = vpow.pop %v2259
          %v2261 = vmul.f32 %v2238, 1.442695
          %v2262 = vpow.pop %v2261
          %v2263 = vmul.f32 %v2239, 1.442695
          %v2264 = vpow.pop %v2263
          %v2265 = vmul.f32 %v2240, 1.442695
          %v2266 = vpow.pop %v2265
          %v2267 = vmul.f32 %v2241, 1.442695
          %v2268 = vpow.pop %v2267
          %v2269 = vmul.f32 %v2242, 1.442695
          %v2270 = vpow.pop %v2269
          %v2271 = vmul.f32 %v2243, 1.442695
          %v2272 = vpow.pop %v2271
          %v2273 = vmul.f32 %v2244, 1.442695
          %v2274 = vpow.pop %v2273
          %v2275 = vmul.f32 %v2245, 1.442695
          %v2276 = vpow.pop %v2275
          %v2277 = vmul.f32 %v2246, 1.442695
          %v2278 = vpow.pop %v2277
          %s2279 = scalar_lea.vmem [#allocation4], 128
          %v2280 = vld [vmem:[%s2279] sm:$0xff]
          %v2281 = vld [vmem:[%s2279 + $0x8] sm:$0xff]
          %v2282 = vld [vmem:[%s2279 + $0x10] sm:$0xff]
          %v2283 = vld [vmem:[%s2279 + $0x18] sm:$0xff]
          %v2284 = vld [vmem:[%s2279 + $0x20] sm:$0xff]
          %v2285 = vld [vmem:[%s2279 + $0x28] sm:$0xff]
          %v2286 = vld [vmem:[%s2279 + $0x30] sm:$0xff]
          %v2287 = vld [vmem:[%s2279 + $0x38] sm:$0xff]
          %v2288 = vld [vmem:[%s2279 + $0x40] sm:$0xff]
          %v2289 = vld [vmem:[%s2279 + $0x48] sm:$0xff]
          %v2290 = vld [vmem:[%s2279 + $0x50] sm:$0xff]
          %v2291 = vld [vmem:[%s2279 + $0x58] sm:$0xff]
          %v2292 = vld [vmem:[%s2279 + $0x60] sm:$0xff]
          %v2293 = vld [vmem:[%s2279 + $0x68] sm:$0xff]
          %v2294 = vld [vmem:[%s2279 + $0x70] sm:$0xff]
          %v2295 = vld [vmem:[%s2279 + $0x78] sm:$0xff]
          %v2296 = vmul.f32 %v2120, %v2280
          %v2297 = vmul.f32 %v2122, %v2281
          %v2298 = vmul.f32 %v2124, %v2282
          %v2299 = vmul.f32 %v2126, %v2283
          %v2300 = vmul.f32 %v2128, %v2284
          %v2301 = vmul.f32 %v2130, %v2285
          %v2302 = vmul.f32 %v2132, %v2286
          %v2303 = vmul.f32 %v2134, %v2287
          %v2304 = vmul.f32 %v2136, %v2288
          %v2305 = vmul.f32 %v2138, %v2289
          %v2306 = vmul.f32 %v2140, %v2290
          %v2307 = vmul.f32 %v2142, %v2291
          %v2308 = vmul.f32 %v2144, %v2292
          %v2309 = vmul.f32 %v2146, %v2293
          %v2310 = vmul.f32 %v2148, %v2294
          %v2311 = vmul.f32 %v2150, %v2295
          %2312 = vadd.xlane.f32.xlu0 %v2248
          %v2313 = vpop.xlane.xlu0 %2312
          %2314 = vadd.xlane.f32.xlu0 %v2250
          %v2315 = vpop.xlane.xlu0 %2314
          %2316 = vadd.xlane.f32.xlu0 %v2252
          %v2317 = vpop.xlane.xlu0 %2316
          %2318 = vadd.xlane.f32.xlu0 %v2254
          %v2319 = vpop.xlane.xlu0 %2318
          %2320 = vadd.xlane.f32.xlu0 %v2256
          %v2321 = vpop.xlane.xlu0 %2320
          %2322 = vadd.xlane.f32.xlu0 %v2258
          %v2323 = vpop.xlane.xlu0 %2322
          %2324 = vadd.xlane.f32.xlu0 %v2260
          %v2325 = vpop.xlane.xlu0 %2324
          %2326 = vadd.xlane.f32.xlu0 %v2262
          %v2327 = vpop.xlane.xlu0 %2326
          %2328 = vadd.xlane.f32.xlu0 %v2264
          %v2329 = vpop.xlane.xlu0 %2328
          %2330 = vadd.xlane.f32.xlu0 %v2266
          %v2331 = vpop.xlane.xlu0 %2330
          %2332 = vadd.xlane.f32.xlu0 %v2268
          %v2333 = vpop.xlane.xlu0 %2332
          %2334 = vadd.xlane.f32.xlu0 %v2270
          %v2335 = vpop.xlane.xlu0 %2334
          %2336 = vadd.xlane.f32.xlu0 %v2272
          %v2337 = vpop.xlane.xlu0 %2336
          %2338 = vadd.xlane.f32.xlu0 %v2274
          %v2339 = vpop.xlane.xlu0 %2338
          %2340 = vadd.xlane.f32.xlu0 %v2276
          %v2341 = vpop.xlane.xlu0 %2340
          %2342 = vadd.xlane.f32.xlu0 %v2278
          %v2343 = vpop.xlane.xlu0 %2342
          %v2344 = vadd.f32 %v2296, %v2313
          %v2345 = vadd.f32 %v2297, %v2315
          %v2346 = vadd.f32 %v2298, %v2317
          %v2347 = vadd.f32 %v2299, %v2319
          %v2348 = vadd.f32 %v2300, %v2321
          %v2349 = vadd.f32 %v2301, %v2323
          %v2350 = vadd.f32 %v2302, %v2325
          %v2351 = vadd.f32 %v2303, %v2327
          %v2352 = vadd.f32 %v2304, %v2329
          %v2353 = vadd.f32 %v2305, %v2331
          %v2354 = vadd.f32 %v2306, %v2333
          %v2355 = vadd.f32 %v2307, %v2335
          %v2356 = vadd.f32 %v2308, %v2337
          %v2357 = vadd.f32 %v2309, %v2339
          %v2358 = vadd.f32 %v2310, %v2341
          %v2359 = vadd.f32 %v2311, %v2343
          %2360 = vst.msk [vmem:[%s2279] sm:$0xff] %vm1587, %v2344
          %2361 = vst.msk [vmem:[%s2279 + $0x8] sm:$0xff] %vm1587, %v2345
          %2362 = vst.msk [vmem:[%s2279 + $0x10] sm:$0xff] %vm1587, %v2346
          %2363 = vst.msk [vmem:[%s2279 + $0x18] sm:$0xff] %vm1587, %v2347
          %2364 = vst.msk [vmem:[%s2279 + $0x20] sm:$0xff] %vm1587, %v2348
          %2365 = vst.msk [vmem:[%s2279 + $0x28] sm:$0xff] %vm1587, %v2349
          %2366 = vst.msk [vmem:[%s2279 + $0x30] sm:$0xff] %vm1587, %v2350
          %2367 = vst.msk [vmem:[%s2279 + $0x38] sm:$0xff] %vm1587, %v2351
          %2368 = vst.msk [vmem:[%s2279 + $0x40] sm:$0xff] %vm1587, %v2352
          %2369 = vst.msk [vmem:[%s2279 + $0x48] sm:$0xff] %vm1587, %v2353
          %2370 = vst.msk [vmem:[%s2279 + $0x50] sm:$0xff] %vm1587, %v2354
          %2371 = vst.msk [vmem:[%s2279 + $0x58] sm:$0xff] %vm1587, %v2355
          %2372 = vst.msk [vmem:[%s2279 + $0x60] sm:$0xff] %vm1587, %v2356
          %2373 = vst.msk [vmem:[%s2279 + $0x68] sm:$0xff] %vm1587, %v2357
          %2374 = vst.msk [vmem:[%s2279 + $0x70] sm:$0xff] %vm1587, %v2358
          %2375 = vst.msk [vmem:[%s2279 + $0x78] sm:$0xff] %vm1587, %v2359
          %v2376 = vpack.c.bf16 %v2250, %v2248
          %v2377 = vpack.c.bf16 %v2254, %v2252
          %v2378 = vpack.c.bf16 %v2258, %v2256
          %v2379 = vpack.c.bf16 %v2262, %v2260
          %v2380 = vpack.c.bf16 %v2266, %v2264
          %v2381 = vpack.c.bf16 %v2270, %v2268
          %v2382 = vpack.c.bf16 %v2274, %v2272
          %v2383 = vpack.c.bf16 %v2278, %v2276
          %2384 = vrot.lane.b32.xlu0 %v1628, 96
          %v2385 = vpop.permute.xlu0 %2384
          %2386 = vrot.lane.b32.xlu0 %v1629, 96
          %v2387 = vpop.permute.xlu0 %2386
          %2388 = vrot.lane.b32.xlu0 %v1630, 96
          %v2389 = vpop.permute.xlu0 %2388
          %2390 = vrot.lane.b32.xlu0 %v1631, 96
          %v2391 = vpop.permute.xlu0 %2390
          %2392 = vrot.lane.b32.xlu0 %v1632, 96
          %v2393 = vpop.permute.xlu0 %2392
          %2394 = vrot.lane.b32.xlu0 %v1633, 96
          %v2395 = vpop.permute.xlu0 %2394
          %2396 = vrot.lane.b32.xlu0 %v1634, 96
          %v2397 = vpop.permute.xlu0 %2396
          %2398 = vrot.lane.b32.xlu0 %v1635, 96
          %v2399 = vpop.permute.xlu0 %2398
          %2408 = vmatpush.bf16.msra.mxu0 %v2399
          %2409 = vmatpush.bf16.msra.mxu0 %v2397
          %2410 = vmatpush.bf16.msra.mxu0 %v2395
          %2411 = vmatpush.bf16.msra.mxu0 %v2393
          %2412 = vmatpush.bf16.msra.mxu0 %v2391
          %2413 = vmatpush.bf16.msra.mxu0 %v2389
          %2414 = vmatpush.bf16.msra.mxu0 %v2387
          %2415 = vmatpush.bf16.msra.mxu0 %v2385
          %2416 = vmatmul.bf16.gmra.mxu0 %v2376
          %v2417 = vpop.f32.mrf.mxu0
          %v2418 = vadd.f32 0.0, %v2417
          %v2419 = vpop.f32.mrf.mxu0
          %v2420 = vadd.f32 0.0, %v2419
          %2421 = vmatmul.bf16.gmra.mxu0 %v2377
          %v2422 = vpop.f32.mrf.mxu0
          %v2423 = vadd.f32 0.0, %v2422
          %v2424 = vpop.f32.mrf.mxu0
          %v2425 = vadd.f32 0.0, %v2424
          %2426 = vmatmul.bf16.gmra.mxu0 %v2378
          %v2427 = vpop.f32.mrf.mxu0
          %v2428 = vadd.f32 0.0, %v2427
          %v2429 = vpop.f32.mrf.mxu0
          %v2430 = vadd.f32 0.0, %v2429
          %2431 = vmatmul.bf16.gmra.mxu0 %v2379
          %v2432 = vpop.f32.mrf.mxu0
          %v2433 = vadd.f32 0.0, %v2432
          %v2434 = vpop.f32.mrf.mxu0
          %v2435 = vadd.f32 0.0, %v2434
          %2436 = vmatmul.bf16.gmra.mxu0 %v2380
          %v2437 = vpop.f32.mrf.mxu0
          %v2438 = vadd.f32 0.0, %v2437
          %v2439 = vpop.f32.mrf.mxu0
          %v2440 = vadd.f32 0.0, %v2439
          %2441 = vmatmul.bf16.gmra.mxu0 %v2381
          %v2442 = vpop.f32.mrf.mxu0
          %v2443 = vadd.f32 0.0, %v2442
          %v2444 = vpop.f32.mrf.mxu0
          %v2445 = vadd.f32 0.0, %v2444
          %2446 = vmatmul.bf16.gmra.mxu0 %v2382
          %v2447 = vpop.f32.mrf.mxu0
          %v2448 = vadd.f32 0.0, %v2447
          %v2449 = vpop.f32.mrf.mxu0
          %v2450 = vadd.f32 0.0, %v2449
          %2451 = vmatmul.bf16.gmra.mxu0 %v2383
          %v2452 = vpop.f32.mrf.mxu0
          %v2453 = vadd.f32 0.0, %v2452
          %v2454 = vpop.f32.mrf.mxu0
          %v2455 = vadd.f32 0.0, %v2454
          %2456 = vdwg.mxu0
          %v2457 = vld [vmem:[#allocation5] sm:$0xff]
          %v2458 = vld [vmem:[#allocation5 + $0x8] sm:$0xff]
          %v2459 = vld [vmem:[#allocation5 + $0x10] sm:$0xff]
          %v2460 = vld [vmem:[#allocation5 + $0x18] sm:$0xff]
          %v2461 = vld [vmem:[#allocation5 + $0x20] sm:$0xff]
          %v2462 = vld [vmem:[#allocation5 + $0x28] sm:$0xff]
          %v2463 = vld [vmem:[#allocation5 + $0x30] sm:$0xff]
          %v2464 = vld [vmem:[#allocation5 + $0x38] sm:$0xff]
          %v2465 = vld [vmem:[#allocation5 + $0x40] sm:$0xff]
          %v2466 = vld [vmem:[#allocation5 + $0x48] sm:$0xff]
          %v2467 = vld [vmem:[#allocation5 + $0x50] sm:$0xff]
          %v2468 = vld [vmem:[#allocation5 + $0x58] sm:$0xff]
          %v2469 = vld [vmem:[#allocation5 + $0x60] sm:$0xff]
          %v2470 = vld [vmem:[#allocation5 + $0x68] sm:$0xff]
          %v2471 = vld [vmem:[#allocation5 + $0x70] sm:$0xff]
          %v2472 = vld [vmem:[#allocation5 + $0x78] sm:$0xff]
          %2474 = vset.pattern.permute.xlu0 0
          %2475 = vperm.xlu0 %2474, %v2120
          %v2476 = vpop.permute.xlu0 %2475
          %2479 = vset.pattern.permute.xlu0 0
          %2480 = vperm.xlu0 %2479, %v2122
          %v2481 = vpop.permute.xlu0 %2480
          %2484 = vset.pattern.permute.xlu0 0
          %2485 = vperm.xlu0 %2484, %v2124
          %v2486 = vpop.permute.xlu0 %2485
          %2489 = vset.pattern.permute.xlu0 0
          %2490 = vperm.xlu0 %2489, %v2126
          %v2491 = vpop.permute.xlu0 %2490
          %2494 = vset.pattern.permute.xlu0 0
          %2495 = vperm.xlu0 %2494, %v2128
          %v2496 = vpop.permute.xlu0 %2495
          %2499 = vset.pattern.permute.xlu0 0
          %2500 = vperm.xlu0 %2499, %v2130
          %v2501 = vpop.permute.xlu0 %2500
          %2504 = vset.pattern.permute.xlu0 0
          %2505 = vperm.xlu0 %2504, %v2132
          %v2506 = vpop.permute.xlu0 %2505
          %2509 = vset.pattern.permute.xlu0 0
          %2510 = vperm.xlu0 %2509, %v2134
          %v2511 = vpop.permute.xlu0 %2510
          %2514 = vset.pattern.permute.xlu0 0
          %2515 = vperm.xlu0 %2514, %v2136
          %v2516 = vpop.permute.xlu0 %2515
          %2519 = vset.pattern.permute.xlu0 0
          %2520 = vperm.xlu0 %2519, %v2138
          %v2521 = vpop.permute.xlu0 %2520
          %2524 = vset.pattern.permute.xlu0 0
          %2525 = vperm.xlu0 %2524, %v2140
          %v2526 = vpop.permute.xlu0 %2525
          %2529 = vset.pattern.permute.xlu0 0
          %2530 = vperm.xlu0 %2529, %v2142
          %v2531 = vpop.permute.xlu0 %2530
          %2534 = vset.pattern.permute.xlu0 0
          %2535 = vperm.xlu0 %2534, %v2144
          %v2536 = vpop.permute.xlu0 %2535
          %2539 = vset.pattern.permute.xlu0 0
          %2540 = vperm.xlu0 %2539, %v2146
          %v2541 = vpop.permute.xlu0 %2540
          %2544 = vset.pattern.permute.xlu0 0
          %2545 = vperm.xlu0 %2544, %v2148
          %v2546 = vpop.permute.xlu0 %2545
          %2549 = vset.pattern.permute.xlu0 0
          %2550 = vperm.xlu0 %2549, %v2150
          %v2551 = vpop.permute.xlu0 %2550
          %v2553 = vmul.f32 %v2476, %v2457
          %v2554 = vmul.f32 %v2481, %v2458
          %v2555 = vmul.f32 %v2486, %v2459
          %v2556 = vmul.f32 %v2491, %v2460
          %v2557 = vmul.f32 %v2496, %v2461
          %v2558 = vmul.f32 %v2501, %v2462
          %v2559 = vmul.f32 %v2506, %v2463
          %v2560 = vmul.f32 %v2511, %v2464
          %v2561 = vmul.f32 %v2516, %v2465
          %v2562 = vmul.f32 %v2521, %v2466
          %v2563 = vmul.f32 %v2526, %v2467
          %v2564 = vmul.f32 %v2531, %v2468
          %v2565 = vmul.f32 %v2536, %v2469
          %v2566 = vmul.f32 %v2541, %v2470
          %v2567 = vmul.f32 %v2546, %v2471
          %v2568 = vmul.f32 %v2551, %v2472
          %2585 = vrot.lane.b32.xlu0 %v2418, 32
          %v2586 = vpop.permute.xlu0 %2585
          %2587 = vrot.lane.b32.xlu0 %v2420, 32
          %v2588 = vpop.permute.xlu0 %2587
          %2589 = vrot.lane.b32.xlu0 %v2423, 32
          %v2590 = vpop.permute.xlu0 %2589
          %2591 = vrot.lane.b32.xlu0 %v2425, 32
          %v2592 = vpop.permute.xlu0 %2591
          %2593 = vrot.lane.b32.xlu0 %v2428, 32
          %v2594 = vpop.permute.xlu0 %2593
          %2595 = vrot.lane.b32.xlu0 %v2430, 32
          %v2596 = vpop.permute.xlu0 %2595
          %2597 = vrot.lane.b32.xlu0 %v2433, 32
          %v2598 = vpop.permute.xlu0 %2597
          %2599 = vrot.lane.b32.xlu0 %v2435, 32
          %v2600 = vpop.permute.xlu0 %2599
          %2601 = vrot.lane.b32.xlu0 %v2438, 32
          %v2602 = vpop.permute.xlu0 %2601
          %2603 = vrot.lane.b32.xlu0 %v2440, 32
          %v2604 = vpop.permute.xlu0 %2603
          %2605 = vrot.lane.b32.xlu0 %v2443, 32
          %v2606 = vpop.permute.xlu0 %2605
          %2607 = vrot.lane.b32.xlu0 %v2445, 32
          %v2608 = vpop.permute.xlu0 %2607
          %2609 = vrot.lane.b32.xlu0 %v2448, 32
          %v2610 = vpop.permute.xlu0 %2609
          %2611 = vrot.lane.b32.xlu0 %v2450, 32
          %v2612 = vpop.permute.xlu0 %2611
          %2613 = vrot.lane.b32.xlu0 %v2453, 32
          %v2614 = vpop.permute.xlu0 %2613
          %2615 = vrot.lane.b32.xlu0 %v2455, 32
          %v2616 = vpop.permute.xlu0 %2615
          %v2633 = vadd.f32 %v2553, %v2586
          %v2634 = vadd.f32 %v2554, %v2588
          %v2635 = vadd.f32 %v2555, %v2590
          %v2636 = vadd.f32 %v2556, %v2592
          %v2637 = vadd.f32 %v2557, %v2594
          %v2638 = vadd.f32 %v2558, %v2596
          %v2639 = vadd.f32 %v2559, %v2598
          %v2640 = vadd.f32 %v2560, %v2600
          %v2641 = vadd.f32 %v2561, %v2602
          %v2642 = vadd.f32 %v2562, %v2604
          %v2643 = vadd.f32 %v2563, %v2606
          %v2644 = vadd.f32 %v2564, %v2608
          %v2645 = vadd.f32 %v2565, %v2610
          %v2646 = vadd.f32 %v2566, %v2612
          %v2647 = vadd.f32 %v2567, %v2614
          %v2648 = vadd.f32 %v2568, %v2616
          %vm2649 = vcmask 523520
          %2650 = vst.msk [vmem:[#allocation5] sm:$0xff] %vm2649, %v2633
          %2651 = vst.msk [vmem:[#allocation5 + $0x8] sm:$0xff] %vm2649, %v2634
          %2652 = vst.msk [vmem:[#allocation5 + $0x10] sm:$0xff] %vm2649, %v2635
          %2653 = vst.msk [vmem:[#allocation5 + $0x18] sm:$0xff] %vm2649, %v2636
          %2654 = vst.msk [vmem:[#allocation5 + $0x20] sm:$0xff] %vm2649, %v2637
          %2655 = vst.msk [vmem:[#allocation5 + $0x28] sm:$0xff] %vm2649, %v2638
          %2656 = vst.msk [vmem:[#allocation5 + $0x30] sm:$0xff] %vm2649, %v2639
          %2657 = vst.msk [vmem:[#allocation5 + $0x38] sm:$0xff] %vm2649, %v2640
          %2658 = vst.msk [vmem:[#allocation5 + $0x40] sm:$0xff] %vm2649, %v2641
          %2659 = vst.msk [vmem:[#allocation5 + $0x48] sm:$0xff] %vm2649, %v2642
          %2660 = vst.msk [vmem:[#allocation5 + $0x50] sm:$0xff] %vm2649, %v2643
          %2661 = vst.msk [vmem:[#allocation5 + $0x58] sm:$0xff] %vm2649, %v2644
          %2662 = vst.msk [vmem:[#allocation5 + $0x60] sm:$0xff] %vm2649, %v2645
          %2663 = vst.msk [vmem:[#allocation5 + $0x68] sm:$0xff] %vm2649, %v2646
          %2664 = vst.msk [vmem:[#allocation5 + $0x70] sm:$0xff] %vm2649, %v2647
          %2665 = vst.msk [vmem:[#allocation5 + $0x78] sm:$0xff] %vm2649, %v2648
          %2666 = vst.msk [vmem:[%s2038] sm:$0xff] %vm1587, %v2087
          %2667 = vst.msk [vmem:[%s2038 + $0x8] sm:$0xff] %vm1587, %v2088
          %2668 = vst.msk [vmem:[%s2038 + $0x10] sm:$0xff] %vm1587, %v2089
          %2669 = vst.msk [vmem:[%s2038 + $0x18] sm:$0xff] %vm1587, %v2090
          %2670 = vst.msk [vmem:[%s2038 + $0x20] sm:$0xff] %vm1587, %v2091
          %2671 = vst.msk [vmem:[%s2038 + $0x28] sm:$0xff] %vm1587, %v2092
          %2672 = vst.msk [vmem:[%s2038 + $0x30] sm:$0xff] %vm1587, %v2093
          %2673 = vst.msk [vmem:[%s2038 + $0x38] sm:$0xff] %vm1587, %v2094
          %2674 = vst.msk [vmem:[%s2038 + $0x40] sm:$0xff] %vm1587, %v2095
          %2675 = vst.msk [vmem:[%s2038 + $0x48] sm:$0xff] %vm1587, %v2096
          %2676 = vst.msk [vmem:[%s2038 + $0x50] sm:$0xff] %vm1587, %v2097
          %2677 = vst.msk [vmem:[%s2038 + $0x58] sm:$0xff] %vm1587, %v2098
          %2678 = vst.msk [vmem:[%s2038 + $0x60] sm:$0xff] %vm1587, %v2099
          %2679 = vst.msk [vmem:[%s2038 + $0x68] sm:$0xff] %vm1587, %v2100
          %2680 = vst.msk [vmem:[%s2038 + $0x70] sm:$0xff] %vm1587, %v2101
          %2681 = vst.msk [vmem:[%s2038 + $0x78] sm:$0xff] %vm1587, %v2102
          %v2682 = vld [vmem:[#allocation2] sm:$0xf]
          %v2683 = vld [vmem:[#allocation2 + $0x4] sm:$0xf]
          %v2684 = vld [vmem:[#allocation2 + $0x8] sm:$0xf]
          %v2685 = vld [vmem:[#allocation2 + $0xc] sm:$0xf]
          %v2686 = vld [vmem:[#allocation2 + $0x10] sm:$0xf]
          %v2687 = vld [vmem:[#allocation2 + $0x14] sm:$0xf]
          %v2688 = vld [vmem:[#allocation2 + $0x18] sm:$0xf]
          %v2689 = vld [vmem:[#allocation2 + $0x1c] sm:$0xf]
          %v2690 = vld [vmem:[#allocation2 + $0x20] sm:$0xf]
          %v2691 = vld [vmem:[#allocation2 + $0x24] sm:$0xf]
          %v2692 = vld [vmem:[#allocation2 + $0x28] sm:$0xf]
          %v2693 = vld [vmem:[#allocation2 + $0x2c] sm:$0xf]
          %v2694 = vld [vmem:[#allocation2 + $0x30] sm:$0xf]
          %v2695 = vld [vmem:[#allocation2 + $0x34] sm:$0xf]
          %v2696 = vld [vmem:[#allocation2 + $0x38] sm:$0xf]
          %v2697 = vld [vmem:[#allocation2 + $0x3c] sm:$0xf]
          %v2714 = vunpack.c.l.b16 %v2682
          %v2715 = vunpack.c.l.b16 %v2683
          %v2716 = vunpack.c.l.b16 %v2684
          %v2717 = vunpack.c.l.b16 %v2685
          %v2718 = vunpack.c.l.b16 %v2686
          %v2719 = vunpack.c.l.b16 %v2687
          %v2720 = vunpack.c.l.b16 %v2688
          %v2721 = vunpack.c.l.b16 %v2689
          %v2722 = vunpack.c.l.b16 %v2690
          %v2723 = vunpack.c.l.b16 %v2691
          %v2724 = vunpack.c.l.b16 %v2692
          %v2725 = vunpack.c.l.b16 %v2693
          %v2726 = vunpack.c.l.b16 %v2694
          %v2727 = vunpack.c.l.b16 %v2695
          %v2728 = vunpack.c.l.b16 %v2696
          %v2729 = vunpack.c.l.b16 %v2697
          %v2730 = vpack.c.b16 %v2715, %v2714
          %v2731 = vpack.c.b16 %v2717, %v2716
          %v2732 = vpack.c.b16 %v2719, %v2718
          %v2733 = vpack.c.b16 %v2721, %v2720
          %v2734 = vpack.c.b16 %v2723, %v2722
          %v2735 = vpack.c.b16 %v2725, %v2724
          %v2736 = vpack.c.b16 %v2727, %v2726
          %v2737 = vpack.c.b16 %v2729, %v2728
          %2738 = vrot.lane.b32.xlu0 %v2730, 64
          %v2739 = vpop.permute.xlu0 %2738
          %2740 = vrot.lane.b32.xlu0 %v2731, 64
          %v2741 = vpop.permute.xlu0 %2740
          %2742 = vrot.lane.b32.xlu0 %v2732, 64
          %v2743 = vpop.permute.xlu0 %2742
          %2744 = vrot.lane.b32.xlu0 %v2733, 64
          %v2745 = vpop.permute.xlu0 %2744
          %2746 = vrot.lane.b32.xlu0 %v2734, 64
          %v2747 = vpop.permute.xlu0 %2746
          %2748 = vrot.lane.b32.xlu0 %v2735, 64
          %v2749 = vpop.permute.xlu0 %2748
          %2750 = vrot.lane.b32.xlu0 %v2736, 64
          %v2751 = vpop.permute.xlu0 %2750
          %2752 = vrot.lane.b32.xlu0 %v2737, 64
          %v2753 = vpop.permute.xlu0 %2752
          %2754 = vrot.lane.b32.xlu0 %v1161, 64
          %v2755 = vpop.permute.xlu0 %2754
          %2756 = vrot.lane.b32.xlu0 %v1162, 64
          %v2757 = vpop.permute.xlu0 %2756
          %2758 = vrot.lane.b32.xlu0 %v1163, 64
          %v2759 = vpop.permute.xlu0 %2758
          %2760 = vrot.lane.b32.xlu0 %v1164, 64
          %v2761 = vpop.permute.xlu0 %2760
          %2762 = vrot.lane.b32.xlu0 %v1165, 64
          %v2763 = vpop.permute.xlu0 %2762
          %2764 = vrot.lane.b32.xlu0 %v1166, 64
          %v2765 = vpop.permute.xlu0 %2764
          %2766 = vrot.lane.b32.xlu0 %v1167, 64
          %v2767 = vpop.permute.xlu0 %2766
          %2768 = vrot.lane.b32.xlu0 %v1168, 64
          %v2769 = vpop.permute.xlu0 %2768
          %v2771 = vsel %vm1169, %v2739, 0
          %v2774 = vsel %vm1169, %v2741, 0
          %v2777 = vsel %vm1169, %v2743, 0
          %v2780 = vsel %vm1169, %v2745, 0
          %v2783 = vsel %vm1169, %v2747, 0
          %v2786 = vsel %vm1169, %v2749, 0
          %v2789 = vsel %vm1169, %v2751, 0
          %v2792 = vsel %vm1169, %v2753, 0
          %v2795 = vsel %vm1169, %v2755, 0
          %v2798 = vsel %vm1169, %v2757, 0
          %v2801 = vsel %vm1169, %v2759, 0
          %v2804 = vsel %vm1169, %v2761, 0
          %v2807 = vsel %vm1169, %v2763, 0
          %v2810 = vsel %vm1169, %v2765, 0
          %v2813 = vsel %vm1169, %v2767, 0
          %v2816 = vsel %vm1169, %v2769, 0
          %2818 = vmatpush.bf16.xpose.msra.mxu0 %v2816
          %2819 = vmatpush.bf16.xpose.msra.mxu0 %v2813
          %2820 = vmatpush.bf16.xpose.msra.mxu0 %v2810
          %2821 = vmatpush.bf16.xpose.msra.mxu0 %v2807
          %2822 = vmatpush.bf16.xpose.msra.mxu0 %v2804
          %2823 = vmatpush.bf16.xpose.msra.mxu0 %v2801
          %2824 = vmatpush.bf16.xpose.msra.mxu0 %v2798
          %2825 = vmatpush.bf16.xpose.msra.mxu0 %v2795
          %2826 = vmatmul.bf16.gmra.mxu0 %v2771
          %v2827 = vpop.f32.mrf.mxu0
          %v2828 = vadd.f32 0.0, %v2827
          %v2829 = vpop.f32.mrf.mxu0
          %v2830 = vadd.f32 0.0, %v2829
          %2831 = vmatmul.bf16.gmra.mxu0 %v2774
          %v2832 = vpop.f32.mrf.mxu0
          %v2833 = vadd.f32 0.0, %v2832
          %v2834 = vpop.f32.mrf.mxu0
          %v2835 = vadd.f32 0.0, %v2834
          %2836 = vmatmul.bf16.gmra.mxu0 %v2777
          %v2837 = vpop.f32.mrf.mxu0
          %v2838 = vadd.f32 0.0, %v2837
          %v2839 = vpop.f32.mrf.mxu0
          %v2840 = vadd.f32 0.0, %v2839
          %2841 = vmatmul.bf16.gmra.mxu0 %v2780
          %v2842 = vpop.f32.mrf.mxu0
          %v2843 = vadd.f32 0.0, %v2842
          %v2844 = vpop.f32.mrf.mxu0
          %v2845 = vadd.f32 0.0, %v2844
          %2846 = vmatmul.bf16.gmra.mxu0 %v2783
          %v2847 = vpop.f32.mrf.mxu0
          %v2848 = vadd.f32 0.0, %v2847
          %v2849 = vpop.f32.mrf.mxu0
          %v2850 = vadd.f32 0.0, %v2849
          %2851 = vmatmul.bf16.gmra.mxu0 %v2786
          %v2852 = vpop.f32.mrf.mxu0
          %v2853 = vadd.f32 0.0, %v2852
          %v2854 = vpop.f32.mrf.mxu0
          %v2855 = vadd.f32 0.0, %v2854
          %2856 = vmatmul.bf16.gmra.mxu0 %v2789
          %v2857 = vpop.f32.mrf.mxu0
          %v2858 = vadd.f32 0.0, %v2857
          %v2859 = vpop.f32.mrf.mxu0
          %v2860 = vadd.f32 0.0, %v2859
          %2861 = vmatmul.bf16.gmra.mxu0 %v2792
          %v2862 = vpop.f32.mrf.mxu0
          %v2863 = vadd.f32 0.0, %v2862
          %v2864 = vpop.f32.mrf.mxu0
          %v2865 = vadd.f32 0.0, %v2864
          %2866 = vdwg.mxu0
          %s2867 = scalar_lea.vmem [#allocation3], 256
          %v2868 = vld [vmem:[%s2867] sm:$0xff]
          %v2869 = vld [vmem:[%s2867 + $0x8] sm:$0xff]
          %v2870 = vld [vmem:[%s2867 + $0x10] sm:$0xff]
          %v2871 = vld [vmem:[%s2867 + $0x18] sm:$0xff]
          %v2872 = vld [vmem:[%s2867 + $0x20] sm:$0xff]
          %v2873 = vld [vmem:[%s2867 + $0x28] sm:$0xff]
          %v2874 = vld [vmem:[%s2867 + $0x30] sm:$0xff]
          %v2875 = vld [vmem:[%s2867 + $0x38] sm:$0xff]
          %v2876 = vld [vmem:[%s2867 + $0x40] sm:$0xff]
          %v2877 = vld [vmem:[%s2867 + $0x48] sm:$0xff]
          %v2878 = vld [vmem:[%s2867 + $0x50] sm:$0xff]
          %v2879 = vld [vmem:[%s2867 + $0x58] sm:$0xff]
          %v2880 = vld [vmem:[%s2867 + $0x60] sm:$0xff]
          %v2881 = vld [vmem:[%s2867 + $0x68] sm:$0xff]
          %v2882 = vld [vmem:[%s2867 + $0x70] sm:$0xff]
          %v2883 = vld [vmem:[%s2867 + $0x78] sm:$0xff]
          %2884 = vmax.xlane.f32.xlu0 %v2828
          %v2885 = vpop.xlane.xlu0 %2884
          %2886 = vmax.xlane.f32.xlu0 %v2830
          %v2887 = vpop.xlane.xlu0 %2886
          %2888 = vmax.xlane.f32.xlu0 %v2833
          %v2889 = vpop.xlane.xlu0 %2888
          %2890 = vmax.xlane.f32.xlu0 %v2835
          %v2891 = vpop.xlane.xlu0 %2890
          %2892 = vmax.xlane.f32.xlu0 %v2838
          %v2893 = vpop.xlane.xlu0 %2892
          %2894 = vmax.xlane.f32.xlu0 %v2840
          %v2895 = vpop.xlane.xlu0 %2894
          %2896 = vmax.xlane.f32.xlu0 %v2843
          %v2897 = vpop.xlane.xlu0 %2896
          %2898 = vmax.xlane.f32.xlu0 %v2845
          %v2899 = vpop.xlane.xlu0 %2898
          %2900 = vmax.xlane.f32.xlu0 %v2848
          %v2901 = vpop.xlane.xlu0 %2900
          %2902 = vmax.xlane.f32.xlu0 %v2850
          %v2903 = vpop.xlane.xlu0 %2902
          %2904 = vmax.xlane.f32.xlu0 %v2853
          %v2905 = vpop.xlane.xlu0 %2904
          %2906 = vmax.xlane.f32.xlu0 %v2855
          %v2907 = vpop.xlane.xlu0 %2906
          %2908 = vmax.xlane.f32.xlu0 %v2858
          %v2909 = vpop.xlane.xlu0 %2908
          %2910 = vmax.xlane.f32.xlu0 %v2860
          %v2911 = vpop.xlane.xlu0 %2910
          %2912 = vmax.xlane.f32.xlu0 %v2863
          %v2913 = vpop.xlane.xlu0 %2912
          %2914 = vmax.xlane.f32.xlu0 %v2865
          %v2915 = vpop.xlane.xlu0 %2914
          %v2916 = vmax.f32 %v2868, %v2885
          %v2917 = vmax.f32 %v2869, %v2887
          %v2918 = vmax.f32 %v2870, %v2889
          %v2919 = vmax.f32 %v2871, %v2891
          %v2920 = vmax.f32 %v2872, %v2893
          %v2921 = vmax.f32 %v2873, %v2895
          %v2922 = vmax.f32 %v2874, %v2897
          %v2923 = vmax.f32 %v2875, %v2899
          %v2924 = vmax.f32 %v2876, %v2901
          %v2925 = vmax.f32 %v2877, %v2903
          %v2926 = vmax.f32 %v2878, %v2905
          %v2927 = vmax.f32 %v2879, %v2907
          %v2928 = vmax.f32 %v2880, %v2909
          %v2929 = vmax.f32 %v2881, %v2911
          %v2930 = vmax.f32 %v2882, %v2913
          %v2931 = vmax.f32 %v2883, %v2915
          %v2932 = vsub.f32 %v2868, %v2916
          %v2933 = vsub.f32 %v2869, %v2917
          %v2934 = vsub.f32 %v2870, %v2918
          %v2935 = vsub.f32 %v2871, %v2919
          %v2936 = vsub.f32 %v2872, %v2920
          %v2937 = vsub.f32 %v2873, %v2921
          %v2938 = vsub.f32 %v2874, %v2922
          %v2939 = vsub.f32 %v2875, %v2923
          %v2940 = vsub.f32 %v2876, %v2924
          %v2941 = vsub.f32 %v2877, %v2925
          %v2942 = vsub.f32 %v2878, %v2926
          %v2943 = vsub.f32 %v2879, %v2927
          %v2944 = vsub.f32 %v2880, %v2928
          %v2945 = vsub.f32 %v2881, %v2929
          %v2946 = vsub.f32 %v2882, %v2930
          %v2947 = vsub.f32 %v2883, %v2931
          %v2948 = vmul.f32 %v2932, 1.442695
          %v2949 = vpow.pop %v2948
          %v2950 = vmul.f32 %v2933, 1.442695
          %v2951 = vpow.pop %v2950
          %v2952 = vmul.f32 %v2934, 1.442695
          %v2953 = vpow.pop %v2952
          %v2954 = vmul.f32 %v2935, 1.442695
          %v2955 = vpow.pop %v2954
          %v2956 = vmul.f32 %v2936, 1.442695
          %v2957 = vpow.pop %v2956
          %v2958 = vmul.f32 %v2937, 1.442695
          %v2959 = vpow.pop %v2958
          %v2960 = vmul.f32 %v2938, 1.442695
          %v2961 = vpow.pop %v2960
          %v2962 = vmul.f32 %v2939, 1.442695
          %v2963 = vpow.pop %v2962
          %v2964 = vmul.f32 %v2940, 1.442695
          %v2965 = vpow.pop %v2964
          %v2966 = vmul.f32 %v2941, 1.442695
          %v2967 = vpow.pop %v2966
          %v2968 = vmul.f32 %v2942, 1.442695
          %v2969 = vpow.pop %v2968
          %v2970 = vmul.f32 %v2943, 1.442695
          %v2971 = vpow.pop %v2970
          %v2972 = vmul.f32 %v2944, 1.442695
          %v2973 = vpow.pop %v2972
          %v2974 = vmul.f32 %v2945, 1.442695
          %v2975 = vpow.pop %v2974
          %v2976 = vmul.f32 %v2946, 1.442695
          %v2977 = vpow.pop %v2976
          %v2978 = vmul.f32 %v2947, 1.442695
          %v2979 = vpow.pop %v2978
          %2981 = vset.pattern.permute.xlu0 0
          %2982 = vperm.xlu0 %2981, %v2916
          %v2983 = vpop.permute.xlu0 %2982
          %2986 = vset.pattern.permute.xlu0 0
          %2987 = vperm.xlu0 %2986, %v2917
          %v2988 = vpop.permute.xlu0 %2987
          %2991 = vset.pattern.permute.xlu0 0
          %2992 = vperm.xlu0 %2991, %v2918
          %v2993 = vpop.permute.xlu0 %2992
          %2996 = vset.pattern.permute.xlu0 0
          %2997 = vperm.xlu0 %2996, %v2919
          %v2998 = vpop.permute.xlu0 %2997
          %3001 = vset.pattern.permute.xlu0 0
          %3002 = vperm.xlu0 %3001, %v2920
          %v3003 = vpop.permute.xlu0 %3002
          %3006 = vset.pattern.permute.xlu0 0
          %3007 = vperm.xlu0 %3006, %v2921
          %v3008 = vpop.permute.xlu0 %3007
          %3011 = vset.pattern.permute.xlu0 0
          %3012 = vperm.xlu0 %3011, %v2922
          %v3013 = vpop.permute.xlu0 %3012
          %3016 = vset.pattern.permute.xlu0 0
          %3017 = vperm.xlu0 %3016, %v2923
          %v3018 = vpop.permute.xlu0 %3017
          %3021 = vset.pattern.permute.xlu0 0
          %3022 = vperm.xlu0 %3021, %v2924
          %v3023 = vpop.permute.xlu0 %3022
          %3026 = vset.pattern.permute.xlu0 0
          %3027 = vperm.xlu0 %3026, %v2925
          %v3028 = vpop.permute.xlu0 %3027
          %3031 = vset.pattern.permute.xlu0 0
          %3032 = vperm.xlu0 %3031, %v2926
          %v3033 = vpop.permute.xlu0 %3032
          %3036 = vset.pattern.permute.xlu0 0
          %3037 = vperm.xlu0 %3036, %v2927
          %v3038 = vpop.permute.xlu0 %3037
          %3041 = vset.pattern.permute.xlu0 0
          %3042 = vperm.xlu0 %3041, %v2928
          %v3043 = vpop.permute.xlu0 %3042
          %3046 = vset.pattern.permute.xlu0 0
          %3047 = vperm.xlu0 %3046, %v2929
          %v3048 = vpop.permute.xlu0 %3047
          %3051 = vset.pattern.permute.xlu0 0
          %3052 = vperm.xlu0 %3051, %v2930
          %v3053 = vpop.permute.xlu0 %3052
          %3056 = vset.pattern.permute.xlu0 0
          %3057 = vperm.xlu0 %3056, %v2931
          %v3058 = vpop.permute.xlu0 %3057
          %v3060 = vsub.f32 %v2828, %v2983
          %v3061 = vsub.f32 %v2830, %v2988
          %v3062 = vsub.f32 %v2833, %v2993
          %v3063 = vsub.f32 %v2835, %v2998
          %v3064 = vsub.f32 %v2838, %v3003
          %v3065 = vsub.f32 %v2840, %v3008
          %v3066 = vsub.f32 %v2843, %v3013
          %v3067 = vsub.f32 %v2845, %v3018
          %v3068 = vsub.f32 %v2848, %v3023
          %v3069 = vsub.f32 %v2850, %v3028
          %v3070 = vsub.f32 %v2853, %v3033
          %v3071 = vsub.f32 %v2855, %v3038
          %v3072 = vsub.f32 %v2858, %v3043
          %v3073 = vsub.f32 %v2860, %v3048
          %v3074 = vsub.f32 %v2863, %v3053
          %v3075 = vsub.f32 %v2865, %v3058
          %v3076 = vmul.f32 %v3060, 1.442695
          %v3077 = vpow.pop %v3076
          %v3078 = vmul.f32 %v3061, 1.442695
          %v3079 = vpow.pop %v3078
          %v3080 = vmul.f32 %v3062, 1.442695
          %v3081 = vpow.pop %v3080
          %v3082 = vmul.f32 %v3063, 1.442695
          %v3083 = vpow.pop %v3082
          %v3084 = vmul.f32 %v3064, 1.442695
          %v3085 = vpow.pop %v3084
          %v3086 = vmul.f32 %v3065, 1.442695
          %v3087 = vpow.pop %v3086
          %v3088 = vmul.f32 %v3066, 1.442695
          %v3089 = vpow.pop %v3088
          %v3090 = vmul.f32 %v3067, 1.442695
          %v3091 = vpow.pop %v3090
          %v3092 = vmul.f32 %v3068, 1.442695
          %v3093 = vpow.pop %v3092
          %v3094 = vmul.f32 %v3069, 1.442695
          %v3095 = vpow.pop %v3094
          %v3096 = vmul.f32 %v3070, 1.442695
          %v3097 = vpow.pop %v3096
          %v3098 = vmul.f32 %v3071, 1.442695
          %v3099 = vpow.pop %v3098
          %v3100 = vmul.f32 %v3072, 1.442695
          %v3101 = vpow.pop %v3100
          %v3102 = vmul.f32 %v3073, 1.442695
          %v3103 = vpow.pop %v3102
          %v3104 = vmul.f32 %v3074, 1.442695
          %v3105 = vpow.pop %v3104
          %v3106 = vmul.f32 %v3075, 1.442695
          %v3107 = vpow.pop %v3106
          %s3108 = scalar_lea.vmem [#allocation4], 256
          %v3109 = vld [vmem:[%s3108] sm:$0xff]
          %v3110 = vld [vmem:[%s3108 + $0x8] sm:$0xff]
          %v3111 = vld [vmem:[%s3108 + $0x10] sm:$0xff]
          %v3112 = vld [vmem:[%s3108 + $0x18] sm:$0xff]
          %v3113 = vld [vmem:[%s3108 + $0x20] sm:$0xff]
          %v3114 = vld [vmem:[%s3108 + $0x28] sm:$0xff]
          %v3115 = vld [vmem:[%s3108 + $0x30] sm:$0xff]
          %v3116 = vld [vmem:[%s3108 + $0x38] sm:$0xff]
          %v3117 = vld [vmem:[%s3108 + $0x40] sm:$0xff]
          %v3118 = vld [vmem:[%s3108 + $0x48] sm:$0xff]
          %v3119 = vld [vmem:[%s3108 + $0x50] sm:$0xff]
          %v3120 = vld [vmem:[%s3108 + $0x58] sm:$0xff]
          %v3121 = vld [vmem:[%s3108 + $0x60] sm:$0xff]
          %v3122 = vld [vmem:[%s3108 + $0x68] sm:$0xff]
          %v3123 = vld [vmem:[%s3108 + $0x70] sm:$0xff]
          %v3124 = vld [vmem:[%s3108 + $0x78] sm:$0xff]
          %v3125 = vmul.f32 %v2949, %v3109
          %v3126 = vmul.f32 %v2951, %v3110
          %v3127 = vmul.f32 %v2953, %v3111
          %v3128 = vmul.f32 %v2955, %v3112
          %v3129 = vmul.f32 %v2957, %v3113
          %v3130 = vmul.f32 %v2959, %v3114
          %v3131 = vmul.f32 %v2961, %v3115
          %v3132 = vmul.f32 %v2963, %v3116
          %v3133 = vmul.f32 %v2965, %v3117
          %v3134 = vmul.f32 %v2967, %v3118
          %v3135 = vmul.f32 %v2969, %v3119
          %v3136 = vmul.f32 %v2971, %v3120
          %v3137 = vmul.f32 %v2973, %v3121
          %v3138 = vmul.f32 %v2975, %v3122
          %v3139 = vmul.f32 %v2977, %v3123
          %v3140 = vmul.f32 %v2979, %v3124
          %3141 = vadd.xlane.f32.xlu0 %v3077
          %v3142 = vpop.xlane.xlu0 %3141
          %3143 = vadd.xlane.f32.xlu0 %v3079
          %v3144 = vpop.xlane.xlu0 %3143
          %3145 = vadd.xlane.f32.xlu0 %v3081
          %v3146 = vpop.xlane.xlu0 %3145
          %3147 = vadd.xlane.f32.xlu0 %v3083
          %v3148 = vpop.xlane.xlu0 %3147
          %3149 = vadd.xlane.f32.xlu0 %v3085
          %v3150 = vpop.xlane.xlu0 %3149
          %3151 = vadd.xlane.f32.xlu0 %v3087
          %v3152 = vpop.xlane.xlu0 %3151
          %3153 = vadd.xlane.f32.xlu0 %v3089
          %v3154 = vpop.xlane.xlu0 %3153
          %3155 = vadd.xlane.f32.xlu0 %v3091
          %v3156 = vpop.xlane.xlu0 %3155
          %3157 = vadd.xlane.f32.xlu0 %v3093
          %v3158 = vpop.xlane.xlu0 %3157
          %3159 = vadd.xlane.f32.xlu0 %v3095
          %v3160 = vpop.xlane.xlu0 %3159
          %3161 = vadd.xlane.f32.xlu0 %v3097
          %v3162 = vpop.xlane.xlu0 %3161
          %3163 = vadd.xlane.f32.xlu0 %v3099
          %v3164 = vpop.xlane.xlu0 %3163
          %3165 = vadd.xlane.f32.xlu0 %v3101
          %v3166 = vpop.xlane.xlu0 %3165
          %3167 = vadd.xlane.f32.xlu0 %v3103
          %v3168 = vpop.xlane.xlu0 %3167
          %3169 = vadd.xlane.f32.xlu0 %v3105
          %v3170 = vpop.xlane.xlu0 %3169
          %3171 = vadd.xlane.f32.xlu0 %v3107
          %v3172 = vpop.xlane.xlu0 %3171
          %v3173 = vadd.f32 %v3125, %v3142
          %v3174 = vadd.f32 %v3126, %v3144
          %v3175 = vadd.f32 %v3127, %v3146
          %v3176 = vadd.f32 %v3128, %v3148
          %v3177 = vadd.f32 %v3129, %v3150
          %v3178 = vadd.f32 %v3130, %v3152
          %v3179 = vadd.f32 %v3131, %v3154
          %v3180 = vadd.f32 %v3132, %v3156
          %v3181 = vadd.f32 %v3133, %v3158
          %v3182 = vadd.f32 %v3134, %v3160
          %v3183 = vadd.f32 %v3135, %v3162
          %v3184 = vadd.f32 %v3136, %v3164
          %v3185 = vadd.f32 %v3137, %v3166
          %v3186 = vadd.f32 %v3138, %v3168
          %v3187 = vadd.f32 %v3139, %v3170
          %v3188 = vadd.f32 %v3140, %v3172
          %3189 = vst.msk [vmem:[%s3108] sm:$0xff] %vm1587, %v3173
          %3190 = vst.msk [vmem:[%s3108 + $0x8] sm:$0xff] %vm1587, %v3174
          %3191 = vst.msk [vmem:[%s3108 + $0x10] sm:$0xff] %vm1587, %v3175
          %3192 = vst.msk [vmem:[%s3108 + $0x18] sm:$0xff] %vm1587, %v3176
          %3193 = vst.msk [vmem:[%s3108 + $0x20] sm:$0xff] %vm1587, %v3177
          %3194 = vst.msk [vmem:[%s3108 + $0x28] sm:$0xff] %vm1587, %v3178
          %3195 = vst.msk [vmem:[%s3108 + $0x30] sm:$0xff] %vm1587, %v3179
          %3196 = vst.msk [vmem:[%s3108 + $0x38] sm:$0xff] %vm1587, %v3180
          %3197 = vst.msk [vmem:[%s3108 + $0x40] sm:$0xff] %vm1587, %v3181
          %3198 = vst.msk [vmem:[%s3108 + $0x48] sm:$0xff] %vm1587, %v3182
          %3199 = vst.msk [vmem:[%s3108 + $0x50] sm:$0xff] %vm1587, %v3183
          %3200 = vst.msk [vmem:[%s3108 + $0x58] sm:$0xff] %vm1587, %v3184
          %3201 = vst.msk [vmem:[%s3108 + $0x60] sm:$0xff] %vm1587, %v3185
          %3202 = vst.msk [vmem:[%s3108 + $0x68] sm:$0xff] %vm1587, %v3186
          %3203 = vst.msk [vmem:[%s3108 + $0x70] sm:$0xff] %vm1587, %v3187
          %3204 = vst.msk [vmem:[%s3108 + $0x78] sm:$0xff] %vm1587, %v3188
          %v3205 = vpack.c.bf16 %v3079, %v3077
          %v3206 = vpack.c.bf16 %v3083, %v3081
          %v3207 = vpack.c.bf16 %v3087, %v3085
          %v3208 = vpack.c.bf16 %v3091, %v3089
          %v3209 = vpack.c.bf16 %v3095, %v3093
          %v3210 = vpack.c.bf16 %v3099, %v3097
          %v3211 = vpack.c.bf16 %v3103, %v3101
          %v3212 = vpack.c.bf16 %v3107, %v3105
          %3213 = vrot.lane.b32.xlu0 %v1628, 64
          %v3214 = vpop.permute.xlu0 %3213
          %3215 = vrot.lane.b32.xlu0 %v1629, 64
          %v3216 = vpop.permute.xlu0 %3215
          %3217 = vrot.lane.b32.xlu0 %v1630, 64
          %v3218 = vpop.permute.xlu0 %3217
          %3219 = vrot.lane.b32.xlu0 %v1631, 64
          %v3220 = vpop.permute.xlu0 %3219
          %3221 = vrot.lane.b32.xlu0 %v1632, 64
          %v3222 = vpop.permute.xlu0 %3221
          %3223 = vrot.lane.b32.xlu0 %v1633, 64
          %v3224 = vpop.permute.xlu0 %3223
          %3225 = vrot.lane.b32.xlu0 %v1634, 64
          %v3226 = vpop.permute.xlu0 %3225
          %3227 = vrot.lane.b32.xlu0 %v1635, 64
          %v3228 = vpop.permute.xlu0 %3227
          %3237 = vmatpush.bf16.msra.mxu0 %v3228
          %3238 = vmatpush.bf16.msra.mxu0 %v3226
          %3239 = vmatpush.bf16.msra.mxu0 %v3224
          %3240 = vmatpush.bf16.msra.mxu0 %v3222
          %3241 = vmatpush.bf16.msra.mxu0 %v3220
          %3242 = vmatpush.bf16.msra.mxu0 %v3218
          %3243 = vmatpush.bf16.msra.mxu0 %v3216
          %3244 = vmatpush.bf16.msra.mxu0 %v3214
          %3245 = vmatmul.bf16.gmra.mxu0 %v3205
          %v3246 = vpop.f32.mrf.mxu0
          %v3247 = vadd.f32 0.0, %v3246
          %v3248 = vpop.f32.mrf.mxu0
          %v3249 = vadd.f32 0.0, %v3248
          %3250 = vmatmul.bf16.gmra.mxu0 %v3206
          %v3251 = vpop.f32.mrf.mxu0
          %v3252 = vadd.f32 0.0, %v3251
          %v3253 = vpop.f32.mrf.mxu0
          %v3254 = vadd.f32 0.0, %v3253
          %3255 = vmatmul.bf16.gmra.mxu0 %v3207
          %v3256 = vpop.f32.mrf.mxu0
          %v3257 = vadd.f32 0.0, %v3256
          %v3258 = vpop.f32.mrf.mxu0
          %v3259 = vadd.f32 0.0, %v3258
          %3260 = vmatmul.bf16.gmra.mxu0 %v3208
          %v3261 = vpop.f32.mrf.mxu0
          %v3262 = vadd.f32 0.0, %v3261
          %v3263 = vpop.f32.mrf.mxu0
          %v3264 = vadd.f32 0.0, %v3263
          %3265 = vmatmul.bf16.gmra.mxu0 %v3209
          %v3266 = vpop.f32.mrf.mxu0
          %v3267 = vadd.f32 0.0, %v3266
          %v3268 = vpop.f32.mrf.mxu0
          %v3269 = vadd.f32 0.0, %v3268
          %3270 = vmatmul.bf16.gmra.mxu0 %v3210
          %v3271 = vpop.f32.mrf.mxu0
          %v3272 = vadd.f32 0.0, %v3271
          %v3273 = vpop.f32.mrf.mxu0
          %v3274 = vadd.f32 0.0, %v3273
          %3275 = vmatmul.bf16.gmra.mxu0 %v3211
          %v3276 = vpop.f32.mrf.mxu0
          %v3277 = vadd.f32 0.0, %v3276
          %v3278 = vpop.f32.mrf.mxu0
          %v3279 = vadd.f32 0.0, %v3278
          %3280 = vmatmul.bf16.gmra.mxu0 %v3212
          %v3281 = vpop.f32.mrf.mxu0
          %v3282 = vadd.f32 0.0, %v3281
          %v3283 = vpop.f32.mrf.mxu0
          %v3284 = vadd.f32 0.0, %v3283
          %3285 = vdwg.mxu0
          %v3286 = vld [vmem:[#allocation5] sm:$0xff]
          %v3287 = vld [vmem:[#allocation5 + $0x8] sm:$0xff]
          %v3288 = vld [vmem:[#allocation5 + $0x10] sm:$0xff]
          %v3289 = vld [vmem:[#allocation5 + $0x18] sm:$0xff]
          %v3290 = vld [vmem:[#allocation5 + $0x20] sm:$0xff]
          %v3291 = vld [vmem:[#allocation5 + $0x28] sm:$0xff]
          %v3292 = vld [vmem:[#allocation5 + $0x30] sm:$0xff]
          %v3293 = vld [vmem:[#allocation5 + $0x38] sm:$0xff]
          %v3294 = vld [vmem:[#allocation5 + $0x40] sm:$0xff]
          %v3295 = vld [vmem:[#allocation5 + $0x48] sm:$0xff]
          %v3296 = vld [vmem:[#allocation5 + $0x50] sm:$0xff]
          %v3297 = vld [vmem:[#allocation5 + $0x58] sm:$0xff]
          %v3298 = vld [vmem:[#allocation5 + $0x60] sm:$0xff]
          %v3299 = vld [vmem:[#allocation5 + $0x68] sm:$0xff]
          %v3300 = vld [vmem:[#allocation5 + $0x70] sm:$0xff]
          %v3301 = vld [vmem:[#allocation5 + $0x78] sm:$0xff]
          %3303 = vset.pattern.permute.xlu0 0
          %3304 = vperm.xlu0 %3303, %v2949
          %v3305 = vpop.permute.xlu0 %3304
          %3308 = vset.pattern.permute.xlu0 0
          %3309 = vperm.xlu0 %3308, %v2951
          %v3310 = vpop.permute.xlu0 %3309
          %3313 = vset.pattern.permute.xlu0 0
          %3314 = vperm.xlu0 %3313, %v2953
          %v3315 = vpop.permute.xlu0 %3314
          %3318 = vset.pattern.permute.xlu0 0
          %3319 = vperm.xlu0 %3318, %v2955
          %v3320 = vpop.permute.xlu0 %3319
          %3323 = vset.pattern.permute.xlu0 0
          %3324 = vperm.xlu0 %3323, %v2957
          %v3325 = vpop.permute.xlu0 %3324
          %3328 = vset.pattern.permute.xlu0 0
          %3329 = vperm.xlu0 %3328, %v2959
          %v3330 = vpop.permute.xlu0 %3329
          %3333 = vset.pattern.permute.xlu0 0
          %3334 = vperm.xlu0 %3333, %v2961
          %v3335 = vpop.permute.xlu0 %3334
          %3338 = vset.pattern.permute.xlu0 0
          %3339 = vperm.xlu0 %3338, %v2963
          %v3340 = vpop.permute.xlu0 %3339
          %3343 = vset.pattern.permute.xlu0 0
          %3344 = vperm.xlu0 %3343, %v2965
          %v3345 = vpop.permute.xlu0 %3344
          %3348 = vset.pattern.permute.xlu0 0
          %3349 = vperm.xlu0 %3348, %v2967
          %v3350 = vpop.permute.xlu0 %3349
          %3353 = vset.pattern.permute.xlu0 0
          %3354 = vperm.xlu0 %3353, %v2969
          %v3355 = vpop.permute.xlu0 %3354
          %3358 = vset.pattern.permute.xlu0 0
          %3359 = vperm.xlu0 %3358, %v2971
          %v3360 = vpop.permute.xlu0 %3359
          %3363 = vset.pattern.permute.xlu0 0
          %3364 = vperm.xlu0 %3363, %v2973
          %v3365 = vpop.permute.xlu0 %3364
          %3368 = vset.pattern.permute.xlu0 0
          %3369 = vperm.xlu0 %3368, %v2975
          %v3370 = vpop.permute.xlu0 %3369
          %3373 = vset.pattern.permute.xlu0 0
          %3374 = vperm.xlu0 %3373, %v2977
          %v3375 = vpop.permute.xlu0 %3374
          %3378 = vset.pattern.permute.xlu0 0
          %3379 = vperm.xlu0 %3378, %v2979
          %v3380 = vpop.permute.xlu0 %3379
          %v3382 = vmul.f32 %v3305, %v3286
          %v3383 = vmul.f32 %v3310, %v3287
          %v3384 = vmul.f32 %v3315, %v3288
          %v3385 = vmul.f32 %v3320, %v3289
          %v3386 = vmul.f32 %v3325, %v3290
          %v3387 = vmul.f32 %v3330, %v3291
          %v3388 = vmul.f32 %v3335, %v3292
          %v3389 = vmul.f32 %v3340, %v3293
          %v3390 = vmul.f32 %v3345, %v3294
          %v3391 = vmul.f32 %v3350, %v3295
          %v3392 = vmul.f32 %v3355, %v3296
          %v3393 = vmul.f32 %v3360, %v3297
          %v3394 = vmul.f32 %v3365, %v3298
          %v3395 = vmul.f32 %v3370, %v3299
          %v3396 = vmul.f32 %v3375, %v3300
          %v3397 = vmul.f32 %v3380, %v3301
          %3414 = vrot.lane.b32.xlu0 %v3247, 64
          %v3415 = vpop.permute.xlu0 %3414
          %3416 = vrot.lane.b32.xlu0 %v3249, 64
          %v3417 = vpop.permute.xlu0 %3416
          %3418 = vrot.lane.b32.xlu0 %v3252, 64
          %v3419 = vpop.permute.xlu0 %3418
          %3420 = vrot.lane.b32.xlu0 %v3254, 64
          %v3421 = vpop.permute.xlu0 %3420
          %3422 = vrot.lane.b32.xlu0 %v3257, 64
          %v3423 = vpop.permute.xlu0 %3422
          %3424 = vrot.lane.b32.xlu0 %v3259, 64
          %v3425 = vpop.permute.xlu0 %3424
          %3426 = vrot.lane.b32.xlu0 %v3262, 64
          %v3427 = vpop.permute.xlu0 %3426
          %3428 = vrot.lane.b32.xlu0 %v3264, 64
          %v3429 = vpop.permute.xlu0 %3428
          %3430 = vrot.lane.b32.xlu0 %v3267, 64
          %v3431 = vpop.permute.xlu0 %3430
          %3432 = vrot.lane.b32.xlu0 %v3269, 64
          %v3433 = vpop.permute.xlu0 %3432
          %3434 = vrot.lane.b32.xlu0 %v3272, 64
          %v3435 = vpop.permute.xlu0 %3434
          %3436 = vrot.lane.b32.xlu0 %v3274, 64
          %v3437 = vpop.permute.xlu0 %3436
          %3438 = vrot.lane.b32.xlu0 %v3277, 64
          %v3439 = vpop.permute.xlu0 %3438
          %3440 = vrot.lane.b32.xlu0 %v3279, 64
          %v3441 = vpop.permute.xlu0 %3440
          %3442 = vrot.lane.b32.xlu0 %v3282, 64
          %v3443 = vpop.permute.xlu0 %3442
          %3444 = vrot.lane.b32.xlu0 %v3284, 64
          %v3445 = vpop.permute.xlu0 %3444
          %v3462 = vadd.f32 %v3382, %v3415
          %v3463 = vadd.f32 %v3383, %v3417
          %v3464 = vadd.f32 %v3384, %v3419
          %v3465 = vadd.f32 %v3385, %v3421
          %v3466 = vadd.f32 %v3386, %v3423
          %v3467 = vadd.f32 %v3387, %v3425
          %v3468 = vadd.f32 %v3388, %v3427
          %v3469 = vadd.f32 %v3389, %v3429
          %v3470 = vadd.f32 %v3390, %v3431
          %v3471 = vadd.f32 %v3391, %v3433
          %v3472 = vadd.f32 %v3392, %v3435
          %v3473 = vadd.f32 %v3393, %v3437
          %v3474 = vadd.f32 %v3394, %v3439
          %v3475 = vadd.f32 %v3395, %v3441
          %v3476 = vadd.f32 %v3396, %v3443
          %v3477 = vadd.f32 %v3397, %v3445
          %vm3478 = vcmask 785920
          %3479 = vst.msk [vmem:[#allocation5] sm:$0xff] %vm3478, %v3462
          %3480 = vst.msk [vmem:[#allocation5 + $0x8] sm:$0xff] %vm3478, %v3463
          %3481 = vst.msk [vmem:[#allocation5 + $0x10] sm:$0xff] %vm3478, %v3464
          %3482 = vst.msk [vmem:[#allocation5 + $0x18] sm:$0xff] %vm3478, %v3465
          %3483 = vst.msk [vmem:[#allocation5 + $0x20] sm:$0xff] %vm3478, %v3466
          %3484 = vst.msk [vmem:[#allocation5 + $0x28] sm:$0xff] %vm3478, %v3467
          %3485 = vst.msk [vmem:[#allocation5 + $0x30] sm:$0xff] %vm3478, %v3468
          %3486 = vst.msk [vmem:[#allocation5 + $0x38] sm:$0xff] %vm3478, %v3469
          %3487 = vst.msk [vmem:[#allocation5 + $0x40] sm:$0xff] %vm3478, %v3470
          %3488 = vst.msk [vmem:[#allocation5 + $0x48] sm:$0xff] %vm3478, %v3471
          %3489 = vst.msk [vmem:[#allocation5 + $0x50] sm:$0xff] %vm3478, %v3472
          %3490 = vst.msk [vmem:[#allocation5 + $0x58] sm:$0xff] %vm3478, %v3473
          %3491 = vst.msk [vmem:[#allocation5 + $0x60] sm:$0xff] %vm3478, %v3474
          %3492 = vst.msk [vmem:[#allocation5 + $0x68] sm:$0xff] %vm3478, %v3475
          %3493 = vst.msk [vmem:[#allocation5 + $0x70] sm:$0xff] %vm3478, %v3476
          %3494 = vst.msk [vmem:[#allocation5 + $0x78] sm:$0xff] %vm3478, %v3477
          %3495 = vst.msk [vmem:[%s2867] sm:$0xff] %vm1587, %v2916
          %3496 = vst.msk [vmem:[%s2867 + $0x8] sm:$0xff] %vm1587, %v2917
          %3497 = vst.msk [vmem:[%s2867 + $0x10] sm:$0xff] %vm1587, %v2918
          %3498 = vst.msk [vmem:[%s2867 + $0x18] sm:$0xff] %vm1587, %v2919
          %3499 = vst.msk [vmem:[%s2867 + $0x20] sm:$0xff] %vm1587, %v2920
          %3500 = vst.msk [vmem:[%s2867 + $0x28] sm:$0xff] %vm1587, %v2921
          %3501 = vst.msk [vmem:[%s2867 + $0x30] sm:$0xff] %vm1587, %v2922
          %3502 = vst.msk [vmem:[%s2867 + $0x38] sm:$0xff] %vm1587, %v2923
          %3503 = vst.msk [vmem:[%s2867 + $0x40] sm:$0xff] %vm1587, %v2924
          %3504 = vst.msk [vmem:[%s2867 + $0x48] sm:$0xff] %vm1587, %v2925
          %3505 = vst.msk [vmem:[%s2867 + $0x50] sm:$0xff] %vm1587, %v2926
          %3506 = vst.msk [vmem:[%s2867 + $0x58] sm:$0xff] %vm1587, %v2927
          %3507 = vst.msk [vmem:[%s2867 + $0x60] sm:$0xff] %vm1587, %v2928
          %3508 = vst.msk [vmem:[%s2867 + $0x68] sm:$0xff] %vm1587, %v2929
          %3509 = vst.msk [vmem:[%s2867 + $0x70] sm:$0xff] %vm1587, %v2930
          %3510 = vst.msk [vmem:[%s2867 + $0x78] sm:$0xff] %vm1587, %v2931
          %v3511 = vld [vmem:[#allocation2] sm:$0xf]
          %v3512 = vld [vmem:[#allocation2 + $0x4] sm:$0xf]
          %v3513 = vld [vmem:[#allocation2 + $0x8] sm:$0xf]
          %v3514 = vld [vmem:[#allocation2 + $0xc] sm:$0xf]
          %v3515 = vld [vmem:[#allocation2 + $0x10] sm:$0xf]
          %v3516 = vld [vmem:[#allocation2 + $0x14] sm:$0xf]
          %v3517 = vld [vmem:[#allocation2 + $0x18] sm:$0xf]
          %v3518 = vld [vmem:[#allocation2 + $0x1c] sm:$0xf]
          %v3519 = vld [vmem:[#allocation2 + $0x20] sm:$0xf]
          %v3520 = vld [vmem:[#allocation2 + $0x24] sm:$0xf]
          %v3521 = vld [vmem:[#allocation2 + $0x28] sm:$0xf]
          %v3522 = vld [vmem:[#allocation2 + $0x2c] sm:$0xf]
          %v3523 = vld [vmem:[#allocation2 + $0x30] sm:$0xf]
          %v3524 = vld [vmem:[#allocation2 + $0x34] sm:$0xf]
          %v3525 = vld [vmem:[#allocation2 + $0x38] sm:$0xf]
          %v3526 = vld [vmem:[#allocation2 + $0x3c] sm:$0xf]
          %v3543 = vunpack.c.l.b16 %v3511
          %v3544 = vunpack.c.l.b16 %v3512
          %v3545 = vunpack.c.l.b16 %v3513
          %v3546 = vunpack.c.l.b16 %v3514
          %v3547 = vunpack.c.l.b16 %v3515
          %v3548 = vunpack.c.l.b16 %v3516
          %v3549 = vunpack.c.l.b16 %v3517
          %v3550 = vunpack.c.l.b16 %v3518
          %v3551 = vunpack.c.l.b16 %v3519
          %v3552 = vunpack.c.l.b16 %v3520
          %v3553 = vunpack.c.l.b16 %v3521
          %v3554 = vunpack.c.l.b16 %v3522
          %v3555 = vunpack.c.l.b16 %v3523
          %v3556 = vunpack.c.l.b16 %v3524
          %v3557 = vunpack.c.l.b16 %v3525
          %v3558 = vunpack.c.l.b16 %v3526
          %v3559 = vpack.c.b16 %v3544, %v3543
          %v3560 = vpack.c.b16 %v3546, %v3545
          %v3561 = vpack.c.b16 %v3548, %v3547
          %v3562 = vpack.c.b16 %v3550, %v3549
          %v3563 = vpack.c.b16 %v3552, %v3551
          %v3564 = vpack.c.b16 %v3554, %v3553
          %v3565 = vpack.c.b16 %v3556, %v3555
          %v3566 = vpack.c.b16 %v3558, %v3557
          %3567 = vrot.lane.b32.xlu0 %v3559, 32
          %v3568 = vpop.permute.xlu0 %3567
          %3569 = vrot.lane.b32.xlu0 %v3560, 32
          %v3570 = vpop.permute.xlu0 %3569
          %3571 = vrot.lane.b32.xlu0 %v3561, 32
          %v3572 = vpop.permute.xlu0 %3571
          %3573 = vrot.lane.b32.xlu0 %v3562, 32
          %v3574 = vpop.permute.xlu0 %3573
          %3575 = vrot.lane.b32.xlu0 %v3563, 32
          %v3576 = vpop.permute.xlu0 %3575
          %3577 = vrot.lane.b32.xlu0 %v3564, 32
          %v3578 = vpop.permute.xlu0 %3577
          %3579 = vrot.lane.b32.xlu0 %v3565, 32
          %v3580 = vpop.permute.xlu0 %3579
          %3581 = vrot.lane.b32.xlu0 %v3566, 32
          %v3582 = vpop.permute.xlu0 %3581
          %3583 = vrot.lane.b32.xlu0 %v1161, 32
          %v3584 = vpop.permute.xlu0 %3583
          %3585 = vrot.lane.b32.xlu0 %v1162, 32
          %v3586 = vpop.permute.xlu0 %3585
          %3587 = vrot.lane.b32.xlu0 %v1163, 32
          %v3588 = vpop.permute.xlu0 %3587
          %3589 = vrot.lane.b32.xlu0 %v1164, 32
          %v3590 = vpop.permute.xlu0 %3589
          %3591 = vrot.lane.b32.xlu0 %v1165, 32
          %v3592 = vpop.permute.xlu0 %3591
          %3593 = vrot.lane.b32.xlu0 %v1166, 32
          %v3594 = vpop.permute.xlu0 %3593
          %3595 = vrot.lane.b32.xlu0 %v1167, 32
          %v3596 = vpop.permute.xlu0 %3595
          %3597 = vrot.lane.b32.xlu0 %v1168, 32
          %v3598 = vpop.permute.xlu0 %3597
          %v3600 = vsel %vm1169, %v3568, 0
          %v3603 = vsel %vm1169, %v3570, 0
          %v3606 = vsel %vm1169, %v3572, 0
          %v3609 = vsel %vm1169, %v3574, 0
          %v3612 = vsel %vm1169, %v3576, 0
          %v3615 = vsel %vm1169, %v3578, 0
          %v3618 = vsel %vm1169, %v3580, 0
          %v3621 = vsel %vm1169, %v3582, 0
          %v3624 = vsel %vm1169, %v3584, 0
          %v3627 = vsel %vm1169, %v3586, 0
          %v3630 = vsel %vm1169, %v3588, 0
          %v3633 = vsel %vm1169, %v3590, 0
          %v3636 = vsel %vm1169, %v3592, 0
          %v3639 = vsel %vm1169, %v3594, 0
          %v3642 = vsel %vm1169, %v3596, 0
          %v3645 = vsel %vm1169, %v3598, 0
          %3647 = vmatpush.bf16.xpose.msra.mxu0 %v3645
          %3648 = vmatpush.bf16.xpose.msra.mxu0 %v3642
          %3649 = vmatpush.bf16.xpose.msra.mxu0 %v3639
          %3650 = vmatpush.bf16.xpose.msra.mxu0 %v3636
          %3651 = vmatpush.bf16.xpose.msra.mxu0 %v3633
          %3652 = vmatpush.bf16.xpose.msra.mxu0 %v3630
          %3653 = vmatpush.bf16.xpose.msra.mxu0 %v3627
          %3654 = vmatpush.bf16.xpose.msra.mxu0 %v3624
          %3655 = vmatmul.bf16.gmra.mxu0 %v3600
          %v3656 = vpop.f32.mrf.mxu0
          %v3657 = vadd.f32 0.0, %v3656
          %v3658 = vpop.f32.mrf.mxu0
          %v3659 = vadd.f32 0.0, %v3658
          %3660 = vmatmul.bf16.gmra.mxu0 %v3603
          %v3661 = vpop.f32.mrf.mxu0
          %v3662 = vadd.f32 0.0, %v3661
          %v3663 = vpop.f32.mrf.mxu0
          %v3664 = vadd.f32 0.0, %v3663
          %3665 = vmatmul.bf16.gmra.mxu0 %v3606
          %v3666 = vpop.f32.mrf.mxu0
          %v3667 = vadd.f32 0.0, %v3666
          %v3668 = vpop.f32.mrf.mxu0
          %v3669 = vadd.f32 0.0, %v3668
          %3670 = vmatmul.bf16.gmra.mxu0 %v3609
          %v3671 = vpop.f32.mrf.mxu0
          %v3672 = vadd.f32 0.0, %v3671
          %v3673 = vpop.f32.mrf.mxu0
          %v3674 = vadd.f32 0.0, %v3673
          %3675 = vmatmul.bf16.gmra.mxu0 %v3612
          %v3676 = vpop.f32.mrf.mxu0
          %v3677 = vadd.f32 0.0, %v3676
          %v3678 = vpop.f32.mrf.mxu0
          %v3679 = vadd.f32 0.0, %v3678
          %3680 = vmatmul.bf16.gmra.mxu0 %v3615
          %v3681 = vpop.f32.mrf.mxu0
          %v3682 = vadd.f32 0.0, %v3681
          %v3683 = vpop.f32.mrf.mxu0
          %v3684 = vadd.f32 0.0, %v3683
          %3685 = vmatmul.bf16.gmra.mxu0 %v3618
          %v3686 = vpop.f32.mrf.mxu0
          %v3687 = vadd.f32 0.0, %v3686
          %v3688 = vpop.f32.mrf.mxu0
          %v3689 = vadd.f32 0.0, %v3688
          %3690 = vmatmul.bf16.gmra.mxu0 %v3621
          %v3691 = vpop.f32.mrf.mxu0
          %v3692 = vadd.f32 0.0, %v3691
          %v3693 = vpop.f32.mrf.mxu0
          %v3694 = vadd.f32 0.0, %v3693
          %3695 = vdwg.mxu0
          %s3696 = scalar_lea.vmem [#allocation3], 384
          %v3697 = vld [vmem:[%s3696] sm:$0xff]
          %v3698 = vld [vmem:[%s3696 + $0x8] sm:$0xff]
          %v3699 = vld [vmem:[%s3696 + $0x10] sm:$0xff]
          %v3700 = vld [vmem:[%s3696 + $0x18] sm:$0xff]
          %v3701 = vld [vmem:[%s3696 + $0x20] sm:$0xff]
          %v3702 = vld [vmem:[%s3696 + $0x28] sm:$0xff]
          %v3703 = vld [vmem:[%s3696 + $0x30] sm:$0xff]
          %v3704 = vld [vmem:[%s3696 + $0x38] sm:$0xff]
          %v3705 = vld [vmem:[%s3696 + $0x40] sm:$0xff]
          %v3706 = vld [vmem:[%s3696 + $0x48] sm:$0xff]
          %v3707 = vld [vmem:[%s3696 + $0x50] sm:$0xff]
          %v3708 = vld [vmem:[%s3696 + $0x58] sm:$0xff]
          %v3709 = vld [vmem:[%s3696 + $0x60] sm:$0xff]
          %v3710 = vld [vmem:[%s3696 + $0x68] sm:$0xff]
          %v3711 = vld [vmem:[%s3696 + $0x70] sm:$0xff]
          %v3712 = vld [vmem:[%s3696 + $0x78] sm:$0xff]
          %3713 = vmax.xlane.f32.xlu0 %v3657
          %v3714 = vpop.xlane.xlu0 %3713
          %3715 = vmax.xlane.f32.xlu0 %v3659
          %v3716 = vpop.xlane.xlu0 %3715
          %3717 = vmax.xlane.f32.xlu0 %v3662
          %v3718 = vpop.xlane.xlu0 %3717
          %3719 = vmax.xlane.f32.xlu0 %v3664
          %v3720 = vpop.xlane.xlu0 %3719
          %3721 = vmax.xlane.f32.xlu0 %v3667
          %v3722 = vpop.xlane.xlu0 %3721
          %3723 = vmax.xlane.f32.xlu0 %v3669
          %v3724 = vpop.xlane.xlu0 %3723
          %3725 = vmax.xlane.f32.xlu0 %v3672
          %v3726 = vpop.xlane.xlu0 %3725
          %3727 = vmax.xlane.f32.xlu0 %v3674
          %v3728 = vpop.xlane.xlu0 %3727
          %3729 = vmax.xlane.f32.xlu0 %v3677
          %v3730 = vpop.xlane.xlu0 %3729
          %3731 = vmax.xlane.f32.xlu0 %v3679
          %v3732 = vpop.xlane.xlu0 %3731
          %3733 = vmax.xlane.f32.xlu0 %v3682
          %v3734 = vpop.xlane.xlu0 %3733
          %3735 = vmax.xlane.f32.xlu0 %v3684
          %v3736 = vpop.xlane.xlu0 %3735
          %3737 = vmax.xlane.f32.xlu0 %v3687
          %v3738 = vpop.xlane.xlu0 %3737
          %3739 = vmax.xlane.f32.xlu0 %v3689
          %v3740 = vpop.xlane.xlu0 %3739
          %3741 = vmax.xlane.f32.xlu0 %v3692
          %v3742 = vpop.xlane.xlu0 %3741
          %3743 = vmax.xlane.f32.xlu0 %v3694
          %v3744 = vpop.xlane.xlu0 %3743
          %v3745 = vmax.f32 %v3697, %v3714
          %v3746 = vmax.f32 %v3698, %v3716
          %v3747 = vmax.f32 %v3699, %v3718
          %v3748 = vmax.f32 %v3700, %v3720
          %v3749 = vmax.f32 %v3701, %v3722
          %v3750 = vmax.f32 %v3702, %v3724
          %v3751 = vmax.f32 %v3703, %v3726
          %v3752 = vmax.f32 %v3704, %v3728
          %v3753 = vmax.f32 %v3705, %v3730
          %v3754 = vmax.f32 %v3706, %v3732
          %v3755 = vmax.f32 %v3707, %v3734
          %v3756 = vmax.f32 %v3708, %v3736
          %v3757 = vmax.f32 %v3709, %v3738
          %v3758 = vmax.f32 %v3710, %v3740
          %v3759 = vmax.f32 %v3711, %v3742
          %v3760 = vmax.f32 %v3712, %v3744
          %v3761 = vsub.f32 %v3697, %v3745
          %v3762 = vsub.f32 %v3698, %v3746
          %v3763 = vsub.f32 %v3699, %v3747
          %v3764 = vsub.f32 %v3700, %v3748
          %v3765 = vsub.f32 %v3701, %v3749
          %v3766 = vsub.f32 %v3702, %v3750
          %v3767 = vsub.f32 %v3703, %v3751
          %v3768 = vsub.f32 %v3704, %v3752
          %v3769 = vsub.f32 %v3705, %v3753
          %v3770 = vsub.f32 %v3706, %v3754
          %v3771 = vsub.f32 %v3707, %v3755
          %v3772 = vsub.f32 %v3708, %v3756
          %v3773 = vsub.f32 %v3709, %v3757
          %v3774 = vsub.f32 %v3710, %v3758
          %v3775 = vsub.f32 %v3711, %v3759
          %v3776 = vsub.f32 %v3712, %v3760
          %v3777 = vmul.f32 %v3761, 1.442695
          %v3778 = vpow.pop %v3777
          %v3779 = vmul.f32 %v3762, 1.442695
          %v3780 = vpow.pop %v3779
          %v3781 = vmul.f32 %v3763, 1.442695
          %v3782 = vpow.pop %v3781
          %v3783 = vmul.f32 %v3764, 1.442695
          %v3784 = vpow.pop %v3783
          %v3785 = vmul.f32 %v3765, 1.442695
          %v3786 = vpow.pop %v3785
          %v3787 = vmul.f32 %v3766, 1.442695
          %v3788 = vpow.pop %v3787
          %v3789 = vmul.f32 %v3767, 1.442695
          %v3790 = vpow.pop %v3789
          %v3791 = vmul.f32 %v3768, 1.442695
          %v3792 = vpow.pop %v3791
          %v3793 = vmul.f32 %v3769, 1.442695
          %v3794 = vpow.pop %v3793
          %v3795 = vmul.f32 %v3770, 1.442695
          %v3796 = vpow.pop %v3795
          %v3797 = vmul.f32 %v3771, 1.442695
          %v3798 = vpow.pop %v3797
          %v3799 = vmul.f32 %v3772, 1.442695
          %v3800 = vpow.pop %v3799
          %v3801 = vmul.f32 %v3773, 1.442695
          %v3802 = vpow.pop %v3801
          %v3803 = vmul.f32 %v3774, 1.442695
          %v3804 = vpow.pop %v3803
          %v3805 = vmul.f32 %v3775, 1.442695
          %v3806 = vpow.pop %v3805
          %v3807 = vmul.f32 %v3776, 1.442695
          %v3808 = vpow.pop %v3807
          %3810 = vset.pattern.permute.xlu0 0
          %3811 = vperm.xlu0 %3810, %v3745
          %v3812 = vpop.permute.xlu0 %3811
          %3815 = vset.pattern.permute.xlu0 0
          %3816 = vperm.xlu0 %3815, %v3746
          %v3817 = vpop.permute.xlu0 %3816
          %3820 = vset.pattern.permute.xlu0 0
          %3821 = vperm.xlu0 %3820, %v3747
          %v3822 = vpop.permute.xlu0 %3821
          %3825 = vset.pattern.permute.xlu0 0
          %3826 = vperm.xlu0 %3825, %v3748
          %v3827 = vpop.permute.xlu0 %3826
          %3830 = vset.pattern.permute.xlu0 0
          %3831 = vperm.xlu0 %3830, %v3749
          %v3832 = vpop.permute.xlu0 %3831
          %3835 = vset.pattern.permute.xlu0 0
          %3836 = vperm.xlu0 %3835, %v3750
          %v3837 = vpop.permute.xlu0 %3836
          %3840 = vset.pattern.permute.xlu0 0
          %3841 = vperm.xlu0 %3840, %v3751
          %v3842 = vpop.permute.xlu0 %3841
          %3845 = vset.pattern.permute.xlu0 0
          %3846 = vperm.xlu0 %3845, %v3752
          %v3847 = vpop.permute.xlu0 %3846
          %3850 = vset.pattern.permute.xlu0 0
          %3851 = vperm.xlu0 %3850, %v3753
          %v3852 = vpop.permute.xlu0 %3851
          %3855 = vset.pattern.permute.xlu0 0
          %3856 = vperm.xlu0 %3855, %v3754
          %v3857 = vpop.permute.xlu0 %3856
          %3860 = vset.pattern.permute.xlu0 0
          %3861 = vperm.xlu0 %3860, %v3755
          %v3862 = vpop.permute.xlu0 %3861
          %3865 = vset.pattern.permute.xlu0 0
          %3866 = vperm.xlu0 %3865, %v3756
          %v3867 = vpop.permute.xlu0 %3866
          %3870 = vset.pattern.permute.xlu0 0
          %3871 = vperm.xlu0 %3870, %v3757
          %v3872 = vpop.permute.xlu0 %3871
          %3875 = vset.pattern.permute.xlu0 0
          %3876 = vperm.xlu0 %3875, %v3758
          %v3877 = vpop.permute.xlu0 %3876
          %3880 = vset.pattern.permute.xlu0 0
          %3881 = vperm.xlu0 %3880, %v3759
          %v3882 = vpop.permute.xlu0 %3881
          %3885 = vset.pattern.permute.xlu0 0
          %3886 = vperm.xlu0 %3885, %v3760
          %v3887 = vpop.permute.xlu0 %3886
          %v3889 = vsub.f32 %v3657, %v3812
          %v3890 = vsub.f32 %v3659, %v3817
          %v3891 = vsub.f32 %v3662, %v3822
          %v3892 = vsub.f32 %v3664, %v3827
          %v3893 = vsub.f32 %v3667, %v3832
          %v3894 = vsub.f32 %v3669, %v3837
          %v3895 = vsub.f32 %v3672, %v3842
          %v3896 = vsub.f32 %v3674, %v3847
          %v3897 = vsub.f32 %v3677, %v3852
          %v3898 = vsub.f32 %v3679, %v3857
          %v3899 = vsub.f32 %v3682, %v3862
          %v3900 = vsub.f32 %v3684, %v3867
          %v3901 = vsub.f32 %v3687, %v3872
          %v3902 = vsub.f32 %v3689, %v3877
          %v3903 = vsub.f32 %v3692, %v3882
          %v3904 = vsub.f32 %v3694, %v3887
          %v3905 = vmul.f32 %v3889, 1.442695
          %v3906 = vpow.pop %v3905
          %v3907 = vmul.f32 %v3890, 1.442695
          %v3908 = vpow.pop %v3907
          %v3909 = vmul.f32 %v3891, 1.442695
          %v3910 = vpow.pop %v3909
          %v3911 = vmul.f32 %v3892, 1.442695
          %v3912 = vpow.pop %v3911
          %v3913 = vmul.f32 %v3893, 1.442695
          %v3914 = vpow.pop %v3913
          %v3915 = vmul.f32 %v3894, 1.442695
          %v3916 = vpow.pop %v3915
          %v3917 = vmul.f32 %v3895, 1.442695
          %v3918 = vpow.pop %v3917
          %v3919 = vmul.f32 %v3896, 1.442695
          %v3920 = vpow.pop %v3919
          %v3921 = vmul.f32 %v3897, 1.442695
          %v3922 = vpow.pop %v3921
          %v3923 = vmul.f32 %v3898, 1.442695
          %v3924 = vpow.pop %v3923
          %v3925 = vmul.f32 %v3899, 1.442695
          %v3926 = vpow.pop %v3925
          %v3927 = vmul.f32 %v3900, 1.442695
          %v3928 = vpow.pop %v3927
          %v3929 = vmul.f32 %v3901, 1.442695
          %v3930 = vpow.pop %v3929
          %v3931 = vmul.f32 %v3902, 1.442695
          %v3932 = vpow.pop %v3931
          %v3933 = vmul.f32 %v3903, 1.442695
          %v3934 = vpow.pop %v3933
          %v3935 = vmul.f32 %v3904, 1.442695
          %v3936 = vpow.pop %v3935
          %s3937 = scalar_lea.vmem [#allocation4], 384
          %v3938 = vld [vmem:[%s3937] sm:$0xff]
          %v3939 = vld [vmem:[%s3937 + $0x8] sm:$0xff]
          %v3940 = vld [vmem:[%s3937 + $0x10] sm:$0xff]
          %v3941 = vld [vmem:[%s3937 + $0x18] sm:$0xff]
          %v3942 = vld [vmem:[%s3937 + $0x20] sm:$0xff]
          %v3943 = vld [vmem:[%s3937 + $0x28] sm:$0xff]
          %v3944 = vld [vmem:[%s3937 + $0x30] sm:$0xff]
          %v3945 = vld [vmem:[%s3937 + $0x38] sm:$0xff]
          %v3946 = vld [vmem:[%s3937 + $0x40] sm:$0xff]
          %v3947 = vld [vmem:[%s3937 + $0x48] sm:$0xff]
          %v3948 = vld [vmem:[%s3937 + $0x50] sm:$0xff]
          %v3949 = vld [vmem:[%s3937 + $0x58] sm:$0xff]
          %v3950 = vld [vmem:[%s3937 + $0x60] sm:$0xff]
          %v3951 = vld [vmem:[%s3937 + $0x68] sm:$0xff]
          %v3952 = vld [vmem:[%s3937 + $0x70] sm:$0xff]
          %v3953 = vld [vmem:[%s3937 + $0x78] sm:$0xff]
          %v3954 = vmul.f32 %v3778, %v3938
          %v3955 = vmul.f32 %v3780, %v3939
          %v3956 = vmul.f32 %v3782, %v3940
          %v3957 = vmul.f32 %v3784, %v3941
          %v3958 = vmul.f32 %v3786, %v3942
          %v3959 = vmul.f32 %v3788, %v3943
          %v3960 = vmul.f32 %v3790, %v3944
          %v3961 = vmul.f32 %v3792, %v3945
          %v3962 = vmul.f32 %v3794, %v3946
          %v3963 = vmul.f32 %v3796, %v3947
          %v3964 = vmul.f32 %v3798, %v3948
          %v3965 = vmul.f32 %v3800, %v3949
          %v3966 = vmul.f32 %v3802, %v3950
          %v3967 = vmul.f32 %v3804, %v3951
          %v3968 = vmul.f32 %v3806, %v3952
          %v3969 = vmul.f32 %v3808, %v3953
          %3970 = vadd.xlane.f32.xlu0 %v3906
          %v3971 = vpop.xlane.xlu0 %3970
          %3972 = vadd.xlane.f32.xlu0 %v3908
          %v3973 = vpop.xlane.xlu0 %3972
          %3974 = vadd.xlane.f32.xlu0 %v3910
          %v3975 = vpop.xlane.xlu0 %3974
          %3976 = vadd.xlane.f32.xlu0 %v3912
          %v3977 = vpop.xlane.xlu0 %3976
          %3978 = vadd.xlane.f32.xlu0 %v3914
          %v3979 = vpop.xlane.xlu0 %3978
          %3980 = vadd.xlane.f32.xlu0 %v3916
          %v3981 = vpop.xlane.xlu0 %3980
          %3982 = vadd.xlane.f32.xlu0 %v3918
          %v3983 = vpop.xlane.xlu0 %3982
          %3984 = vadd.xlane.f32.xlu0 %v3920
          %v3985 = vpop.xlane.xlu0 %3984
          %3986 = vadd.xlane.f32.xlu0 %v3922
          %v3987 = vpop.xlane.xlu0 %3986
          %3988 = vadd.xlane.f32.xlu0 %v3924
          %v3989 = vpop.xlane.xlu0 %3988
          %3990 = vadd.xlane.f32.xlu0 %v3926
          %v3991 = vpop.xlane.xlu0 %3990
          %3992 = vadd.xlane.f32.xlu0 %v3928
          %v3993 = vpop.xlane.xlu0 %3992
          %3994 = vadd.xlane.f32.xlu0 %v3930
          %v3995 = vpop.xlane.xlu0 %3994
          %3996 = vadd.xlane.f32.xlu0 %v3932
          %v3997 = vpop.xlane.xlu0 %3996
          %3998 = vadd.xlane.f32.xlu0 %v3934
          %v3999 = vpop.xlane.xlu0 %3998
          %4000 = vadd.xlane.f32.xlu0 %v3936
          %v4001 = vpop.xlane.xlu0 %4000
          %v4002 = vadd.f32 %v3954, %v3971
          %v4003 = vadd.f32 %v3955, %v3973
          %v4004 = vadd.f32 %v3956, %v3975
          %v4005 = vadd.f32 %v3957, %v3977
          %v4006 = vadd.f32 %v3958, %v3979
          %v4007 = vadd.f32 %v3959, %v3981
          %v4008 = vadd.f32 %v3960, %v3983
          %v4009 = vadd.f32 %v3961, %v3985
          %v4010 = vadd.f32 %v3962, %v3987
          %v4011 = vadd.f32 %v3963, %v3989
          %v4012 = vadd.f32 %v3964, %v3991
          %v4013 = vadd.f32 %v3965, %v3993
          %v4014 = vadd.f32 %v3966, %v3995
          %v4015 = vadd.f32 %v3967, %v3997
          %v4016 = vadd.f32 %v3968, %v3999
          %v4017 = vadd.f32 %v3969, %v4001
          %4018 = vst.msk [vmem:[%s3937] sm:$0xff] %vm1587, %v4002
          %4019 = vst.msk [vmem:[%s3937 + $0x8] sm:$0xff] %vm1587, %v4003
          %4020 = vst.msk [vmem:[%s3937 + $0x10] sm:$0xff] %vm1587, %v4004
          %4021 = vst.msk [vmem:[%s3937 + $0x18] sm:$0xff] %vm1587, %v4005
          %4022 = vst.msk [vmem:[%s3937 + $0x20] sm:$0xff] %vm1587, %v4006
          %4023 = vst.msk [vmem:[%s3937 + $0x28] sm:$0xff] %vm1587, %v4007
          %4024 = vst.msk [vmem:[%s3937 + $0x30] sm:$0xff] %vm1587, %v4008
          %4025 = vst.msk [vmem:[%s3937 + $0x38] sm:$0xff] %vm1587, %v4009
          %4026 = vst.msk [vmem:[%s3937 + $0x40] sm:$0xff] %vm1587, %v4010
          %4027 = vst.msk [vmem:[%s3937 + $0x48] sm:$0xff] %vm1587, %v4011
          %4028 = vst.msk [vmem:[%s3937 + $0x50] sm:$0xff] %vm1587, %v4012
          %4029 = vst.msk [vmem:[%s3937 + $0x58] sm:$0xff] %vm1587, %v4013
          %4030 = vst.msk [vmem:[%s3937 + $0x60] sm:$0xff] %vm1587, %v4014
          %4031 = vst.msk [vmem:[%s3937 + $0x68] sm:$0xff] %vm1587, %v4015
          %4032 = vst.msk [vmem:[%s3937 + $0x70] sm:$0xff] %vm1587, %v4016
          %4033 = vst.msk [vmem:[%s3937 + $0x78] sm:$0xff] %vm1587, %v4017
          %v4034 = vpack.c.bf16 %v3908, %v3906
          %v4035 = vpack.c.bf16 %v3912, %v3910
          %v4036 = vpack.c.bf16 %v3916, %v3914
          %v4037 = vpack.c.bf16 %v3920, %v3918
          %v4038 = vpack.c.bf16 %v3924, %v3922
          %v4039 = vpack.c.bf16 %v3928, %v3926
          %v4040 = vpack.c.bf16 %v3932, %v3930
          %v4041 = vpack.c.bf16 %v3936, %v3934
          %4042 = vrot.lane.b32.xlu0 %v1628, 32
          %v4043 = vpop.permute.xlu0 %4042
          %4044 = vrot.lane.b32.xlu0 %v1629, 32
          %v4045 = vpop.permute.xlu0 %4044
          %4046 = vrot.lane.b32.xlu0 %v1630, 32
          %v4047 = vpop.permute.xlu0 %4046
          %4048 = vrot.lane.b32.xlu0 %v1631, 32
          %v4049 = vpop.permute.xlu0 %4048
          %4050 = vrot.lane.b32.xlu0 %v1632, 32
          %v4051 = vpop.permute.xlu0 %4050
          %4052 = vrot.lane.b32.xlu0 %v1633, 32
          %v4053 = vpop.permute.xlu0 %4052
          %4054 = vrot.lane.b32.xlu0 %v1634, 32
          %v4055 = vpop.permute.xlu0 %4054
          %4056 = vrot.lane.b32.xlu0 %v1635, 32
          %v4057 = vpop.permute.xlu0 %4056
          %4066 = vmatpush.bf16.msra.mxu0 %v4057
          %4067 = vmatpush.bf16.msra.mxu0 %v4055
          %4068 = vmatpush.bf16.msra.mxu0 %v4053
          %4069 = vmatpush.bf16.msra.mxu0 %v4051
          %4070 = vmatpush.bf16.msra.mxu0 %v4049
          %4071 = vmatpush.bf16.msra.mxu0 %v4047
          %4072 = vmatpush.bf16.msra.mxu0 %v4045
          %4073 = vmatpush.bf16.msra.mxu0 %v4043
          %4074 = vmatmul.bf16.gmra.mxu0 %v4034
          %v4075 = vpop.f32.mrf.mxu0
          %v4076 = vadd.f32 0.0, %v4075
          %v4077 = vpop.f32.mrf.mxu0
          %v4078 = vadd.f32 0.0, %v4077
          %4079 = vmatmul.bf16.gmra.mxu0 %v4035
          %v4080 = vpop.f32.mrf.mxu0
          %v4081 = vadd.f32 0.0, %v4080
          %v4082 = vpop.f32.mrf.mxu0
          %v4083 = vadd.f32 0.0, %v4082
          %4084 = vmatmul.bf16.gmra.mxu0 %v4036
          %v4085 = vpop.f32.mrf.mxu0
          %v4086 = vadd.f32 0.0, %v4085
          %v4087 = vpop.f32.mrf.mxu0
          %v4088 = vadd.f32 0.0, %v4087
          %4089 = vmatmul.bf16.gmra.mxu0 %v4037
          %v4090 = vpop.f32.mrf.mxu0
          %v4091 = vadd.f32 0.0, %v4090
          %v4092 = vpop.f32.mrf.mxu0
          %v4093 = vadd.f32 0.0, %v4092
          %4094 = vmatmul.bf16.gmra.mxu0 %v4038
          %v4095 = vpop.f32.mrf.mxu0
          %v4096 = vadd.f32 0.0, %v4095
          %v4097 = vpop.f32.mrf.mxu0
          %v4098 = vadd.f32 0.0, %v4097
          %4099 = vmatmul.bf16.gmra.mxu0 %v4039
          %v4100 = vpop.f32.mrf.mxu0
          %v4101 = vadd.f32 0.0, %v4100
          %v4102 = vpop.f32.mrf.mxu0
          %v4103 = vadd.f32 0.0, %v4102
          %4104 = vmatmul.bf16.gmra.mxu0 %v4040
          %v4105 = vpop.f32.mrf.mxu0
          %v4106 = vadd.f32 0.0, %v4105
          %v4107 = vpop.f32.mrf.mxu0
          %v4108 = vadd.f32 0.0, %v4107
          %4109 = vmatmul.bf16.gmra.mxu0 %v4041
          %v4110 = vpop.f32.mrf.mxu0
          %v4111 = vadd.f32 0.0, %v4110
          %v4112 = vpop.f32.mrf.mxu0
          %v4113 = vadd.f32 0.0, %v4112
          %4114 = vdwg.mxu0
          %v4115 = vld [vmem:[#allocation5] sm:$0xff]
          %v4116 = vld [vmem:[#allocation5 + $0x8] sm:$0xff]
          %v4117 = vld [vmem:[#allocation5 + $0x10] sm:$0xff]
          %v4118 = vld [vmem:[#allocation5 + $0x18] sm:$0xff]
          %v4119 = vld [vmem:[#allocation5 + $0x20] sm:$0xff]
          %v4120 = vld [vmem:[#allocation5 + $0x28] sm:$0xff]
          %v4121 = vld [vmem:[#allocation5 + $0x30] sm:$0xff]
          %v4122 = vld [vmem:[#allocation5 + $0x38] sm:$0xff]
          %v4123 = vld [vmem:[#allocation5 + $0x40] sm:$0xff]
          %v4124 = vld [vmem:[#allocation5 + $0x48] sm:$0xff]
          %v4125 = vld [vmem:[#allocation5 + $0x50] sm:$0xff]
          %v4126 = vld [vmem:[#allocation5 + $0x58] sm:$0xff]
          %v4127 = vld [vmem:[#allocation5 + $0x60] sm:$0xff]
          %v4128 = vld [vmem:[#allocation5 + $0x68] sm:$0xff]
          %v4129 = vld [vmem:[#allocation5 + $0x70] sm:$0xff]
          %v4130 = vld [vmem:[#allocation5 + $0x78] sm:$0xff]
          %4132 = vset.pattern.permute.xlu0 0
          %4133 = vperm.xlu0 %4132, %v3778
          %v4134 = vpop.permute.xlu0 %4133
          %4137 = vset.pattern.permute.xlu0 0
          %4138 = vperm.xlu0 %4137, %v3780
          %v4139 = vpop.permute.xlu0 %4138
          %4142 = vset.pattern.permute.xlu0 0
          %4143 = vperm.xlu0 %4142, %v3782
          %v4144 = vpop.permute.xlu0 %4143
          %4147 = vset.pattern.permute.xlu0 0
          %4148 = vperm.xlu0 %4147, %v3784
          %v4149 = vpop.permute.xlu0 %4148
          %4152 = vset.pattern.permute.xlu0 0
          %4153 = vperm.xlu0 %4152, %v3786
          %v4154 = vpop.permute.xlu0 %4153
          %4157 = vset.pattern.permute.xlu0 0
          %4158 = vperm.xlu0 %4157, %v3788
          %v4159 = vpop.permute.xlu0 %4158
          %4162 = vset.pattern.permute.xlu0 0
          %4163 = vperm.xlu0 %4162, %v3790
          %v4164 = vpop.permute.xlu0 %4163
          %4167 = vset.pattern.permute.xlu0 0
          %4168 = vperm.xlu0 %4167, %v3792
          %v4169 = vpop.permute.xlu0 %4168
          %4172 = vset.pattern.permute.xlu0 0
          %4173 = vperm.xlu0 %4172, %v3794
          %v4174 = vpop.permute.xlu0 %4173
          %4177 = vset.pattern.permute.xlu0 0
          %4178 = vperm.xlu0 %4177, %v3796
          %v4179 = vpop.permute.xlu0 %4178
          %4182 = vset.pattern.permute.xlu0 0
          %4183 = vperm.xlu0 %4182, %v3798
          %v4184 = vpop.permute.xlu0 %4183
          %4187 = vset.pattern.permute.xlu0 0
          %4188 = vperm.xlu0 %4187, %v3800
          %v4189 = vpop.permute.xlu0 %4188
          %4192 = vset.pattern.permute.xlu0 0
          %4193 = vperm.xlu0 %4192, %v3802
          %v4194 = vpop.permute.xlu0 %4193
          %4197 = vset.pattern.permute.xlu0 0
          %4198 = vperm.xlu0 %4197, %v3804
          %v4199 = vpop.permute.xlu0 %4198
          %4202 = vset.pattern.permute.xlu0 0
          %4203 = vperm.xlu0 %4202, %v3806
          %v4204 = vpop.permute.xlu0 %4203
          %4207 = vset.pattern.permute.xlu0 0
          %4208 = vperm.xlu0 %4207, %v3808
          %v4209 = vpop.permute.xlu0 %4208
          %v4211 = vmul.f32 %v4134, %v4115
          %v4212 = vmul.f32 %v4139, %v4116
          %v4213 = vmul.f32 %v4144, %v4117
          %v4214 = vmul.f32 %v4149, %v4118
          %v4215 = vmul.f32 %v4154, %v4119
          %v4216 = vmul.f32 %v4159, %v4120
          %v4217 = vmul.f32 %v4164, %v4121
          %v4218 = vmul.f32 %v4169, %v4122
          %v4219 = vmul.f32 %v4174, %v4123
          %v4220 = vmul.f32 %v4179, %v4124
          %v4221 = vmul.f32 %v4184, %v4125
          %v4222 = vmul.f32 %v4189, %v4126
          %v4223 = vmul.f32 %v4194, %v4127
          %v4224 = vmul.f32 %v4199, %v4128
          %v4225 = vmul.f32 %v4204, %v4129
          %v4226 = vmul.f32 %v4209, %v4130
          %4243 = vrot.lane.b32.xlu0 %v4076, 96
          %v4244 = vpop.permute.xlu0 %4243
          %4245 = vrot.lane.b32.xlu0 %v4078, 96
          %v4246 = vpop.permute.xlu0 %4245
          %4247 = vrot.lane.b32.xlu0 %v4081, 96
          %v4248 = vpop.permute.xlu0 %4247
          %4249 = vrot.lane.b32.xlu0 %v4083, 96
          %v4250 = vpop.permute.xlu0 %4249
          %4251 = vrot.lane.b32.xlu0 %v4086, 96
          %v4252 = vpop.permute.xlu0 %4251
          %4253 = vrot.lane.b32.xlu0 %v4088, 96
          %v4254 = vpop.permute.xlu0 %4253
          %4255 = vrot.lane.b32.xlu0 %v4091, 96
          %v4256 = vpop.permute.xlu0 %4255
          %4257 = vrot.lane.b32.xlu0 %v4093, 96
          %v4258 = vpop.permute.xlu0 %4257
          %4259 = vrot.lane.b32.xlu0 %v4096, 96
          %v4260 = vpop.permute.xlu0 %4259
          %4261 = vrot.lane.b32.xlu0 %v4098, 96
          %v4262 = vpop.permute.xlu0 %4261
          %4263 = vrot.lane.b32.xlu0 %v4101, 96
          %v4264 = vpop.permute.xlu0 %4263
          %4265 = vrot.lane.b32.xlu0 %v4103, 96
          %v4266 = vpop.permute.xlu0 %4265
          %4267 = vrot.lane.b32.xlu0 %v4106, 96
          %v4268 = vpop.permute.xlu0 %4267
          %4269 = vrot.lane.b32.xlu0 %v4108, 96
          %v4270 = vpop.permute.xlu0 %4269
          %4271 = vrot.lane.b32.xlu0 %v4111, 96
          %v4272 = vpop.permute.xlu0 %4271
          %4273 = vrot.lane.b32.xlu0 %v4113, 96
          %v4274 = vpop.permute.xlu0 %4273
          %v4291 = vadd.f32 %v4211, %v4244
          %v4292 = vadd.f32 %v4212, %v4246
          %v4293 = vadd.f32 %v4213, %v4248
          %v4294 = vadd.f32 %v4214, %v4250
          %v4295 = vadd.f32 %v4215, %v4252
          %v4296 = vadd.f32 %v4216, %v4254
          %v4297 = vadd.f32 %v4217, %v4256
          %v4298 = vadd.f32 %v4218, %v4258
          %v4299 = vadd.f32 %v4219, %v4260
          %v4300 = vadd.f32 %v4220, %v4262
          %v4301 = vadd.f32 %v4221, %v4264
          %v4302 = vadd.f32 %v4222, %v4266
          %v4303 = vadd.f32 %v4223, %v4268
          %v4304 = vadd.f32 %v4224, %v4270
          %v4305 = vadd.f32 %v4225, %v4272
          %v4306 = vadd.f32 %v4226, %v4274
          %vm4307 = vcmask 1048320
          %4308 = vst.msk [vmem:[#allocation5] sm:$0xff] %vm4307, %v4291
          %4309 = vst.msk [vmem:[#allocation5 + $0x8] sm:$0xff] %vm4307, %v4292
          %4310 = vst.msk [vmem:[#allocation5 + $0x10] sm:$0xff] %vm4307, %v4293
          %4311 = vst.msk [vmem:[#allocation5 + $0x18] sm:$0xff] %vm4307, %v4294
          %4312 = vst.msk [vmem:[#allocation5 + $0x20] sm:$0xff] %vm4307, %v4295
          %4313 = vst.msk [vmem:[#allocation5 + $0x28] sm:$0xff] %vm4307, %v4296
          %4314 = vst.msk [vmem:[#allocation5 + $0x30] sm:$0xff] %vm4307, %v4297
          %4315 = vst.msk [vmem:[#allocation5 + $0x38] sm:$0xff] %vm4307, %v4298
          %4316 = vst.msk [vmem:[#allocation5 + $0x40] sm:$0xff] %vm4307, %v4299
          %4317 = vst.msk [vmem:[#allocation5 + $0x48] sm:$0xff] %vm4307, %v4300
          %4318 = vst.msk [vmem:[#allocation5 + $0x50] sm:$0xff] %vm4307, %v4301
          %4319 = vst.msk [vmem:[#allocation5 + $0x58] sm:$0xff] %vm4307, %v4302
          %4320 = vst.msk [vmem:[#allocation5 + $0x60] sm:$0xff] %vm4307, %v4303
          %4321 = vst.msk [vmem:[#allocation5 + $0x68] sm:$0xff] %vm4307, %v4304
          %4322 = vst.msk [vmem:[#allocation5 + $0x70] sm:$0xff] %vm4307, %v4305
          %4323 = vst.msk [vmem:[#allocation5 + $0x78] sm:$0xff] %vm4307, %v4306
          %4324 = vst.msk [vmem:[%s3696] sm:$0xff] %vm1587, %v3745
          %4325 = vst.msk [vmem:[%s3696 + $0x8] sm:$0xff] %vm1587, %v3746
          %4326 = vst.msk [vmem:[%s3696 + $0x10] sm:$0xff] %vm1587, %v3747
          %4327 = vst.msk [vmem:[%s3696 + $0x18] sm:$0xff] %vm1587, %v3748
          %4328 = vst.msk [vmem:[%s3696 + $0x20] sm:$0xff] %vm1587, %v3749
          %4329 = vst.msk [vmem:[%s3696 + $0x28] sm:$0xff] %vm1587, %v3750
          %4330 = vst.msk [vmem:[%s3696 + $0x30] sm:$0xff] %vm1587, %v3751
          %4331 = vst.msk [vmem:[%s3696 + $0x38] sm:$0xff] %vm1587, %v3752
          %4332 = vst.msk [vmem:[%s3696 + $0x40] sm:$0xff] %vm1587, %v3753
          %4333 = vst.msk [vmem:[%s3696 + $0x48] sm:$0xff] %vm1587, %v3754
          %4334 = vst.msk [vmem:[%s3696 + $0x50] sm:$0xff] %vm1587, %v3755
          %4335 = vst.msk [vmem:[%s3696 + $0x58] sm:$0xff] %vm1587, %v3756
          %4336 = vst.msk [vmem:[%s3696 + $0x60] sm:$0xff] %vm1587, %v3757
          %4337 = vst.msk [vmem:[%s3696 + $0x68] sm:$0xff] %vm1587, %v3758
          %4338 = vst.msk [vmem:[%s3696 + $0x70] sm:$0xff] %vm1587, %v3759
          %4339 = vst.msk [vmem:[%s3696 + $0x78] sm:$0xff] %vm1587, %v3760
        $region52: #{tpu_custom_call.1} parent=43 // pred_fallthru
          _
        // Predicated region
        $region53: #{tpu_custom_call.1} parent=43 // pred_check
          %p4340 = pneg %p323
        $region54: #{tpu_custom_call.1} parent=43 // pred_check_branch
          %4342 = sbr.rel (%p4340) target = $region56
        $region55: #{tpu_custom_call.1} parent=43 // pred_region
          %v4343 = vld [vmem:[%s321] sm:$0xf]
          %v4344 = vld [vmem:[%s321 + $0x4] sm:$0xf]
          %v4345 = vld [vmem:[%s321 + $0x8] sm:$0xf]
          %v4346 = vld [vmem:[%s321 + $0xc] sm:$0xf]
          %v4347 = vld [vmem:[%s321 + $0x10] sm:$0xf]
          %v4348 = vld [vmem:[%s321 + $0x14] sm:$0xf]
          %v4349 = vld [vmem:[%s321 + $0x18] sm:$0xf]
          %v4350 = vld [vmem:[%s321 + $0x1c] sm:$0xf]
          %v4351 = vld [vmem:[%s321 + $0x20] sm:$0xf]
          %v4352 = vld [vmem:[%s321 + $0x24] sm:$0xf]
          %v4353 = vld [vmem:[%s321 + $0x28] sm:$0xf]
          %v4354 = vld [vmem:[%s321 + $0x2c] sm:$0xf]
          %v4355 = vld [vmem:[%s321 + $0x30] sm:$0xf]
          %v4356 = vld [vmem:[%s321 + $0x34] sm:$0xf]
          %v4357 = vld [vmem:[%s321 + $0x38] sm:$0xf]
          %v4358 = vld [vmem:[%s321 + $0x3c] sm:$0xf]
          %v4359 = vld [vmem:[%s3] sm:$0xf]
          %v4360 = vld [vmem:[%s3 + $0x4] sm:$0xf]
          %v4361 = vld [vmem:[%s3 + $0x8] sm:$0xf]
          %v4362 = vld [vmem:[%s3 + $0xc] sm:$0xf]
          %v4363 = vld [vmem:[%s3 + $0x10] sm:$0xf]
          %v4364 = vld [vmem:[%s3 + $0x14] sm:$0xf]
          %v4365 = vld [vmem:[%s3 + $0x18] sm:$0xf]
          %v4366 = vld [vmem:[%s3 + $0x1c] sm:$0xf]
          %v4367 = vld [vmem:[%s3 + $0x20] sm:$0xf]
          %v4368 = vld [vmem:[%s3 + $0x24] sm:$0xf]
          %v4369 = vld [vmem:[%s3 + $0x28] sm:$0xf]
          %v4370 = vld [vmem:[%s3 + $0x2c] sm:$0xf]
          %v4371 = vld [vmem:[%s3 + $0x30] sm:$0xf]
          %v4372 = vld [vmem:[%s3 + $0x34] sm:$0xf]
          %v4373 = vld [vmem:[%s3 + $0x38] sm:$0xf]
          %v4374 = vld [vmem:[%s3 + $0x3c] sm:$0xf]
          %v4375 = vld [vmem:[%s3 + $0x40] sm:$0xf]
          %v4376 = vld [vmem:[%s3 + $0x44] sm:$0xf]
          %v4377 = vld [vmem:[%s3 + $0x48] sm:$0xf]
          %v4378 = vld [vmem:[%s3 + $0x4c] sm:$0xf]
          %v4379 = vld [vmem:[%s3 + $0x50] sm:$0xf]
          %v4380 = vld [vmem:[%s3 + $0x54] sm:$0xf]
          %v4381 = vld [vmem:[%s3 + $0x58] sm:$0xf]
          %v4382 = vld [vmem:[%s3 + $0x5c] sm:$0xf]
          %v4383 = vld [vmem:[%s3 + $0x60] sm:$0xf]
          %v4384 = vld [vmem:[%s3 + $0x64] sm:$0xf]
          %v4385 = vld [vmem:[%s3 + $0x68] sm:$0xf]
          %v4386 = vld [vmem:[%s3 + $0x6c] sm:$0xf]
          %v4387 = vld [vmem:[%s3 + $0x70] sm:$0xf]
          %v4388 = vld [vmem:[%s3 + $0x74] sm:$0xf]
          %v4389 = vld [vmem:[%s3 + $0x78] sm:$0xf]
          %v4390 = vld [vmem:[%s3 + $0x7c] sm:$0xf]
          %v4407 = vunpack.c.l.b16 %v4343
          %v4408 = vunpack.c.l.b16 %v4344
          %v4409 = vunpack.c.l.b16 %v4345
          %v4410 = vunpack.c.l.b16 %v4346
          %v4411 = vunpack.c.l.b16 %v4347
          %v4412 = vunpack.c.l.b16 %v4348
          %v4413 = vunpack.c.l.b16 %v4349
          %v4414 = vunpack.c.l.b16 %v4350
          %v4415 = vunpack.c.l.b16 %v4351
          %v4416 = vunpack.c.l.b16 %v4352
          %v4417 = vunpack.c.l.b16 %v4353
          %v4418 = vunpack.c.l.b16 %v4354
          %v4419 = vunpack.c.l.b16 %v4355
          %v4420 = vunpack.c.l.b16 %v4356
          %v4421 = vunpack.c.l.b16 %v4357
          %v4422 = vunpack.c.l.b16 %v4358
          %v4423 = vpack.c.b16 %v4408, %v4407
          %v4424 = vpack.c.b16 %v4410, %v4409
          %v4425 = vpack.c.b16 %v4412, %v4411
          %v4426 = vpack.c.b16 %v4414, %v4413
          %v4427 = vpack.c.b16 %v4416, %v4415
          %v4428 = vpack.c.b16 %v4418, %v4417
          %v4429 = vpack.c.b16 %v4420, %v4419
          %v4430 = vpack.c.b16 %v4422, %v4421
          %v4463 = vunpack.c.l.b16 %v4359
          %v4464 = vunpack.c.l.b16 %v4360
          %v4465 = vunpack.c.l.b16 %v4361
          %v4466 = vunpack.c.l.b16 %v4362
          %v4467 = vunpack.c.l.b16 %v4363
          %v4468 = vunpack.c.l.b16 %v4364
          %v4469 = vunpack.c.l.b16 %v4365
          %v4470 = vunpack.c.l.b16 %v4366
          %v4471 = vunpack.c.l.b16 %v4367
          %v4472 = vunpack.c.l.b16 %v4368
          %v4473 = vunpack.c.l.b16 %v4369
          %v4474 = vunpack.c.l.b16 %v4370
          %v4475 = vunpack.c.l.b16 %v4371
          %v4476 = vunpack.c.l.b16 %v4372
          %v4477 = vunpack.c.l.b16 %v4373
          %v4478 = vunpack.c.l.b16 %v4374
          %v4479 = vunpack.c.l.b16 %v4375
          %v4480 = vunpack.c.l.b16 %v4376
          %v4481 = vunpack.c.l.b16 %v4377
          %v4482 = vunpack.c.l.b16 %v4378
          %v4483 = vunpack.c.l.b16 %v4379
          %v4484 = vunpack.c.l.b16 %v4380
          %v4485 = vunpack.c.l.b16 %v4381
          %v4486 = vunpack.c.l.b16 %v4382
          %v4487 = vunpack.c.l.b16 %v4383
          %v4488 = vunpack.c.l.b16 %v4384
          %v4489 = vunpack.c.l.b16 %v4385
          %v4490 = vunpack.c.l.b16 %v4386
          %v4491 = vunpack.c.l.b16 %v4387
          %v4492 = vunpack.c.l.b16 %v4388
          %v4493 = vunpack.c.l.b16 %v4389
          %v4494 = vunpack.c.l.b16 %v4390
          %v4495 = vpack.c.b16 %v4464, %v4463
          %v4496 = vpack.c.b16 %v4466, %v4465
          %v4497 = vpack.c.b16 %v4468, %v4467
          %v4498 = vpack.c.b16 %v4470, %v4469
          %v4499 = vpack.c.b16 %v4472, %v4471
          %v4500 = vpack.c.b16 %v4474, %v4473
          %v4501 = vpack.c.b16 %v4476, %v4475
          %v4502 = vpack.c.b16 %v4478, %v4477
          %v4503 = vpack.c.b16 %v4480, %v4479
          %v4504 = vpack.c.b16 %v4482, %v4481
          %v4505 = vpack.c.b16 %v4484, %v4483
          %v4506 = vpack.c.b16 %v4486, %v4485
          %v4507 = vpack.c.b16 %v4488, %v4487
          %v4508 = vpack.c.b16 %v4490, %v4489
          %v4509 = vpack.c.b16 %v4492, %v4491
          %v4510 = vpack.c.b16 %v4494, %v4493
          %vm4511 = vcmask 64512
          %v4513 = vsel %vm4511, %v4423, 0
          %v4516 = vsel %vm4511, %v4424, 0
          %v4519 = vsel %vm4511, %v4425, 0
          %v4522 = vsel %vm4511, %v4426, 0
          %v4525 = vsel %vm4511, %v4427, 0
          %v4528 = vsel %vm4511, %v4428, 0
          %v4531 = vsel %vm4511, %v4429, 0
          %v4534 = vsel %vm4511, %v4430, 0
          %v4537 = vsel %vm4511, %v4495, 0
          %v4540 = vsel %vm4511, %v4496, 0
          %v4543 = vsel %vm4511, %v4497, 0
          %v4546 = vsel %vm4511, %v4498, 0
          %v4549 = vsel %vm4511, %v4499, 0
          %v4552 = vsel %vm4511, %v4500, 0
          %v4555 = vsel %vm4511, %v4501, 0
          %v4558 = vsel %vm4511, %v4502, 0
          %v4561 = vsel %vm4511, %v4503, 0
          %v4564 = vsel %vm4511, %v4504, 0
          %v4567 = vsel %vm4511, %v4505, 0
          %v4570 = vsel %vm4511, %v4506, 0
          %v4573 = vsel %vm4511, %v4507, 0
          %v4576 = vsel %vm4511, %v4508, 0
          %v4579 = vsel %vm4511, %v4509, 0
          %v4582 = vsel %vm4511, %v4510, 0
          %4584 = vmatpush.bf16.xpose.msra.mxu0 %v4558
          %4585 = vmatpush.bf16.xpose.msra.mxu0 %v4555
          %4586 = vmatpush.bf16.xpose.msra.mxu0 %v4552
          %4587 = vmatpush.bf16.xpose.msra.mxu0 %v4549
          %4588 = vmatpush.bf16.xpose.msra.mxu0 %v4546
          %4589 = vmatpush.bf16.xpose.msra.mxu0 %v4543
          %4590 = vmatpush.bf16.xpose.msra.mxu0 %v4540
          %4591 = vmatpush.bf16.xpose.msra.mxu0 %v4537
          %4592 = vmatmul.bf16.gmra.mxu0 %v4513
          %v4593 = vpop.f32.mrf.mxu0
          %v4594 = vadd.f32 0.0, %v4593
          %v4595 = vpop.f32.mrf.mxu0
          %v4596 = vadd.f32 0.0, %v4595
          %4597 = vmatmul.bf16.gmra.mxu0 %v4516
          %v4598 = vpop.f32.mrf.mxu0
          %v4599 = vadd.f32 0.0, %v4598
          %v4600 = vpop.f32.mrf.mxu0
          %v4601 = vadd.f32 0.0, %v4600
          %4602 = vmatmul.bf16.gmra.mxu0 %v4519
          %v4603 = vpop.f32.mrf.mxu0
          %v4604 = vadd.f32 0.0, %v4603
          %v4605 = vpop.f32.mrf.mxu0
          %v4606 = vadd.f32 0.0, %v4605
          %4607 = vmatmul.bf16.gmra.mxu0 %v4522
          %v4608 = vpop.f32.mrf.mxu0
          %v4609 = vadd.f32 0.0, %v4608
          %v4610 = vpop.f32.mrf.mxu0
          %v4611 = vadd.f32 0.0, %v4610
          %4612 = vmatmul.bf16.gmra.mxu0 %v4525
          %v4613 = vpop.f32.mrf.mxu0
          %v4614 = vadd.f32 0.0, %v4613
          %v4615 = vpop.f32.mrf.mxu0
          %v4616 = vadd.f32 0.0, %v4615
          %4617 = vmatmul.bf16.gmra.mxu0 %v4528
          %v4618 = vpop.f32.mrf.mxu0
          %v4619 = vadd.f32 0.0, %v4618
          %v4620 = vpop.f32.mrf.mxu0
          %v4621 = vadd.f32 0.0, %v4620
          %4622 = vmatmul.bf16.gmra.mxu0 %v4531
          %v4623 = vpop.f32.mrf.mxu0
          %v4624 = vadd.f32 0.0, %v4623
          %v4625 = vpop.f32.mrf.mxu0
          %v4626 = vadd.f32 0.0, %v4625
          %4627 = vmatmul.bf16.gmra.mxu0 %v4534
          %v4628 = vpop.f32.mrf.mxu0
          %v4629 = vadd.f32 0.0, %v4628
          %v4630 = vpop.f32.mrf.mxu0
          %v4631 = vadd.f32 0.0, %v4630
          %4632 = vdwg.mxu0
          %4633 = vmatpush.bf16.xpose.msra.mxu0 %v4582
          %4634 = vmatpush.bf16.xpose.msra.mxu0 %v4579
          %4635 = vmatpush.bf16.xpose.msra.mxu0 %v4576
          %4636 = vmatpush.bf16.xpose.msra.mxu0 %v4573
          %4637 = vmatpush.bf16.xpose.msra.mxu0 %v4570
          %4638 = vmatpush.bf16.xpose.msra.mxu0 %v4567
          %4639 = vmatpush.bf16.xpose.msra.mxu0 %v4564
          %4640 = vmatpush.bf16.xpose.msra.mxu0 %v4561
          %4641 = vmatmul.bf16.gmra.mxu0 %v4513
          %v4642 = vpop.f32.mrf.mxu0
          %v4643 = vadd.f32 0.0, %v4642
          %v4644 = vpop.f32.mrf.mxu0
          %v4645 = vadd.f32 0.0, %v4644
          %4646 = vmatmul.bf16.gmra.mxu0 %v4516
          %v4647 = vpop.f32.mrf.mxu0
          %v4648 = vadd.f32 0.0, %v4647
          %v4649 = vpop.f32.mrf.mxu0
          %v4650 = vadd.f32 0.0, %v4649
          %4651 = vmatmul.bf16.gmra.mxu0 %v4519
          %v4652 = vpop.f32.mrf.mxu0
          %v4653 = vadd.f32 0.0, %v4652
          %v4654 = vpop.f32.mrf.mxu0
          %v4655 = vadd.f32 0.0, %v4654
          %4656 = vmatmul.bf16.gmra.mxu0 %v4522
          %v4657 = vpop.f32.mrf.mxu0
          %v4658 = vadd.f32 0.0, %v4657
          %v4659 = vpop.f32.mrf.mxu0
          %v4660 = vadd.f32 0.0, %v4659
          %4661 = vmatmul.bf16.gmra.mxu0 %v4525
          %v4662 = vpop.f32.mrf.mxu0
          %v4663 = vadd.f32 0.0, %v4662
          %v4664 = vpop.f32.mrf.mxu0
          %v4665 = vadd.f32 0.0, %v4664
          %4666 = vmatmul.bf16.gmra.mxu0 %v4528
          %v4667 = vpop.f32.mrf.mxu0
          %v4668 = vadd.f32 0.0, %v4667
          %v4669 = vpop.f32.mrf.mxu0
          %v4670 = vadd.f32 0.0, %v4669
          %4671 = vmatmul.bf16.gmra.mxu0 %v4531
          %v4672 = vpop.f32.mrf.mxu0
          %v4673 = vadd.f32 0.0, %v4672
          %v4674 = vpop.f32.mrf.mxu0
          %v4675 = vadd.f32 0.0, %v4674
          %4676 = vmatmul.bf16.gmra.mxu0 %v4534
          %v4677 = vpop.f32.mrf.mxu0
          %v4678 = vadd.f32 0.0, %v4677
          %v4679 = vpop.f32.mrf.mxu0
          %v4680 = vadd.f32 0.0, %v4679
          %4681 = vdwg.mxu0
          %v4682 = vpack.c.bf16 %v4643, %v4594
          %v4683 = vpack.c.bf16 %v4645, %v4596
          %v4684 = vpack.c.bf16 %v4648, %v4599
          %v4685 = vpack.c.bf16 %v4650, %v4601
          %v4686 = vpack.c.bf16 %v4653, %v4604
          %v4687 = vpack.c.bf16 %v4655, %v4606
          %v4688 = vpack.c.bf16 %v4658, %v4609
          %v4689 = vpack.c.bf16 %v4660, %v4611
          %v4690 = vpack.c.bf16 %v4663, %v4614
          %v4691 = vpack.c.bf16 %v4665, %v4616
          %v4692 = vpack.c.bf16 %v4668, %v4619
          %v4693 = vpack.c.bf16 %v4670, %v4621
          %v4694 = vpack.c.bf16 %v4673, %v4624
          %v4695 = vpack.c.bf16 %v4675, %v4626
          %v4696 = vpack.c.bf16 %v4678, %v4629
          %v4697 = vpack.c.bf16 %v4680, %v4631
          %v4698 = vlaneseq
          %v4699 = vand.u32 %v4698, 127
          %s4700 = smul.u32 %s27, 128
          %v4701 = vstv %s4700
          %v4702 = vadd.s32 %v4699, %v4701
          %vm4703 = vcmp.lt.s32.totalorder %v4702, 64
          %v4704 = vld [vmem:[#allocation2] sm:$0xf]
          %v4705 = vld [vmem:[#allocation2 + $0x4] sm:$0xf]
          %v4706 = vld [vmem:[#allocation2 + $0x8] sm:$0xf]
          %v4707 = vld [vmem:[#allocation2 + $0xc] sm:$0xf]
          %v4708 = vld [vmem:[#allocation2 + $0x10] sm:$0xf]
          %v4709 = vld [vmem:[#allocation2 + $0x14] sm:$0xf]
          %v4710 = vld [vmem:[#allocation2 + $0x18] sm:$0xf]
          %v4711 = vld [vmem:[#allocation2 + $0x1c] sm:$0xf]
          %v4712 = vld [vmem:[#allocation2 + $0x20] sm:$0xf]
          %v4713 = vld [vmem:[#allocation2 + $0x24] sm:$0xf]
          %v4714 = vld [vmem:[#allocation2 + $0x28] sm:$0xf]
          %v4715 = vld [vmem:[#allocation2 + $0x2c] sm:$0xf]
          %v4716 = vld [vmem:[#allocation2 + $0x30] sm:$0xf]
          %v4717 = vld [vmem:[#allocation2 + $0x34] sm:$0xf]
          %v4718 = vld [vmem:[#allocation2 + $0x38] sm:$0xf]
          %v4719 = vld [vmem:[#allocation2 + $0x3c] sm:$0xf]
          %v4736 = vunpack.c.l.b16 %v4704
          %v4737 = vunpack.c.l.b16 %v4705
          %v4738 = vunpack.c.l.b16 %v4706
          %v4739 = vunpack.c.l.b16 %v4707
          %v4740 = vunpack.c.l.b16 %v4708
          %v4741 = vunpack.c.l.b16 %v4709
          %v4742 = vunpack.c.l.b16 %v4710
          %v4743 = vunpack.c.l.b16 %v4711
          %v4744 = vunpack.c.l.b16 %v4712
          %v4745 = vunpack.c.l.b16 %v4713
          %v4746 = vunpack.c.l.b16 %v4714
          %v4747 = vunpack.c.l.b16 %v4715
          %v4748 = vunpack.c.l.b16 %v4716
          %v4749 = vunpack.c.l.b16 %v4717
          %v4750 = vunpack.c.l.b16 %v4718
          %v4751 = vunpack.c.l.b16 %v4719
          %v4752 = vpack.c.b16 %v4737, %v4736
          %v4753 = vpack.c.b16 %v4739, %v4738
          %v4754 = vpack.c.b16 %v4741, %v4740
          %v4755 = vpack.c.b16 %v4743, %v4742
          %v4756 = vpack.c.b16 %v4745, %v4744
          %v4757 = vpack.c.b16 %v4747, %v4746
          %v4758 = vpack.c.b16 %v4749, %v4748
          %v4759 = vpack.c.b16 %v4751, %v4750
          %v4776 = vunpack.c.l.b16 %v4682
          %v4777 = vunpack.c.l.b16 %v4683
          %v4778 = vunpack.c.l.b16 %v4684
          %v4779 = vunpack.c.l.b16 %v4685
          %v4780 = vunpack.c.l.b16 %v4686
          %v4781 = vunpack.c.l.b16 %v4687
          %v4782 = vunpack.c.l.b16 %v4688
          %v4783 = vunpack.c.l.b16 %v4689
          %v4784 = vunpack.c.l.b16 %v4690
          %v4785 = vunpack.c.l.b16 %v4691
          %v4786 = vunpack.c.l.b16 %v4692
          %v4787 = vunpack.c.l.b16 %v4693
          %v4788 = vunpack.c.l.b16 %v4694
          %v4789 = vunpack.c.l.b16 %v4695
          %v4790 = vunpack.c.l.b16 %v4696
          %v4791 = vunpack.c.l.b16 %v4697
          %v4792 = vpack.c.b16 %v4777, %v4776
          %v4793 = vpack.c.b16 %v4779, %v4778
          %v4794 = vpack.c.b16 %v4781, %v4780
          %v4795 = vpack.c.b16 %v4783, %v4782
          %v4796 = vpack.c.b16 %v4785, %v4784
          %v4797 = vpack.c.b16 %v4787, %v4786
          %v4798 = vpack.c.b16 %v4789, %v4788
          %v4799 = vpack.c.b16 %v4791, %v4790
          %vm4800 = vcmask 261120
          %v4802 = vsel %vm4800, %v4752, 0
          %v4805 = vsel %vm4800, %v4753, 0
          %v4808 = vsel %vm4800, %v4754, 0
          %v4811 = vsel %vm4800, %v4755, 0
          %v4814 = vsel %vm4800, %v4756, 0
          %v4817 = vsel %vm4800, %v4757, 0
          %v4820 = vsel %vm4800, %v4758, 0
          %v4823 = vsel %vm4800, %v4759, 0
          %v4826 = vsel %vm4800, %v4792, 0
          %v4829 = vsel %vm4800, %v4793, 0
          %v4832 = vsel %vm4800, %v4794, 0
          %v4835 = vsel %vm4800, %v4795, 0
          %v4838 = vsel %vm4800, %v4796, 0
          %v4841 = vsel %vm4800, %v4797, 0
          %v4844 = vsel %vm4800, %v4798, 0
          %v4847 = vsel %vm4800, %v4799, 0
          %4849 = vmatpush.bf16.xpose.msra.mxu0 %v4847
          %4850 = vmatpush.bf16.xpose.msra.mxu0 %v4844
          %4851 = vmatpush.bf16.xpose.msra.mxu0 %v4841
          %4852 = vmatpush.bf16.xpose.msra.mxu0 %v4838
          %4853 = vmatpush.bf16.xpose.msra.mxu0 %v4835
          %4854 = vmatpush.bf16.xpose.msra.mxu0 %v4832
          %4855 = vmatpush.bf16.xpose.msra.mxu0 %v4829
          %4856 = vmatpush.bf16.xpose.msra.mxu0 %v4826
          %4857 = vmatmul.bf16.gmra.mxu0 %v4802
          %v4858 = vpop.f32.mrf.mxu0
          %v4859 = vadd.f32 0.0, %v4858
          %v4860 = vpop.f32.mrf.mxu0
          %v4861 = vadd.f32 0.0, %v4860
          %4862 = vmatmul.bf16.gmra.mxu0 %v4805
          %v4863 = vpop.f32.mrf.mxu0
          %v4864 = vadd.f32 0.0, %v4863
          %v4865 = vpop.f32.mrf.mxu0
          %v4866 = vadd.f32 0.0, %v4865
          %4867 = vmatmul.bf16.gmra.mxu0 %v4808
          %v4868 = vpop.f32.mrf.mxu0
          %v4869 = vadd.f32 0.0, %v4868
          %v4870 = vpop.f32.mrf.mxu0
          %v4871 = vadd.f32 0.0, %v4870
          %4872 = vmatmul.bf16.gmra.mxu0 %v4811
          %v4873 = vpop.f32.mrf.mxu0
          %v4874 = vadd.f32 0.0, %v4873
          %v4875 = vpop.f32.mrf.mxu0
          %v4876 = vadd.f32 0.0, %v4875
          %4877 = vmatmul.bf16.gmra.mxu0 %v4814
          %v4878 = vpop.f32.mrf.mxu0
          %v4879 = vadd.f32 0.0, %v4878
          %v4880 = vpop.f32.mrf.mxu0
          %v4881 = vadd.f32 0.0, %v4880
          %4882 = vmatmul.bf16.gmra.mxu0 %v4817
          %v4883 = vpop.f32.mrf.mxu0
          %v4884 = vadd.f32 0.0, %v4883
          %v4885 = vpop.f32.mrf.mxu0
          %v4886 = vadd.f32 0.0, %v4885
          %4887 = vmatmul.bf16.gmra.mxu0 %v4820
          %v4888 = vpop.f32.mrf.mxu0
          %v4889 = vadd.f32 0.0, %v4888
          %v4890 = vpop.f32.mrf.mxu0
          %v4891 = vadd.f32 0.0, %v4890
          %4892 = vmatmul.bf16.gmra.mxu0 %v4823
          %v4893 = vpop.f32.mrf.mxu0
          %v4894 = vadd.f32 0.0, %v4893
          %v4895 = vpop.f32.mrf.mxu0
          %v4896 = vadd.f32 0.0, %v4895
          %4897 = vdwg.mxu0
          %v4898 = vsel %vm4703, 1, 0
          %vm4899 = vcmp.eq.s32.totalorder %v4898, 1
          %v4900 = vsel %vm4899, %v4859, -1e+30
          %v4901 = vsel %vm4899, %v4861, -1e+30
          %v4902 = vsel %vm4899, %v4864, -1e+30
          %v4903 = vsel %vm4899, %v4866, -1e+30
          %v4904 = vsel %vm4899, %v4869, -1e+30
          %v4905 = vsel %vm4899, %v4871, -1e+30
          %v4906 = vsel %vm4899, %v4874, -1e+30
          %v4907 = vsel %vm4899, %v4876, -1e+30
          %v4908 = vsel %vm4899, %v4879, -1e+30
          %v4909 = vsel %vm4899, %v4881, -1e+30
          %v4910 = vsel %vm4899, %v4884, -1e+30
          %v4911 = vsel %vm4899, %v4886, -1e+30
          %v4912 = vsel %vm4899, %v4889, -1e+30
          %v4913 = vsel %vm4899, %v4891, -1e+30
          %v4914 = vsel %vm4899, %v4894, -1e+30
          %v4915 = vsel %vm4899, %v4896, -1e+30
          %v4916 = vld [vmem:[#allocation3] sm:$0xff]
          %v4917 = vld [vmem:[#allocation3 + $0x8] sm:$0xff]
          %v4918 = vld [vmem:[#allocation3 + $0x10] sm:$0xff]
          %v4919 = vld [vmem:[#allocation3 + $0x18] sm:$0xff]
          %v4920 = vld [vmem:[#allocation3 + $0x20] sm:$0xff]
          %v4921 = vld [vmem:[#allocation3 + $0x28] sm:$0xff]
          %v4922 = vld [vmem:[#allocation3 + $0x30] sm:$0xff]
          %v4923 = vld [vmem:[#allocation3 + $0x38] sm:$0xff]
          %v4924 = vld [vmem:[#allocation3 + $0x40] sm:$0xff]
          %v4925 = vld [vmem:[#allocation3 + $0x48] sm:$0xff]
          %v4926 = vld [vmem:[#allocation3 + $0x50] sm:$0xff]
          %v4927 = vld [vmem:[#allocation3 + $0x58] sm:$0xff]
          %v4928 = vld [vmem:[#allocation3 + $0x60] sm:$0xff]
          %v4929 = vld [vmem:[#allocation3 + $0x68] sm:$0xff]
          %v4930 = vld [vmem:[#allocation3 + $0x70] sm:$0xff]
          %v4931 = vld [vmem:[#allocation3 + $0x78] sm:$0xff]
          %4932 = vmax.xlane.f32.xlu0 %v4900
          %v4933 = vpop.xlane.xlu0 %4932
          %4934 = vmax.xlane.f32.xlu0 %v4901
          %v4935 = vpop.xlane.xlu0 %4934
          %4936 = vmax.xlane.f32.xlu0 %v4902
          %v4937 = vpop.xlane.xlu0 %4936
          %4938 = vmax.xlane.f32.xlu0 %v4903
          %v4939 = vpop.xlane.xlu0 %4938
          %4940 = vmax.xlane.f32.xlu0 %v4904
          %v4941 = vpop.xlane.xlu0 %4940
          %4942 = vmax.xlane.f32.xlu0 %v4905
          %v4943 = vpop.xlane.xlu0 %4942
          %4944 = vmax.xlane.f32.xlu0 %v4906
          %v4945 = vpop.xlane.xlu0 %4944
          %4946 = vmax.xlane.f32.xlu0 %v4907
          %v4947 = vpop.xlane.xlu0 %4946
          %4948 = vmax.xlane.f32.xlu0 %v4908
          %v4949 = vpop.xlane.xlu0 %4948
          %4950 = vmax.xlane.f32.xlu0 %v4909
          %v4951 = vpop.xlane.xlu0 %4950
          %4952 = vmax.xlane.f32.xlu0 %v4910
          %v4953 = vpop.xlane.xlu0 %4952
          %4954 = vmax.xlane.f32.xlu0 %v4911
          %v4955 = vpop.xlane.xlu0 %4954
          %4956 = vmax.xlane.f32.xlu0 %v4912
          %v4957 = vpop.xlane.xlu0 %4956
          %4958 = vmax.xlane.f32.xlu0 %v4913
          %v4959 = vpop.xlane.xlu0 %4958
          %4960 = vmax.xlane.f32.xlu0 %v4914
          %v4961 = vpop.xlane.xlu0 %4960
          %4962 = vmax.xlane.f32.xlu0 %v4915
          %v4963 = vpop.xlane.xlu0 %4962
          %v4964 = vmax.f32 %v4916, %v4933
          %v4965 = vmax.f32 %v4917, %v4935
          %v4966 = vmax.f32 %v4918, %v4937
          %v4967 = vmax.f32 %v4919, %v4939
          %v4968 = vmax.f32 %v4920, %v4941
          %v4969 = vmax.f32 %v4921, %v4943
          %v4970 = vmax.f32 %v4922, %v4945
          %v4971 = vmax.f32 %v4923, %v4947
          %v4972 = vmax.f32 %v4924, %v4949
          %v4973 = vmax.f32 %v4925, %v4951
          %v4974 = vmax.f32 %v4926, %v4953
          %v4975 = vmax.f32 %v4927, %v4955
          %v4976 = vmax.f32 %v4928, %v4957
          %v4977 = vmax.f32 %v4929, %v4959
          %v4978 = vmax.f32 %v4930, %v4961
          %v4979 = vmax.f32 %v4931, %v4963
          %v4980 = vsub.f32 %v4916, %v4964
          %v4981 = vsub.f32 %v4917, %v4965
          %v4982 = vsub.f32 %v4918, %v4966
          %v4983 = vsub.f32 %v4919, %v4967
          %v4984 = vsub.f32 %v4920, %v4968
          %v4985 = vsub.f32 %v4921, %v4969
          %v4986 = vsub.f32 %v4922, %v4970
          %v4987 = vsub.f32 %v4923, %v4971
          %v4988 = vsub.f32 %v4924, %v4972
          %v4989 = vsub.f32 %v4925, %v4973
          %v4990 = vsub.f32 %v4926, %v4974
          %v4991 = vsub.f32 %v4927, %v4975
          %v4992 = vsub.f32 %v4928, %v4976
          %v4993 = vsub.f32 %v4929, %v4977
          %v4994 = vsub.f32 %v4930, %v4978
          %v4995 = vsub.f32 %v4931, %v4979
          %v4996 = vmul.f32 %v4980, 1.442695
          %v4997 = vpow.pop %v4996
          %v4998 = vmul.f32 %v4981, 1.442695
          %v4999 = vpow.pop %v4998
          %v5000 = vmul.f32 %v4982, 1.442695
          %v5001 = vpow.pop %v5000
          %v5002 = vmul.f32 %v4983, 1.442695
          %v5003 = vpow.pop %v5002
          %v5004 = vmul.f32 %v4984, 1.442695
          %v5005 = vpow.pop %v5004
          %v5006 = vmul.f32 %v4985, 1.442695
          %v5007 = vpow.pop %v5006
          %v5008 = vmul.f32 %v4986, 1.442695
          %v5009 = vpow.pop %v5008
          %v5010 = vmul.f32 %v4987, 1.442695
          %v5011 = vpow.pop %v5010
          %v5012 = vmul.f32 %v4988, 1.442695
          %v5013 = vpow.pop %v5012
          %v5014 = vmul.f32 %v4989, 1.442695
          %v5015 = vpow.pop %v5014
          %v5016 = vmul.f32 %v4990, 1.442695
          %v5017 = vpow.pop %v5016
          %v5018 = vmul.f32 %v4991, 1.442695
          %v5019 = vpow.pop %v5018
          %v5020 = vmul.f32 %v4992, 1.442695
          %v5021 = vpow.pop %v5020
          %v5022 = vmul.f32 %v4993, 1.442695
          %v5023 = vpow.pop %v5022
          %v5024 = vmul.f32 %v4994, 1.442695
          %v5025 = vpow.pop %v5024
          %v5026 = vmul.f32 %v4995, 1.442695
          %v5027 = vpow.pop %v5026
          %5029 = vset.pattern.permute.xlu0 0
          %5030 = vperm.xlu0 %5029, %v4964
          %v5031 = vpop.permute.xlu0 %5030
          %5034 = vset.pattern.permute.xlu0 0
          %5035 = vperm.xlu0 %5034, %v4965
          %v5036 = vpop.permute.xlu0 %5035
          %5039 = vset.pattern.permute.xlu0 0
          %5040 = vperm.xlu0 %5039, %v4966
          %v5041 = vpop.permute.xlu0 %5040
          %5044 = vset.pattern.permute.xlu0 0
          %5045 = vperm.xlu0 %5044, %v4967
          %v5046 = vpop.permute.xlu0 %5045
          %5049 = vset.pattern.permute.xlu0 0
          %5050 = vperm.xlu0 %5049, %v4968
          %v5051 = vpop.permute.xlu0 %5050
          %5054 = vset.pattern.permute.xlu0 0
          %5055 = vperm.xlu0 %5054, %v4969
          %v5056 = vpop.permute.xlu0 %5055
          %5059 = vset.pattern.permute.xlu0 0
          %5060 = vperm.xlu0 %5059, %v4970
          %v5061 = vpop.permute.xlu0 %5060
          %5064 = vset.pattern.permute.xlu0 0
          %5065 = vperm.xlu0 %5064, %v4971
          %v5066 = vpop.permute.xlu0 %5065
          %5069 = vset.pattern.permute.xlu0 0
          %5070 = vperm.xlu0 %5069, %v4972
          %v5071 = vpop.permute.xlu0 %5070
          %5074 = vset.pattern.permute.xlu0 0
          %5075 = vperm.xlu0 %5074, %v4973
          %v5076 = vpop.permute.xlu0 %5075
          %5079 = vset.pattern.permute.xlu0 0
          %5080 = vperm.xlu0 %5079, %v4974
          %v5081 = vpop.permute.xlu0 %5080
          %5084 = vset.pattern.permute.xlu0 0
          %5085 = vperm.xlu0 %5084, %v4975
          %v5086 = vpop.permute.xlu0 %5085
          %5089 = vset.pattern.permute.xlu0 0
          %5090 = vperm.xlu0 %5089, %v4976
          %v5091 = vpop.permute.xlu0 %5090
          %5094 = vset.pattern.permute.xlu0 0
          %5095 = vperm.xlu0 %5094, %v4977
          %v5096 = vpop.permute.xlu0 %5095
          %5099 = vset.pattern.permute.xlu0 0
          %5100 = vperm.xlu0 %5099, %v4978
          %v5101 = vpop.permute.xlu0 %5100
          %5104 = vset.pattern.permute.xlu0 0
          %5105 = vperm.xlu0 %5104, %v4979
          %v5106 = vpop.permute.xlu0 %5105
          %v5108 = vsub.f32 %v4900, %v5031
          %v5109 = vsub.f32 %v4901, %v5036
          %v5110 = vsub.f32 %v4902, %v5041
          %v5111 = vsub.f32 %v4903, %v5046
          %v5112 = vsub.f32 %v4904, %v5051
          %v5113 = vsub.f32 %v4905, %v5056
          %v5114 = vsub.f32 %v4906, %v5061
          %v5115 = vsub.f32 %v4907, %v5066
          %v5116 = vsub.f32 %v4908, %v5071
          %v5117 = vsub.f32 %v4909, %v5076
          %v5118 = vsub.f32 %v4910, %v5081
          %v5119 = vsub.f32 %v4911, %v5086
          %v5120 = vsub.f32 %v4912, %v5091
          %v5121 = vsub.f32 %v4913, %v5096
          %v5122 = vsub.f32 %v4914, %v5101
          %v5123 = vsub.f32 %v4915, %v5106
          %v5124 = vmul.f32 %v5108, 1.442695
          %v5125 = vpow.pop %v5124
          %v5126 = vmul.f32 %v5109, 1.442695
          %v5127 = vpow.pop %v5126
          %v5128 = vmul.f32 %v5110, 1.442695
          %v5129 = vpow.pop %v5128
          %v5130 = vmul.f32 %v5111, 1.442695
          %v5131 = vpow.pop %v5130
          %v5132 = vmul.f32 %v5112, 1.442695
          %v5133 = vpow.pop %v5132
          %v5134 = vmul.f32 %v5113, 1.442695
          %v5135 = vpow.pop %v5134
          %v5136 = vmul.f32 %v5114, 1.442695
          %v5137 = vpow.pop %v5136
          %v5138 = vmul.f32 %v5115, 1.442695
          %v5139 = vpow.pop %v5138
          %v5140 = vmul.f32 %v5116, 1.442695
          %v5141 = vpow.pop %v5140
          %v5142 = vmul.f32 %v5117, 1.442695
          %v5143 = vpow.pop %v5142
          %v5144 = vmul.f32 %v5118, 1.442695
          %v5145 = vpow.pop %v5144
          %v5146 = vmul.f32 %v5119, 1.442695
          %v5147 = vpow.pop %v5146
          %v5148 = vmul.f32 %v5120, 1.442695
          %v5149 = vpow.pop %v5148
          %v5150 = vmul.f32 %v5121, 1.442695
          %v5151 = vpow.pop %v5150
          %v5152 = vmul.f32 %v5122, 1.442695
          %v5153 = vpow.pop %v5152
          %v5154 = vmul.f32 %v5123, 1.442695
          %v5155 = vpow.pop %v5154
          %v5156 = vld [vmem:[#allocation4] sm:$0xff]
          %v5157 = vld [vmem:[#allocation4 + $0x8] sm:$0xff]
          %v5158 = vld [vmem:[#allocation4 + $0x10] sm:$0xff]
          %v5159 = vld [vmem:[#allocation4 + $0x18] sm:$0xff]
          %v5160 = vld [vmem:[#allocation4 + $0x20] sm:$0xff]
          %v5161 = vld [vmem:[#allocation4 + $0x28] sm:$0xff]
          %v5162 = vld [vmem:[#allocation4 + $0x30] sm:$0xff]
          %v5163 = vld [vmem:[#allocation4 + $0x38] sm:$0xff]
          %v5164 = vld [vmem:[#allocation4 + $0x40] sm:$0xff]
          %v5165 = vld [vmem:[#allocation4 + $0x48] sm:$0xff]
          %v5166 = vld [vmem:[#allocation4 + $0x50] sm:$0xff]
          %v5167 = vld [vmem:[#allocation4 + $0x58] sm:$0xff]
          %v5168 = vld [vmem:[#allocation4 + $0x60] sm:$0xff]
          %v5169 = vld [vmem:[#allocation4 + $0x68] sm:$0xff]
          %v5170 = vld [vmem:[#allocation4 + $0x70] sm:$0xff]
          %v5171 = vld [vmem:[#allocation4 + $0x78] sm:$0xff]
          %v5172 = vmul.f32 %v4997, %v5156
          %v5173 = vmul.f32 %v4999, %v5157
          %v5174 = vmul.f32 %v5001, %v5158
          %v5175 = vmul.f32 %v5003, %v5159
          %v5176 = vmul.f32 %v5005, %v5160
          %v5177 = vmul.f32 %v5007, %v5161
          %v5178 = vmul.f32 %v5009, %v5162
          %v5179 = vmul.f32 %v5011, %v5163
          %v5180 = vmul.f32 %v5013, %v5164
          %v5181 = vmul.f32 %v5015, %v5165
          %v5182 = vmul.f32 %v5017, %v5166
          %v5183 = vmul.f32 %v5019, %v5167
          %v5184 = vmul.f32 %v5021, %v5168
          %v5185 = vmul.f32 %v5023, %v5169
          %v5186 = vmul.f32 %v5025, %v5170
          %v5187 = vmul.f32 %v5027, %v5171
          %5188 = vadd.xlane.f32.xlu0 %v5125
          %v5189 = vpop.xlane.xlu0 %5188
          %5190 = vadd.xlane.f32.xlu0 %v5127
          %v5191 = vpop.xlane.xlu0 %5190
          %5192 = vadd.xlane.f32.xlu0 %v5129
          %v5193 = vpop.xlane.xlu0 %5192
          %5194 = vadd.xlane.f32.xlu0 %v5131
          %v5195 = vpop.xlane.xlu0 %5194
          %5196 = vadd.xlane.f32.xlu0 %v5133
          %v5197 = vpop.xlane.xlu0 %5196
          %5198 = vadd.xlane.f32.xlu0 %v5135
          %v5199 = vpop.xlane.xlu0 %5198
          %5200 = vadd.xlane.f32.xlu0 %v5137
          %v5201 = vpop.xlane.xlu0 %5200
          %5202 = vadd.xlane.f32.xlu0 %v5139
          %v5203 = vpop.xlane.xlu0 %5202
          %5204 = vadd.xlane.f32.xlu0 %v5141
          %v5205 = vpop.xlane.xlu0 %5204
          %5206 = vadd.xlane.f32.xlu0 %v5143
          %v5207 = vpop.xlane.xlu0 %5206
          %5208 = vadd.xlane.f32.xlu0 %v5145
          %v5209 = vpop.xlane.xlu0 %5208
          %5210 = vadd.xlane.f32.xlu0 %v5147
          %v5211 = vpop.xlane.xlu0 %5210
          %5212 = vadd.xlane.f32.xlu0 %v5149
          %v5213 = vpop.xlane.xlu0 %5212
          %5214 = vadd.xlane.f32.xlu0 %v5151
          %v5215 = vpop.xlane.xlu0 %5214
          %5216 = vadd.xlane.f32.xlu0 %v5153
          %v5217 = vpop.xlane.xlu0 %5216
          %5218 = vadd.xlane.f32.xlu0 %v5155
          %v5219 = vpop.xlane.xlu0 %5218
          %v5220 = vadd.f32 %v5172, %v5189
          %v5221 = vadd.f32 %v5173, %v5191
          %v5222 = vadd.f32 %v5174, %v5193
          %v5223 = vadd.f32 %v5175, %v5195
          %v5224 = vadd.f32 %v5176, %v5197
          %v5225 = vadd.f32 %v5177, %v5199
          %v5226 = vadd.f32 %v5178, %v5201
          %v5227 = vadd.f32 %v5179, %v5203
          %v5228 = vadd.f32 %v5180, %v5205
          %v5229 = vadd.f32 %v5181, %v5207
          %v5230 = vadd.f32 %v5182, %v5209
          %v5231 = vadd.f32 %v5183, %v5211
          %v5232 = vadd.f32 %v5184, %v5213
          %v5233 = vadd.f32 %v5185, %v5215
          %v5234 = vadd.f32 %v5186, %v5217
          %v5235 = vadd.f32 %v5187, %v5219
          %vm5236 = vcmask 7168
          %5237 = vst.msk [vmem:[#allocation4] sm:$0xff] %vm5236, %v5220
          %5238 = vst.msk [vmem:[#allocation4 + $0x8] sm:$0xff] %vm5236, %v5221
          %5239 = vst.msk [vmem:[#allocation4 + $0x10] sm:$0xff] %vm5236, %v5222
          %5240 = vst.msk [vmem:[#allocation4 + $0x18] sm:$0xff] %vm5236, %v5223
          %5241 = vst.msk [vmem:[#allocation4 + $0x20] sm:$0xff] %vm5236, %v5224
          %5242 = vst.msk [vmem:[#allocation4 + $0x28] sm:$0xff] %vm5236, %v5225
          %5243 = vst.msk [vmem:[#allocation4 + $0x30] sm:$0xff] %vm5236, %v5226
          %5244 = vst.msk [vmem:[#allocation4 + $0x38] sm:$0xff] %vm5236, %v5227
          %5245 = vst.msk [vmem:[#allocation4 + $0x40] sm:$0xff] %vm5236, %v5228
          %5246 = vst.msk [vmem:[#allocation4 + $0x48] sm:$0xff] %vm5236, %v5229
          %5247 = vst.msk [vmem:[#allocation4 + $0x50] sm:$0xff] %vm5236, %v5230
          %5248 = vst.msk [vmem:[#allocation4 + $0x58] sm:$0xff] %vm5236, %v5231
          %5249 = vst.msk [vmem:[#allocation4 + $0x60] sm:$0xff] %vm5236, %v5232
          %5250 = vst.msk [vmem:[#allocation4 + $0x68] sm:$0xff] %vm5236, %v5233
          %5251 = vst.msk [vmem:[#allocation4 + $0x70] sm:$0xff] %vm5236, %v5234
          %5252 = vst.msk [vmem:[#allocation4 + $0x78] sm:$0xff] %vm5236, %v5235
          %v5253 = vpack.c.bf16 %v5127, %v5125
          %v5254 = vpack.c.bf16 %v5131, %v5129
          %v5255 = vpack.c.bf16 %v5135, %v5133
          %v5256 = vpack.c.bf16 %v5139, %v5137
          %v5257 = vpack.c.bf16 %v5143, %v5141
          %v5258 = vpack.c.bf16 %v5147, %v5145
          %v5259 = vpack.c.bf16 %v5151, %v5149
          %v5260 = vpack.c.bf16 %v5155, %v5153
          %v5261 = vunpack.c.h.b16 %v4682
          %v5262 = vunpack.c.h.b16 %v4683
          %v5263 = vunpack.c.h.b16 %v4684
          %v5264 = vunpack.c.h.b16 %v4685
          %v5265 = vunpack.c.h.b16 %v4686
          %v5266 = vunpack.c.h.b16 %v4687
          %v5267 = vunpack.c.h.b16 %v4688
          %v5268 = vunpack.c.h.b16 %v4689
          %v5269 = vunpack.c.h.b16 %v4690
          %v5270 = vunpack.c.h.b16 %v4691
          %v5271 = vunpack.c.h.b16 %v4692
          %v5272 = vunpack.c.h.b16 %v4693
          %v5273 = vunpack.c.h.b16 %v4694
          %v5274 = vunpack.c.h.b16 %v4695
          %v5275 = vunpack.c.h.b16 %v4696
          %v5276 = vunpack.c.h.b16 %v4697
          %v5277 = vpack.c.b16 %v5262, %v5261
          %v5278 = vpack.c.b16 %v5264, %v5263
          %v5279 = vpack.c.b16 %v5266, %v5265
          %v5280 = vpack.c.b16 %v5268, %v5267
          %v5281 = vpack.c.b16 %v5270, %v5269
          %v5282 = vpack.c.b16 %v5272, %v5271
          %v5283 = vpack.c.b16 %v5274, %v5273
          %v5284 = vpack.c.b16 %v5276, %v5275
          %5293 = vmatpush.bf16.msra.mxu0 %v5284
          %5294 = vmatpush.bf16.msra.mxu0 %v5283
          %5295 = vmatpush.bf16.msra.mxu0 %v5282
          %5296 = vmatpush.bf16.msra.mxu0 %v5281
          %5297 = vmatpush.bf16.msra.mxu0 %v5280
          %5298 = vmatpush.bf16.msra.mxu0 %v5279
          %5299 = vmatpush.bf16.msra.mxu0 %v5278
          %5300 = vmatpush.bf16.msra.mxu0 %v5277
          %5301 = vmatmul.bf16.gmra.mxu0 %v5253
          %v5302 = vpop.f32.mrf.mxu0
          %v5303 = vadd.f32 0.0, %v5302
          %v5304 = vpop.f32.mrf.mxu0
          %v5305 = vadd.f32 0.0, %v5304
          %5306 = vmatmul.bf16.gmra.mxu0 %v5254
          %v5307 = vpop.f32.mrf.mxu0
          %v5308 = vadd.f32 0.0, %v5307
          %v5309 = vpop.f32.mrf.mxu0
          %v5310 = vadd.f32 0.0, %v5309
          %5311 = vmatmul.bf16.gmra.mxu0 %v5255
          %v5312 = vpop.f32.mrf.mxu0
          %v5313 = vadd.f32 0.0, %v5312
          %v5314 = vpop.f32.mrf.mxu0
          %v5315 = vadd.f32 0.0, %v5314
          %5316 = vmatmul.bf16.gmra.mxu0 %v5256
          %v5317 = vpop.f32.mrf.mxu0
          %v5318 = vadd.f32 0.0, %v5317
          %v5319 = vpop.f32.mrf.mxu0
          %v5320 = vadd.f32 0.0, %v5319
          %5321 = vmatmul.bf16.gmra.mxu0 %v5257
          %v5322 = vpop.f32.mrf.mxu0
          %v5323 = vadd.f32 0.0, %v5322
          %v5324 = vpop.f32.mrf.mxu0
          %v5325 = vadd.f32 0.0, %v5324
          %5326 = vmatmul.bf16.gmra.mxu0 %v5258
          %v5327 = vpop.f32.mrf.mxu0
          %v5328 = vadd.f32 0.0, %v5327
          %v5329 = vpop.f32.mrf.mxu0
          %v5330 = vadd.f32 0.0, %v5329
          %5331 = vmatmul.bf16.gmra.mxu0 %v5259
          %v5332 = vpop.f32.mrf.mxu0
          %v5333 = vadd.f32 0.0, %v5332
          %v5334 = vpop.f32.mrf.mxu0
          %v5335 = vadd.f32 0.0, %v5334
          %5336 = vmatmul.bf16.gmra.mxu0 %v5260
          %v5337 = vpop.f32.mrf.mxu0
          %v5338 = vadd.f32 0.0, %v5337
          %v5339 = vpop.f32.mrf.mxu0
          %v5340 = vadd.f32 0.0, %v5339
          %5341 = vdwg.mxu0
          %v5342 = vld [vmem:[#allocation5] sm:$0xff]
          %v5343 = vld [vmem:[#allocation5 + $0x8] sm:$0xff]
          %v5344 = vld [vmem:[#allocation5 + $0x10] sm:$0xff]
          %v5345 = vld [vmem:[#allocation5 + $0x18] sm:$0xff]
          %v5346 = vld [vmem:[#allocation5 + $0x20] sm:$0xff]
          %v5347 = vld [vmem:[#allocation5 + $0x28] sm:$0xff]
          %v5348 = vld [vmem:[#allocation5 + $0x30] sm:$0xff]
          %v5349 = vld [vmem:[#allocation5 + $0x38] sm:$0xff]
          %v5350 = vld [vmem:[#allocation5 + $0x40] sm:$0xff]
          %v5351 = vld [vmem:[#allocation5 + $0x48] sm:$0xff]
          %v5352 = vld [vmem:[#allocation5 + $0x50] sm:$0xff]
          %v5353 = vld [vmem:[#allocation5 + $0x58] sm:$0xff]
          %v5354 = vld [vmem:[#allocation5 + $0x60] sm:$0xff]
          %v5355 = vld [vmem:[#allocation5 + $0x68] sm:$0xff]
          %v5356 = vld [vmem:[#allocation5 + $0x70] sm:$0xff]
          %v5357 = vld [vmem:[#allocation5 + $0x78] sm:$0xff]
          %5359 = vset.pattern.permute.xlu0 0
          %5360 = vperm.xlu0 %5359, %v4997
          %v5361 = vpop.permute.xlu0 %5360
          %5364 = vset.pattern.permute.xlu0 0
          %5365 = vperm.xlu0 %5364, %v4999
          %v5366 = vpop.permute.xlu0 %5365
          %5369 = vset.pattern.permute.xlu0 0
          %5370 = vperm.xlu0 %5369, %v5001
          %v5371 = vpop.permute.xlu0 %5370
          %5374 = vset.pattern.permute.xlu0 0
          %5375 = vperm.xlu0 %5374, %v5003
          %v5376 = vpop.permute.xlu0 %5375
          %5379 = vset.pattern.permute.xlu0 0
          %5380 = vperm.xlu0 %5379, %v5005
          %v5381 = vpop.permute.xlu0 %5380
          %5384 = vset.pattern.permute.xlu0 0
          %5385 = vperm.xlu0 %5384, %v5007
          %v5386 = vpop.permute.xlu0 %5385
          %5389 = vset.pattern.permute.xlu0 0
          %5390 = vperm.xlu0 %5389, %v5009
          %v5391 = vpop.permute.xlu0 %5390
          %5394 = vset.pattern.permute.xlu0 0
          %5395 = vperm.xlu0 %5394, %v5011
          %v5396 = vpop.permute.xlu0 %5395
          %5399 = vset.pattern.permute.xlu0 0
          %5400 = vperm.xlu0 %5399, %v5013
          %v5401 = vpop.permute.xlu0 %5400
          %5404 = vset.pattern.permute.xlu0 0
          %5405 = vperm.xlu0 %5404, %v5015
          %v5406 = vpop.permute.xlu0 %5405
          %5409 = vset.pattern.permute.xlu0 0
          %5410 = vperm.xlu0 %5409, %v5017
          %v5411 = vpop.permute.xlu0 %5410
          %5414 = vset.pattern.permute.xlu0 0
          %5415 = vperm.xlu0 %5414, %v5019
          %v5416 = vpop.permute.xlu0 %5415
          %5419 = vset.pattern.permute.xlu0 0
          %5420 = vperm.xlu0 %5419, %v5021
          %v5421 = vpop.permute.xlu0 %5420
          %5424 = vset.pattern.permute.xlu0 0
          %5425 = vperm.xlu0 %5424, %v5023
          %v5426 = vpop.permute.xlu0 %5425
          %5429 = vset.pattern.permute.xlu0 0
          %5430 = vperm.xlu0 %5429, %v5025
          %v5431 = vpop.permute.xlu0 %5430
          %5434 = vset.pattern.permute.xlu0 0
          %5435 = vperm.xlu0 %5434, %v5027
          %v5436 = vpop.permute.xlu0 %5435
          %v5438 = vmul.f32 %v5361, %v5342
          %v5439 = vmul.f32 %v5366, %v5343
          %v5440 = vmul.f32 %v5371, %v5344
          %v5441 = vmul.f32 %v5376, %v5345
          %v5442 = vmul.f32 %v5381, %v5346
          %v5443 = vmul.f32 %v5386, %v5347
          %v5444 = vmul.f32 %v5391, %v5348
          %v5445 = vmul.f32 %v5396, %v5349
          %v5446 = vmul.f32 %v5401, %v5350
          %v5447 = vmul.f32 %v5406, %v5351
          %v5448 = vmul.f32 %v5411, %v5352
          %v5449 = vmul.f32 %v5416, %v5353
          %v5450 = vmul.f32 %v5421, %v5354
          %v5451 = vmul.f32 %v5426, %v5355
          %v5452 = vmul.f32 %v5431, %v5356
          %v5453 = vmul.f32 %v5436, %v5357
          %v5454 = vadd.f32 %v5438, %v5303
          %v5455 = vadd.f32 %v5439, %v5305
          %v5456 = vadd.f32 %v5440, %v5308
          %v5457 = vadd.f32 %v5441, %v5310
          %v5458 = vadd.f32 %v5442, %v5313
          %v5459 = vadd.f32 %v5443, %v5315
          %v5460 = vadd.f32 %v5444, %v5318
          %v5461 = vadd.f32 %v5445, %v5320
          %v5462 = vadd.f32 %v5446, %v5323
          %v5463 = vadd.f32 %v5447, %v5325
          %v5464 = vadd.f32 %v5448, %v5328
          %v5465 = vadd.f32 %v5449, %v5330
          %v5466 = vadd.f32 %v5450, %v5333
          %v5467 = vadd.f32 %v5451, %v5335
          %v5468 = vadd.f32 %v5452, %v5338
          %v5469 = vadd.f32 %v5453, %v5340
          %5470 = vst.msk [vmem:[#allocation5] sm:$0xff] %vm4800, %v5454
          %5471 = vst.msk [vmem:[#allocation5 + $0x8] sm:$0xff] %vm4800, %v5455
          %5472 = vst.msk [vmem:[#allocation5 + $0x10] sm:$0xff] %vm4800, %v5456
          %5473 = vst.msk [vmem:[#allocation5 + $0x18] sm:$0xff] %vm4800, %v5457
          %5474 = vst.msk [vmem:[#allocation5 + $0x20] sm:$0xff] %vm4800, %v5458
          %5475 = vst.msk [vmem:[#allocation5 + $0x28] sm:$0xff] %vm4800, %v5459
          %5476 = vst.msk [vmem:[#allocation5 + $0x30] sm:$0xff] %vm4800, %v5460
          %5477 = vst.msk [vmem:[#allocation5 + $0x38] sm:$0xff] %vm4800, %v5461
          %5478 = vst.msk [vmem:[#allocation5 + $0x40] sm:$0xff] %vm4800, %v5462
          %5479 = vst.msk [vmem:[#allocation5 + $0x48] sm:$0xff] %vm4800, %v5463
          %5480 = vst.msk [vmem:[#allocation5 + $0x50] sm:$0xff] %vm4800, %v5464
          %5481 = vst.msk [vmem:[#allocation5 + $0x58] sm:$0xff] %vm4800, %v5465
          %5482 = vst.msk [vmem:[#allocation5 + $0x60] sm:$0xff] %vm4800, %v5466
          %5483 = vst.msk [vmem:[#allocation5 + $0x68] sm:$0xff] %vm4800, %v5467
          %5484 = vst.msk [vmem:[#allocation5 + $0x70] sm:$0xff] %vm4800, %v5468
          %5485 = vst.msk [vmem:[#allocation5 + $0x78] sm:$0xff] %vm4800, %v5469
          %5486 = vst.msk [vmem:[#allocation3] sm:$0xff] %vm5236, %v4964
          %5487 = vst.msk [vmem:[#allocation3 + $0x8] sm:$0xff] %vm5236, %v4965
          %5488 = vst.msk [vmem:[#allocation3 + $0x10] sm:$0xff] %vm5236, %v4966
          %5489 = vst.msk [vmem:[#allocation3 + $0x18] sm:$0xff] %vm5236, %v4967
          %5490 = vst.msk [vmem:[#allocation3 + $0x20] sm:$0xff] %vm5236, %v4968
          %5491 = vst.msk [vmem:[#allocation3 + $0x28] sm:$0xff] %vm5236, %v4969
          %5492 = vst.msk [vmem:[#allocation3 + $0x30] sm:$0xff] %vm5236, %v4970
          %5493 = vst.msk [vmem:[#allocation3 + $0x38] sm:$0xff] %vm5236, %v4971
          %5494 = vst.msk [vmem:[#allocation3 + $0x40] sm:$0xff] %vm5236, %v4972
          %5495 = vst.msk [vmem:[#allocation3 + $0x48] sm:$0xff] %vm5236, %v4973
          %5496 = vst.msk [vmem:[#allocation3 + $0x50] sm:$0xff] %vm5236, %v4974
          %5497 = vst.msk [vmem:[#allocation3 + $0x58] sm:$0xff] %vm5236, %v4975
          %5498 = vst.msk [vmem:[#allocation3 + $0x60] sm:$0xff] %vm5236, %v4976
          %5499 = vst.msk [vmem:[#allocation3 + $0x68] sm:$0xff] %vm5236, %v4977
          %5500 = vst.msk [vmem:[#allocation3 + $0x70] sm:$0xff] %vm5236, %v4978
          %5501 = vst.msk [vmem:[#allocation3 + $0x78] sm:$0xff] %vm5236, %v4979
          %v5502 = vld [vmem:[#allocation2] sm:$0xf]
          %v5503 = vld [vmem:[#allocation2 + $0x4] sm:$0xf]
          %v5504 = vld [vmem:[#allocation2 + $0x8] sm:$0xf]
          %v5505 = vld [vmem:[#allocation2 + $0xc] sm:$0xf]
          %v5506 = vld [vmem:[#allocation2 + $0x10] sm:$0xf]
          %v5507 = vld [vmem:[#allocation2 + $0x14] sm:$0xf]
          %v5508 = vld [vmem:[#allocation2 + $0x18] sm:$0xf]
          %v5509 = vld [vmem:[#allocation2 + $0x1c] sm:$0xf]
          %v5510 = vld [vmem:[#allocation2 + $0x20] sm:$0xf]
          %v5511 = vld [vmem:[#allocation2 + $0x24] sm:$0xf]
          %v5512 = vld [vmem:[#allocation2 + $0x28] sm:$0xf]
          %v5513 = vld [vmem:[#allocation2 + $0x2c] sm:$0xf]
          %v5514 = vld [vmem:[#allocation2 + $0x30] sm:$0xf]
          %v5515 = vld [vmem:[#allocation2 + $0x34] sm:$0xf]
          %v5516 = vld [vmem:[#allocation2 + $0x38] sm:$0xf]
          %v5517 = vld [vmem:[#allocation2 + $0x3c] sm:$0xf]
          %v5534 = vunpack.c.l.b16 %v5502
          %v5535 = vunpack.c.l.b16 %v5503
          %v5536 = vunpack.c.l.b16 %v5504
          %v5537 = vunpack.c.l.b16 %v5505
          %v5538 = vunpack.c.l.b16 %v5506
          %v5539 = vunpack.c.l.b16 %v5507
          %v5540 = vunpack.c.l.b16 %v5508
          %v5541 = vunpack.c.l.b16 %v5509
          %v5542 = vunpack.c.l.b16 %v5510
          %v5543 = vunpack.c.l.b16 %v5511
          %v5544 = vunpack.c.l.b16 %v5512
          %v5545 = vunpack.c.l.b16 %v5513
          %v5546 = vunpack.c.l.b16 %v5514
          %v5547 = vunpack.c.l.b16 %v5515
          %v5548 = vunpack.c.l.b16 %v5516
          %v5549 = vunpack.c.l.b16 %v5517
          %v5550 = vpack.c.b16 %v5535, %v5534
          %v5551 = vpack.c.b16 %v5537, %v5536
          %v5552 = vpack.c.b16 %v5539, %v5538
          %v5553 = vpack.c.b16 %v5541, %v5540
          %v5554 = vpack.c.b16 %v5543, %v5542
          %v5555 = vpack.c.b16 %v5545, %v5544
          %v5556 = vpack.c.b16 %v5547, %v5546
          %v5557 = vpack.c.b16 %v5549, %v5548
          %5558 = vrot.lane.b32.xlu0 %v5550, 96
          %v5559 = vpop.permute.xlu0 %5558
          %5560 = vrot.lane.b32.xlu0 %v5551, 96
          %v5561 = vpop.permute.xlu0 %5560
          %5562 = vrot.lane.b32.xlu0 %v5552, 96
          %v5563 = vpop.permute.xlu0 %5562
          %5564 = vrot.lane.b32.xlu0 %v5553, 96
          %v5565 = vpop.permute.xlu0 %5564
          %5566 = vrot.lane.b32.xlu0 %v5554, 96
          %v5567 = vpop.permute.xlu0 %5566
          %5568 = vrot.lane.b32.xlu0 %v5555, 96
          %v5569 = vpop.permute.xlu0 %5568
          %5570 = vrot.lane.b32.xlu0 %v5556, 96
          %v5571 = vpop.permute.xlu0 %5570
          %5572 = vrot.lane.b32.xlu0 %v5557, 96
          %v5573 = vpop.permute.xlu0 %5572
          %5574 = vrot.lane.b32.xlu0 %v4792, 96
          %v5575 = vpop.permute.xlu0 %5574
          %5576 = vrot.lane.b32.xlu0 %v4793, 96
          %v5577 = vpop.permute.xlu0 %5576
          %5578 = vrot.lane.b32.xlu0 %v4794, 96
          %v5579 = vpop.permute.xlu0 %5578
          %5580 = vrot.lane.b32.xlu0 %v4795, 96
          %v5581 = vpop.permute.xlu0 %5580
          %5582 = vrot.lane.b32.xlu0 %v4796, 96
          %v5583 = vpop.permute.xlu0 %5582
          %5584 = vrot.lane.b32.xlu0 %v4797, 96
          %v5585 = vpop.permute.xlu0 %5584
          %5586 = vrot.lane.b32.xlu0 %v4798, 96
          %v5587 = vpop.permute.xlu0 %5586
          %5588 = vrot.lane.b32.xlu0 %v4799, 96
          %v5589 = vpop.permute.xlu0 %5588
          %v5591 = vsel %vm4800, %v5559, 0
          %v5594 = vsel %vm4800, %v5561, 0
          %v5597 = vsel %vm4800, %v5563, 0
          %v5600 = vsel %vm4800, %v5565, 0
          %v5603 = vsel %vm4800, %v5567, 0
          %v5606 = vsel %vm4800, %v5569, 0
          %v5609 = vsel %vm4800, %v5571, 0
          %v5612 = vsel %vm4800, %v5573, 0
          %v5615 = vsel %vm4800, %v5575, 0
          %v5618 = vsel %vm4800, %v5577, 0
          %v5621 = vsel %vm4800, %v5579, 0
          %v5624 = vsel %vm4800, %v5581, 0
          %v5627 = vsel %vm4800, %v5583, 0
          %v5630 = vsel %vm4800, %v5585, 0
          %v5633 = vsel %vm4800, %v5587, 0
          %v5636 = vsel %vm4800, %v5589, 0
          %5638 = vmatpush.bf16.xpose.msra.mxu0 %v5636
          %5639 = vmatpush.bf16.xpose.msra.mxu0 %v5633
          %5640 = vmatpush.bf16.xpose.msra.mxu0 %v5630
          %5641 = vmatpush.bf16.xpose.msra.mxu0 %v5627
          %5642 = vmatpush.bf16.xpose.msra.mxu0 %v5624
          %5643 = vmatpush.bf16.xpose.msra.mxu0 %v5621
          %5644 = vmatpush.bf16.xpose.msra.mxu0 %v5618
          %5645 = vmatpush.bf16.xpose.msra.mxu0 %v5615
          %5646 = vmatmul.bf16.gmra.mxu0 %v5591
          %v5647 = vpop.f32.mrf.mxu0
          %v5648 = vadd.f32 0.0, %v5647
          %v5649 = vpop.f32.mrf.mxu0
          %v5650 = vadd.f32 0.0, %v5649
          %5651 = vmatmul.bf16.gmra.mxu0 %v5594
          %v5652 = vpop.f32.mrf.mxu0
          %v5653 = vadd.f32 0.0, %v5652
          %v5654 = vpop.f32.mrf.mxu0
          %v5655 = vadd.f32 0.0, %v5654
          %5656 = vmatmul.bf16.gmra.mxu0 %v5597
          %v5657 = vpop.f32.mrf.mxu0
          %v5658 = vadd.f32 0.0, %v5657
          %v5659 = vpop.f32.mrf.mxu0
          %v5660 = vadd.f32 0.0, %v5659
          %5661 = vmatmul.bf16.gmra.mxu0 %v5600
          %v5662 = vpop.f32.mrf.mxu0
          %v5663 = vadd.f32 0.0, %v5662
          %v5664 = vpop.f32.mrf.mxu0
          %v5665 = vadd.f32 0.0, %v5664
          %5666 = vmatmul.bf16.gmra.mxu0 %v5603
          %v5667 = vpop.f32.mrf.mxu0
          %v5668 = vadd.f32 0.0, %v5667
          %v5669 = vpop.f32.mrf.mxu0
          %v5670 = vadd.f32 0.0, %v5669
          %5671 = vmatmul.bf16.gmra.mxu0 %v5606
          %v5672 = vpop.f32.mrf.mxu0
          %v5673 = vadd.f32 0.0, %v5672
          %v5674 = vpop.f32.mrf.mxu0
          %v5675 = vadd.f32 0.0, %v5674
          %5676 = vmatmul.bf16.gmra.mxu0 %v5609
          %v5677 = vpop.f32.mrf.mxu0
          %v5678 = vadd.f32 0.0, %v5677
          %v5679 = vpop.f32.mrf.mxu0
          %v5680 = vadd.f32 0.0, %v5679
          %5681 = vmatmul.bf16.gmra.mxu0 %v5612
          %v5682 = vpop.f32.mrf.mxu0
          %v5683 = vadd.f32 0.0, %v5682
          %v5684 = vpop.f32.mrf.mxu0
          %v5685 = vadd.f32 0.0, %v5684
          %5686 = vdwg.mxu0
          %v5687 = vsel %vm4899, %v5648, -1e+30
          %v5688 = vsel %vm4899, %v5650, -1e+30
          %v5689 = vsel %vm4899, %v5653, -1e+30
          %v5690 = vsel %vm4899, %v5655, -1e+30
          %v5691 = vsel %vm4899, %v5658, -1e+30
          %v5692 = vsel %vm4899, %v5660, -1e+30
          %v5693 = vsel %vm4899, %v5663, -1e+30
          %v5694 = vsel %vm4899, %v5665, -1e+30
          %v5695 = vsel %vm4899, %v5668, -1e+30
          %v5696 = vsel %vm4899, %v5670, -1e+30
          %v5697 = vsel %vm4899, %v5673, -1e+30
          %v5698 = vsel %vm4899, %v5675, -1e+30
          %v5699 = vsel %vm4899, %v5678, -1e+30
          %v5700 = vsel %vm4899, %v5680, -1e+30
          %v5701 = vsel %vm4899, %v5683, -1e+30
          %v5702 = vsel %vm4899, %v5685, -1e+30
          %s5703 = scalar_lea.vmem [#allocation3], 128
          %v5704 = vld [vmem:[%s5703] sm:$0xff]
          %v5705 = vld [vmem:[%s5703 + $0x8] sm:$0xff]
          %v5706 = vld [vmem:[%s5703 + $0x10] sm:$0xff]
          %v5707 = vld [vmem:[%s5703 + $0x18] sm:$0xff]
          %v5708 = vld [vmem:[%s5703 + $0x20] sm:$0xff]
          %v5709 = vld [vmem:[%s5703 + $0x28] sm:$0xff]
          %v5710 = vld [vmem:[%s5703 + $0x30] sm:$0xff]
          %v5711 = vld [vmem:[%s5703 + $0x38] sm:$0xff]
          %v5712 = vld [vmem:[%s5703 + $0x40] sm:$0xff]
          %v5713 = vld [vmem:[%s5703 + $0x48] sm:$0xff]
          %v5714 = vld [vmem:[%s5703 + $0x50] sm:$0xff]
          %v5715 = vld [vmem:[%s5703 + $0x58] sm:$0xff]
          %v5716 = vld [vmem:[%s5703 + $0x60] sm:$0xff]
          %v5717 = vld [vmem:[%s5703 + $0x68] sm:$0xff]
          %v5718 = vld [vmem:[%s5703 + $0x70] sm:$0xff]
          %v5719 = vld [vmem:[%s5703 + $0x78] sm:$0xff]
          %5720 = vmax.xlane.f32.xlu0 %v5687
          %v5721 = vpop.xlane.xlu0 %5720
          %5722 = vmax.xlane.f32.xlu0 %v5688
          %v5723 = vpop.xlane.xlu0 %5722
          %5724 = vmax.xlane.f32.xlu0 %v5689
          %v5725 = vpop.xlane.xlu0 %5724
          %5726 = vmax.xlane.f32.xlu0 %v5690
          %v5727 = vpop.xlane.xlu0 %5726
          %5728 = vmax.xlane.f32.xlu0 %v5691
          %v5729 = vpop.xlane.xlu0 %5728
          %5730 = vmax.xlane.f32.xlu0 %v5692
          %v5731 = vpop.xlane.xlu0 %5730
          %5732 = vmax.xlane.f32.xlu0 %v5693
          %v5733 = vpop.xlane.xlu0 %5732
          %5734 = vmax.xlane.f32.xlu0 %v5694
          %v5735 = vpop.xlane.xlu0 %5734
          %5736 = vmax.xlane.f32.xlu0 %v5695
          %v5737 = vpop.xlane.xlu0 %5736
          %5738 = vmax.xlane.f32.xlu0 %v5696
          %v5739 = vpop.xlane.xlu0 %5738
          %5740 = vmax.xlane.f32.xlu0 %v5697
          %v5741 = vpop.xlane.xlu0 %5740
          %5742 = vmax.xlane.f32.xlu0 %v5698
          %v5743 = vpop.xlane.xlu0 %5742
          %5744 = vmax.xlane.f32.xlu0 %v5699
          %v5745 = vpop.xlane.xlu0 %5744
          %5746 = vmax.xlane.f32.xlu0 %v5700
          %v5747 = vpop.xlane.xlu0 %5746
          %5748 = vmax.xlane.f32.xlu0 %v5701
          %v5749 = vpop.xlane.xlu0 %5748
          %5750 = vmax.xlane.f32.xlu0 %v5702
          %v5751 = vpop.xlane.xlu0 %5750
          %v5752 = vmax.f32 %v5704, %v5721
          %v5753 = vmax.f32 %v5705, %v5723
          %v5754 = vmax.f32 %v5706, %v5725
          %v5755 = vmax.f32 %v5707, %v5727
          %v5756 = vmax.f32 %v5708, %v5729
          %v5757 = vmax.f32 %v5709, %v5731
          %v5758 = vmax.f32 %v5710, %v5733
          %v5759 = vmax.f32 %v5711, %v5735
          %v5760 = vmax.f32 %v5712, %v5737
          %v5761 = vmax.f32 %v5713, %v5739
          %v5762 = vmax.f32 %v5714, %v5741
          %v5763 = vmax.f32 %v5715, %v5743
          %v5764 = vmax.f32 %v5716, %v5745
          %v5765 = vmax.f32 %v5717, %v5747
          %v5766 = vmax.f32 %v5718, %v5749
          %v5767 = vmax.f32 %v5719, %v5751
          %v5768 = vsub.f32 %v5704, %v5752
          %v5769 = vsub.f32 %v5705, %v5753
          %v5770 = vsub.f32 %v5706, %v5754
          %v5771 = vsub.f32 %v5707, %v5755
          %v5772 = vsub.f32 %v5708, %v5756
          %v5773 = vsub.f32 %v5709, %v5757
          %v5774 = vsub.f32 %v5710, %v5758
          %v5775 = vsub.f32 %v5711, %v5759
          %v5776 = vsub.f32 %v5712, %v5760
          %v5777 = vsub.f32 %v5713, %v5761
          %v5778 = vsub.f32 %v5714, %v5762
          %v5779 = vsub.f32 %v5715, %v5763
          %v5780 = vsub.f32 %v5716, %v5764
          %v5781 = vsub.f32 %v5717, %v5765
          %v5782 = vsub.f32 %v5718, %v5766
          %v5783 = vsub.f32 %v5719, %v5767
          %v5784 = vmul.f32 %v5768, 1.442695
          %v5785 = vpow.pop %v5784
          %v5786 = vmul.f32 %v5769, 1.442695
          %v5787 = vpow.pop %v5786
          %v5788 = vmul.f32 %v5770, 1.442695
          %v5789 = vpow.pop %v5788
          %v5790 = vmul.f32 %v5771, 1.442695
          %v5791 = vpow.pop %v5790
          %v5792 = vmul.f32 %v5772, 1.442695
          %v5793 = vpow.pop %v5792
          %v5794 = vmul.f32 %v5773, 1.442695
          %v5795 = vpow.pop %v5794
          %v5796 = vmul.f32 %v5774, 1.442695
          %v5797 = vpow.pop %v5796
          %v5798 = vmul.f32 %v5775, 1.442695
          %v5799 = vpow.pop %v5798
          %v5800 = vmul.f32 %v5776, 1.442695
          %v5801 = vpow.pop %v5800
          %v5802 = vmul.f32 %v5777, 1.442695
          %v5803 = vpow.pop %v5802
          %v5804 = vmul.f32 %v5778, 1.442695
          %v5805 = vpow.pop %v5804
          %v5806 = vmul.f32 %v5779, 1.442695
          %v5807 = vpow.pop %v5806
          %v5808 = vmul.f32 %v5780, 1.442695
          %v5809 = vpow.pop %v5808
          %v5810 = vmul.f32 %v5781, 1.442695
          %v5811 = vpow.pop %v5810
          %v5812 = vmul.f32 %v5782, 1.442695
          %v5813 = vpow.pop %v5812
          %v5814 = vmul.f32 %v5783, 1.442695
          %v5815 = vpow.pop %v5814
          %5817 = vset.pattern.permute.xlu0 0
          %5818 = vperm.xlu0 %5817, %v5752
          %v5819 = vpop.permute.xlu0 %5818
          %5822 = vset.pattern.permute.xlu0 0
          %5823 = vperm.xlu0 %5822, %v5753
          %v5824 = vpop.permute.xlu0 %5823
          %5827 = vset.pattern.permute.xlu0 0
          %5828 = vperm.xlu0 %5827, %v5754
          %v5829 = vpop.permute.xlu0 %5828
          %5832 = vset.pattern.permute.xlu0 0
          %5833 = vperm.xlu0 %5832, %v5755
          %v5834 = vpop.permute.xlu0 %5833
          %5837 = vset.pattern.permute.xlu0 0
          %5838 = vperm.xlu0 %5837, %v5756
          %v5839 = vpop.permute.xlu0 %5838
          %5842 = vset.pattern.permute.xlu0 0
          %5843 = vperm.xlu0 %5842, %v5757
          %v5844 = vpop.permute.xlu0 %5843
          %5847 = vset.pattern.permute.xlu0 0
          %5848 = vperm.xlu0 %5847, %v5758
          %v5849 = vpop.permute.xlu0 %5848
          %5852 = vset.pattern.permute.xlu0 0
          %5853 = vperm.xlu0 %5852, %v5759
          %v5854 = vpop.permute.xlu0 %5853
          %5857 = vset.pattern.permute.xlu0 0
          %5858 = vperm.xlu0 %5857, %v5760
          %v5859 = vpop.permute.xlu0 %5858
          %5862 = vset.pattern.permute.xlu0 0
          %5863 = vperm.xlu0 %5862, %v5761
          %v5864 = vpop.permute.xlu0 %5863
          %5867 = vset.pattern.permute.xlu0 0
          %5868 = vperm.xlu0 %5867, %v5762
          %v5869 = vpop.permute.xlu0 %5868
          %5872 = vset.pattern.permute.xlu0 0
          %5873 = vperm.xlu0 %5872, %v5763
          %v5874 = vpop.permute.xlu0 %5873
          %5877 = vset.pattern.permute.xlu0 0
          %5878 = vperm.xlu0 %5877, %v5764
          %v5879 = vpop.permute.xlu0 %5878
          %5882 = vset.pattern.permute.xlu0 0
          %5883 = vperm.xlu0 %5882, %v5765
          %v5884 = vpop.permute.xlu0 %5883
          %5887 = vset.pattern.permute.xlu0 0
          %5888 = vperm.xlu0 %5887, %v5766
          %v5889 = vpop.permute.xlu0 %5888
          %5892 = vset.pattern.permute.xlu0 0
          %5893 = vperm.xlu0 %5892, %v5767
          %v5894 = vpop.permute.xlu0 %5893
          %v5896 = vsub.f32 %v5687, %v5819
          %v5897 = vsub.f32 %v5688, %v5824
          %v5898 = vsub.f32 %v5689, %v5829
          %v5899 = vsub.f32 %v5690, %v5834
          %v5900 = vsub.f32 %v5691, %v5839
          %v5901 = vsub.f32 %v5692, %v5844
          %v5902 = vsub.f32 %v5693, %v5849
          %v5903 = vsub.f32 %v5694, %v5854
          %v5904 = vsub.f32 %v5695, %v5859
          %v5905 = vsub.f32 %v5696, %v5864
          %v5906 = vsub.f32 %v5697, %v5869
          %v5907 = vsub.f32 %v5698, %v5874
          %v5908 = vsub.f32 %v5699, %v5879
          %v5909 = vsub.f32 %v5700, %v5884
          %v5910 = vsub.f32 %v5701, %v5889
          %v5911 = vsub.f32 %v5702, %v5894
          %v5912 = vmul.f32 %v5896, 1.442695
          %v5913 = vpow.pop %v5912
          %v5914 = vmul.f32 %v5897, 1.442695
          %v5915 = vpow.pop %v5914
          %v5916 = vmul.f32 %v5898, 1.442695
          %v5917 = vpow.pop %v5916
          %v5918 = vmul.f32 %v5899, 1.442695
          %v5919 = vpow.pop %v5918
          %v5920 = vmul.f32 %v5900, 1.442695
          %v5921 = vpow.pop %v5920
          %v5922 = vmul.f32 %v5901, 1.442695
          %v5923 = vpow.pop %v5922
          %v5924 = vmul.f32 %v5902, 1.442695
          %v5925 = vpow.pop %v5924
          %v5926 = vmul.f32 %v5903, 1.442695
          %v5927 = vpow.pop %v5926
          %v5928 = vmul.f32 %v5904, 1.442695
          %v5929 = vpow.pop %v5928
          %v5930 = vmul.f32 %v5905, 1.442695
          %v5931 = vpow.pop %v5930
          %v5932 = vmul.f32 %v5906, 1.442695
          %v5933 = vpow.pop %v5932
          %v5934 = vmul.f32 %v5907, 1.442695
          %v5935 = vpow.pop %v5934
          %v5936 = vmul.f32 %v5908, 1.442695
          %v5937 = vpow.pop %v5936
          %v5938 = vmul.f32 %v5909, 1.442695
          %v5939 = vpow.pop %v5938
          %v5940 = vmul.f32 %v5910, 1.442695
          %v5941 = vpow.pop %v5940
          %v5942 = vmul.f32 %v5911, 1.442695
          %v5943 = vpow.pop %v5942
          %s5944 = scalar_lea.vmem [#allocation4], 128
          %v5945 = vld [vmem:[%s5944] sm:$0xff]
          %v5946 = vld [vmem:[%s5944 + $0x8] sm:$0xff]
          %v5947 = vld [vmem:[%s5944 + $0x10] sm:$0xff]
          %v5948 = vld [vmem:[%s5944 + $0x18] sm:$0xff]
          %v5949 = vld [vmem:[%s5944 + $0x20] sm:$0xff]
          %v5950 = vld [vmem:[%s5944 + $0x28] sm:$0xff]
          %v5951 = vld [vmem:[%s5944 + $0x30] sm:$0xff]
          %v5952 = vld [vmem:[%s5944 + $0x38] sm:$0xff]
          %v5953 = vld [vmem:[%s5944 + $0x40] sm:$0xff]
          %v5954 = vld [vmem:[%s5944 + $0x48] sm:$0xff]
          %v5955 = vld [vmem:[%s5944 + $0x50] sm:$0xff]
          %v5956 = vld [vmem:[%s5944 + $0x58] sm:$0xff]
          %v5957 = vld [vmem:[%s5944 + $0x60] sm:$0xff]
          %v5958 = vld [vmem:[%s5944 + $0x68] sm:$0xff]
          %v5959 = vld [vmem:[%s5944 + $0x70] sm:$0xff]
          %v5960 = vld [vmem:[%s5944 + $0x78] sm:$0xff]
          %v5961 = vmul.f32 %v5785, %v5945
          %v5962 = vmul.f32 %v5787, %v5946
          %v5963 = vmul.f32 %v5789, %v5947
          %v5964 = vmul.f32 %v5791, %v5948
          %v5965 = vmul.f32 %v5793, %v5949
          %v5966 = vmul.f32 %v5795, %v5950
          %v5967 = vmul.f32 %v5797, %v5951
          %v5968 = vmul.f32 %v5799, %v5952
          %v5969 = vmul.f32 %v5801, %v5953
          %v5970 = vmul.f32 %v5803, %v5954
          %v5971 = vmul.f32 %v5805, %v5955
          %v5972 = vmul.f32 %v5807, %v5956
          %v5973 = vmul.f32 %v5809, %v5957
          %v5974 = vmul.f32 %v5811, %v5958
          %v5975 = vmul.f32 %v5813, %v5959
          %v5976 = vmul.f32 %v5815, %v5960
          %5977 = vadd.xlane.f32.xlu0 %v5913
          %v5978 = vpop.xlane.xlu0 %5977
          %5979 = vadd.xlane.f32.xlu0 %v5915
          %v5980 = vpop.xlane.xlu0 %5979
          %5981 = vadd.xlane.f32.xlu0 %v5917
          %v5982 = vpop.xlane.xlu0 %5981
          %5983 = vadd.xlane.f32.xlu0 %v5919
          %v5984 = vpop.xlane.xlu0 %5983
          %5985 = vadd.xlane.f32.xlu0 %v5921
          %v5986 = vpop.xlane.xlu0 %5985
          %5987 = vadd.xlane.f32.xlu0 %v5923
          %v5988 = vpop.xlane.xlu0 %5987
          %5989 = vadd.xlane.f32.xlu0 %v5925
          %v5990 = vpop.xlane.xlu0 %5989
          %5991 = vadd.xlane.f32.xlu0 %v5927
          %v5992 = vpop.xlane.xlu0 %5991
          %5993 = vadd.xlane.f32.xlu0 %v5929
          %v5994 = vpop.xlane.xlu0 %5993
          %5995 = vadd.xlane.f32.xlu0 %v5931
          %v5996 = vpop.xlane.xlu0 %5995
          %5997 = vadd.xlane.f32.xlu0 %v5933
          %v5998 = vpop.xlane.xlu0 %5997
          %5999 = vadd.xlane.f32.xlu0 %v5935
          %v6000 = vpop.xlane.xlu0 %5999
          %6001 = vadd.xlane.f32.xlu0 %v5937
          %v6002 = vpop.xlane.xlu0 %6001
          %6003 = vadd.xlane.f32.xlu0 %v5939
          %v6004 = vpop.xlane.xlu0 %6003
          %6005 = vadd.xlane.f32.xlu0 %v5941
          %v6006 = vpop.xlane.xlu0 %6005
          %6007 = vadd.xlane.f32.xlu0 %v5943
          %v6008 = vpop.xlane.xlu0 %6007
          %v6009 = vadd.f32 %v5961, %v5978
          %v6010 = vadd.f32 %v5962, %v5980
          %v6011 = vadd.f32 %v5963, %v5982
          %v6012 = vadd.f32 %v5964, %v5984
          %v6013 = vadd.f32 %v5965, %v5986
          %v6014 = vadd.f32 %v5966, %v5988
          %v6015 = vadd.f32 %v5967, %v5990
          %v6016 = vadd.f32 %v5968, %v5992
          %v6017 = vadd.f32 %v5969, %v5994
          %v6018 = vadd.f32 %v5970, %v5996
          %v6019 = vadd.f32 %v5971, %v5998
          %v6020 = vadd.f32 %v5972, %v6000
          %v6021 = vadd.f32 %v5973, %v6002
          %v6022 = vadd.f32 %v5974, %v6004
          %v6023 = vadd.f32 %v5975, %v6006
          %v6024 = vadd.f32 %v5976, %v6008
          %6025 = vst.msk [vmem:[%s5944] sm:$0xff] %vm5236, %v6009
          %6026 = vst.msk [vmem:[%s5944 + $0x8] sm:$0xff] %vm5236, %v6010
          %6027 = vst.msk [vmem:[%s5944 + $0x10] sm:$0xff] %vm5236, %v6011
          %6028 = vst.msk [vmem:[%s5944 + $0x18] sm:$0xff] %vm5236, %v6012
          %6029 = vst.msk [vmem:[%s5944 + $0x20] sm:$0xff] %vm5236, %v6013
          %6030 = vst.msk [vmem:[%s5944 + $0x28] sm:$0xff] %vm5236, %v6014
          %6031 = vst.msk [vmem:[%s5944 + $0x30] sm:$0xff] %vm5236, %v6015
          %6032 = vst.msk [vmem:[%s5944 + $0x38] sm:$0xff] %vm5236, %v6016
          %6033 = vst.msk [vmem:[%s5944 + $0x40] sm:$0xff] %vm5236, %v6017
          %6034 = vst.msk [vmem:[%s5944 + $0x48] sm:$0xff] %vm5236, %v6018
          %6035 = vst.msk [vmem:[%s5944 + $0x50] sm:$0xff] %vm5236, %v6019
          %6036 = vst.msk [vmem:[%s5944 + $0x58] sm:$0xff] %vm5236, %v6020
          %6037 = vst.msk [vmem:[%s5944 + $0x60] sm:$0xff] %vm5236, %v6021
          %6038 = vst.msk [vmem:[%s5944 + $0x68] sm:$0xff] %vm5236, %v6022
          %6039 = vst.msk [vmem:[%s5944 + $0x70] sm:$0xff] %vm5236, %v6023
          %6040 = vst.msk [vmem:[%s5944 + $0x78] sm:$0xff] %vm5236, %v6024
          %v6041 = vpack.c.bf16 %v5915, %v5913
          %v6042 = vpack.c.bf16 %v5919, %v5917
          %v6043 = vpack.c.bf16 %v5923, %v5921
          %v6044 = vpack.c.bf16 %v5927, %v5925
          %v6045 = vpack.c.bf16 %v5931, %v5929
          %v6046 = vpack.c.bf16 %v5935, %v5933
          %v6047 = vpack.c.bf16 %v5939, %v5937
          %v6048 = vpack.c.bf16 %v5943, %v5941
          %6049 = vrot.lane.b32.xlu0 %v5277, 96
          %v6050 = vpop.permute.xlu0 %6049
          %6051 = vrot.lane.b32.xlu0 %v5278, 96
          %v6052 = vpop.permute.xlu0 %6051
          %6053 = vrot.lane.b32.xlu0 %v5279, 96
          %v6054 = vpop.permute.xlu0 %6053
          %6055 = vrot.lane.b32.xlu0 %v5280, 96
          %v6056 = vpop.permute.xlu0 %6055
          %6057 = vrot.lane.b32.xlu0 %v5281, 96
          %v6058 = vpop.permute.xlu0 %6057
          %6059 = vrot.lane.b32.xlu0 %v5282, 96
          %v6060 = vpop.permute.xlu0 %6059
          %6061 = vrot.lane.b32.xlu0 %v5283, 96
          %v6062 = vpop.permute.xlu0 %6061
          %6063 = vrot.lane.b32.xlu0 %v5284, 96
          %v6064 = vpop.permute.xlu0 %6063
          %6073 = vmatpush.bf16.msra.mxu0 %v6064
          %6074 = vmatpush.bf16.msra.mxu0 %v6062
          %6075 = vmatpush.bf16.msra.mxu0 %v6060
          %6076 = vmatpush.bf16.msra.mxu0 %v6058
          %6077 = vmatpush.bf16.msra.mxu0 %v6056
          %6078 = vmatpush.bf16.msra.mxu0 %v6054
          %6079 = vmatpush.bf16.msra.mxu0 %v6052
          %6080 = vmatpush.bf16.msra.mxu0 %v6050
          %6081 = vmatmul.bf16.gmra.mxu0 %v6041
          %v6082 = vpop.f32.mrf.mxu0
          %v6083 = vadd.f32 0.0, %v6082
          %v6084 = vpop.f32.mrf.mxu0
          %v6085 = vadd.f32 0.0, %v6084
          %6086 = vmatmul.bf16.gmra.mxu0 %v6042
          %v6087 = vpop.f32.mrf.mxu0
          %v6088 = vadd.f32 0.0, %v6087
          %v6089 = vpop.f32.mrf.mxu0
          %v6090 = vadd.f32 0.0, %v6089
          %6091 = vmatmul.bf16.gmra.mxu0 %v6043
          %v6092 = vpop.f32.mrf.mxu0
          %v6093 = vadd.f32 0.0, %v6092
          %v6094 = vpop.f32.mrf.mxu0
          %v6095 = vadd.f32 0.0, %v6094
          %6096 = vmatmul.bf16.gmra.mxu0 %v6044
          %v6097 = vpop.f32.mrf.mxu0
          %v6098 = vadd.f32 0.0, %v6097
          %v6099 = vpop.f32.mrf.mxu0
          %v6100 = vadd.f32 0.0, %v6099
          %6101 = vmatmul.bf16.gmra.mxu0 %v6045
          %v6102 = vpop.f32.mrf.mxu0
          %v6103 = vadd.f32 0.0, %v6102
          %v6104 = vpop.f32.mrf.mxu0
          %v6105 = vadd.f32 0.0, %v6104
          %6106 = vmatmul.bf16.gmra.mxu0 %v6046
          %v6107 = vpop.f32.mrf.mxu0
          %v6108 = vadd.f32 0.0, %v6107
          %v6109 = vpop.f32.mrf.mxu0
          %v6110 = vadd.f32 0.0, %v6109
          %6111 = vmatmul.bf16.gmra.mxu0 %v6047
          %v6112 = vpop.f32.mrf.mxu0
          %v6113 = vadd.f32 0.0, %v6112
          %v6114 = vpop.f32.mrf.mxu0
          %v6115 = vadd.f32 0.0, %v6114
          %6116 = vmatmul.bf16.gmra.mxu0 %v6048
          %v6117 = vpop.f32.mrf.mxu0
          %v6118 = vadd.f32 0.0, %v6117
          %v6119 = vpop.f32.mrf.mxu0
          %v6120 = vadd.f32 0.0, %v6119
          %6121 = vdwg.mxu0
          %v6122 = vld [vmem:[#allocation5] sm:$0xff]
          %v6123 = vld [vmem:[#allocation5 + $0x8] sm:$0xff]
          %v6124 = vld [vmem:[#allocation5 + $0x10] sm:$0xff]
          %v6125 = vld [vmem:[#allocation5 + $0x18] sm:$0xff]
          %v6126 = vld [vmem:[#allocation5 + $0x20] sm:$0xff]
          %v6127 = vld [vmem:[#allocation5 + $0x28] sm:$0xff]
          %v6128 = vld [vmem:[#allocation5 + $0x30] sm:$0xff]
          %v6129 = vld [vmem:[#allocation5 + $0x38] sm:$0xff]
          %v6130 = vld [vmem:[#allocation5 + $0x40] sm:$0xff]
          %v6131 = vld [vmem:[#allocation5 + $0x48] sm:$0xff]
          %v6132 = vld [vmem:[#allocation5 + $0x50] sm:$0xff]
          %v6133 = vld [vmem:[#allocation5 + $0x58] sm:$0xff]
          %v6134 = vld [vmem:[#allocation5 + $0x60] sm:$0xff]
          %v6135 = vld [vmem:[#allocation5 + $0x68] sm:$0xff]
          %v6136 = vld [vmem:[#allocation5 + $0x70] sm:$0xff]
          %v6137 = vld [vmem:[#allocation5 + $0x78] sm:$0xff]
          %6139 = vset.pattern.permute.xlu0 0
          %6140 = vperm.xlu0 %6139, %v5785
          %v6141 = vpop.permute.xlu0 %6140
          %6144 = vset.pattern.permute.xlu0 0
          %6145 = vperm.xlu0 %6144, %v5787
          %v6146 = vpop.permute.xlu0 %6145
          %6149 = vset.pattern.permute.xlu0 0
          %6150 = vperm.xlu0 %6149, %v5789
          %v6151 = vpop.permute.xlu0 %6150
          %6154 = vset.pattern.permute.xlu0 0
          %6155 = vperm.xlu0 %6154, %v5791
          %v6156 = vpop.permute.xlu0 %6155
          %6159 = vset.pattern.permute.xlu0 0
          %6160 = vperm.xlu0 %6159, %v5793
          %v6161 = vpop.permute.xlu0 %6160
          %6164 = vset.pattern.permute.xlu0 0
          %6165 = vperm.xlu0 %6164, %v5795
          %v6166 = vpop.permute.xlu0 %6165
          %6169 = vset.pattern.permute.xlu0 0
          %6170 = vperm.xlu0 %6169, %v5797
          %v6171 = vpop.permute.xlu0 %6170
          %6174 = vset.pattern.permute.xlu0 0
          %6175 = vperm.xlu0 %6174, %v5799
          %v6176 = vpop.permute.xlu0 %6175
          %6179 = vset.pattern.permute.xlu0 0
          %6180 = vperm.xlu0 %6179, %v5801
          %v6181 = vpop.permute.xlu0 %6180
          %6184 = vset.pattern.permute.xlu0 0
          %6185 = vperm.xlu0 %6184, %v5803
          %v6186 = vpop.permute.xlu0 %6185
          %6189 = vset.pattern.permute.xlu0 0
          %6190 = vperm.xlu0 %6189, %v5805
          %v6191 = vpop.permute.xlu0 %6190
          %6194 = vset.pattern.permute.xlu0 0
          %6195 = vperm.xlu0 %6194, %v5807
          %v6196 = vpop.permute.xlu0 %6195
          %6199 = vset.pattern.permute.xlu0 0
          %6200 = vperm.xlu0 %6199, %v5809
          %v6201 = vpop.permute.xlu0 %6200
          %6204 = vset.pattern.permute.xlu0 0
          %6205 = vperm.xlu0 %6204, %v5811
          %v6206 = vpop.permute.xlu0 %6205
          %6209 = vset.pattern.permute.xlu0 0
          %6210 = vperm.xlu0 %6209, %v5813
          %v6211 = vpop.permute.xlu0 %6210
          %6214 = vset.pattern.permute.xlu0 0
          %6215 = vperm.xlu0 %6214, %v5815
          %v6216 = vpop.permute.xlu0 %6215
          %v6218 = vmul.f32 %v6141, %v6122
          %v6219 = vmul.f32 %v6146, %v6123
          %v6220 = vmul.f32 %v6151, %v6124
          %v6221 = vmul.f32 %v6156, %v6125
          %v6222 = vmul.f32 %v6161, %v6126
          %v6223 = vmul.f32 %v6166, %v6127
          %v6224 = vmul.f32 %v6171, %v6128
          %v6225 = vmul.f32 %v6176, %v6129
          %v6226 = vmul.f32 %v6181, %v6130
          %v6227 = vmul.f32 %v6186, %v6131
          %v6228 = vmul.f32 %v6191, %v6132
          %v6229 = vmul.f32 %v6196, %v6133
          %v6230 = vmul.f32 %v6201, %v6134
          %v6231 = vmul.f32 %v6206, %v6135
          %v6232 = vmul.f32 %v6211, %v6136
          %v6233 = vmul.f32 %v6216, %v6137
          %6250 = vrot.lane.b32.xlu0 %v6083, 32
          %v6251 = vpop.permute.xlu0 %6250
          %6252 = vrot.lane.b32.xlu0 %v6085, 32
          %v6253 = vpop.permute.xlu0 %6252
          %6254 = vrot.lane.b32.xlu0 %v6088, 32
          %v6255 = vpop.permute.xlu0 %6254
          %6256 = vrot.lane.b32.xlu0 %v6090, 32
          %v6257 = vpop.permute.xlu0 %6256
          %6258 = vrot.lane.b32.xlu0 %v6093, 32
          %v6259 = vpop.permute.xlu0 %6258
          %6260 = vrot.lane.b32.xlu0 %v6095, 32
          %v6261 = vpop.permute.xlu0 %6260
          %6262 = vrot.lane.b32.xlu0 %v6098, 32
          %v6263 = vpop.permute.xlu0 %6262
          %6264 = vrot.lane.b32.xlu0 %v6100, 32
          %v6265 = vpop.permute.xlu0 %6264
          %6266 = vrot.lane.b32.xlu0 %v6103, 32
          %v6267 = vpop.permute.xlu0 %6266
          %6268 = vrot.lane.b32.xlu0 %v6105, 32
          %v6269 = vpop.permute.xlu0 %6268
          %6270 = vrot.lane.b32.xlu0 %v6108, 32
          %v6271 = vpop.permute.xlu0 %6270
          %6272 = vrot.lane.b32.xlu0 %v6110, 32
          %v6273 = vpop.permute.xlu0 %6272
          %6274 = vrot.lane.b32.xlu0 %v6113, 32
          %v6275 = vpop.permute.xlu0 %6274
          %6276 = vrot.lane.b32.xlu0 %v6115, 32
          %v6277 = vpop.permute.xlu0 %6276
          %6278 = vrot.lane.b32.xlu0 %v6118, 32
          %v6279 = vpop.permute.xlu0 %6278
          %6280 = vrot.lane.b32.xlu0 %v6120, 32
          %v6281 = vpop.permute.xlu0 %6280
          %v6298 = vadd.f32 %v6218, %v6251
          %v6299 = vadd.f32 %v6219, %v6253
          %v6300 = vadd.f32 %v6220, %v6255
          %v6301 = vadd.f32 %v6221, %v6257
          %v6302 = vadd.f32 %v6222, %v6259
          %v6303 = vadd.f32 %v6223, %v6261
          %v6304 = vadd.f32 %v6224, %v6263
          %v6305 = vadd.f32 %v6225, %v6265
          %v6306 = vadd.f32 %v6226, %v6267
          %v6307 = vadd.f32 %v6227, %v6269
          %v6308 = vadd.f32 %v6228, %v6271
          %v6309 = vadd.f32 %v6229, %v6273
          %v6310 = vadd.f32 %v6230, %v6275
          %v6311 = vadd.f32 %v6231, %v6277
          %v6312 = vadd.f32 %v6232, %v6279
          %v6313 = vadd.f32 %v6233, %v6281
          %vm6314 = vcmask 523520
          %6315 = vst.msk [vmem:[#allocation5] sm:$0xff] %vm6314, %v6298
          %6316 = vst.msk [vmem:[#allocation5 + $0x8] sm:$0xff] %vm6314, %v6299
          %6317 = vst.msk [vmem:[#allocation5 + $0x10] sm:$0xff] %vm6314, %v6300
          %6318 = vst.msk [vmem:[#allocation5 + $0x18] sm:$0xff] %vm6314, %v6301
          %6319 = vst.msk [vmem:[#allocation5 + $0x20] sm:$0xff] %vm6314, %v6302
          %6320 = vst.msk [vmem:[#allocation5 + $0x28] sm:$0xff] %vm6314, %v6303
          %6321 = vst.msk [vmem:[#allocation5 + $0x30] sm:$0xff] %vm6314, %v6304
          %6322 = vst.msk [vmem:[#allocation5 + $0x38] sm:$0xff] %vm6314, %v6305
          %6323 = vst.msk [vmem:[#allocation5 + $0x40] sm:$0xff] %vm6314, %v6306
          %6324 = vst.msk [vmem:[#allocation5 + $0x48] sm:$0xff] %vm6314, %v6307
          %6325 = vst.msk [vmem:[#allocation5 + $0x50] sm:$0xff] %vm6314, %v6308
          %6326 = vst.msk [vmem:[#allocation5 + $0x58] sm:$0xff] %vm6314, %v6309
          %6327 = vst.msk [vmem:[#allocation5 + $0x60] sm:$0xff] %vm6314, %v6310
          %6328 = vst.msk [vmem:[#allocation5 + $0x68] sm:$0xff] %vm6314, %v6311
          %6329 = vst.msk [vmem:[#allocation5 + $0x70] sm:$0xff] %vm6314, %v6312
          %6330 = vst.msk [vmem:[#allocation5 + $0x78] sm:$0xff] %vm6314, %v6313
          %6331 = vst.msk [vmem:[%s5703] sm:$0xff] %vm5236, %v5752
          %6332 = vst.msk [vmem:[%s5703 + $0x8] sm:$0xff] %vm5236, %v5753
          %6333 = vst.msk [vmem:[%s5703 + $0x10] sm:$0xff] %vm5236, %v5754
          %6334 = vst.msk [vmem:[%s5703 + $0x18] sm:$0xff] %vm5236, %v5755
          %6335 = vst.msk [vmem:[%s5703 + $0x20] sm:$0xff] %vm5236, %v5756
          %6336 = vst.msk [vmem:[%s5703 + $0x28] sm:$0xff] %vm5236, %v5757
          %6337 = vst.msk [vmem:[%s5703 + $0x30] sm:$0xff] %vm5236, %v5758
          %6338 = vst.msk [vmem:[%s5703 + $0x38] sm:$0xff] %vm5236, %v5759
          %6339 = vst.msk [vmem:[%s5703 + $0x40] sm:$0xff] %vm5236, %v5760
          %6340 = vst.msk [vmem:[%s5703 + $0x48] sm:$0xff] %vm5236, %v5761
          %6341 = vst.msk [vmem:[%s5703 + $0x50] sm:$0xff] %vm5236, %v5762
          %6342 = vst.msk [vmem:[%s5703 + $0x58] sm:$0xff] %vm5236, %v5763
          %6343 = vst.msk [vmem:[%s5703 + $0x60] sm:$0xff] %vm5236, %v5764
          %6344 = vst.msk [vmem:[%s5703 + $0x68] sm:$0xff] %vm5236, %v5765
          %6345 = vst.msk [vmem:[%s5703 + $0x70] sm:$0xff] %vm5236, %v5766
          %6346 = vst.msk [vmem:[%s5703 + $0x78] sm:$0xff] %vm5236, %v5767
          %v6347 = vld [vmem:[#allocation2] sm:$0xf]
          %v6348 = vld [vmem:[#allocation2 + $0x4] sm:$0xf]
          %v6349 = vld [vmem:[#allocation2 + $0x8] sm:$0xf]
          %v6350 = vld [vmem:[#allocation2 + $0xc] sm:$0xf]
          %v6351 = vld [vmem:[#allocation2 + $0x10] sm:$0xf]
          %v6352 = vld [vmem:[#allocation2 + $0x14] sm:$0xf]
          %v6353 = vld [vmem:[#allocation2 + $0x18] sm:$0xf]
          %v6354 = vld [vmem:[#allocation2 + $0x1c] sm:$0xf]
          %v6355 = vld [vmem:[#allocation2 + $0x20] sm:$0xf]
          %v6356 = vld [vmem:[#allocation2 + $0x24] sm:$0xf]
          %v6357 = vld [vmem:[#allocation2 + $0x28] sm:$0xf]
          %v6358 = vld [vmem:[#allocation2 + $0x2c] sm:$0xf]
          %v6359 = vld [vmem:[#allocation2 + $0x30] sm:$0xf]
          %v6360 = vld [vmem:[#allocation2 + $0x34] sm:$0xf]
          %v6361 = vld [vmem:[#allocation2 + $0x38] sm:$0xf]
          %v6362 = vld [vmem:[#allocation2 + $0x3c] sm:$0xf]
          %v6379 = vunpack.c.l.b16 %v6347
          %v6380 = vunpack.c.l.b16 %v6348
          %v6381 = vunpack.c.l.b16 %v6349
          %v6382 = vunpack.c.l.b16 %v6350
          %v6383 = vunpack.c.l.b16 %v6351
          %v6384 = vunpack.c.l.b16 %v6352
          %v6385 = vunpack.c.l.b16 %v6353
          %v6386 = vunpack.c.l.b16 %v6354
          %v6387 = vunpack.c.l.b16 %v6355
          %v6388 = vunpack.c.l.b16 %v6356
          %v6389 = vunpack.c.l.b16 %v6357
          %v6390 = vunpack.c.l.b16 %v6358
          %v6391 = vunpack.c.l.b16 %v6359
          %v6392 = vunpack.c.l.b16 %v6360
          %v6393 = vunpack.c.l.b16 %v6361
          %v6394 = vunpack.c.l.b16 %v6362
          %v6395 = vpack.c.b16 %v6380, %v6379
          %v6396 = vpack.c.b16 %v6382, %v6381
          %v6397 = vpack.c.b16 %v6384, %v6383
          %v6398 = vpack.c.b16 %v6386, %v6385
          %v6399 = vpack.c.b16 %v6388, %v6387
          %v6400 = vpack.c.b16 %v6390, %v6389
          %v6401 = vpack.c.b16 %v6392, %v6391
          %v6402 = vpack.c.b16 %v6394, %v6393
          %6403 = vrot.lane.b32.xlu0 %v6395, 64
          %v6404 = vpop.permute.xlu0 %6403
          %6405 = vrot.lane.b32.xlu0 %v6396, 64
          %v6406 = vpop.permute.xlu0 %6405
          %6407 = vrot.lane.b32.xlu0 %v6397, 64
          %v6408 = vpop.permute.xlu0 %6407
          %6409 = vrot.lane.b32.xlu0 %v6398, 64
          %v6410 = vpop.permute.xlu0 %6409
          %6411 = vrot.lane.b32.xlu0 %v6399, 64
          %v6412 = vpop.permute.xlu0 %6411
          %6413 = vrot.lane.b32.xlu0 %v6400, 64
          %v6414 = vpop.permute.xlu0 %6413
          %6415 = vrot.lane.b32.xlu0 %v6401, 64
          %v6416 = vpop.permute.xlu0 %6415
          %6417 = vrot.lane.b32.xlu0 %v6402, 64
          %v6418 = vpop.permute.xlu0 %6417
          %6419 = vrot.lane.b32.xlu0 %v4792, 64
          %v6420 = vpop.permute.xlu0 %6419
          %6421 = vrot.lane.b32.xlu0 %v4793, 64
          %v6422 = vpop.permute.xlu0 %6421
          %6423 = vrot.lane.b32.xlu0 %v4794, 64
          %v6424 = vpop.permute.xlu0 %6423
          %6425 = vrot.lane.b32.xlu0 %v4795, 64
          %v6426 = vpop.permute.xlu0 %6425
          %6427 = vrot.lane.b32.xlu0 %v4796, 64
          %v6428 = vpop.permute.xlu0 %6427
          %6429 = vrot.lane.b32.xlu0 %v4797, 64
          %v6430 = vpop.permute.xlu0 %6429
          %6431 = vrot.lane.b32.xlu0 %v4798, 64
          %v6432 = vpop.permute.xlu0 %6431
          %6433 = vrot.lane.b32.xlu0 %v4799, 64
          %v6434 = vpop.permute.xlu0 %6433
          %v6436 = vsel %vm4800, %v6404, 0
          %v6439 = vsel %vm4800, %v6406, 0
          %v6442 = vsel %vm4800, %v6408, 0
          %v6445 = vsel %vm4800, %v6410, 0
          %v6448 = vsel %vm4800, %v6412, 0
          %v6451 = vsel %vm4800, %v6414, 0
          %v6454 = vsel %vm4800, %v6416, 0
          %v6457 = vsel %vm4800, %v6418, 0
          %v6460 = vsel %vm4800, %v6420, 0
          %v6463 = vsel %vm4800, %v6422, 0
          %v6466 = vsel %vm4800, %v6424, 0
          %v6469 = vsel %vm4800, %v6426, 0
          %v6472 = vsel %vm4800, %v6428, 0
          %v6475 = vsel %vm4800, %v6430, 0
          %v6478 = vsel %vm4800, %v6432, 0
          %v6481 = vsel %vm4800, %v6434, 0
          %6483 = vmatpush.bf16.xpose.msra.mxu0 %v6481
          %6484 = vmatpush.bf16.xpose.msra.mxu0 %v6478
          %6485 = vmatpush.bf16.xpose.msra.mxu0 %v6475
          %6486 = vmatpush.bf16.xpose.msra.mxu0 %v6472
          %6487 = vmatpush.bf16.xpose.msra.mxu0 %v6469
          %6488 = vmatpush.bf16.xpose.msra.mxu0 %v6466
          %6489 = vmatpush.bf16.xpose.msra.mxu0 %v6463
          %6490 = vmatpush.bf16.xpose.msra.mxu0 %v6460
          %6491 = vmatmul.bf16.gmra.mxu0 %v6436
          %v6492 = vpop.f32.mrf.mxu0
          %v6493 = vadd.f32 0.0, %v6492
          %v6494 = vpop.f32.mrf.mxu0
          %v6495 = vadd.f32 0.0, %v6494
          %6496 = vmatmul.bf16.gmra.mxu0 %v6439
          %v6497 = vpop.f32.mrf.mxu0
          %v6498 = vadd.f32 0.0, %v6497
          %v6499 = vpop.f32.mrf.mxu0
          %v6500 = vadd.f32 0.0, %v6499
          %6501 = vmatmul.bf16.gmra.mxu0 %v6442
          %v6502 = vpop.f32.mrf.mxu0
          %v6503 = vadd.f32 0.0, %v6502
          %v6504 = vpop.f32.mrf.mxu0
          %v6505 = vadd.f32 0.0, %v6504
          %6506 = vmatmul.bf16.gmra.mxu0 %v6445
          %v6507 = vpop.f32.mrf.mxu0
          %v6508 = vadd.f32 0.0, %v6507
          %v6509 = vpop.f32.mrf.mxu0
          %v6510 = vadd.f32 0.0, %v6509
          %6511 = vmatmul.bf16.gmra.mxu0 %v6448
          %v6512 = vpop.f32.mrf.mxu0
          %v6513 = vadd.f32 0.0, %v6512
          %v6514 = vpop.f32.mrf.mxu0
          %v6515 = vadd.f32 0.0, %v6514
          %6516 = vmatmul.bf16.gmra.mxu0 %v6451
          %v6517 = vpop.f32.mrf.mxu0
          %v6518 = vadd.f32 0.0, %v6517
          %v6519 = vpop.f32.mrf.mxu0
          %v6520 = vadd.f32 0.0, %v6519
          %6521 = vmatmul.bf16.gmra.mxu0 %v6454
          %v6522 = vpop.f32.mrf.mxu0
          %v6523 = vadd.f32 0.0, %v6522
          %v6524 = vpop.f32.mrf.mxu0
          %v6525 = vadd.f32 0.0, %v6524
          %6526 = vmatmul.bf16.gmra.mxu0 %v6457
          %v6527 = vpop.f32.mrf.mxu0
          %v6528 = vadd.f32 0.0, %v6527
          %v6529 = vpop.f32.mrf.mxu0
          %v6530 = vadd.f32 0.0, %v6529
          %6531 = vdwg.mxu0
          %v6532 = vsel %vm4899, %v6493, -1e+30
          %v6533 = vsel %vm4899, %v6495, -1e+30
          %v6534 = vsel %vm4899, %v6498, -1e+30
          %v6535 = vsel %vm4899, %v6500, -1e+30
          %v6536 = vsel %vm4899, %v6503, -1e+30
          %v6537 = vsel %vm4899, %v6505, -1e+30
          %v6538 = vsel %vm4899, %v6508, -1e+30
          %v6539 = vsel %vm4899, %v6510, -1e+30
          %v6540 = vsel %vm4899, %v6513, -1e+30
          %v6541 = vsel %vm4899, %v6515, -1e+30
          %v6542 = vsel %vm4899, %v6518, -1e+30
          %v6543 = vsel %vm4899, %v6520, -1e+30
          %v6544 = vsel %vm4899, %v6523, -1e+30
          %v6545 = vsel %vm4899, %v6525, -1e+30
          %v6546 = vsel %vm4899, %v6528, -1e+30
          %v6547 = vsel %vm4899, %v6530, -1e+30
          %s6548 = scalar_lea.vmem [#allocation3], 256
          %v6549 = vld [vmem:[%s6548] sm:$0xff]
          %v6550 = vld [vmem:[%s6548 + $0x8] sm:$0xff]
          %v6551 = vld [vmem:[%s6548 + $0x10] sm:$0xff]
          %v6552 = vld [vmem:[%s6548 + $0x18] sm:$0xff]
          %v6553 = vld [vmem:[%s6548 + $0x20] sm:$0xff]
          %v6554 = vld [vmem:[%s6548 + $0x28] sm:$0xff]
          %v6555 = vld [vmem:[%s6548 + $0x30] sm:$0xff]
          %v6556 = vld [vmem:[%s6548 + $0x38] sm:$0xff]
          %v6557 = vld [vmem:[%s6548 + $0x40] sm:$0xff]
          %v6558 = vld [vmem:[%s6548 + $0x48] sm:$0xff]
          %v6559 = vld [vmem:[%s6548 + $0x50] sm:$0xff]
          %v6560 = vld [vmem:[%s6548 + $0x58] sm:$0xff]
          %v6561 = vld [vmem:[%s6548 + $0x60] sm:$0xff]
          %v6562 = vld [vmem:[%s6548 + $0x68] sm:$0xff]
          %v6563 = vld [vmem:[%s6548 + $0x70] sm:$0xff]
          %v6564 = vld [vmem:[%s6548 + $0x78] sm:$0xff]
          %6565 = vmax.xlane.f32.xlu0 %v6532
          %v6566 = vpop.xlane.xlu0 %6565
          %6567 = vmax.xlane.f32.xlu0 %v6533
          %v6568 = vpop.xlane.xlu0 %6567
          %6569 = vmax.xlane.f32.xlu0 %v6534
          %v6570 = vpop.xlane.xlu0 %6569
          %6571 = vmax.xlane.f32.xlu0 %v6535
          %v6572 = vpop.xlane.xlu0 %6571
          %6573 = vmax.xlane.f32.xlu0 %v6536
          %v6574 = vpop.xlane.xlu0 %6573
          %6575 = vmax.xlane.f32.xlu0 %v6537
          %v6576 = vpop.xlane.xlu0 %6575
          %6577 = vmax.xlane.f32.xlu0 %v6538
          %v6578 = vpop.xlane.xlu0 %6577
          %6579 = vmax.xlane.f32.xlu0 %v6539
          %v6580 = vpop.xlane.xlu0 %6579
          %6581 = vmax.xlane.f32.xlu0 %v6540
          %v6582 = vpop.xlane.xlu0 %6581
          %6583 = vmax.xlane.f32.xlu0 %v6541
          %v6584 = vpop.xlane.xlu0 %6583
          %6585 = vmax.xlane.f32.xlu0 %v6542
          %v6586 = vpop.xlane.xlu0 %6585
          %6587 = vmax.xlane.f32.xlu0 %v6543
          %v6588 = vpop.xlane.xlu0 %6587
          %6589 = vmax.xlane.f32.xlu0 %v6544
          %v6590 = vpop.xlane.xlu0 %6589
          %6591 = vmax.xlane.f32.xlu0 %v6545
          %v6592 = vpop.xlane.xlu0 %6591
          %6593 = vmax.xlane.f32.xlu0 %v6546
          %v6594 = vpop.xlane.xlu0 %6593
          %6595 = vmax.xlane.f32.xlu0 %v6547
          %v6596 = vpop.xlane.xlu0 %6595
          %v6597 = vmax.f32 %v6549, %v6566
          %v6598 = vmax.f32 %v6550, %v6568
          %v6599 = vmax.f32 %v6551, %v6570
          %v6600 = vmax.f32 %v6552, %v6572
          %v6601 = vmax.f32 %v6553, %v6574
          %v6602 = vmax.f32 %v6554, %v6576
          %v6603 = vmax.f32 %v6555, %v6578
          %v6604 = vmax.f32 %v6556, %v6580
          %v6605 = vmax.f32 %v6557, %v6582
          %v6606 = vmax.f32 %v6558, %v6584
          %v6607 = vmax.f32 %v6559, %v6586
          %v6608 = vmax.f32 %v6560, %v6588
          %v6609 = vmax.f32 %v6561, %v6590
          %v6610 = vmax.f32 %v6562, %v6592
          %v6611 = vmax.f32 %v6563, %v6594
          %v6612 = vmax.f32 %v6564, %v6596
          %v6613 = vsub.f32 %v6549, %v6597
          %v6614 = vsub.f32 %v6550, %v6598
          %v6615 = vsub.f32 %v6551, %v6599
          %v6616 = vsub.f32 %v6552, %v6600
          %v6617 = vsub.f32 %v6553, %v6601
          %v6618 = vsub.f32 %v6554, %v6602
          %v6619 = vsub.f32 %v6555, %v6603
          %v6620 = vsub.f32 %v6556, %v6604
          %v6621 = vsub.f32 %v6557, %v6605
          %v6622 = vsub.f32 %v6558, %v6606
          %v6623 = vsub.f32 %v6559, %v6607
          %v6624 = vsub.f32 %v6560, %v6608
          %v6625 = vsub.f32 %v6561, %v6609
          %v6626 = vsub.f32 %v6562, %v6610
          %v6627 = vsub.f32 %v6563, %v6611
          %v6628 = vsub.f32 %v6564, %v6612
          %v6629 = vmul.f32 %v6613, 1.442695
          %v6630 = vpow.pop %v6629
          %v6631 = vmul.f32 %v6614, 1.442695
          %v6632 = vpow.pop %v6631
          %v6633 = vmul.f32 %v6615, 1.442695
          %v6634 = vpow.pop %v6633
          %v6635 = vmul.f32 %v6616, 1.442695
          %v6636 = vpow.pop %v6635
          %v6637 = vmul.f32 %v6617, 1.442695
          %v6638 = vpow.pop %v6637
          %v6639 = vmul.f32 %v6618, 1.442695
          %v6640 = vpow.pop %v6639
          %v6641 = vmul.f32 %v6619, 1.442695
          %v6642 = vpow.pop %v6641
          %v6643 = vmul.f32 %v6620, 1.442695
          %v6644 = vpow.pop %v6643
          %v6645 = vmul.f32 %v6621, 1.442695
          %v6646 = vpow.pop %v6645
          %v6647 = vmul.f32 %v6622, 1.442695
          %v6648 = vpow.pop %v6647
          %v6649 = vmul.f32 %v6623, 1.442695
          %v6650 = vpow.pop %v6649
          %v6651 = vmul.f32 %v6624, 1.442695
          %v6652 = vpow.pop %v6651
          %v6653 = vmul.f32 %v6625, 1.442695
          %v6654 = vpow.pop %v6653
          %v6655 = vmul.f32 %v6626, 1.442695
          %v6656 = vpow.pop %v6655
          %v6657 = vmul.f32 %v6627, 1.442695
          %v6658 = vpow.pop %v6657
          %v6659 = vmul.f32 %v6628, 1.442695
          %v6660 = vpow.pop %v6659
          %6662 = vset.pattern.permute.xlu0 0
          %6663 = vperm.xlu0 %6662, %v6597
          %v6664 = vpop.permute.xlu0 %6663
          %6667 = vset.pattern.permute.xlu0 0
          %6668 = vperm.xlu0 %6667, %v6598
          %v6669 = vpop.permute.xlu0 %6668
          %6672 = vset.pattern.permute.xlu0 0
          %6673 = vperm.xlu0 %6672, %v6599
          %v6674 = vpop.permute.xlu0 %6673
          %6677 = vset.pattern.permute.xlu0 0
          %6678 = vperm.xlu0 %6677, %v6600
          %v6679 = vpop.permute.xlu0 %6678
          %6682 = vset.pattern.permute.xlu0 0
          %6683 = vperm.xlu0 %6682, %v6601
          %v6684 = vpop.permute.xlu0 %6683
          %6687 = vset.pattern.permute.xlu0 0
          %6688 = vperm.xlu0 %6687, %v6602
          %v6689 = vpop.permute.xlu0 %6688
          %6692 = vset.pattern.permute.xlu0 0
          %6693 = vperm.xlu0 %6692, %v6603
          %v6694 = vpop.permute.xlu0 %6693
          %6697 = vset.pattern.permute.xlu0 0
          %6698 = vperm.xlu0 %6697, %v6604
          %v6699 = vpop.permute.xlu0 %6698
          %6702 = vset.pattern.permute.xlu0 0
          %6703 = vperm.xlu0 %6702, %v6605
          %v6704 = vpop.permute.xlu0 %6703
          %6707 = vset.pattern.permute.xlu0 0
          %6708 = vperm.xlu0 %6707, %v6606
          %v6709 = vpop.permute.xlu0 %6708
          %6712 = vset.pattern.permute.xlu0 0
          %6713 = vperm.xlu0 %6712, %v6607
          %v6714 = vpop.permute.xlu0 %6713
          %6717 = vset.pattern.permute.xlu0 0
          %6718 = vperm.xlu0 %6717, %v6608
          %v6719 = vpop.permute.xlu0 %6718
          %6722 = vset.pattern.permute.xlu0 0
          %6723 = vperm.xlu0 %6722, %v6609
          %v6724 = vpop.permute.xlu0 %6723
          %6727 = vset.pattern.permute.xlu0 0
          %6728 = vperm.xlu0 %6727, %v6610
          %v6729 = vpop.permute.xlu0 %6728
          %6732 = vset.pattern.permute.xlu0 0
          %6733 = vperm.xlu0 %6732, %v6611
          %v6734 = vpop.permute.xlu0 %6733
          %6737 = vset.pattern.permute.xlu0 0
          %6738 = vperm.xlu0 %6737, %v6612
          %v6739 = vpop.permute.xlu0 %6738
          %v6741 = vsub.f32 %v6532, %v6664
          %v6742 = vsub.f32 %v6533, %v6669
          %v6743 = vsub.f32 %v6534, %v6674
          %v6744 = vsub.f32 %v6535, %v6679
          %v6745 = vsub.f32 %v6536, %v6684
          %v6746 = vsub.f32 %v6537, %v6689
          %v6747 = vsub.f32 %v6538, %v6694
          %v6748 = vsub.f32 %v6539, %v6699
          %v6749 = vsub.f32 %v6540, %v6704
          %v6750 = vsub.f32 %v6541, %v6709
          %v6751 = vsub.f32 %v6542, %v6714
          %v6752 = vsub.f32 %v6543, %v6719
          %v6753 = vsub.f32 %v6544, %v6724
          %v6754 = vsub.f32 %v6545, %v6729
          %v6755 = vsub.f32 %v6546, %v6734
          %v6756 = vsub.f32 %v6547, %v6739
          %v6757 = vmul.f32 %v6741, 1.442695
          %v6758 = vpow.pop %v6757
          %v6759 = vmul.f32 %v6742, 1.442695
          %v6760 = vpow.pop %v6759
          %v6761 = vmul.f32 %v6743, 1.442695
          %v6762 = vpow.pop %v6761
          %v6763 = vmul.f32 %v6744, 1.442695
          %v6764 = vpow.pop %v6763
          %v6765 = vmul.f32 %v6745, 1.442695
          %v6766 = vpow.pop %v6765
          %v6767 = vmul.f32 %v6746, 1.442695
          %v6768 = vpow.pop %v6767
          %v6769 = vmul.f32 %v6747, 1.442695
          %v6770 = vpow.pop %v6769
          %v6771 = vmul.f32 %v6748, 1.442695
          %v6772 = vpow.pop %v6771
          %v6773 = vmul.f32 %v6749, 1.442695
          %v6774 = vpow.pop %v6773
          %v6775 = vmul.f32 %v6750, 1.442695
          %v6776 = vpow.pop %v6775
          %v6777 = vmul.f32 %v6751, 1.442695
          %v6778 = vpow.pop %v6777
          %v6779 = vmul.f32 %v6752, 1.442695
          %v6780 = vpow.pop %v6779
          %v6781 = vmul.f32 %v6753, 1.442695
          %v6782 = vpow.pop %v6781
          %v6783 = vmul.f32 %v6754, 1.442695
          %v6784 = vpow.pop %v6783
          %v6785 = vmul.f32 %v6755, 1.442695
          %v6786 = vpow.pop %v6785
          %v6787 = vmul.f32 %v6756, 1.442695
          %v6788 = vpow.pop %v6787
          %s6789 = scalar_lea.vmem [#allocation4], 256
          %v6790 = vld [vmem:[%s6789] sm:$0xff]
          %v6791 = vld [vmem:[%s6789 + $0x8] sm:$0xff]
          %v6792 = vld [vmem:[%s6789 + $0x10] sm:$0xff]
          %v6793 = vld [vmem:[%s6789 + $0x18] sm:$0xff]
          %v6794 = vld [vmem:[%s6789 + $0x20] sm:$0xff]
          %v6795 = vld [vmem:[%s6789 + $0x28] sm:$0xff]
          %v6796 = vld [vmem:[%s6789 + $0x30] sm:$0xff]
          %v6797 = vld [vmem:[%s6789 + $0x38] sm:$0xff]
          %v6798 = vld [vmem:[%s6789 + $0x40] sm:$0xff]
          %v6799 = vld [vmem:[%s6789 + $0x48] sm:$0xff]
          %v6800 = vld [vmem:[%s6789 + $0x50] sm:$0xff]
          %v6801 = vld [vmem:[%s6789 + $0x58] sm:$0xff]
          %v6802 = vld [vmem:[%s6789 + $0x60] sm:$0xff]
          %v6803 = vld [vmem:[%s6789 + $0x68] sm:$0xff]
          %v6804 = vld [vmem:[%s6789 + $0x70] sm:$0xff]
          %v6805 = vld [vmem:[%s6789 + $0x78] sm:$0xff]
          %v6806 = vmul.f32 %v6630, %v6790
          %v6807 = vmul.f32 %v6632, %v6791
          %v6808 = vmul.f32 %v6634, %v6792
          %v6809 = vmul.f32 %v6636, %v6793
          %v6810 = vmul.f32 %v6638, %v6794
          %v6811 = vmul.f32 %v6640, %v6795
          %v6812 = vmul.f32 %v6642, %v6796
          %v6813 = vmul.f32 %v6644, %v6797
          %v6814 = vmul.f32 %v6646, %v6798
          %v6815 = vmul.f32 %v6648, %v6799
          %v6816 = vmul.f32 %v6650, %v6800
          %v6817 = vmul.f32 %v6652, %v6801
          %v6818 = vmul.f32 %v6654, %v6802
          %v6819 = vmul.f32 %v6656, %v6803
          %v6820 = vmul.f32 %v6658, %v6804
          %v6821 = vmul.f32 %v6660, %v6805
          %6822 = vadd.xlane.f32.xlu0 %v6758
          %v6823 = vpop.xlane.xlu0 %6822
          %6824 = vadd.xlane.f32.xlu0 %v6760
          %v6825 = vpop.xlane.xlu0 %6824
          %6826 = vadd.xlane.f32.xlu0 %v6762
          %v6827 = vpop.xlane.xlu0 %6826
          %6828 = vadd.xlane.f32.xlu0 %v6764
          %v6829 = vpop.xlane.xlu0 %6828
          %6830 = vadd.xlane.f32.xlu0 %v6766
          %v6831 = vpop.xlane.xlu0 %6830
          %6832 = vadd.xlane.f32.xlu0 %v6768
          %v6833 = vpop.xlane.xlu0 %6832
          %6834 = vadd.xlane.f32.xlu0 %v6770
          %v6835 = vpop.xlane.xlu0 %6834
          %6836 = vadd.xlane.f32.xlu0 %v6772
          %v6837 = vpop.xlane.xlu0 %6836
          %6838 = vadd.xlane.f32.xlu0 %v6774
          %v6839 = vpop.xlane.xlu0 %6838
          %6840 = vadd.xlane.f32.xlu0 %v6776
          %v6841 = vpop.xlane.xlu0 %6840
          %6842 = vadd.xlane.f32.xlu0 %v6778
          %v6843 = vpop.xlane.xlu0 %6842
          %6844 = vadd.xlane.f32.xlu0 %v6780
          %v6845 = vpop.xlane.xlu0 %6844
          %6846 = vadd.xlane.f32.xlu0 %v6782
          %v6847 = vpop.xlane.xlu0 %6846
          %6848 = vadd.xlane.f32.xlu0 %v6784
          %v6849 = vpop.xlane.xlu0 %6848
          %6850 = vadd.xlane.f32.xlu0 %v6786
          %v6851 = vpop.xlane.xlu0 %6850
          %6852 = vadd.xlane.f32.xlu0 %v6788
          %v6853 = vpop.xlane.xlu0 %6852
          %v6854 = vadd.f32 %v6806, %v6823
          %v6855 = vadd.f32 %v6807, %v6825
          %v6856 = vadd.f32 %v6808, %v6827
          %v6857 = vadd.f32 %v6809, %v6829
          %v6858 = vadd.f32 %v6810, %v6831
          %v6859 = vadd.f32 %v6811, %v6833
          %v6860 = vadd.f32 %v6812, %v6835
          %v6861 = vadd.f32 %v6813, %v6837
          %v6862 = vadd.f32 %v6814, %v6839
          %v6863 = vadd.f32 %v6815, %v6841
          %v6864 = vadd.f32 %v6816, %v6843
          %v6865 = vadd.f32 %v6817, %v6845
          %v6866 = vadd.f32 %v6818, %v6847
          %v6867 = vadd.f32 %v6819, %v6849
          %v6868 = vadd.f32 %v6820, %v6851
          %v6869 = vadd.f32 %v6821, %v6853
          %6870 = vst.msk [vmem:[%s6789] sm:$0xff] %vm5236, %v6854
          %6871 = vst.msk [vmem:[%s6789 + $0x8] sm:$0xff] %vm5236, %v6855
          %6872 = vst.msk [vmem:[%s6789 + $0x10] sm:$0xff] %vm5236, %v6856
          %6873 = vst.msk [vmem:[%s6789 + $0x18] sm:$0xff] %vm5236, %v6857
          %6874 = vst.msk [vmem:[%s6789 + $0x20] sm:$0xff] %vm5236, %v6858
          %6875 = vst.msk [vmem:[%s6789 + $0x28] sm:$0xff] %vm5236, %v6859
          %6876 = vst.msk [vmem:[%s6789 + $0x30] sm:$0xff] %vm5236, %v6860
          %6877 = vst.msk [vmem:[%s6789 + $0x38] sm:$0xff] %vm5236, %v6861
          %6878 = vst.msk [vmem:[%s6789 + $0x40] sm:$0xff] %vm5236, %v6862
          %6879 = vst.msk [vmem:[%s6789 + $0x48] sm:$0xff] %vm5236, %v6863
          %6880 = vst.msk [vmem:[%s6789 + $0x50] sm:$0xff] %vm5236, %v6864
          %6881 = vst.msk [vmem:[%s6789 + $0x58] sm:$0xff] %vm5236, %v6865
          %6882 = vst.msk [vmem:[%s6789 + $0x60] sm:$0xff] %vm5236, %v6866
          %6883 = vst.msk [vmem:[%s6789 + $0x68] sm:$0xff] %vm5236, %v6867
          %6884 = vst.msk [vmem:[%s6789 + $0x70] sm:$0xff] %vm5236, %v6868
          %6885 = vst.msk [vmem:[%s6789 + $0x78] sm:$0xff] %vm5236, %v6869
          %v6886 = vpack.c.bf16 %v6760, %v6758
          %v6887 = vpack.c.bf16 %v6764, %v6762
          %v6888 = vpack.c.bf16 %v6768, %v6766
          %v6889 = vpack.c.bf16 %v6772, %v6770
          %v6890 = vpack.c.bf16 %v6776, %v6774
          %v6891 = vpack.c.bf16 %v6780, %v6778
          %v6892 = vpack.c.bf16 %v6784, %v6782
          %v6893 = vpack.c.bf16 %v6788, %v6786
          %6894 = vrot.lane.b32.xlu0 %v5277, 64
          %v6895 = vpop.permute.xlu0 %6894
          %6896 = vrot.lane.b32.xlu0 %v5278, 64
          %v6897 = vpop.permute.xlu0 %6896
          %6898 = vrot.lane.b32.xlu0 %v5279, 64
          %v6899 = vpop.permute.xlu0 %6898
          %6900 = vrot.lane.b32.xlu0 %v5280, 64
          %v6901 = vpop.permute.xlu0 %6900
          %6902 = vrot.lane.b32.xlu0 %v5281, 64
          %v6903 = vpop.permute.xlu0 %6902
          %6904 = vrot.lane.b32.xlu0 %v5282, 64
          %v6905 = vpop.permute.xlu0 %6904
          %6906 = vrot.lane.b32.xlu0 %v5283, 64
          %v6907 = vpop.permute.xlu0 %6906
          %6908 = vrot.lane.b32.xlu0 %v5284, 64
          %v6909 = vpop.permute.xlu0 %6908
          %6918 = vmatpush.bf16.msra.mxu0 %v6909
          %6919 = vmatpush.bf16.msra.mxu0 %v6907
          %6920 = vmatpush.bf16.msra.mxu0 %v6905
          %6921 = vmatpush.bf16.msra.mxu0 %v6903
          %6922 = vmatpush.bf16.msra.mxu0 %v6901
          %6923 = vmatpush.bf16.msra.mxu0 %v6899
          %6924 = vmatpush.bf16.msra.mxu0 %v6897
          %6925 = vmatpush.bf16.msra.mxu0 %v6895
          %6926 = vmatmul.bf16.gmra.mxu0 %v6886
          %v6927 = vpop.f32.mrf.mxu0
          %v6928 = vadd.f32 0.0, %v6927
          %v6929 = vpop.f32.mrf.mxu0
          %v6930 = vadd.f32 0.0, %v6929
          %6931 = vmatmul.bf16.gmra.mxu0 %v6887
          %v6932 = vpop.f32.mrf.mxu0
          %v6933 = vadd.f32 0.0, %v6932
          %v6934 = vpop.f32.mrf.mxu0
          %v6935 = vadd.f32 0.0, %v6934
          %6936 = vmatmul.bf16.gmra.mxu0 %v6888
          %v6937 = vpop.f32.mrf.mxu0
          %v6938 = vadd.f32 0.0, %v6937
          %v6939 = vpop.f32.mrf.mxu0
          %v6940 = vadd.f32 0.0, %v6939
          %6941 = vmatmul.bf16.gmra.mxu0 %v6889
          %v6942 = vpop.f32.mrf.mxu0
          %v6943 = vadd.f32 0.0, %v6942
          %v6944 = vpop.f32.mrf.mxu0
          %v6945 = vadd.f32 0.0, %v6944
          %6946 = vmatmul.bf16.gmra.mxu0 %v6890
          %v6947 = vpop.f32.mrf.mxu0
          %v6948 = vadd.f32 0.0, %v6947
          %v6949 = vpop.f32.mrf.mxu0
          %v6950 = vadd.f32 0.0, %v6949
          %6951 = vmatmul.bf16.gmra.mxu0 %v6891
          %v6952 = vpop.f32.mrf.mxu0
          %v6953 = vadd.f32 0.0, %v6952
          %v6954 = vpop.f32.mrf.mxu0
          %v6955 = vadd.f32 0.0, %v6954
          %6956 = vmatmul.bf16.gmra.mxu0 %v6892
          %v6957 = vpop.f32.mrf.mxu0
          %v6958 = vadd.f32 0.0, %v6957
          %v6959 = vpop.f32.mrf.mxu0
          %v6960 = vadd.f32 0.0, %v6959
          %6961 = vmatmul.bf16.gmra.mxu0 %v6893
          %v6962 = vpop.f32.mrf.mxu0
          %v6963 = vadd.f32 0.0, %v6962
          %v6964 = vpop.f32.mrf.mxu0
          %v6965 = vadd.f32 0.0, %v6964
          %6966 = vdwg.mxu0
          %v6967 = vld [vmem:[#allocation5] sm:$0xff]
          %v6968 = vld [vmem:[#allocation5 + $0x8] sm:$0xff]
          %v6969 = vld [vmem:[#allocation5 + $0x10] sm:$0xff]
          %v6970 = vld [vmem:[#allocation5 + $0x18] sm:$0xff]
          %v6971 = vld [vmem:[#allocation5 + $0x20] sm:$0xff]
          %v6972 = vld [vmem:[#allocation5 + $0x28] sm:$0xff]
          %v6973 = vld [vmem:[#allocation5 + $0x30] sm:$0xff]
          %v6974 = vld [vmem:[#allocation5 + $0x38] sm:$0xff]
          %v6975 = vld [vmem:[#allocation5 + $0x40] sm:$0xff]
          %v6976 = vld [vmem:[#allocation5 + $0x48] sm:$0xff]
          %v6977 = vld [vmem:[#allocation5 + $0x50] sm:$0xff]
          %v6978 = vld [vmem:[#allocation5 + $0x58] sm:$0xff]
          %v6979 = vld [vmem:[#allocation5 + $0x60] sm:$0xff]
          %v6980 = vld [vmem:[#allocation5 + $0x68] sm:$0xff]
          %v6981 = vld [vmem:[#allocation5 + $0x70] sm:$0xff]
          %v6982 = vld [vmem:[#allocation5 + $0x78] sm:$0xff]
          %6984 = vset.pattern.permute.xlu0 0
          %6985 = vperm.xlu0 %6984, %v6630
          %v6986 = vpop.permute.xlu0 %6985
          %6989 = vset.pattern.permute.xlu0 0
          %6990 = vperm.xlu0 %6989, %v6632
          %v6991 = vpop.permute.xlu0 %6990
          %6994 = vset.pattern.permute.xlu0 0
          %6995 = vperm.xlu0 %6994, %v6634
          %v6996 = vpop.permute.xlu0 %6995
          %6999 = vset.pattern.permute.xlu0 0
          %7000 = vperm.xlu0 %6999, %v6636
          %v7001 = vpop.permute.xlu0 %7000
          %7004 = vset.pattern.permute.xlu0 0
          %7005 = vperm.xlu0 %7004, %v6638
          %v7006 = vpop.permute.xlu0 %7005
          %7009 = vset.pattern.permute.xlu0 0
          %7010 = vperm.xlu0 %7009, %v6640
          %v7011 = vpop.permute.xlu0 %7010
          %7014 = vset.pattern.permute.xlu0 0
          %7015 = vperm.xlu0 %7014, %v6642
          %v7016 = vpop.permute.xlu0 %7015
          %7019 = vset.pattern.permute.xlu0 0
          %7020 = vperm.xlu0 %7019, %v6644
          %v7021 = vpop.permute.xlu0 %7020
          %7024 = vset.pattern.permute.xlu0 0
          %7025 = vperm.xlu0 %7024, %v6646
          %v7026 = vpop.permute.xlu0 %7025
          %7029 = vset.pattern.permute.xlu0 0
          %7030 = vperm.xlu0 %7029, %v6648
          %v7031 = vpop.permute.xlu0 %7030
          %7034 = vset.pattern.permute.xlu0 0
          %7035 = vperm.xlu0 %7034, %v6650
          %v7036 = vpop.permute.xlu0 %7035
          %7039 = vset.pattern.permute.xlu0 0
          %7040 = vperm.xlu0 %7039, %v6652
          %v7041 = vpop.permute.xlu0 %7040
          %7044 = vset.pattern.permute.xlu0 0
          %7045 = vperm.xlu0 %7044, %v6654
          %v7046 = vpop.permute.xlu0 %7045
          %7049 = vset.pattern.permute.xlu0 0
          %7050 = vperm.xlu0 %7049, %v6656
          %v7051 = vpop.permute.xlu0 %7050
          %7054 = vset.pattern.permute.xlu0 0
          %7055 = vperm.xlu0 %7054, %v6658
          %v7056 = vpop.permute.xlu0 %7055
          %7059 = vset.pattern.permute.xlu0 0
          %7060 = vperm.xlu0 %7059, %v6660
          %v7061 = vpop.permute.xlu0 %7060
          %v7063 = vmul.f32 %v6986, %v6967
          %v7064 = vmul.f32 %v6991, %v6968
          %v7065 = vmul.f32 %v6996, %v6969
          %v7066 = vmul.f32 %v7001, %v6970
          %v7067 = vmul.f32 %v7006, %v6971
          %v7068 = vmul.f32 %v7011, %v6972
          %v7069 = vmul.f32 %v7016, %v6973
          %v7070 = vmul.f32 %v7021, %v6974
          %v7071 = vmul.f32 %v7026, %v6975
          %v7072 = vmul.f32 %v7031, %v6976
          %v7073 = vmul.f32 %v7036, %v6977
          %v7074 = vmul.f32 %v7041, %v6978
          %v7075 = vmul.f32 %v7046, %v6979
          %v7076 = vmul.f32 %v7051, %v6980
          %v7077 = vmul.f32 %v7056, %v6981
          %v7078 = vmul.f32 %v7061, %v6982
          %7095 = vrot.lane.b32.xlu0 %v6928, 64
          %v7096 = vpop.permute.xlu0 %7095
          %7097 = vrot.lane.b32.xlu0 %v6930, 64
          %v7098 = vpop.permute.xlu0 %7097
          %7099 = vrot.lane.b32.xlu0 %v6933, 64
          %v7100 = vpop.permute.xlu0 %7099
          %7101 = vrot.lane.b32.xlu0 %v6935, 64
          %v7102 = vpop.permute.xlu0 %7101
          %7103 = vrot.lane.b32.xlu0 %v6938, 64
          %v7104 = vpop.permute.xlu0 %7103
          %7105 = vrot.lane.b32.xlu0 %v6940, 64
          %v7106 = vpop.permute.xlu0 %7105
          %7107 = vrot.lane.b32.xlu0 %v6943, 64
          %v7108 = vpop.permute.xlu0 %7107
          %7109 = vrot.lane.b32.xlu0 %v6945, 64
          %v7110 = vpop.permute.xlu0 %7109
          %7111 = vrot.lane.b32.xlu0 %v6948, 64
          %v7112 = vpop.permute.xlu0 %7111
          %7113 = vrot.lane.b32.xlu0 %v6950, 64
          %v7114 = vpop.permute.xlu0 %7113
          %7115 = vrot.lane.b32.xlu0 %v6953, 64
          %v7116 = vpop.permute.xlu0 %7115
          %7117 = vrot.lane.b32.xlu0 %v6955, 64
          %v7118 = vpop.permute.xlu0 %7117
          %7119 = vrot.lane.b32.xlu0 %v6958, 64
          %v7120 = vpop.permute.xlu0 %7119
          %7121 = vrot.lane.b32.xlu0 %v6960, 64
          %v7122 = vpop.permute.xlu0 %7121
          %7123 = vrot.lane.b32.xlu0 %v6963, 64
          %v7124 = vpop.permute.xlu0 %7123
          %7125 = vrot.lane.b32.xlu0 %v6965, 64
          %v7126 = vpop.permute.xlu0 %7125
          %v7143 = vadd.f32 %v7063, %v7096
          %v7144 = vadd.f32 %v7064, %v7098
          %v7145 = vadd.f32 %v7065, %v7100
          %v7146 = vadd.f32 %v7066, %v7102
          %v7147 = vadd.f32 %v7067, %v7104
          %v7148 = vadd.f32 %v7068, %v7106
          %v7149 = vadd.f32 %v7069, %v7108
          %v7150 = vadd.f32 %v7070, %v7110
          %v7151 = vadd.f32 %v7071, %v7112
          %v7152 = vadd.f32 %v7072, %v7114
          %v7153 = vadd.f32 %v7073, %v7116
          %v7154 = vadd.f32 %v7074, %v7118
          %v7155 = vadd.f32 %v7075, %v7120
          %v7156 = vadd.f32 %v7076, %v7122
          %v7157 = vadd.f32 %v7077, %v7124
          %v7158 = vadd.f32 %v7078, %v7126
          %vm7159 = vcmask 785920
          %7160 = vst.msk [vmem:[#allocation5] sm:$0xff] %vm7159, %v7143
          %7161 = vst.msk [vmem:[#allocation5 + $0x8] sm:$0xff] %vm7159, %v7144
          %7162 = vst.msk [vmem:[#allocation5 + $0x10] sm:$0xff] %vm7159, %v7145
          %7163 = vst.msk [vmem:[#allocation5 + $0x18] sm:$0xff] %vm7159, %v7146
          %7164 = vst.msk [vmem:[#allocation5 + $0x20] sm:$0xff] %vm7159, %v7147
          %7165 = vst.msk [vmem:[#allocation5 + $0x28] sm:$0xff] %vm7159, %v7148
          %7166 = vst.msk [vmem:[#allocation5 + $0x30] sm:$0xff] %vm7159, %v7149
          %7167 = vst.msk [vmem:[#allocation5 + $0x38] sm:$0xff] %vm7159, %v7150
          %7168 = vst.msk [vmem:[#allocation5 + $0x40] sm:$0xff] %vm7159, %v7151
          %7169 = vst.msk [vmem:[#allocation5 + $0x48] sm:$0xff] %vm7159, %v7152
          %7170 = vst.msk [vmem:[#allocation5 + $0x50] sm:$0xff] %vm7159, %v7153
          %7171 = vst.msk [vmem:[#allocation5 + $0x58] sm:$0xff] %vm7159, %v7154
          %7172 = vst.msk [vmem:[#allocation5 + $0x60] sm:$0xff] %vm7159, %v7155
          %7173 = vst.msk [vmem:[#allocation5 + $0x68] sm:$0xff] %vm7159, %v7156
          %7174 = vst.msk [vmem:[#allocation5 + $0x70] sm:$0xff] %vm7159, %v7157
          %7175 = vst.msk [vmem:[#allocation5 + $0x78] sm:$0xff] %vm7159, %v7158
          %7176 = vst.msk [vmem:[%s6548] sm:$0xff] %vm5236, %v6597
          %7177 = vst.msk [vmem:[%s6548 + $0x8] sm:$0xff] %vm5236, %v6598
          %7178 = vst.msk [vmem:[%s6548 + $0x10] sm:$0xff] %vm5236, %v6599
          %7179 = vst.msk [vmem:[%s6548 + $0x18] sm:$0xff] %vm5236, %v6600
          %7180 = vst.msk [vmem:[%s6548 + $0x20] sm:$0xff] %vm5236, %v6601
          %7181 = vst.msk [vmem:[%s6548 + $0x28] sm:$0xff] %vm5236, %v6602
          %7182 = vst.msk [vmem:[%s6548 + $0x30] sm:$0xff] %vm5236, %v6603
          %7183 = vst.msk [vmem:[%s6548 + $0x38] sm:$0xff] %vm5236, %v6604
          %7184 = vst.msk [vmem:[%s6548 + $0x40] sm:$0xff] %vm5236, %v6605
          %7185 = vst.msk [vmem:[%s6548 + $0x48] sm:$0xff] %vm5236, %v6606
          %7186 = vst.msk [vmem:[%s6548 + $0x50] sm:$0xff] %vm5236, %v6607
          %7187 = vst.msk [vmem:[%s6548 + $0x58] sm:$0xff] %vm5236, %v6608
          %7188 = vst.msk [vmem:[%s6548 + $0x60] sm:$0xff] %vm5236, %v6609
          %7189 = vst.msk [vmem:[%s6548 + $0x68] sm:$0xff] %vm5236, %v6610
          %7190 = vst.msk [vmem:[%s6548 + $0x70] sm:$0xff] %vm5236, %v6611
          %7191 = vst.msk [vmem:[%s6548 + $0x78] sm:$0xff] %vm5236, %v6612
          %v7192 = vld [vmem:[#allocation2] sm:$0xf]
          %v7193 = vld [vmem:[#allocation2 + $0x4] sm:$0xf]
          %v7194 = vld [vmem:[#allocation2 + $0x8] sm:$0xf]
          %v7195 = vld [vmem:[#allocation2 + $0xc] sm:$0xf]
          %v7196 = vld [vmem:[#allocation2 + $0x10] sm:$0xf]
          %v7197 = vld [vmem:[#allocation2 + $0x14] sm:$0xf]
          %v7198 = vld [vmem:[#allocation2 + $0x18] sm:$0xf]
          %v7199 = vld [vmem:[#allocation2 + $0x1c] sm:$0xf]
          %v7200 = vld [vmem:[#allocation2 + $0x20] sm:$0xf]
          %v7201 = vld [vmem:[#allocation2 + $0x24] sm:$0xf]
          %v7202 = vld [vmem:[#allocation2 + $0x28] sm:$0xf]
          %v7203 = vld [vmem:[#allocation2 + $0x2c] sm:$0xf]
          %v7204 = vld [vmem:[#allocation2 + $0x30] sm:$0xf]
          %v7205 = vld [vmem:[#allocation2 + $0x34] sm:$0xf]
          %v7206 = vld [vmem:[#allocation2 + $0x38] sm:$0xf]
          %v7207 = vld [vmem:[#allocation2 + $0x3c] sm:$0xf]
          %v7224 = vunpack.c.l.b16 %v7192
          %v7225 = vunpack.c.l.b16 %v7193
          %v7226 = vunpack.c.l.b16 %v7194
          %v7227 = vunpack.c.l.b16 %v7195
          %v7228 = vunpack.c.l.b16 %v7196
          %v7229 = vunpack.c.l.b16 %v7197
          %v7230 = vunpack.c.l.b16 %v7198
          %v7231 = vunpack.c.l.b16 %v7199
          %v7232 = vunpack.c.l.b16 %v7200
          %v7233 = vunpack.c.l.b16 %v7201
          %v7234 = vunpack.c.l.b16 %v7202
          %v7235 = vunpack.c.l.b16 %v7203
          %v7236 = vunpack.c.l.b16 %v7204
          %v7237 = vunpack.c.l.b16 %v7205
          %v7238 = vunpack.c.l.b16 %v7206
          %v7239 = vunpack.c.l.b16 %v7207
          %v7240 = vpack.c.b16 %v7225, %v7224
          %v7241 = vpack.c.b16 %v7227, %v7226
          %v7242 = vpack.c.b16 %v7229, %v7228
          %v7243 = vpack.c.b16 %v7231, %v7230
          %v7244 = vpack.c.b16 %v7233, %v7232
          %v7245 = vpack.c.b16 %v7235, %v7234
          %v7246 = vpack.c.b16 %v7237, %v7236
          %v7247 = vpack.c.b16 %v7239, %v7238
          %7248 = vrot.lane.b32.xlu0 %v7240, 32
          %v7249 = vpop.permute.xlu0 %7248
          %7250 = vrot.lane.b32.xlu0 %v7241, 32
          %v7251 = vpop.permute.xlu0 %7250
          %7252 = vrot.lane.b32.xlu0 %v7242, 32
          %v7253 = vpop.permute.xlu0 %7252
          %7254 = vrot.lane.b32.xlu0 %v7243, 32
          %v7255 = vpop.permute.xlu0 %7254
          %7256 = vrot.lane.b32.xlu0 %v7244, 32
          %v7257 = vpop.permute.xlu0 %7256
          %7258 = vrot.lane.b32.xlu0 %v7245, 32
          %v7259 = vpop.permute.xlu0 %7258
          %7260 = vrot.lane.b32.xlu0 %v7246, 32
          %v7261 = vpop.permute.xlu0 %7260
          %7262 = vrot.lane.b32.xlu0 %v7247, 32
          %v7263 = vpop.permute.xlu0 %7262
          %7264 = vrot.lane.b32.xlu0 %v4792, 32
          %v7265 = vpop.permute.xlu0 %7264
          %7266 = vrot.lane.b32.xlu0 %v4793, 32
          %v7267 = vpop.permute.xlu0 %7266
          %7268 = vrot.lane.b32.xlu0 %v4794, 32
          %v7269 = vpop.permute.xlu0 %7268
          %7270 = vrot.lane.b32.xlu0 %v4795, 32
          %v7271 = vpop.permute.xlu0 %7270
          %7272 = vrot.lane.b32.xlu0 %v4796, 32
          %v7273 = vpop.permute.xlu0 %7272
          %7274 = vrot.lane.b32.xlu0 %v4797, 32
          %v7275 = vpop.permute.xlu0 %7274
          %7276 = vrot.lane.b32.xlu0 %v4798, 32
          %v7277 = vpop.permute.xlu0 %7276
          %7278 = vrot.lane.b32.xlu0 %v4799, 32
          %v7279 = vpop.permute.xlu0 %7278
          %v7281 = vsel %vm4800, %v7249, 0
          %v7284 = vsel %vm4800, %v7251, 0
          %v7287 = vsel %vm4800, %v7253, 0
          %v7290 = vsel %vm4800, %v7255, 0
          %v7293 = vsel %vm4800, %v7257, 0
          %v7296 = vsel %vm4800, %v7259, 0
          %v7299 = vsel %vm4800, %v7261, 0
          %v7302 = vsel %vm4800, %v7263, 0
          %v7305 = vsel %vm4800, %v7265, 0
          %v7308 = vsel %vm4800, %v7267, 0
          %v7311 = vsel %vm4800, %v7269, 0
          %v7314 = vsel %vm4800, %v7271, 0
          %v7317 = vsel %vm4800, %v7273, 0
          %v7320 = vsel %vm4800, %v7275, 0
          %v7323 = vsel %vm4800, %v7277, 0
          %v7326 = vsel %vm4800, %v7279, 0
          %7328 = vmatpush.bf16.xpose.msra.mxu0 %v7326
          %7329 = vmatpush.bf16.xpose.msra.mxu0 %v7323
          %7330 = vmatpush.bf16.xpose.msra.mxu0 %v7320
          %7331 = vmatpush.bf16.xpose.msra.mxu0 %v7317
          %7332 = vmatpush.bf16.xpose.msra.mxu0 %v7314
          %7333 = vmatpush.bf16.xpose.msra.mxu0 %v7311
          %7334 = vmatpush.bf16.xpose.msra.mxu0 %v7308
          %7335 = vmatpush.bf16.xpose.msra.mxu0 %v7305
          %7336 = vmatmul.bf16.gmra.mxu0 %v7281
          %v7337 = vpop.f32.mrf.mxu0
          %v7338 = vadd.f32 0.0, %v7337
          %v7339 = vpop.f32.mrf.mxu0
          %v7340 = vadd.f32 0.0, %v7339
          %7341 = vmatmul.bf16.gmra.mxu0 %v7284
          %v7342 = vpop.f32.mrf.mxu0
          %v7343 = vadd.f32 0.0, %v7342
          %v7344 = vpop.f32.mrf.mxu0
          %v7345 = vadd.f32 0.0, %v7344
          %7346 = vmatmul.bf16.gmra.mxu0 %v7287
          %v7347 = vpop.f32.mrf.mxu0
          %v7348 = vadd.f32 0.0, %v7347
          %v7349 = vpop.f32.mrf.mxu0
          %v7350 = vadd.f32 0.0, %v7349
          %7351 = vmatmul.bf16.gmra.mxu0 %v7290
          %v7352 = vpop.f32.mrf.mxu0
          %v7353 = vadd.f32 0.0, %v7352
          %v7354 = vpop.f32.mrf.mxu0
          %v7355 = vadd.f32 0.0, %v7354
          %7356 = vmatmul.bf16.gmra.mxu0 %v7293
          %v7357 = vpop.f32.mrf.mxu0
          %v7358 = vadd.f32 0.0, %v7357
          %v7359 = vpop.f32.mrf.mxu0
          %v7360 = vadd.f32 0.0, %v7359
          %7361 = vmatmul.bf16.gmra.mxu0 %v7296
          %v7362 = vpop.f32.mrf.mxu0
          %v7363 = vadd.f32 0.0, %v7362
          %v7364 = vpop.f32.mrf.mxu0
          %v7365 = vadd.f32 0.0, %v7364
          %7366 = vmatmul.bf16.gmra.mxu0 %v7299
          %v7367 = vpop.f32.mrf.mxu0
          %v7368 = vadd.f32 0.0, %v7367
          %v7369 = vpop.f32.mrf.mxu0
          %v7370 = vadd.f32 0.0, %v7369
          %7371 = vmatmul.bf16.gmra.mxu0 %v7302
          %v7372 = vpop.f32.mrf.mxu0
          %v7373 = vadd.f32 0.0, %v7372
          %v7374 = vpop.f32.mrf.mxu0
          %v7375 = vadd.f32 0.0, %v7374
          %7376 = vdwg.mxu0
          %v7377 = vsel %vm4899, %v7338, -1e+30
          %v7378 = vsel %vm4899, %v7340, -1e+30
          %v7379 = vsel %vm4899, %v7343, -1e+30
          %v7380 = vsel %vm4899, %v7345, -1e+30
          %v7381 = vsel %vm4899, %v7348, -1e+30
          %v7382 = vsel %vm4899, %v7350, -1e+30
          %v7383 = vsel %vm4899, %v7353, -1e+30
          %v7384 = vsel %vm4899, %v7355, -1e+30
          %v7385 = vsel %vm4899, %v7358, -1e+30
          %v7386 = vsel %vm4899, %v7360, -1e+30
          %v7387 = vsel %vm4899, %v7363, -1e+30
          %v7388 = vsel %vm4899, %v7365, -1e+30
          %v7389 = vsel %vm4899, %v7368, -1e+30
          %v7390 = vsel %vm4899, %v7370, -1e+30
          %v7391 = vsel %vm4899, %v7373, -1e+30
          %v7392 = vsel %vm4899, %v7375, -1e+30
          %s7393 = scalar_lea.vmem [#allocation3], 384
          %v7394 = vld [vmem:[%s7393] sm:$0xff]
          %v7395 = vld [vmem:[%s7393 + $0x8] sm:$0xff]
          %v7396 = vld [vmem:[%s7393 + $0x10] sm:$0xff]
          %v7397 = vld [vmem:[%s7393 + $0x18] sm:$0xff]
          %v7398 = vld [vmem:[%s7393 + $0x20] sm:$0xff]
          %v7399 = vld [vmem:[%s7393 + $0x28] sm:$0xff]
          %v7400 = vld [vmem:[%s7393 + $0x30] sm:$0xff]
          %v7401 = vld [vmem:[%s7393 + $0x38] sm:$0xff]
          %v7402 = vld [vmem:[%s7393 + $0x40] sm:$0xff]
          %v7403 = vld [vmem:[%s7393 + $0x48] sm:$0xff]
          %v7404 = vld [vmem:[%s7393 + $0x50] sm:$0xff]
          %v7405 = vld [vmem:[%s7393 + $0x58] sm:$0xff]
          %v7406 = vld [vmem:[%s7393 + $0x60] sm:$0xff]
          %v7407 = vld [vmem:[%s7393 + $0x68] sm:$0xff]
          %v7408 = vld [vmem:[%s7393 + $0x70] sm:$0xff]
          %v7409 = vld [vmem:[%s7393 + $0x78] sm:$0xff]
          %7410 = vmax.xlane.f32.xlu0 %v7377
          %v7411 = vpop.xlane.xlu0 %7410
          %7412 = vmax.xlane.f32.xlu0 %v7378
          %v7413 = vpop.xlane.xlu0 %7412
          %7414 = vmax.xlane.f32.xlu0 %v7379
          %v7415 = vpop.xlane.xlu0 %7414
          %7416 = vmax.xlane.f32.xlu0 %v7380
          %v7417 = vpop.xlane.xlu0 %7416
          %7418 = vmax.xlane.f32.xlu0 %v7381
          %v7419 = vpop.xlane.xlu0 %7418
          %7420 = vmax.xlane.f32.xlu0 %v7382
          %v7421 = vpop.xlane.xlu0 %7420
          %7422 = vmax.xlane.f32.xlu0 %v7383
          %v7423 = vpop.xlane.xlu0 %7422
          %7424 = vmax.xlane.f32.xlu0 %v7384
          %v7425 = vpop.xlane.xlu0 %7424
          %7426 = vmax.xlane.f32.xlu0 %v7385
          %v7427 = vpop.xlane.xlu0 %7426
          %7428 = vmax.xlane.f32.xlu0 %v7386
          %v7429 = vpop.xlane.xlu0 %7428
          %7430 = vmax.xlane.f32.xlu0 %v7387
          %v7431 = vpop.xlane.xlu0 %7430
          %7432 = vmax.xlane.f32.xlu0 %v7388
          %v7433 = vpop.xlane.xlu0 %7432
          %7434 = vmax.xlane.f32.xlu0 %v7389
          %v7435 = vpop.xlane.xlu0 %7434
          %7436 = vmax.xlane.f32.xlu0 %v7390
          %v7437 = vpop.xlane.xlu0 %7436
          %7438 = vmax.xlane.f32.xlu0 %v7391
          %v7439 = vpop.xlane.xlu0 %7438
          %7440 = vmax.xlane.f32.xlu0 %v7392
          %v7441 = vpop.xlane.xlu0 %7440
          %v7442 = vmax.f32 %v7394, %v7411
          %v7443 = vmax.f32 %v7395, %v7413
          %v7444 = vmax.f32 %v7396, %v7415
          %v7445 = vmax.f32 %v7397, %v7417
          %v7446 = vmax.f32 %v7398, %v7419
          %v7447 = vmax.f32 %v7399, %v7421
          %v7448 = vmax.f32 %v7400, %v7423
          %v7449 = vmax.f32 %v7401, %v7425
          %v7450 = vmax.f32 %v7402, %v7427
          %v7451 = vmax.f32 %v7403, %v7429
          %v7452 = vmax.f32 %v7404, %v7431
          %v7453 = vmax.f32 %v7405, %v7433
          %v7454 = vmax.f32 %v7406, %v7435
          %v7455 = vmax.f32 %v7407, %v7437
          %v7456 = vmax.f32 %v7408, %v7439
          %v7457 = vmax.f32 %v7409, %v7441
          %v7458 = vsub.f32 %v7394, %v7442
          %v7459 = vsub.f32 %v7395, %v7443
          %v7460 = vsub.f32 %v7396, %v7444
          %v7461 = vsub.f32 %v7397, %v7445
          %v7462 = vsub.f32 %v7398, %v7446
          %v7463 = vsub.f32 %v7399, %v7447
          %v7464 = vsub.f32 %v7400, %v7448
          %v7465 = vsub.f32 %v7401, %v7449
          %v7466 = vsub.f32 %v7402, %v7450
          %v7467 = vsub.f32 %v7403, %v7451
          %v7468 = vsub.f32 %v7404, %v7452
          %v7469 = vsub.f32 %v7405, %v7453
          %v7470 = vsub.f32 %v7406, %v7454
          %v7471 = vsub.f32 %v7407, %v7455
          %v7472 = vsub.f32 %v7408, %v7456
          %v7473 = vsub.f32 %v7409, %v7457
          %v7474 = vmul.f32 %v7458, 1.442695
          %v7475 = vpow.pop %v7474
          %v7476 = vmul.f32 %v7459, 1.442695
          %v7477 = vpow.pop %v7476
          %v7478 = vmul.f32 %v7460, 1.442695
          %v7479 = vpow.pop %v7478
          %v7480 = vmul.f32 %v7461, 1.442695
          %v7481 = vpow.pop %v7480
          %v7482 = vmul.f32 %v7462, 1.442695
          %v7483 = vpow.pop %v7482
          %v7484 = vmul.f32 %v7463, 1.442695
          %v7485 = vpow.pop %v7484
          %v7486 = vmul.f32 %v7464, 1.442695
          %v7487 = vpow.pop %v7486
          %v7488 = vmul.f32 %v7465, 1.442695
          %v7489 = vpow.pop %v7488
          %v7490 = vmul.f32 %v7466, 1.442695
          %v7491 = vpow.pop %v7490
          %v7492 = vmul.f32 %v7467, 1.442695
          %v7493 = vpow.pop %v7492
          %v7494 = vmul.f32 %v7468, 1.442695
          %v7495 = vpow.pop %v7494
          %v7496 = vmul.f32 %v7469, 1.442695
          %v7497 = vpow.pop %v7496
          %v7498 = vmul.f32 %v7470, 1.442695
          %v7499 = vpow.pop %v7498
          %v7500 = vmul.f32 %v7471, 1.442695
          %v7501 = vpow.pop %v7500
          %v7502 = vmul.f32 %v7472, 1.442695
          %v7503 = vpow.pop %v7502
          %v7504 = vmul.f32 %v7473, 1.442695
          %v7505 = vpow.pop %v7504
          %7507 = vset.pattern.permute.xlu0 0
          %7508 = vperm.xlu0 %7507, %v7442
          %v7509 = vpop.permute.xlu0 %7508
          %7512 = vset.pattern.permute.xlu0 0
          %7513 = vperm.xlu0 %7512, %v7443
          %v7514 = vpop.permute.xlu0 %7513
          %7517 = vset.pattern.permute.xlu0 0
          %7518 = vperm.xlu0 %7517, %v7444
          %v7519 = vpop.permute.xlu0 %7518
          %7522 = vset.pattern.permute.xlu0 0
          %7523 = vperm.xlu0 %7522, %v7445
          %v7524 = vpop.permute.xlu0 %7523
          %7527 = vset.pattern.permute.xlu0 0
          %7528 = vperm.xlu0 %7527, %v7446
          %v7529 = vpop.permute.xlu0 %7528
          %7532 = vset.pattern.permute.xlu0 0
          %7533 = vperm.xlu0 %7532, %v7447
          %v7534 = vpop.permute.xlu0 %7533
          %7537 = vset.pattern.permute.xlu0 0
          %7538 = vperm.xlu0 %7537, %v7448
          %v7539 = vpop.permute.xlu0 %7538
          %7542 = vset.pattern.permute.xlu0 0
          %7543 = vperm.xlu0 %7542, %v7449
          %v7544 = vpop.permute.xlu0 %7543
          %7547 = vset.pattern.permute.xlu0 0
          %7548 = vperm.xlu0 %7547, %v7450
          %v7549 = vpop.permute.xlu0 %7548
          %7552 = vset.pattern.permute.xlu0 0
          %7553 = vperm.xlu0 %7552, %v7451
          %v7554 = vpop.permute.xlu0 %7553
          %7557 = vset.pattern.permute.xlu0 0
          %7558 = vperm.xlu0 %7557, %v7452
          %v7559 = vpop.permute.xlu0 %7558
          %7562 = vset.pattern.permute.xlu0 0
          %7563 = vperm.xlu0 %7562, %v7453
          %v7564 = vpop.permute.xlu0 %7563
          %7567 = vset.pattern.permute.xlu0 0
          %7568 = vperm.xlu0 %7567, %v7454
          %v7569 = vpop.permute.xlu0 %7568
          %7572 = vset.pattern.permute.xlu0 0
          %7573 = vperm.xlu0 %7572, %v7455
          %v7574 = vpop.permute.xlu0 %7573
          %7577 = vset.pattern.permute.xlu0 0
          %7578 = vperm.xlu0 %7577, %v7456
          %v7579 = vpop.permute.xlu0 %7578
          %7582 = vset.pattern.permute.xlu0 0
          %7583 = vperm.xlu0 %7582, %v7457
          %v7584 = vpop.permute.xlu0 %7583
          %v7586 = vsub.f32 %v7377, %v7509
          %v7587 = vsub.f32 %v7378, %v7514
          %v7588 = vsub.f32 %v7379, %v7519
          %v7589 = vsub.f32 %v7380, %v7524
          %v7590 = vsub.f32 %v7381, %v7529
          %v7591 = vsub.f32 %v7382, %v7534
          %v7592 = vsub.f32 %v7383, %v7539
          %v7593 = vsub.f32 %v7384, %v7544
          %v7594 = vsub.f32 %v7385, %v7549
          %v7595 = vsub.f32 %v7386, %v7554
          %v7596 = vsub.f32 %v7387, %v7559
          %v7597 = vsub.f32 %v7388, %v7564
          %v7598 = vsub.f32 %v7389, %v7569
          %v7599 = vsub.f32 %v7390, %v7574
          %v7600 = vsub.f32 %v7391, %v7579
          %v7601 = vsub.f32 %v7392, %v7584
          %v7602 = vmul.f32 %v7586, 1.442695
          %v7603 = vpow.pop %v7602
          %v7604 = vmul.f32 %v7587, 1.442695
          %v7605 = vpow.pop %v7604
          %v7606 = vmul.f32 %v7588, 1.442695
          %v7607 = vpow.pop %v7606
          %v7608 = vmul.f32 %v7589, 1.442695
          %v7609 = vpow.pop %v7608
          %v7610 = vmul.f32 %v7590, 1.442695
          %v7611 = vpow.pop %v7610
          %v7612 = vmul.f32 %v7591, 1.442695
          %v7613 = vpow.pop %v7612
          %v7614 = vmul.f32 %v7592, 1.442695
          %v7615 = vpow.pop %v7614
          %v7616 = vmul.f32 %v7593, 1.442695
          %v7617 = vpow.pop %v7616
          %v7618 = vmul.f32 %v7594, 1.442695
          %v7619 = vpow.pop %v7618
          %v7620 = vmul.f32 %v7595, 1.442695
          %v7621 = vpow.pop %v7620
          %v7622 = vmul.f32 %v7596, 1.442695
          %v7623 = vpow.pop %v7622
          %v7624 = vmul.f32 %v7597, 1.442695
          %v7625 = vpow.pop %v7624
          %v7626 = vmul.f32 %v7598, 1.442695
          %v7627 = vpow.pop %v7626
          %v7628 = vmul.f32 %v7599, 1.442695
          %v7629 = vpow.pop %v7628
          %v7630 = vmul.f32 %v7600, 1.442695
          %v7631 = vpow.pop %v7630
          %v7632 = vmul.f32 %v7601, 1.442695
          %v7633 = vpow.pop %v7632
          %s7634 = scalar_lea.vmem [#allocation4], 384
          %v7635 = vld [vmem:[%s7634] sm:$0xff]
          %v7636 = vld [vmem:[%s7634 + $0x8] sm:$0xff]
          %v7637 = vld [vmem:[%s7634 + $0x10] sm:$0xff]
          %v7638 = vld [vmem:[%s7634 + $0x18] sm:$0xff]
          %v7639 = vld [vmem:[%s7634 + $0x20] sm:$0xff]
          %v7640 = vld [vmem:[%s7634 + $0x28] sm:$0xff]
          %v7641 = vld [vmem:[%s7634 + $0x30] sm:$0xff]
          %v7642 = vld [vmem:[%s7634 + $0x38] sm:$0xff]
          %v7643 = vld [vmem:[%s7634 + $0x40] sm:$0xff]
          %v7644 = vld [vmem:[%s7634 + $0x48] sm:$0xff]
          %v7645 = vld [vmem:[%s7634 + $0x50] sm:$0xff]
          %v7646 = vld [vmem:[%s7634 + $0x58] sm:$0xff]
          %v7647 = vld [vmem:[%s7634 + $0x60] sm:$0xff]
          %v7648 = vld [vmem:[%s7634 + $0x68] sm:$0xff]
          %v7649 = vld [vmem:[%s7634 + $0x70] sm:$0xff]
          %v7650 = vld [vmem:[%s7634 + $0x78] sm:$0xff]
          %v7651 = vmul.f32 %v7475, %v7635
          %v7652 = vmul.f32 %v7477, %v7636
          %v7653 = vmul.f32 %v7479, %v7637
          %v7654 = vmul.f32 %v7481, %v7638
          %v7655 = vmul.f32 %v7483, %v7639
          %v7656 = vmul.f32 %v7485, %v7640
          %v7657 = vmul.f32 %v7487, %v7641
          %v7658 = vmul.f32 %v7489, %v7642
          %v7659 = vmul.f32 %v7491, %v7643
          %v7660 = vmul.f32 %v7493, %v7644
          %v7661 = vmul.f32 %v7495, %v7645
          %v7662 = vmul.f32 %v7497, %v7646
          %v7663 = vmul.f32 %v7499, %v7647
          %v7664 = vmul.f32 %v7501, %v7648
          %v7665 = vmul.f32 %v7503, %v7649
          %v7666 = vmul.f32 %v7505, %v7650
          %7667 = vadd.xlane.f32.xlu0 %v7603
          %v7668 = vpop.xlane.xlu0 %7667
          %7669 = vadd.xlane.f32.xlu0 %v7605
          %v7670 = vpop.xlane.xlu0 %7669
          %7671 = vadd.xlane.f32.xlu0 %v7607
          %v7672 = vpop.xlane.xlu0 %7671
          %7673 = vadd.xlane.f32.xlu0 %v7609
          %v7674 = vpop.xlane.xlu0 %7673
          %7675 = vadd.xlane.f32.xlu0 %v7611
          %v7676 = vpop.xlane.xlu0 %7675
          %7677 = vadd.xlane.f32.xlu0 %v7613
          %v7678 = vpop.xlane.xlu0 %7677
          %7679 = vadd.xlane.f32.xlu0 %v7615
          %v7680 = vpop.xlane.xlu0 %7679
          %7681 = vadd.xlane.f32.xlu0 %v7617
          %v7682 = vpop.xlane.xlu0 %7681
          %7683 = vadd.xlane.f32.xlu0 %v7619
          %v7684 = vpop.xlane.xlu0 %7683
          %7685 = vadd.xlane.f32.xlu0 %v7621
          %v7686 = vpop.xlane.xlu0 %7685
          %7687 = vadd.xlane.f32.xlu0 %v7623
          %v7688 = vpop.xlane.xlu0 %7687
          %7689 = vadd.xlane.f32.xlu0 %v7625
          %v7690 = vpop.xlane.xlu0 %7689
          %7691 = vadd.xlane.f32.xlu0 %v7627
          %v7692 = vpop.xlane.xlu0 %7691
          %7693 = vadd.xlane.f32.xlu0 %v7629
          %v7694 = vpop.xlane.xlu0 %7693
          %7695 = vadd.xlane.f32.xlu0 %v7631
          %v7696 = vpop.xlane.xlu0 %7695
          %7697 = vadd.xlane.f32.xlu0 %v7633
          %v7698 = vpop.xlane.xlu0 %7697
          %v7699 = vadd.f32 %v7651, %v7668
          %v7700 = vadd.f32 %v7652, %v7670
          %v7701 = vadd.f32 %v7653, %v7672
          %v7702 = vadd.f32 %v7654, %v7674
          %v7703 = vadd.f32 %v7655, %v7676
          %v7704 = vadd.f32 %v7656, %v7678
          %v7705 = vadd.f32 %v7657, %v7680
          %v7706 = vadd.f32 %v7658, %v7682
          %v7707 = vadd.f32 %v7659, %v7684
          %v7708 = vadd.f32 %v7660, %v7686
          %v7709 = vadd.f32 %v7661, %v7688
          %v7710 = vadd.f32 %v7662, %v7690
          %v7711 = vadd.f32 %v7663, %v7692
          %v7712 = vadd.f32 %v7664, %v7694
          %v7713 = vadd.f32 %v7665, %v7696
          %v7714 = vadd.f32 %v7666, %v7698
          %7715 = vst.msk [vmem:[%s7634] sm:$0xff] %vm5236, %v7699
          %7716 = vst.msk [vmem:[%s7634 + $0x8] sm:$0xff] %vm5236, %v7700
          %7717 = vst.msk [vmem:[%s7634 + $0x10] sm:$0xff] %vm5236, %v7701
          %7718 = vst.msk [vmem:[%s7634 + $0x18] sm:$0xff] %vm5236, %v7702
          %7719 = vst.msk [vmem:[%s7634 + $0x20] sm:$0xff] %vm5236, %v7703
          %7720 = vst.msk [vmem:[%s7634 + $0x28] sm:$0xff] %vm5236, %v7704
          %7721 = vst.msk [vmem:[%s7634 + $0x30] sm:$0xff] %vm5236, %v7705
          %7722 = vst.msk [vmem:[%s7634 + $0x38] sm:$0xff] %vm5236, %v7706
          %7723 = vst.msk [vmem:[%s7634 + $0x40] sm:$0xff] %vm5236, %v7707
          %7724 = vst.msk [vmem:[%s7634 + $0x48] sm:$0xff] %vm5236, %v7708
          %7725 = vst.msk [vmem:[%s7634 + $0x50] sm:$0xff] %vm5236, %v7709
          %7726 = vst.msk [vmem:[%s7634 + $0x58] sm:$0xff] %vm5236, %v7710
          %7727 = vst.msk [vmem:[%s7634 + $0x60] sm:$0xff] %vm5236, %v7711
          %7728 = vst.msk [vmem:[%s7634 + $0x68] sm:$0xff] %vm5236, %v7712
          %7729 = vst.msk [vmem:[%s7634 + $0x70] sm:$0xff] %vm5236, %v7713
          %7730 = vst.msk [vmem:[%s7634 + $0x78] sm:$0xff] %vm5236, %v7714
          %v7731 = vpack.c.bf16 %v7605, %v7603
          %v7732 = vpack.c.bf16 %v7609, %v7607
          %v7733 = vpack.c.bf16 %v7613, %v7611
          %v7734 = vpack.c.bf16 %v7617, %v7615
          %v7735 = vpack.c.bf16 %v7621, %v7619
          %v7736 = vpack.c.bf16 %v7625, %v7623
          %v7737 = vpack.c.bf16 %v7629, %v7627
          %v7738 = vpack.c.bf16 %v7633, %v7631
          %7739 = vrot.lane.b32.xlu0 %v5277, 32
          %v7740 = vpop.permute.xlu0 %7739
          %7741 = vrot.lane.b32.xlu0 %v5278, 32
          %v7742 = vpop.permute.xlu0 %7741
          %7743 = vrot.lane.b32.xlu0 %v5279, 32
          %v7744 = vpop.permute.xlu0 %7743
          %7745 = vrot.lane.b32.xlu0 %v5280, 32
          %v7746 = vpop.permute.xlu0 %7745
          %7747 = vrot.lane.b32.xlu0 %v5281, 32
          %v7748 = vpop.permute.xlu0 %7747
          %7749 = vrot.lane.b32.xlu0 %v5282, 32
          %v7750 = vpop.permute.xlu0 %7749
          %7751 = vrot.lane.b32.xlu0 %v5283, 32
          %v7752 = vpop.permute.xlu0 %7751
          %7753 = vrot.lane.b32.xlu0 %v5284, 32
          %v7754 = vpop.permute.xlu0 %7753
          %7763 = vmatpush.bf16.msra.mxu0 %v7754
          %7764 = vmatpush.bf16.msra.mxu0 %v7752
          %7765 = vmatpush.bf16.msra.mxu0 %v7750
          %7766 = vmatpush.bf16.msra.mxu0 %v7748
          %7767 = vmatpush.bf16.msra.mxu0 %v7746
          %7768 = vmatpush.bf16.msra.mxu0 %v7744
          %7769 = vmatpush.bf16.msra.mxu0 %v7742
          %7770 = vmatpush.bf16.msra.mxu0 %v7740
          %7771 = vmatmul.bf16.gmra.mxu0 %v7731
          %v7772 = vpop.f32.mrf.mxu0
          %v7773 = vadd.f32 0.0, %v7772
          %v7774 = vpop.f32.mrf.mxu0
          %v7775 = vadd.f32 0.0, %v7774
          %7776 = vmatmul.bf16.gmra.mxu0 %v7732
          %v7777 = vpop.f32.mrf.mxu0
          %v7778 = vadd.f32 0.0, %v7777
          %v7779 = vpop.f32.mrf.mxu0
          %v7780 = vadd.f32 0.0, %v7779
          %7781 = vmatmul.bf16.gmra.mxu0 %v7733
          %v7782 = vpop.f32.mrf.mxu0
          %v7783 = vadd.f32 0.0, %v7782
          %v7784 = vpop.f32.mrf.mxu0
          %v7785 = vadd.f32 0.0, %v7784
          %7786 = vmatmul.bf16.gmra.mxu0 %v7734
          %v7787 = vpop.f32.mrf.mxu0
          %v7788 = vadd.f32 0.0, %v7787
          %v7789 = vpop.f32.mrf.mxu0
          %v7790 = vadd.f32 0.0, %v7789
          %7791 = vmatmul.bf16.gmra.mxu0 %v7735
          %v7792 = vpop.f32.mrf.mxu0
          %v7793 = vadd.f32 0.0, %v7792
          %v7794 = vpop.f32.mrf.mxu0
          %v7795 = vadd.f32 0.0, %v7794
          %7796 = vmatmul.bf16.gmra.mxu0 %v7736
          %v7797 = vpop.f32.mrf.mxu0
          %v7798 = vadd.f32 0.0, %v7797
          %v7799 = vpop.f32.mrf.mxu0
          %v7800 = vadd.f32 0.0, %v7799
          %7801 = vmatmul.bf16.gmra.mxu0 %v7737
          %v7802 = vpop.f32.mrf.mxu0
          %v7803 = vadd.f32 0.0, %v7802
          %v7804 = vpop.f32.mrf.mxu0
          %v7805 = vadd.f32 0.0, %v7804
          %7806 = vmatmul.bf16.gmra.mxu0 %v7738
          %v7807 = vpop.f32.mrf.mxu0
          %v7808 = vadd.f32 0.0, %v7807
          %v7809 = vpop.f32.mrf.mxu0
          %v7810 = vadd.f32 0.0, %v7809
          %7811 = vdwg.mxu0
          %v7812 = vld [vmem:[#allocation5] sm:$0xff]
          %v7813 = vld [vmem:[#allocation5 + $0x8] sm:$0xff]
          %v7814 = vld [vmem:[#allocation5 + $0x10] sm:$0xff]
          %v7815 = vld [vmem:[#allocation5 + $0x18] sm:$0xff]
          %v7816 = vld [vmem:[#allocation5 + $0x20] sm:$0xff]
          %v7817 = vld [vmem:[#allocation5 + $0x28] sm:$0xff]
          %v7818 = vld [vmem:[#allocation5 + $0x30] sm:$0xff]
          %v7819 = vld [vmem:[#allocation5 + $0x38] sm:$0xff]
          %v7820 = vld [vmem:[#allocation5 + $0x40] sm:$0xff]
          %v7821 = vld [vmem:[#allocation5 + $0x48] sm:$0xff]
          %v7822 = vld [vmem:[#allocation5 + $0x50] sm:$0xff]
          %v7823 = vld [vmem:[#allocation5 + $0x58] sm:$0xff]
          %v7824 = vld [vmem:[#allocation5 + $0x60] sm:$0xff]
          %v7825 = vld [vmem:[#allocation5 + $0x68] sm:$0xff]
          %v7826 = vld [vmem:[#allocation5 + $0x70] sm:$0xff]
          %v7827 = vld [vmem:[#allocation5 + $0x78] sm:$0xff]
          %7829 = vset.pattern.permute.xlu0 0
          %7830 = vperm.xlu0 %7829, %v7475
          %v7831 = vpop.permute.xlu0 %7830
          %7834 = vset.pattern.permute.xlu0 0
          %7835 = vperm.xlu0 %7834, %v7477
          %v7836 = vpop.permute.xlu0 %7835
          %7839 = vset.pattern.permute.xlu0 0
          %7840 = vperm.xlu0 %7839, %v7479
          %v7841 = vpop.permute.xlu0 %7840
          %7844 = vset.pattern.permute.xlu0 0
          %7845 = vperm.xlu0 %7844, %v7481
          %v7846 = vpop.permute.xlu0 %7845
          %7849 = vset.pattern.permute.xlu0 0
          %7850 = vperm.xlu0 %7849, %v7483
          %v7851 = vpop.permute.xlu0 %7850
          %7854 = vset.pattern.permute.xlu0 0
          %7855 = vperm.xlu0 %7854, %v7485
          %v7856 = vpop.permute.xlu0 %7855
          %7859 = vset.pattern.permute.xlu0 0
          %7860 = vperm.xlu0 %7859, %v7487
          %v7861 = vpop.permute.xlu0 %7860
          %7864 = vset.pattern.permute.xlu0 0
          %7865 = vperm.xlu0 %7864, %v7489
          %v7866 = vpop.permute.xlu0 %7865
          %7869 = vset.pattern.permute.xlu0 0
          %7870 = vperm.xlu0 %7869, %v7491
          %v7871 = vpop.permute.xlu0 %7870
          %7874 = vset.pattern.permute.xlu0 0
          %7875 = vperm.xlu0 %7874, %v7493
          %v7876 = vpop.permute.xlu0 %7875
          %7879 = vset.pattern.permute.xlu0 0
          %7880 = vperm.xlu0 %7879, %v7495
          %v7881 = vpop.permute.xlu0 %7880
          %7884 = vset.pattern.permute.xlu0 0
          %7885 = vperm.xlu0 %7884, %v7497
          %v7886 = vpop.permute.xlu0 %7885
          %7889 = vset.pattern.permute.xlu0 0
          %7890 = vperm.xlu0 %7889, %v7499
          %v7891 = vpop.permute.xlu0 %7890
          %7894 = vset.pattern.permute.xlu0 0
          %7895 = vperm.xlu0 %7894, %v7501
          %v7896 = vpop.permute.xlu0 %7895
          %7899 = vset.pattern.permute.xlu0 0
          %7900 = vperm.xlu0 %7899, %v7503
          %v7901 = vpop.permute.xlu0 %7900
          %7904 = vset.pattern.permute.xlu0 0
          %7905 = vperm.xlu0 %7904, %v7505
          %v7906 = vpop.permute.xlu0 %7905
          %v7908 = vmul.f32 %v7831, %v7812
          %v7909 = vmul.f32 %v7836, %v7813
          %v7910 = vmul.f32 %v7841, %v7814
          %v7911 = vmul.f32 %v7846, %v7815
          %v7912 = vmul.f32 %v7851, %v7816
          %v7913 = vmul.f32 %v7856, %v7817
          %v7914 = vmul.f32 %v7861, %v7818
          %v7915 = vmul.f32 %v7866, %v7819
          %v7916 = vmul.f32 %v7871, %v7820
          %v7917 = vmul.f32 %v7876, %v7821
          %v7918 = vmul.f32 %v7881, %v7822
          %v7919 = vmul.f32 %v7886, %v7823
          %v7920 = vmul.f32 %v7891, %v7824
          %v7921 = vmul.f32 %v7896, %v7825
          %v7922 = vmul.f32 %v7901, %v7826
          %v7923 = vmul.f32 %v7906, %v7827
          %7940 = vrot.lane.b32.xlu0 %v7773, 96
          %v7941 = vpop.permute.xlu0 %7940
          %7942 = vrot.lane.b32.xlu0 %v7775, 96
          %v7943 = vpop.permute.xlu0 %7942
          %7944 = vrot.lane.b32.xlu0 %v7778, 96
          %v7945 = vpop.permute.xlu0 %7944
          %7946 = vrot.lane.b32.xlu0 %v7780, 96
          %v7947 = vpop.permute.xlu0 %7946
          %7948 = vrot.lane.b32.xlu0 %v7783, 96
          %v7949 = vpop.permute.xlu0 %7948
          %7950 = vrot.lane.b32.xlu0 %v7785, 96
          %v7951 = vpop.permute.xlu0 %7950
          %7952 = vrot.lane.b32.xlu0 %v7788, 96
          %v7953 = vpop.permute.xlu0 %7952
          %7954 = vrot.lane.b32.xlu0 %v7790, 96
          %v7955 = vpop.permute.xlu0 %7954
          %7956 = vrot.lane.b32.xlu0 %v7793, 96
          %v7957 = vpop.permute.xlu0 %7956
          %7958 = vrot.lane.b32.xlu0 %v7795, 96
          %v7959 = vpop.permute.xlu0 %7958
          %7960 = vrot.lane.b32.xlu0 %v7798, 96
          %v7961 = vpop.permute.xlu0 %7960
          %7962 = vrot.lane.b32.xlu0 %v7800, 96
          %v7963 = vpop.permute.xlu0 %7962
          %7964 = vrot.lane.b32.xlu0 %v7803, 96
          %v7965 = vpop.permute.xlu0 %7964
          %7966 = vrot.lane.b32.xlu0 %v7805, 96
          %v7967 = vpop.permute.xlu0 %7966
          %7968 = vrot.lane.b32.xlu0 %v7808, 96
          %v7969 = vpop.permute.xlu0 %7968
          %7970 = vrot.lane.b32.xlu0 %v7810, 96
          %v7971 = vpop.permute.xlu0 %7970
          %v7988 = vadd.f32 %v7908, %v7941
          %v7989 = vadd.f32 %v7909, %v7943
          %v7990 = vadd.f32 %v7910, %v7945
          %v7991 = vadd.f32 %v7911, %v7947
          %v7992 = vadd.f32 %v7912, %v7949
          %v7993 = vadd.f32 %v7913, %v7951
          %v7994 = vadd.f32 %v7914, %v7953
          %v7995 = vadd.f32 %v7915, %v7955
          %v7996 = vadd.f32 %v7916, %v7957
          %v7997 = vadd.f32 %v7917, %v7959
          %v7998 = vadd.f32 %v7918, %v7961
          %v7999 = vadd.f32 %v7919, %v7963
          %v8000 = vadd.f32 %v7920, %v7965
          %v8001 = vadd.f32 %v7921, %v7967
          %v8002 = vadd.f32 %v7922, %v7969
          %v8003 = vadd.f32 %v7923, %v7971
          %vm8004 = vcmask 1048320
          %8005 = vst.msk [vmem:[#allocation5] sm:$0xff] %vm8004, %v7988
          %8006 = vst.msk [vmem:[#allocation5 + $0x8] sm:$0xff] %vm8004, %v7989
          %8007 = vst.msk [vmem:[#allocation5 + $0x10] sm:$0xff] %vm8004, %v7990
          %8008 = vst.msk [vmem:[#allocation5 + $0x18] sm:$0xff] %vm8004, %v7991
          %8009 = vst.msk [vmem:[#allocation5 + $0x20] sm:$0xff] %vm8004, %v7992
          %8010 = vst.msk [vmem:[#allocation5 + $0x28] sm:$0xff] %vm8004, %v7993
          %8011 = vst.msk [vmem:[#allocation5 + $0x30] sm:$0xff] %vm8004, %v7994
          %8012 = vst.msk [vmem:[#allocation5 + $0x38] sm:$0xff] %vm8004, %v7995
          %8013 = vst.msk [vmem:[#allocation5 + $0x40] sm:$0xff] %vm8004, %v7996
          %8014 = vst.msk [vmem:[#allocation5 + $0x48] sm:$0xff] %vm8004, %v7997
          %8015 = vst.msk [vmem:[#allocation5 + $0x50] sm:$0xff] %vm8004, %v7998
          %8016 = vst.msk [vmem:[#allocation5 + $0x58] sm:$0xff] %vm8004, %v7999
          %8017 = vst.msk [vmem:[#allocation5 + $0x60] sm:$0xff] %vm8004, %v8000
          %8018 = vst.msk [vmem:[#allocation5 + $0x68] sm:$0xff] %vm8004, %v8001
          %8019 = vst.msk [vmem:[#allocation5 + $0x70] sm:$0xff] %vm8004, %v8002
          %8020 = vst.msk [vmem:[#allocation5 + $0x78] sm:$0xff] %vm8004, %v8003
          %8021 = vst.msk [vmem:[%s7393] sm:$0xff] %vm5236, %v7442
          %8022 = vst.msk [vmem:[%s7393 + $0x8] sm:$0xff] %vm5236, %v7443
          %8023 = vst.msk [vmem:[%s7393 + $0x10] sm:$0xff] %vm5236, %v7444
          %8024 = vst.msk [vmem:[%s7393 + $0x18] sm:$0xff] %vm5236, %v7445
          %8025 = vst.msk [vmem:[%s7393 + $0x20] sm:$0xff] %vm5236, %v7446
          %8026 = vst.msk [vmem:[%s7393 + $0x28] sm:$0xff] %vm5236, %v7447
          %8027 = vst.msk [vmem:[%s7393 + $0x30] sm:$0xff] %vm5236, %v7448
          %8028 = vst.msk [vmem:[%s7393 + $0x38] sm:$0xff] %vm5236, %v7449
          %8029 = vst.msk [vmem:[%s7393 + $0x40] sm:$0xff] %vm5236, %v7450
          %8030 = vst.msk [vmem:[%s7393 + $0x48] sm:$0xff] %vm5236, %v7451
          %8031 = vst.msk [vmem:[%s7393 + $0x50] sm:$0xff] %vm5236, %v7452
          %8032 = vst.msk [vmem:[%s7393 + $0x58] sm:$0xff] %vm5236, %v7453
          %8033 = vst.msk [vmem:[%s7393 + $0x60] sm:$0xff] %vm5236, %v7454
          %8034 = vst.msk [vmem:[%s7393 + $0x68] sm:$0xff] %vm5236, %v7455
          %8035 = vst.msk [vmem:[%s7393 + $0x70] sm:$0xff] %vm5236, %v7456
          %8036 = vst.msk [vmem:[%s7393 + $0x78] sm:$0xff] %vm5236, %v7457
          %v8037 = vld [vmem:[#allocation4] sm:$0xff]
          %v8038 = vld [vmem:[#allocation4 + $0x8] sm:$0xff]
          %v8039 = vld [vmem:[#allocation4 + $0x10] sm:$0xff]
          %v8040 = vld [vmem:[#allocation4 + $0x18] sm:$0xff]
          %v8041 = vld [vmem:[#allocation4 + $0x20] sm:$0xff]
          %v8042 = vld [vmem:[#allocation4 + $0x28] sm:$0xff]
          %v8043 = vld [vmem:[#allocation4 + $0x30] sm:$0xff]
          %v8044 = vld [vmem:[#allocation4 + $0x38] sm:$0xff]
          %v8045 = vld [vmem:[#allocation4 + $0x40] sm:$0xff]
          %v8046 = vld [vmem:[#allocation4 + $0x48] sm:$0xff]
          %v8047 = vld [vmem:[#allocation4 + $0x50] sm:$0xff]
          %v8048 = vld [vmem:[#allocation4 + $0x58] sm:$0xff]
          %v8049 = vld [vmem:[#allocation4 + $0x60] sm:$0xff]
          %v8050 = vld [vmem:[#allocation4 + $0x68] sm:$0xff]
          %v8051 = vld [vmem:[#allocation4 + $0x70] sm:$0xff]
          %v8052 = vld [vmem:[#allocation4 + $0x78] sm:$0xff]
          %v8053 = vrcp.pop %v8037
          %v8054 = vrcp.pop %v8038
          %v8055 = vrcp.pop %v8039
          %v8056 = vrcp.pop %v8040
          %v8057 = vrcp.pop %v8041
          %v8058 = vrcp.pop %v8042
          %v8059 = vrcp.pop %v8043
          %v8060 = vrcp.pop %v8044
          %v8061 = vrcp.pop %v8045
          %v8062 = vrcp.pop %v8046
          %v8063 = vrcp.pop %v8047
          %v8064 = vrcp.pop %v8048
          %v8065 = vrcp.pop %v8049
          %v8066 = vrcp.pop %v8050
          %v8067 = vrcp.pop %v8051
          %v8068 = vrcp.pop %v8052
          %v8069 = vld [vmem:[#allocation5] sm:$0xff]
          %v8070 = vld [vmem:[#allocation5 + $0x8] sm:$0xff]
          %v8071 = vld [vmem:[#allocation5 + $0x10] sm:$0xff]
          %v8072 = vld [vmem:[#allocation5 + $0x18] sm:$0xff]
          %v8073 = vld [vmem:[#allocation5 + $0x20] sm:$0xff]
          %v8074 = vld [vmem:[#allocation5 + $0x28] sm:$0xff]
          %v8075 = vld [vmem:[#allocation5 + $0x30] sm:$0xff]
          %v8076 = vld [vmem:[#allocation5 + $0x38] sm:$0xff]
          %v8077 = vld [vmem:[#allocation5 + $0x40] sm:$0xff]
          %v8078 = vld [vmem:[#allocation5 + $0x48] sm:$0xff]
          %v8079 = vld [vmem:[#allocation5 + $0x50] sm:$0xff]
          %v8080 = vld [vmem:[#allocation5 + $0x58] sm:$0xff]
          %v8081 = vld [vmem:[#allocation5 + $0x60] sm:$0xff]
          %v8082 = vld [vmem:[#allocation5 + $0x68] sm:$0xff]
          %v8083 = vld [vmem:[#allocation5 + $0x70] sm:$0xff]
          %v8084 = vld [vmem:[#allocation5 + $0x78] sm:$0xff]
          %8086 = vset.pattern.permute.xlu0 0
          %8087 = vperm.xlu0 %8086, %v8053
          %v8088 = vpop.permute.xlu0 %8087
          %8091 = vset.pattern.permute.xlu0 0
          %8092 = vperm.xlu0 %8091, %v8054
          %v8093 = vpop.permute.xlu0 %8092
          %8096 = vset.pattern.permute.xlu0 0
          %8097 = vperm.xlu0 %8096, %v8055
          %v8098 = vpop.permute.xlu0 %8097
          %8101 = vset.pattern.permute.xlu0 0
          %8102 = vperm.xlu0 %8101, %v8056
          %v8103 = vpop.permute.xlu0 %8102
          %8106 = vset.pattern.permute.xlu0 0
          %8107 = vperm.xlu0 %8106, %v8057
          %v8108 = vpop.permute.xlu0 %8107
          %8111 = vset.pattern.permute.xlu0 0
          %8112 = vperm.xlu0 %8111, %v8058
          %v8113 = vpop.permute.xlu0 %8112
          %8116 = vset.pattern.permute.xlu0 0
          %8117 = vperm.xlu0 %8116, %v8059
          %v8118 = vpop.permute.xlu0 %8117
          %8121 = vset.pattern.permute.xlu0 0
          %8122 = vperm.xlu0 %8121, %v8060
          %v8123 = vpop.permute.xlu0 %8122
          %8126 = vset.pattern.permute.xlu0 0
          %8127 = vperm.xlu0 %8126, %v8061
          %v8128 = vpop.permute.xlu0 %8127
          %8131 = vset.pattern.permute.xlu0 0
          %8132 = vperm.xlu0 %8131, %v8062
          %v8133 = vpop.permute.xlu0 %8132
          %8136 = vset.pattern.permute.xlu0 0
          %8137 = vperm.xlu0 %8136, %v8063
          %v8138 = vpop.permute.xlu0 %8137
          %8141 = vset.pattern.permute.xlu0 0
          %8142 = vperm.xlu0 %8141, %v8064
          %v8143 = vpop.permute.xlu0 %8142
          %8146 = vset.pattern.permute.xlu0 0
          %8147 = vperm.xlu0 %8146, %v8065
          %v8148 = vpop.permute.xlu0 %8147
          %8151 = vset.pattern.permute.xlu0 0
          %8152 = vperm.xlu0 %8151, %v8066
          %v8153 = vpop.permute.xlu0 %8152
          %8156 = vset.pattern.permute.xlu0 0
          %8157 = vperm.xlu0 %8156, %v8067
          %v8158 = vpop.permute.xlu0 %8157
          %8161 = vset.pattern.permute.xlu0 0
          %8162 = vperm.xlu0 %8161, %v8068
          %v8163 = vpop.permute.xlu0 %8162
          %v8165 = vmul.f32 %v8069, %v8088
          %v8166 = vmul.f32 %v8070, %v8093
          %v8167 = vmul.f32 %v8071, %v8098
          %v8168 = vmul.f32 %v8072, %v8103
          %v8169 = vmul.f32 %v8073, %v8108
          %v8170 = vmul.f32 %v8074, %v8113
          %v8171 = vmul.f32 %v8075, %v8118
          %v8172 = vmul.f32 %v8076, %v8123
          %v8173 = vmul.f32 %v8077, %v8128
          %v8174 = vmul.f32 %v8078, %v8133
          %v8175 = vmul.f32 %v8079, %v8138
          %v8176 = vmul.f32 %v8080, %v8143
          %v8177 = vmul.f32 %v8081, %v8148
          %v8178 = vmul.f32 %v8082, %v8153
          %v8179 = vmul.f32 %v8083, %v8158
          %v8180 = vmul.f32 %v8084, %v8163
          %8181 = vst.msk [vmem:[#allocation5] sm:$0xff] %vm4800, %v8165
          %8182 = vst.msk [vmem:[#allocation5 + $0x8] sm:$0xff] %vm4800, %v8166
          %8183 = vst.msk [vmem:[#allocation5 + $0x10] sm:$0xff] %vm4800, %v8167
          %8184 = vst.msk [vmem:[#allocation5 + $0x18] sm:$0xff] %vm4800, %v8168
          %8185 = vst.msk [vmem:[#allocation5 + $0x20] sm:$0xff] %vm4800, %v8169
          %8186 = vst.msk [vmem:[#allocation5 + $0x28] sm:$0xff] %vm4800, %v8170
          %8187 = vst.msk [vmem:[#allocation5 + $0x30] sm:$0xff] %vm4800, %v8171
          %8188 = vst.msk [vmem:[#allocation5 + $0x38] sm:$0xff] %vm4800, %v8172
          %8189 = vst.msk [vmem:[#allocation5 + $0x40] sm:$0xff] %vm4800, %v8173
          %8190 = vst.msk [vmem:[#allocation5 + $0x48] sm:$0xff] %vm4800, %v8174
          %8191 = vst.msk [vmem:[#allocation5 + $0x50] sm:$0xff] %vm4800, %v8175
          %8192 = vst.msk [vmem:[#allocation5 + $0x58] sm:$0xff] %vm4800, %v8176
          %8193 = vst.msk [vmem:[#allocation5 + $0x60] sm:$0xff] %vm4800, %v8177
          %8194 = vst.msk [vmem:[#allocation5 + $0x68] sm:$0xff] %vm4800, %v8178
          %8195 = vst.msk [vmem:[#allocation5 + $0x70] sm:$0xff] %vm4800, %v8179
          %8196 = vst.msk [vmem:[#allocation5 + $0x78] sm:$0xff] %vm4800, %v8180
          %v8197 = vld [vmem:[%s5944] sm:$0xff]
          %v8198 = vld [vmem:[%s5944 + $0x8] sm:$0xff]
          %v8199 = vld [vmem:[%s5944 + $0x10] sm:$0xff]
          %v8200 = vld [vmem:[%s5944 + $0x18] sm:$0xff]
          %v8201 = vld [vmem:[%s5944 + $0x20] sm:$0xff]
          %v8202 = vld [vmem:[%s5944 + $0x28] sm:$0xff]
          %v8203 = vld [vmem:[%s5944 + $0x30] sm:$0xff]
          %v8204 = vld [vmem:[%s5944 + $0x38] sm:$0xff]
          %v8205 = vld [vmem:[%s5944 + $0x40] sm:$0xff]
          %v8206 = vld [vmem:[%s5944 + $0x48] sm:$0xff]
          %v8207 = vld [vmem:[%s5944 + $0x50] sm:$0xff]
          %v8208 = vld [vmem:[%s5944 + $0x58] sm:$0xff]
          %v8209 = vld [vmem:[%s5944 + $0x60] sm:$0xff]
          %v8210 = vld [vmem:[%s5944 + $0x68] sm:$0xff]
          %v8211 = vld [vmem:[%s5944 + $0x70] sm:$0xff]
          %v8212 = vld [vmem:[%s5944 + $0x78] sm:$0xff]
          %v8213 = vrcp.pop %v8197
          %v8214 = vrcp.pop %v8198
          %v8215 = vrcp.pop %v8199
          %v8216 = vrcp.pop %v8200
          %v8217 = vrcp.pop %v8201
          %v8218 = vrcp.pop %v8202
          %v8219 = vrcp.pop %v8203
          %v8220 = vrcp.pop %v8204
          %v8221 = vrcp.pop %v8205
          %v8222 = vrcp.pop %v8206
          %v8223 = vrcp.pop %v8207
          %v8224 = vrcp.pop %v8208
          %v8225 = vrcp.pop %v8209
          %v8226 = vrcp.pop %v8210
          %v8227 = vrcp.pop %v8211
          %v8228 = vrcp.pop %v8212
          %v8229 = vld [vmem:[#allocation5] sm:$0xff]
          %v8230 = vld [vmem:[#allocation5 + $0x8] sm:$0xff]
          %v8231 = vld [vmem:[#allocation5 + $0x10] sm:$0xff]
          %v8232 = vld [vmem:[#allocation5 + $0x18] sm:$0xff]
          %v8233 = vld [vmem:[#allocation5 + $0x20] sm:$0xff]
          %v8234 = vld [vmem:[#allocation5 + $0x28] sm:$0xff]
          %v8235 = vld [vmem:[#allocation5 + $0x30] sm:$0xff]
          %v8236 = vld [vmem:[#allocation5 + $0x38] sm:$0xff]
          %v8237 = vld [vmem:[#allocation5 + $0x40] sm:$0xff]
          %v8238 = vld [vmem:[#allocation5 + $0x48] sm:$0xff]
          %v8239 = vld [vmem:[#allocation5 + $0x50] sm:$0xff]
          %v8240 = vld [vmem:[#allocation5 + $0x58] sm:$0xff]
          %v8241 = vld [vmem:[#allocation5 + $0x60] sm:$0xff]
          %v8242 = vld [vmem:[#allocation5 + $0x68] sm:$0xff]
          %v8243 = vld [vmem:[#allocation5 + $0x70] sm:$0xff]
          %v8244 = vld [vmem:[#allocation5 + $0x78] sm:$0xff]
          %8246 = vset.pattern.permute.xlu0 0
          %8247 = vperm.xlu0 %8246, %v8213
          %v8248 = vpop.permute.xlu0 %8247
          %8251 = vset.pattern.permute.xlu0 0
          %8252 = vperm.xlu0 %8251, %v8214
          %v8253 = vpop.permute.xlu0 %8252
          %8256 = vset.pattern.permute.xlu0 0
          %8257 = vperm.xlu0 %8256, %v8215
          %v8258 = vpop.permute.xlu0 %8257
          %8261 = vset.pattern.permute.xlu0 0
          %8262 = vperm.xlu0 %8261, %v8216
          %v8263 = vpop.permute.xlu0 %8262
          %8266 = vset.pattern.permute.xlu0 0
          %8267 = vperm.xlu0 %8266, %v8217
          %v8268 = vpop.permute.xlu0 %8267
          %8271 = vset.pattern.permute.xlu0 0
          %8272 = vperm.xlu0 %8271, %v8218
          %v8273 = vpop.permute.xlu0 %8272
          %8276 = vset.pattern.permute.xlu0 0
          %8277 = vperm.xlu0 %8276, %v8219
          %v8278 = vpop.permute.xlu0 %8277
          %8281 = vset.pattern.permute.xlu0 0
          %8282 = vperm.xlu0 %8281, %v8220
          %v8283 = vpop.permute.xlu0 %8282
          %8286 = vset.pattern.permute.xlu0 0
          %8287 = vperm.xlu0 %8286, %v8221
          %v8288 = vpop.permute.xlu0 %8287
          %8291 = vset.pattern.permute.xlu0 0
          %8292 = vperm.xlu0 %8291, %v8222
          %v8293 = vpop.permute.xlu0 %8292
          %8296 = vset.pattern.permute.xlu0 0
          %8297 = vperm.xlu0 %8296, %v8223
          %v8298 = vpop.permute.xlu0 %8297
          %8301 = vset.pattern.permute.xlu0 0
          %8302 = vperm.xlu0 %8301, %v8224
          %v8303 = vpop.permute.xlu0 %8302
          %8306 = vset.pattern.permute.xlu0 0
          %8307 = vperm.xlu0 %8306, %v8225
          %v8308 = vpop.permute.xlu0 %8307
          %8311 = vset.pattern.permute.xlu0 0
          %8312 = vperm.xlu0 %8311, %v8226
          %v8313 = vpop.permute.xlu0 %8312
          %8316 = vset.pattern.permute.xlu0 0
          %8317 = vperm.xlu0 %8316, %v8227
          %v8318 = vpop.permute.xlu0 %8317
          %8321 = vset.pattern.permute.xlu0 0
          %8322 = vperm.xlu0 %8321, %v8228
          %v8323 = vpop.permute.xlu0 %8322
          %v8325 = vmul.f32 %v8229, %v8248
          %v8326 = vmul.f32 %v8230, %v8253
          %v8327 = vmul.f32 %v8231, %v8258
          %v8328 = vmul.f32 %v8232, %v8263
          %v8329 = vmul.f32 %v8233, %v8268
          %v8330 = vmul.f32 %v8234, %v8273
          %v8331 = vmul.f32 %v8235, %v8278
          %v8332 = vmul.f32 %v8236, %v8283
          %v8333 = vmul.f32 %v8237, %v8288
          %v8334 = vmul.f32 %v8238, %v8293
          %v8335 = vmul.f32 %v8239, %v8298
          %v8336 = vmul.f32 %v8240, %v8303
          %v8337 = vmul.f32 %v8241, %v8308
          %v8338 = vmul.f32 %v8242, %v8313
          %v8339 = vmul.f32 %v8243, %v8318
          %v8340 = vmul.f32 %v8244, %v8323
          %8341 = vst.msk [vmem:[#allocation5] sm:$0xff] %vm6314, %v8325
          %8342 = vst.msk [vmem:[#allocation5 + $0x8] sm:$0xff] %vm6314, %v8326
          %8343 = vst.msk [vmem:[#allocation5 + $0x10] sm:$0xff] %vm6314, %v8327
          %8344 = vst.msk [vmem:[#allocation5 + $0x18] sm:$0xff] %vm6314, %v8328
          %8345 = vst.msk [vmem:[#allocation5 + $0x20] sm:$0xff] %vm6314, %v8329
          %8346 = vst.msk [vmem:[#allocation5 + $0x28] sm:$0xff] %vm6314, %v8330
          %8347 = vst.msk [vmem:[#allocation5 + $0x30] sm:$0xff] %vm6314, %v8331
          %8348 = vst.msk [vmem:[#allocation5 + $0x38] sm:$0xff] %vm6314, %v8332
          %8349 = vst.msk [vmem:[#allocation5 + $0x40] sm:$0xff] %vm6314, %v8333
          %8350 = vst.msk [vmem:[#allocation5 + $0x48] sm:$0xff] %vm6314, %v8334
          %8351 = vst.msk [vmem:[#allocation5 + $0x50] sm:$0xff] %vm6314, %v8335
          %8352 = vst.msk [vmem:[#allocation5 + $0x58] sm:$0xff] %vm6314, %v8336
          %8353 = vst.msk [vmem:[#allocation5 + $0x60] sm:$0xff] %vm6314, %v8337
          %8354 = vst.msk [vmem:[#allocation5 + $0x68] sm:$0xff] %vm6314, %v8338
          %8355 = vst.msk [vmem:[#allocation5 + $0x70] sm:$0xff] %vm6314, %v8339
          %8356 = vst.msk [vmem:[#allocation5 + $0x78] sm:$0xff] %vm6314, %v8340
          %v8357 = vld [vmem:[%s6789] sm:$0xff]
          %v8358 = vld [vmem:[%s6789 + $0x8] sm:$0xff]
          %v8359 = vld [vmem:[%s6789 + $0x10] sm:$0xff]
          %v8360 = vld [vmem:[%s6789 + $0x18] sm:$0xff]
          %v8361 = vld [vmem:[%s6789 + $0x20] sm:$0xff]
          %v8362 = vld [vmem:[%s6789 + $0x28] sm:$0xff]
          %v8363 = vld [vmem:[%s6789 + $0x30] sm:$0xff]
          %v8364 = vld [vmem:[%s6789 + $0x38] sm:$0xff]
          %v8365 = vld [vmem:[%s6789 + $0x40] sm:$0xff]
          %v8366 = vld [vmem:[%s6789 + $0x48] sm:$0xff]
          %v8367 = vld [vmem:[%s6789 + $0x50] sm:$0xff]
          %v8368 = vld [vmem:[%s6789 + $0x58] sm:$0xff]
          %v8369 = vld [vmem:[%s6789 + $0x60] sm:$0xff]
          %v8370 = vld [vmem:[%s6789 + $0x68] sm:$0xff]
          %v8371 = vld [vmem:[%s6789 + $0x70] sm:$0xff]
          %v8372 = vld [vmem:[%s6789 + $0x78] sm:$0xff]
          %v8373 = vrcp.pop %v8357
          %v8374 = vrcp.pop %v8358
          %v8375 = vrcp.pop %v8359
          %v8376 = vrcp.pop %v8360
          %v8377 = vrcp.pop %v8361
          %v8378 = vrcp.pop %v8362
          %v8379 = vrcp.pop %v8363
          %v8380 = vrcp.pop %v8364
          %v8381 = vrcp.pop %v8365
          %v8382 = vrcp.pop %v8366
          %v8383 = vrcp.pop %v8367
          %v8384 = vrcp.pop %v8368
          %v8385 = vrcp.pop %v8369
          %v8386 = vrcp.pop %v8370
          %v8387 = vrcp.pop %v8371
          %v8388 = vrcp.pop %v8372
          %v8389 = vld [vmem:[#allocation5] sm:$0xff]
          %v8390 = vld [vmem:[#allocation5 + $0x8] sm:$0xff]
          %v8391 = vld [vmem:[#allocation5 + $0x10] sm:$0xff]
          %v8392 = vld [vmem:[#allocation5 + $0x18] sm:$0xff]
          %v8393 = vld [vmem:[#allocation5 + $0x20] sm:$0xff]
          %v8394 = vld [vmem:[#allocation5 + $0x28] sm:$0xff]
          %v8395 = vld [vmem:[#allocation5 + $0x30] sm:$0xff]
          %v8396 = vld [vmem:[#allocation5 + $0x38] sm:$0xff]
          %v8397 = vld [vmem:[#allocation5 + $0x40] sm:$0xff]
          %v8398 = vld [vmem:[#allocation5 + $0x48] sm:$0xff]
          %v8399 = vld [vmem:[#allocation5 + $0x50] sm:$0xff]
          %v8400 = vld [vmem:[#allocation5 + $0x58] sm:$0xff]
          %v8401 = vld [vmem:[#allocation5 + $0x60] sm:$0xff]
          %v8402 = vld [vmem:[#allocation5 + $0x68] sm:$0xff]
          %v8403 = vld [vmem:[#allocation5 + $0x70] sm:$0xff]
          %v8404 = vld [vmem:[#allocation5 + $0x78] sm:$0xff]
          %8406 = vset.pattern.permute.xlu0 0
          %8407 = vperm.xlu0 %8406, %v8373
          %v8408 = vpop.permute.xlu0 %8407
          %8411 = vset.pattern.permute.xlu0 0
          %8412 = vperm.xlu0 %8411, %v8374
          %v8413 = vpop.permute.xlu0 %8412
          %8416 = vset.pattern.permute.xlu0 0
          %8417 = vperm.xlu0 %8416, %v8375
          %v8418 = vpop.permute.xlu0 %8417
          %8421 = vset.pattern.permute.xlu0 0
          %8422 = vperm.xlu0 %8421, %v8376
          %v8423 = vpop.permute.xlu0 %8422
          %8426 = vset.pattern.permute.xlu0 0
          %8427 = vperm.xlu0 %8426, %v8377
          %v8428 = vpop.permute.xlu0 %8427
          %8431 = vset.pattern.permute.xlu0 0
          %8432 = vperm.xlu0 %8431, %v8378
          %v8433 = vpop.permute.xlu0 %8432
          %8436 = vset.pattern.permute.xlu0 0
          %8437 = vperm.xlu0 %8436, %v8379
          %v8438 = vpop.permute.xlu0 %8437
          %8441 = vset.pattern.permute.xlu0 0
          %8442 = vperm.xlu0 %8441, %v8380
          %v8443 = vpop.permute.xlu0 %8442
          %8446 = vset.pattern.permute.xlu0 0
          %8447 = vperm.xlu0 %8446, %v8381
          %v8448 = vpop.permute.xlu0 %8447
          %8451 = vset.pattern.permute.xlu0 0
          %8452 = vperm.xlu0 %8451, %v8382
          %v8453 = vpop.permute.xlu0 %8452
          %8456 = vset.pattern.permute.xlu0 0
          %8457 = vperm.xlu0 %8456, %v8383
          %v8458 = vpop.permute.xlu0 %8457
          %8461 = vset.pattern.permute.xlu0 0
          %8462 = vperm.xlu0 %8461, %v8384
          %v8463 = vpop.permute.xlu0 %8462
          %8466 = vset.pattern.permute.xlu0 0
          %8467 = vperm.xlu0 %8466, %v8385
          %v8468 = vpop.permute.xlu0 %8467
          %8471 = vset.pattern.permute.xlu0 0
          %8472 = vperm.xlu0 %8471, %v8386
          %v8473 = vpop.permute.xlu0 %8472
          %8476 = vset.pattern.permute.xlu0 0
          %8477 = vperm.xlu0 %8476, %v8387
          %v8478 = vpop.permute.xlu0 %8477
          %8481 = vset.pattern.permute.xlu0 0
          %8482 = vperm.xlu0 %8481, %v8388
          %v8483 = vpop.permute.xlu0 %8482
          %v8485 = vmul.f32 %v8389, %v8408
          %v8486 = vmul.f32 %v8390, %v8413
          %v8487 = vmul.f32 %v8391, %v8418
          %v8488 = vmul.f32 %v8392, %v8423
          %v8489 = vmul.f32 %v8393, %v8428
          %v8490 = vmul.f32 %v8394, %v8433
          %v8491 = vmul.f32 %v8395, %v8438
          %v8492 = vmul.f32 %v8396, %v8443
          %v8493 = vmul.f32 %v8397, %v8448
          %v8494 = vmul.f32 %v8398, %v8453
          %v8495 = vmul.f32 %v8399, %v8458
          %v8496 = vmul.f32 %v8400, %v8463
          %v8497 = vmul.f32 %v8401, %v8468
          %v8498 = vmul.f32 %v8402, %v8473
          %v8499 = vmul.f32 %v8403, %v8478
          %v8500 = vmul.f32 %v8404, %v8483
          %8501 = vst.msk [vmem:[#allocation5] sm:$0xff] %vm7159, %v8485
          %8502 = vst.msk [vmem:[#allocation5 + $0x8] sm:$0xff] %vm7159, %v8486
          %8503 = vst.msk [vmem:[#allocation5 + $0x10] sm:$0xff] %vm7159, %v8487
          %8504 = vst.msk [vmem:[#allocation5 + $0x18] sm:$0xff] %vm7159, %v8488
          %8505 = vst.msk [vmem:[#allocation5 + $0x20] sm:$0xff] %vm7159, %v8489
          %8506 = vst.msk [vmem:[#allocation5 + $0x28] sm:$0xff] %vm7159, %v8490
          %8507 = vst.msk [vmem:[#allocation5 + $0x30] sm:$0xff] %vm7159, %v8491
          %8508 = vst.msk [vmem:[#allocation5 + $0x38] sm:$0xff] %vm7159, %v8492
          %8509 = vst.msk [vmem:[#allocation5 + $0x40] sm:$0xff] %vm7159, %v8493
          %8510 = vst.msk [vmem:[#allocation5 + $0x48] sm:$0xff] %vm7159, %v8494
          %8511 = vst.msk [vmem:[#allocation5 + $0x50] sm:$0xff] %vm7159, %v8495
          %8512 = vst.msk [vmem:[#allocation5 + $0x58] sm:$0xff] %vm7159, %v8496
          %8513 = vst.msk [vmem:[#allocation5 + $0x60] sm:$0xff] %vm7159, %v8497
          %8514 = vst.msk [vmem:[#allocation5 + $0x68] sm:$0xff] %vm7159, %v8498
          %8515 = vst.msk [vmem:[#allocation5 + $0x70] sm:$0xff] %vm7159, %v8499
          %8516 = vst.msk [vmem:[#allocation5 + $0x78] sm:$0xff] %vm7159, %v8500
          %v8517 = vld [vmem:[%s7634] sm:$0xff]
          %v8518 = vld [vmem:[%s7634 + $0x8] sm:$0xff]
          %v8519 = vld [vmem:[%s7634 + $0x10] sm:$0xff]
          %v8520 = vld [vmem:[%s7634 + $0x18] sm:$0xff]
          %v8521 = vld [vmem:[%s7634 + $0x20] sm:$0xff]
          %v8522 = vld [vmem:[%s7634 + $0x28] sm:$0xff]
          %v8523 = vld [vmem:[%s7634 + $0x30] sm:$0xff]
          %v8524 = vld [vmem:[%s7634 + $0x38] sm:$0xff]
          %v8525 = vld [vmem:[%s7634 + $0x40] sm:$0xff]
          %v8526 = vld [vmem:[%s7634 + $0x48] sm:$0xff]
          %v8527 = vld [vmem:[%s7634 + $0x50] sm:$0xff]
          %v8528 = vld [vmem:[%s7634 + $0x58] sm:$0xff]
          %v8529 = vld [vmem:[%s7634 + $0x60] sm:$0xff]
          %v8530 = vld [vmem:[%s7634 + $0x68] sm:$0xff]
          %v8531 = vld [vmem:[%s7634 + $0x70] sm:$0xff]
          %v8532 = vld [vmem:[%s7634 + $0x78] sm:$0xff]
          %v8533 = vrcp.pop %v8517
          %v8534 = vrcp.pop %v8518
          %v8535 = vrcp.pop %v8519
          %v8536 = vrcp.pop %v8520
          %v8537 = vrcp.pop %v8521
          %v8538 = vrcp.pop %v8522
          %v8539 = vrcp.pop %v8523
          %v8540 = vrcp.pop %v8524
          %v8541 = vrcp.pop %v8525
          %v8542 = vrcp.pop %v8526
          %v8543 = vrcp.pop %v8527
          %v8544 = vrcp.pop %v8528
          %v8545 = vrcp.pop %v8529
          %v8546 = vrcp.pop %v8530
          %v8547 = vrcp.pop %v8531
          %v8548 = vrcp.pop %v8532
          %v8549 = vld [vmem:[#allocation5] sm:$0xff]
          %v8550 = vld [vmem:[#allocation5 + $0x8] sm:$0xff]
          %v8551 = vld [vmem:[#allocation5 + $0x10] sm:$0xff]
          %v8552 = vld [vmem:[#allocation5 + $0x18] sm:$0xff]
          %v8553 = vld [vmem:[#allocation5 + $0x20] sm:$0xff]
          %v8554 = vld [vmem:[#allocation5 + $0x28] sm:$0xff]
          %v8555 = vld [vmem:[#allocation5 + $0x30] sm:$0xff]
          %v8556 = vld [vmem:[#allocation5 + $0x38] sm:$0xff]
          %v8557 = vld [vmem:[#allocation5 + $0x40] sm:$0xff]
          %v8558 = vld [vmem:[#allocation5 + $0x48] sm:$0xff]
          %v8559 = vld [vmem:[#allocation5 + $0x50] sm:$0xff]
          %v8560 = vld [vmem:[#allocation5 + $0x58] sm:$0xff]
          %v8561 = vld [vmem:[#allocation5 + $0x60] sm:$0xff]
          %v8562 = vld [vmem:[#allocation5 + $0x68] sm:$0xff]
          %v8563 = vld [vmem:[#allocation5 + $0x70] sm:$0xff]
          %v8564 = vld [vmem:[#allocation5 + $0x78] sm:$0xff]
          %8566 = vset.pattern.permute.xlu0 0
          %8567 = vperm.xlu0 %8566, %v8533
          %v8568 = vpop.permute.xlu0 %8567
          %8571 = vset.pattern.permute.xlu0 0
          %8572 = vperm.xlu0 %8571, %v8534
          %v8573 = vpop.permute.xlu0 %8572
          %8576 = vset.pattern.permute.xlu0 0
          %8577 = vperm.xlu0 %8576, %v8535
          %v8578 = vpop.permute.xlu0 %8577
          %8581 = vset.pattern.permute.xlu0 0
          %8582 = vperm.xlu0 %8581, %v8536
          %v8583 = vpop.permute.xlu0 %8582
          %8586 = vset.pattern.permute.xlu0 0
          %8587 = vperm.xlu0 %8586, %v8537
          %v8588 = vpop.permute.xlu0 %8587
          %8591 = vset.pattern.permute.xlu0 0
          %8592 = vperm.xlu0 %8591, %v8538
          %v8593 = vpop.permute.xlu0 %8592
          %8596 = vset.pattern.permute.xlu0 0
          %8597 = vperm.xlu0 %8596, %v8539
          %v8598 = vpop.permute.xlu0 %8597
          %8601 = vset.pattern.permute.xlu0 0
          %8602 = vperm.xlu0 %8601, %v8540
          %v8603 = vpop.permute.xlu0 %8602
          %8606 = vset.pattern.permute.xlu0 0
          %8607 = vperm.xlu0 %8606, %v8541
          %v8608 = vpop.permute.xlu0 %8607
          %8611 = vset.pattern.permute.xlu0 0
          %8612 = vperm.xlu0 %8611, %v8542
          %v8613 = vpop.permute.xlu0 %8612
          %8616 = vset.pattern.permute.xlu0 0
          %8617 = vperm.xlu0 %8616, %v8543
          %v8618 = vpop.permute.xlu0 %8617
          %8621 = vset.pattern.permute.xlu0 0
          %8622 = vperm.xlu0 %8621, %v8544
          %v8623 = vpop.permute.xlu0 %8622
          %8626 = vset.pattern.permute.xlu0 0
          %8627 = vperm.xlu0 %8626, %v8545
          %v8628 = vpop.permute.xlu0 %8627
          %8631 = vset.pattern.permute.xlu0 0
          %8632 = vperm.xlu0 %8631, %v8546
          %v8633 = vpop.permute.xlu0 %8632
          %8636 = vset.pattern.permute.xlu0 0
          %8637 = vperm.xlu0 %8636, %v8547
          %v8638 = vpop.permute.xlu0 %8637
          %8641 = vset.pattern.permute.xlu0 0
          %8642 = vperm.xlu0 %8641, %v8548
          %v8643 = vpop.permute.xlu0 %8642
          %v8645 = vmul.f32 %v8549, %v8568
          %v8646 = vmul.f32 %v8550, %v8573
          %v8647 = vmul.f32 %v8551, %v8578
          %v8648 = vmul.f32 %v8552, %v8583
          %v8649 = vmul.f32 %v8553, %v8588
          %v8650 = vmul.f32 %v8554, %v8593
          %v8651 = vmul.f32 %v8555, %v8598
          %v8652 = vmul.f32 %v8556, %v8603
          %v8653 = vmul.f32 %v8557, %v8608
          %v8654 = vmul.f32 %v8558, %v8613
          %v8655 = vmul.f32 %v8559, %v8618
          %v8656 = vmul.f32 %v8560, %v8623
          %v8657 = vmul.f32 %v8561, %v8628
          %v8658 = vmul.f32 %v8562, %v8633
          %v8659 = vmul.f32 %v8563, %v8638
          %v8660 = vmul.f32 %v8564, %v8643
          %8661 = vst.msk [vmem:[#allocation5] sm:$0xff] %vm8004, %v8645
          %8662 = vst.msk [vmem:[#allocation5 + $0x8] sm:$0xff] %vm8004, %v8646
          %8663 = vst.msk [vmem:[#allocation5 + $0x10] sm:$0xff] %vm8004, %v8647
          %8664 = vst.msk [vmem:[#allocation5 + $0x18] sm:$0xff] %vm8004, %v8648
          %8665 = vst.msk [vmem:[#allocation5 + $0x20] sm:$0xff] %vm8004, %v8649
          %8666 = vst.msk [vmem:[#allocation5 + $0x28] sm:$0xff] %vm8004, %v8650
          %8667 = vst.msk [vmem:[#allocation5 + $0x30] sm:$0xff] %vm8004, %v8651
          %8668 = vst.msk [vmem:[#allocation5 + $0x38] sm:$0xff] %vm8004, %v8652
          %8669 = vst.msk [vmem:[#allocation5 + $0x40] sm:$0xff] %vm8004, %v8653
          %8670 = vst.msk [vmem:[#allocation5 + $0x48] sm:$0xff] %vm8004, %v8654
          %8671 = vst.msk [vmem:[#allocation5 + $0x50] sm:$0xff] %vm8004, %v8655
          %8672 = vst.msk [vmem:[#allocation5 + $0x58] sm:$0xff] %vm8004, %v8656
          %8673 = vst.msk [vmem:[#allocation5 + $0x60] sm:$0xff] %vm8004, %v8657
          %8674 = vst.msk [vmem:[#allocation5 + $0x68] sm:$0xff] %vm8004, %v8658
          %8675 = vst.msk [vmem:[#allocation5 + $0x70] sm:$0xff] %vm8004, %v8659
          %8676 = vst.msk [vmem:[#allocation5 + $0x78] sm:$0xff] %vm8004, %v8660
          %v8677 = vld [vmem:[#allocation5] sm:$0xff]
          %v8678 = vld [vmem:[#allocation5 + $0x8] sm:$0xff]
          %v8679 = vld [vmem:[#allocation5 + $0x10] sm:$0xff]
          %v8680 = vld [vmem:[#allocation5 + $0x18] sm:$0xff]
          %v8681 = vld [vmem:[#allocation5 + $0x20] sm:$0xff]
          %v8682 = vld [vmem:[#allocation5 + $0x28] sm:$0xff]
          %v8683 = vld [vmem:[#allocation5 + $0x30] sm:$0xff]
          %v8684 = vld [vmem:[#allocation5 + $0x38] sm:$0xff]
          %v8685 = vld [vmem:[#allocation5 + $0x40] sm:$0xff]
          %v8686 = vld [vmem:[#allocation5 + $0x48] sm:$0xff]
          %v8687 = vld [vmem:[#allocation5 + $0x50] sm:$0xff]
          %v8688 = vld [vmem:[#allocation5 + $0x58] sm:$0xff]
          %v8689 = vld [vmem:[#allocation5 + $0x60] sm:$0xff]
          %v8690 = vld [vmem:[#allocation5 + $0x68] sm:$0xff]
          %v8691 = vld [vmem:[#allocation5 + $0x70] sm:$0xff]
          %v8692 = vld [vmem:[#allocation5 + $0x78] sm:$0xff]
          %v8693 = vpack.c.bf16 %v8678, %v8677
          %v8694 = vpack.c.bf16 %v8680, %v8679
          %v8695 = vpack.c.bf16 %v8682, %v8681
          %v8696 = vpack.c.bf16 %v8684, %v8683
          %v8697 = vpack.c.bf16 %v8686, %v8685
          %v8698 = vpack.c.bf16 %v8688, %v8687
          %v8699 = vpack.c.bf16 %v8690, %v8689
          %v8700 = vpack.c.bf16 %v8692, %v8691
          %v8701 = vld [vmem:[%s4] sm:$0xf]
          %v8702 = vld [vmem:[%s5] sm:$0xff]
          %8704 = vset.pattern.permute.xlu0 0
          %8705 = vperm.xlu0 %8704, %v8702
          %v8706 = vpop.permute.xlu0 %8705
          %8708 = vmatpush.bf16.xpose.msra.mxu0 %v8700
          %8709 = vmatpush.bf16.xpose.msra.mxu0 %v8699
          %8710 = vmatpush.bf16.xpose.msra.mxu0 %v8698
          %8711 = vmatpush.bf16.xpose.msra.mxu0 %v8697
          %8712 = vmatpush.bf16.xpose.msra.mxu0 %v8696
          %8713 = vmatpush.bf16.xpose.msra.mxu0 %v8695
          %8714 = vmatpush.bf16.xpose.msra.mxu0 %v8694
          %8715 = vmatpush.bf16.xpose.msra.mxu0 %v8693
          %8716 = vmatmul.bf16.gmra.mxu0 %v8701
          %v8717 = vpop.f32.mrf.mxu0
          %v8718 = vadd.f32 %v8706, %v8717
          %v8719 = vpop.f32.mrf.mxu0
          %8720 = vdwg.mxu0
          %8721 = vst [vmem:[%s302] sm:$0xff] %v8718
        $region56: #{tpu_custom_call.1} parent=43 // pred_fallthru
          _
        %s8722 = sand.u32 %s189, 1
        %s8723 = scalar_lea.sflag [#allocation7], %s8722
        %s8724 = sand.u32 %s189, 1
        %s8725 = smul.addr %s8724, 8
        %s8726 = scalar_lea.vmem [#allocation6], %s8725
        // Predicated region
        $region57: #{tpu_custom_call.1} parent=43 // pred_check
          %p8727 = pneg %p199
        $region58: #{tpu_custom_call.1} parent=43 // pred_check_branch
          %8729 = sbr.rel (%p8727) target = $region60
        $region59: #{tpu_custom_call.1} parent=43 // pred_region
          %8731 = vsyncadd %s8723, 0
          %s8732 = sadd.s32 %s26, %s25
          %s8733 = smul.addr %s8732, 8
          %s8734 = scalar_lea.hbm %s6, %s8733
          %s8736 = sshll.u32 %s8726, 4
          %s8737 = int_to_ptr.vmem [resolvable:$true] %s8736
          %s8738 = sshll.u32 %s8734, 4
          %s8739 = int_to_ptr.hbm [resolvable:$true] %s8738
          %8741 = dma.vmem_to_hbm [thread:$0]  %s8737, 128, %s8739, %s8723
        $region60: #{tpu_custom_call.1} parent=43 // pred_fallthru
          _
      $region44: #{tpu_custom_call.1} parent=5 // pred_fallthru
        _
      %p8742 = scmp.le.s32.totalorder 2, %s15
      // Predicated region
      $region61: #{tpu_custom_call.1} parent=5 // pred_check
        %p8743 = pneg %p8742
      $region62: #{tpu_custom_call.1} parent=5 // pred_check_branch
        %8745 = sbr.rel (%p8743) target = $region64
      $region63: #{tpu_custom_call.1} parent=5 // pred_region
        %s8746 = ssub.s32 %s15, 2
        // Predicated region
        $region65: #{tpu_custom_call.1} parent=63 // pred_check
          %p8747 = pneg %p205
        $region66: #{tpu_custom_call.1} parent=63 // pred_check_branch
          %8749 = sbr.rel (%p8747) target = $region68
        $region67: #{tpu_custom_call.1} parent=63 // pred_region
          %s8750 = sand.u32 %s190, 1
          %s8751 = scalar_lea.sflag [#allocation7], %s8750
          %s8752 = sand.u32 %s190, 1
          %s8753 = smul.addr %s8752, 8
          %s8754 = scalar_lea.vmem [#allocation6], %s8753
          %8756 = dma.done %s8751, 128
        $region68: #{tpu_custom_call.1} parent=63 // pred_fallthru
          _
      $region64: #{tpu_custom_call.1} parent=5 // pred_fallthru
        _
    $region6: #{tpu_custom_call.1} parent=1 // loop_footer
      %s19 = sadd.s32 1, %s15
    $region7: #{tpu_custom_call.1} parent=1 // loop_footer_branch
      %14 = sbr.rel target = $region3
    $region8: #{tpu_custom_call.1} parent=1 // loop_exit
      _
    %8757 = vsyncpa [#allocation7], 1
    %s8758 = scalar_lea.sflag [#allocation7], 1
    %8759 = vsyncpa %s8758, 1

</llo_original>
